<compile_context>
chip_gen: v6e
topology: v6e:2x2x1
jax: 0.10.0
libtpu: 0.0.40
codegen_flags: <defaults>
</compile_context>

<pallas_src>
import functools

import jax
import jax.numpy as jnp
from jax import lax
from jax.experimental import pallas as pl
from jax.experimental.pallas import tpu as pltpu

EPS = 1e-5
LANE = 128  # lane width / padding quantum for channel dims


def _round_up(x, m):
    return (x + m - 1) // m * m


@functools.lru_cache(maxsize=None)
def _vmem_limit():
    """Per-generation scoped VMEM budget (leave headroom below physical VMEM)."""
    try:
        cap = int(pltpu.get_tpu_info().vmem_capacity_bytes)
    except Exception:
        cap = 64 * 1024 * 1024  # conservative fallback (v7x-sized)
    return int(min(3 * cap // 4, 100 * 1024 * 1024))


# ---------------------------------------------------------------------------
# Pallas kernels
# ---------------------------------------------------------------------------
def _conv3x3_stats_kernel(x_ref, w_ref, y_ref, s_ref, acc_ref, *, ho, wo, stride):
    """One padded image: 9 shifted matmuls into an f32 scratch, bf16 writeback + stats.

    x_ref : (stride*stride, Hs, Ws, Ci)  phase-split, spatially padded image (bf16)
    w_ref : (9, Ci, Co)                  resident conv taps (bf16)
    y_ref : (1, ho*wo, Co)               conv output (bf16)
    s_ref : (1, 2, Co)                   per-image (sum, sum-of-squares) in f32
    acc_ref: (ho*wo, Co)                 f32 accumulator scratch
    """
    first = True
    for kh in range(3):
        for kw in range(3):
            phase = (kh % stride) * stride + (kw % stride)
            a, b = kh // stride, kw // stride
            tap = x_ref[phase, a:a + ho, b:b + wo, :]               # (ho, wo, Ci)
            contrib = jnp.dot(tap.reshape(ho * wo, tap.shape[-1]),
                              w_ref[kh * 3 + kw],
                              preferred_element_type=jnp.float32)
            if first:
                acc_ref[...] = contrib
                first = False
            else:
                acc_ref[...] += contrib
    acc = acc_ref[...]
    y_ref[0] = acc.astype(y_ref.dtype)
    # Stats rows written directly (no concatenate / relayout).
    s_ref[0, 0:1, :] = jnp.sum(acc, axis=0, keepdims=True)
    s_ref[0, 1:2, :] = jnp.sum(acc * acc, axis=0, keepdims=True)


def _bn_relu_kernel(y_ref, sc_ref, sh_ref, o_ref):
    """out = relu(y * scale + shift); affine in f32, bf16 in/out."""
    a = y_ref[0].astype(jnp.float32) * sc_ref[...] + sh_ref[...]
    o_ref[0] = jnp.maximum(a, 0.0).astype(o_ref.dtype)


def _bn_id_add_relu_kernel(y_ref, sc_ref, sh_ref, xid_ref, wid_ref, o_ref):
    """out = relu(y * scale + shift + xid @ wid) — BN2 + 1x1 identity conv + residual."""
    ident = jnp.dot(xid_ref[0], wid_ref[...], preferred_element_type=jnp.float32)
    a = y_ref[0].astype(jnp.float32) * sc_ref[...] + sh_ref[...] + ident
    o_ref[0] = jnp.maximum(a, 0.0).astype(o_ref.dtype)


# ---------------------------------------------------------------------------
# pallas_call wrappers
# ---------------------------------------------------------------------------
def _conv3x3_stats(xpad, w9, ho, wo, stride):
    """xpad: (N, Hp, Wp, Ci) bf16 spatially padded; w9: (9, Ci, Co) bf16.

    Returns (y (N, ho*wo, Co) bf16, stats (N, 2, Co) f32).
    """
    N, Hp, Wp, Ci = xpad.shape
    Co = w9.shape[-1]
    st = stride
    Hp2, Wp2 = _round_up(Hp, st), _round_up(Wp, st)
    if (Hp2, Wp2) != (Hp, Wp):
        xpad = jnp.pad(xpad, ((0, 0), (0, Hp2 - Hp), (0, Wp2 - Wp), (0, 0)))
    Hs, Ws = Hp2 // st, Wp2 // st
    # s x s phase split: xr[n*st*st + p*st + q, i, j, c] == xpad[n, st*i+p, st*j+q, c]
    # (a no-op re-labelling for stride == 1), so all in-kernel slices are contiguous.
    xr = (xpad.reshape(N, Hs, st, Ws, st, Ci)
               .transpose(0, 2, 4, 1, 3, 5)
               .reshape(N * st * st, Hs, Ws, Ci))
    M = ho * wo
    kern = functools.partial(_conv3x3_stats_kernel, ho=ho, wo=wo, stride=st)
    return pl.pallas_call(
        kern,
        out_shape=(jax.ShapeDtypeStruct((N, M, Co), jnp.bfloat16),
                   jax.ShapeDtypeStruct((N, 2, Co), jnp.float32)),
        grid=(N,),
        in_specs=[pl.BlockSpec((st * st, Hs, Ws, Ci), lambda n: (n, 0, 0, 0)),
                  pl.BlockSpec((9, Ci, Co), lambda n: (0, 0, 0))],     # resident weight
        out_specs=(pl.BlockSpec((1, M, Co), lambda n: (n, 0, 0)),
                   pl.BlockSpec((1, 2, Co), lambda n: (n, 0, 0))),
        scratch_shapes=[pltpu.VMEM((M, Co), jnp.float32)],
        compiler_params=pltpu.CompilerParams(
            dimension_semantics=("parallel",),
            vmem_limit_bytes=_vmem_limit()),
    )(xr, w9)


def _bn_relu(y, scale, shift):
    N, M, C = y.shape
    return pl.pallas_call(
        _bn_relu_kernel,
        out_shape=jax.ShapeDtypeStruct((N, M, C), jnp.bfloat16),
        grid=(N,),
        in_specs=[pl.BlockSpec((1, M, C), lambda n: (n, 0, 0)),
                  pl.BlockSpec((1, C), lambda n: (0, 0)),
                  pl.BlockSpec((1, C), lambda n: (0, 0))],
        out_specs=pl.BlockSpec((1, M, C), lambda n: (n, 0, 0)),
        compiler_params=pltpu.CompilerParams(
            dimension_semantics=("parallel",),
            vmem_limit_bytes=_vmem_limit()),
    )(y, scale, shift)


def _bn_id_add_relu(y, scale, shift, xid, wid):
    N, M, C = y.shape
    Ci = xid.shape[-1]
    return pl.pallas_call(
        _bn_id_add_relu_kernel,
        out_shape=jax.ShapeDtypeStruct((N, M, C), jnp.bfloat16),
        grid=(N,),
        in_specs=[pl.BlockSpec((1, M, C), lambda n: (n, 0, 0)),
                  pl.BlockSpec((1, C), lambda n: (0, 0)),
                  pl.BlockSpec((1, C), lambda n: (0, 0)),
                  pl.BlockSpec((1, M, Ci), lambda n: (n, 0, 0)),
                  pl.BlockSpec((Ci, C), lambda n: (0, 0))],            # resident weight
        out_specs=pl.BlockSpec((1, M, C), lambda n: (n, 0, 0)),
        compiler_params=pltpu.CompilerParams(
            dimension_semantics=("parallel",),
            vmem_limit_bytes=_vmem_limit()),
    )(y, scale, shift, xid, wid)


# ---------------------------------------------------------------------------
# JAX glue: weight layout, BN finalize
# ---------------------------------------------------------------------------
def _w3x3_to_taps(w_oihw, ci_p, co_p):
    # [Cout, Cin, 3, 3] -> (9, Ci_p, Co_p) bf16, tap index = kh*3 + kw
    co, ci, kh, kw = w_oihw.shape
    w = jnp.transpose(w_oihw, (2, 3, 1, 0)).reshape(kh * kw, ci, co)
    w = jnp.pad(w, ((0, 0), (0, ci_p - ci), (0, co_p - co)))
    return w.astype(jnp.bfloat16)


def _bn_scale_shift(stats, gamma, beta, count, c_pad):
    """Finish the cross-image BN reduction (tiny) and fold into per-channel scale/shift."""
    tot = jnp.sum(stats, axis=0)                      # (2, C_p)
    mean = tot[0] / count
    var = jnp.maximum(tot[1] / count - mean * mean, 0.0)
    g = jnp.pad(gamma, (0, c_pad - gamma.shape[0]))
    b = jnp.pad(beta, (0, c_pad - beta.shape[0]))
    scale = g * lax.rsqrt(var + EPS)
    shift = b - mean * scale
    return (scale.reshape(1, c_pad).astype(jnp.float32),
            shift.reshape(1, c_pad).astype(jnp.float32))


# ---------------------------------------------------------------------------
# BasicBlock forward
# ---------------------------------------------------------------------------
@functools.partial(jax.jit, static_argnames=("stride",))
def basic_block_forward(x_nchw, params, stride=1):
    N, Cin, H, W = x_nchw.shape
    Cout = params["w1"].shape[0]
    Ci_p = _round_up(Cin, LANE)
    Co_p = _round_up(Cout, LANE)
    Ho = (H - 1) // stride + 1
    Wo = (W - 1) // stride + 1
    count = N * Ho * Wo

    # NHWC, lane-pad channels, bf16 MXU inputs (padded channels are exactly zero).
    x = jnp.transpose(x_nchw, (0, 2, 3, 1))
    x = jnp.pad(x, ((0, 0), (0, 0), (0, 0), (0, Ci_p - Cin))).astype(jnp.bfloat16)

    w1 = _w3x3_to_taps(params["w1"], Ci_p, Co_p)
    w2 = _w3x3_to_taps(params["w2"], Co_p, Co_p)
    wid = jnp.pad(params["wid"][:, :, 0, 0].T,
                  ((0, Ci_p - Cin), (0, Co_p - Cout))).astype(jnp.bfloat16)

    # ---- conv1 (3x3, stride, pad=1) + batch statistics --------------------------
    x1p = jnp.pad(x, ((0, 0), (1, 1), (1, 1), (0, 0)))
    y1, s1 = _conv3x3_stats(x1p, w1, Ho, Wo, stride)
    sc1, sh1 = _bn_scale_shift(s1, params["g1"], params["b1"], count, Co_p)

    # ---- bn1 + relu (fused), then zero spatial pad for conv2 --------------------
    out1 = _bn_relu(y1, sc1, sh1)                              # (N, Ho*Wo, Co_p) bf16
    out1p = jnp.pad(out1.reshape(N, Ho, Wo, Co_p),
                    ((0, 0), (1, 1), (1, 1), (0, 0)))

    # ---- conv2 (3x3, s=1, pad=1) + batch statistics ------------------------------
    y2, s2 = _conv3x3_stats(out1p, w2, Ho, Wo, 1)
    sc2, sh2 = _bn_scale_shift(s2, params["g2"], params["b2"], count, Co_p)

    # ---- bn2 + 1x1 identity conv (stride) + residual add + relu (fused) ----------
    xid = x[:, ::stride, ::stride, :].reshape(N, Ho * Wo, Ci_p)
    out = _bn_id_add_relu(y2, sc2, sh2, xid, wid)              # (N, Ho*Wo, Co_p) bf16

    out = out[:, :, :Cout].reshape(N, Ho, Wo, Cout)
    return jnp.transpose(out, (0, 3, 1, 2)).astype(jnp.float32)   # back to NCHW, f32


# ---------------------------------------------------------------------------
# Pure-JAX f32 reference (lax.conv) for the correctness check
# ---------------------------------------------------------------------------
def _bn_ref(x, g, b):
    m = jnp.mean(x, axis=(0, 2, 3), keepdims=True)
    v = jnp.mean((x - m) ** 2, axis=(0, 2, 3), keepdims=True)
    return (x - m) / jnp.sqrt(v + EPS) * g[None, :, None, None] + b[None, :, None, None]


def basic_block_ref(x, params, stride=1):
    dn = ("NCHW", "OIHW", "NCHW")
    y = lax.conv_general_dilated(x, params["w1"], (stride, stride),
                                 ((1, 1), (1, 1)), dimension_numbers=dn)
    y = jnp.maximum(_bn_ref(y, params["g1"], params["b1"]), 0.0)
    y = lax.conv_general_dilated(y, params["w2"], (1, 1),
                                 ((1, 1), (1, 1)), dimension_numbers=dn)
    y = _bn_ref(y, params["g2"], params["b2"])
    ident = lax.conv_general_dilated(x, params["wid"], (stride, stride),
                                     ((0, 0), (0, 0)), dimension_numbers=dn)
    return jnp.maximum(y + ident, 0.0)


# ---------------------------------------------------------------------------
def init_params(key, in_channels, out_channels):
    k1, k2, k3 = jax.random.split(key, 3)
    return {
        "w1": 0.1 * jax.random.normal(k1, (out_channels, in_channels, 3, 3), jnp.float32),
        "w2": 0.1 * jax.random.normal(k2, (out_channels, out_channels, 3, 3), jnp.float32),
        "wid": 0.1 * jax.random.normal(k3, (out_channels, in_channels, 1, 1), jnp.float32),
        # BatchNorm2d default init: weight = 1, bias = 0
        "g1": jnp.ones((out_channels,), jnp.float32),
        "b1": jnp.zeros((out_channels,), jnp.float32),
        "g2": jnp.ones((out_channels,), jnp.float32),
        "b2": jnp.zeros((out_channels,), jnp.float32),
    }


if __name__ == "__main__":
    key = jax.random.PRNGKey(0)
    kx, kp = jax.random.split(key)

    N, Cin, Cout, H, W, stride = 2, 4, 8, 16, 16, 1
    x = jax.random.normal(kx, (N, Cin, H, W), jnp.float32)
    params = init_params(kp, Cin, Cout)

    out = basic_block_forward(x, params, stride=stride)
    out = jax.block_until_ready(out)

    ref = basic_block_ref(x, params, stride=stride)
    assert out.shape == ref.shape, (out.shape, ref.shape)
    # bf16 MXU inputs and bf16 HBM intermediates (f32 accumulation / f32 BN math) vs a
    # pure-f32 reference -> loose absolute tolerance on the unit-scale normalized output.
    err = float(jnp.max(jnp.abs(out - ref)))
    assert err < 1.5e-1, err

    print("KERNEL_OK")
</pallas_src>

<mosaic_0001>
module attributes {stable_mosaic.version = 11 : i64} {
  func.func @_conv3x3_stats_kernel(%arg0: i32, %arg1: memref<1x18x18x128xbf16, #tpu.memory_space<vmem>>, %arg2: memref<9x128x128xbf16, #tpu.memory_space<vmem>>, %arg3: memref<1x256x128xbf16, #tpu.memory_space<vmem>>, %arg4: memref<1x2x128xf32, #tpu.memory_space<vmem>>, %arg5: memref<256x128xf32, #tpu.memory_space<vmem>>) attributes {dimension_semantics = [#tpu.dimension_semantics<parallel>], iteration_bounds = array<i64: 2>, scalar_prefetch = 0 : i64, scratch_operands = 1 : i64, tpu.core_type = #tpu.core_type<tc>, window_params = [{transform_indices = @transform_0, window_bounds = array<i64: 1, 18, 18, 128>}, {pipeline_mode = #tpu.pipeline_mode<synchronous>, transform_indices = @transform_1, window_bounds = array<i64: 9, 128, 128>}, {transform_indices = @transform_2, window_bounds = array<i64: 1, 256, 128>}, {transform_indices = @transform_3, window_bounds = array<i64: 1, 2, 128>}]} {
    %c0 = arith.constant 0 : index
    %c0_0 = arith.constant 0 : index
    %c0_1 = arith.constant 0 : index
    %c0_2 = arith.constant 0 : index
    %0 = vector.load %arg1[%c0, %c0_0, %c0_1, %c0_2] : memref<1x18x18x128xbf16, #tpu.memory_space<vmem>>, vector<1x16x16x128xbf16>
    %1 = vector.shape_cast %0 : vector<1x16x16x128xbf16> to vector<16x16x128xbf16>
    %2 = vector.shape_cast %1 : vector<16x16x128xbf16> to vector<256x128xbf16>
    %c0_3 = arith.constant 0 : index
    %c0_4 = arith.constant 0 : index
    %c0_5 = arith.constant 0 : index
    %3 = vector.load %arg2[%c0_3, %c0_4, %c0_5] : memref<9x128x128xbf16, #tpu.memory_space<vmem>>, vector<1x128x128xbf16>
    %4 = vector.shape_cast %3 : vector<1x128x128xbf16> to vector<128x128xbf16>
    %cst = arith.constant dense<0.000000e+00> : vector<256x128xf32>
    %5 = tpu.matmul %2, %4, %cst {dimension_numbers = #tpu.dot_dimension_numbers<[1], [0], [0], [1], [0, 0, 1, 1], [], []>} : vector<256x128xbf16>, vector<128x128xbf16>, vector<256x128xf32> -> vector<256x128xf32>
    %c0_6 = arith.constant 0 : index
    %c0_7 = arith.constant 0 : index
    %6 = vector.load %arg5[%c0_6, %c0_7] : memref<256x128xf32, #tpu.memory_space<vmem>>, vector<256x128xf32>
    tpu.vector_store %arg5[%c0_6, %c0_7], %5 {strides = array<i32>} : memref<256x128xf32, #tpu.memory_space<vmem>>, vector<256x128xf32>,
    %c0_8 = arith.constant 0 : index
    %c0_9 = arith.constant 0 : index
    %c1 = arith.constant 1 : index
    %c0_10 = arith.constant 0 : index
    %7 = vector.load %arg1[%c0_8, %c0_9, %c1, %c0_10] : memref<1x18x18x128xbf16, #tpu.memory_space<vmem>>, vector<1x16x16x128xbf16>
    %8 = vector.shape_cast %7 : vector<1x16x16x128xbf16> to vector<16x16x128xbf16>
    %9 = vector.shape_cast %8 : vector<16x16x128xbf16> to vector<256x128xbf16>
    %c1_11 = arith.constant 1 : index
    %c0_12 = arith.constant 0 : index
    %c0_13 = arith.constant 0 : index
    %10 = vector.load %arg2[%c1_11, %c0_12, %c0_13] : memref<9x128x128xbf16, #tpu.memory_space<vmem>>, vector<1x128x128xbf16>
    %11 = vector.shape_cast %10 : vector<1x128x128xbf16> to vector<128x128xbf16>
    %cst_14 = arith.constant dense<0.000000e+00> : vector<256x128xf32>
    %12 = tpu.matmul %9, %11, %cst_14 {dimension_numbers = #tpu.dot_dimension_numbers<[1], [0], [0], [1], [0, 0, 1, 1], [], []>} : vector<256x128xbf16>, vector<128x128xbf16>, vector<256x128xf32> -> vector<256x128xf32>
    %c0_15 = arith.constant 0 : index
    %c0_16 = arith.constant 0 : index
    %13 = vector.load %arg5[%c0_15, %c0_16] : memref<256x128xf32, #tpu.memory_space<vmem>>, vector<256x128xf32>
    %14 = arith.addf %13, %12 : vector<256x128xf32>
    %c0_17 = arith.constant 0 : index
    %c0_18 = arith.constant 0 : index
    %15 = vector.load %arg5[%c0_17, %c0_18] : memref<256x128xf32, #tpu.memory_space<vmem>>, vector<256x128xf32>
    tpu.vector_store %arg5[%c0_17, %c0_18], %14 {strides = array<i32>} : memref<256x128xf32, #tpu.memory_space<vmem>>, vector<256x128xf32>,
    %c0_19 = arith.constant 0 : index
    %c0_20 = arith.constant 0 : index
    %c2 = arith.constant 2 : index
    %c0_21 = arith.constant 0 : index
    %16 = vector.load %arg1[%c0_19, %c0_20, %c2, %c0_21] : memref<1x18x18x128xbf16, #tpu.memory_space<vmem>>, vector<1x16x16x128xbf16>
    %17 = vector.shape_cast %16 : vector<1x16x16x128xbf16> to vector<16x16x128xbf16>
    %18 = vector.shape_cast %17 : vector<16x16x128xbf16> to vector<256x128xbf16>
    %c2_22 = arith.constant 2 : index
    %c0_23 = arith.constant 0 : index
    %c0_24 = arith.constant 0 : index
    %19 = vector.load %arg2[%c2_22, %c0_23, %c0_24] : memref<9x128x128xbf16, #tpu.memory_space<vmem>>, vector<1x128x128xbf16>
    %20 = vector.shape_cast %19 : vector<1x128x128xbf16> to vector<128x128xbf16>
    %cst_25 = arith.constant dense<0.000000e+00> : vector<256x128xf32>
    %21 = tpu.matmul %18, %20, %cst_25 {dimension_numbers = #tpu.dot_dimension_numbers<[1], [0], [0], [1], [0, 0, 1, 1], [], []>} : vector<256x128xbf16>, vector<128x128xbf16>, vector<256x128xf32> -> vector<256x128xf32>
    %c0_26 = arith.constant 0 : index
    %c0_27 = arith.constant 0 : index
    %22 = vector.load %arg5[%c0_26, %c0_27] : memref<256x128xf32, #tpu.memory_space<vmem>>, vector<256x128xf32>
    %23 = arith.addf %22, %21 : vector<256x128xf32>
    %c0_28 = arith.constant 0 : index
    %c0_29 = arith.constant 0 : index
    %24 = vector.load %arg5[%c0_28, %c0_29] : memref<256x128xf32, #tpu.memory_space<vmem>>, vector<256x128xf32>
    tpu.vector_store %arg5[%c0_28, %c0_29], %23 {strides = array<i32>} : memref<256x128xf32, #tpu.memory_space<vmem>>, vector<256x128xf32>,
    %c0_30 = arith.constant 0 : index
    %c1_31 = arith.constant 1 : index
    %c0_32 = arith.constant 0 : index
    %c0_33 = arith.constant 0 : index
    %25 = vector.load %arg1[%c0_30, %c1_31, %c0_32, %c0_33] : memref<1x18x18x128xbf16, #tpu.memory_space<vmem>>, vector<1x16x16x128xbf16>
    %26 = vector.shape_cast %25 : vector<1x16x16x128xbf16> to vector<16x16x128xbf16>
    %27 = vector.shape_cast %26 : vector<16x16x128xbf16> to vector<256x128xbf16>
    %c3 = arith.constant 3 : index
    %c0_34 = arith.constant 0 : index
    %c0_35 = arith.constant 0 : index
    %28 = vector.load %arg2[%c3, %c0_34, %c0_35] : memref<9x128x128xbf16, #tpu.memory_space<vmem>>, vector<1x128x128xbf16>
    %29 = vector.shape_cast %28 : vector<1x128x128xbf16> to vector<128x128xbf16>
    %cst_36 = arith.constant dense<0.000000e+00> : vector<256x128xf32>
    %30 = tpu.matmul %27, %29, %cst_36 {dimension_numbers = #tpu.dot_dimension_numbers<[1], [0], [0], [1], [0, 0, 1, 1], [], []>} : vector<256x128xbf16>, vector<128x128xbf16>, vector<256x128xf32> -> vector<256x128xf32>
    %c0_37 = arith.constant 0 : index
    %c0_38 = arith.constant 0 : index
    %31 = vector.load %arg5[%c0_37, %c0_38] : memref<256x128xf32, #tpu.memory_space<vmem>>, vector<256x128xf32>
    %32 = arith.addf %31, %30 : vector<256x128xf32>
    %c0_39 = arith.constant 0 : index
    %c0_40 = arith.constant 0 : index
    %33 = vector.load %arg5[%c0_39, %c0_40] : memref<256x128xf32, #tpu.memory_space<vmem>>, vector<256x128xf32>
    tpu.vector_store %arg5[%c0_39, %c0_40], %32 {strides = array<i32>} : memref<256x128xf32, #tpu.memory_space<vmem>>, vector<256x128xf32>,
    %c0_41 = arith.constant 0 : index
    %c1_42 = arith.constant 1 : index
    %c1_43 = arith.constant 1 : index
    %c0_44 = arith.constant 0 : index
    %34 = vector.load %arg1[%c0_41, %c1_42, %c1_43, %c0_44] : memref<1x18x18x128xbf16, #tpu.memory_space<vmem>>, vector<1x16x16x128xbf16>
    %35 = vector.shape_cast %34 : vector<1x16x16x128xbf16> to vector<16x16x128xbf16>
    %36 = vector.shape_cast %35 : vector<16x16x128xbf16> to vector<256x128xbf16>
    %c4 = arith.constant 4 : index
    %c0_45 = arith.constant 0 : index
    %c0_46 = arith.constant 0 : index
    %37 = vector.load %arg2[%c4, %c0_45, %c0_46] : memref<9x128x128xbf16, #tpu.memory_space<vmem>>, vector<1x128x128xbf16>
    %38 = vector.shape_cast %37 : vector<1x128x128xbf16> to vector<128x128xbf16>
    %cst_47 = arith.constant dense<0.000000e+00> : vector<256x128xf32>
    %39 = tpu.matmul %36, %38, %cst_47 {dimension_numbers = #tpu.dot_dimension_numbers<[1], [0], [0], [1], [0, 0, 1, 1], [], []>} : vector<256x128xbf16>, vector<128x128xbf16>, vector<256x128xf32> -> vector<256x128xf32>
    %c0_48 = arith.constant 0 : index
    %c0_49 = arith.constant 0 : index
    %40 = vector.load %arg5[%c0_48, %c0_49] : memref<256x128xf32, #tpu.memory_space<vmem>>, vector<256x128xf32>
    %41 = arith.addf %40, %39 : vector<256x128xf32>
    %c0_50 = arith.constant 0 : index
    %c0_51 = arith.constant 0 : index
    %42 = vector.load %arg5[%c0_50, %c0_51] : memref<256x128xf32, #tpu.memory_space<vmem>>, vector<256x128xf32>
    tpu.vector_store %arg5[%c0_50, %c0_51], %41 {strides = array<i32>} : memref<256x128xf32, #tpu.memory_space<vmem>>, vector<256x128xf32>,
    %c0_52 = arith.constant 0 : index
    %c1_53 = arith.constant 1 : index
    %c2_54 = arith.constant 2 : index
    %c0_55 = arith.constant 0 : index
    %43 = vector.load %arg1[%c0_52, %c1_53, %c2_54, %c0_55] : memref<1x18x18x128xbf16, #tpu.memory_space<vmem>>, vector<1x16x16x128xbf16>
    %44 = vector.shape_cast %43 : vector<1x16x16x128xbf16> to vector<16x16x128xbf16>
    %45 = vector.shape_cast %44 : vector<16x16x128xbf16> to vector<256x128xbf16>
    %c5 = arith.constant 5 : index
    %c0_56 = arith.constant 0 : index
    %c0_57 = arith.constant 0 : index
    %46 = vector.load %arg2[%c5, %c0_56, %c0_57] : memref<9x128x128xbf16, #tpu.memory_space<vmem>>, vector<1x128x128xbf16>
    %47 = vector.shape_cast %46 : vector<1x128x128xbf16> to vector<128x128xbf16>
    %cst_58 = arith.constant dense<0.000000e+00> : vector<256x128xf32>
    %48 = tpu.matmul %45, %47, %cst_58 {dimension_numbers = #tpu.dot_dimension_numbers<[1], [0], [0], [1], [0, 0, 1, 1], [], []>} : vector<256x128xbf16>, vector<128x128xbf16>, vector<256x128xf32> -> vector<256x128xf32>
    %c0_59 = arith.constant 0 : index
    %c0_60 = arith.constant 0 : index
    %49 = vector.load %arg5[%c0_59, %c0_60] : memref<256x128xf32, #tpu.memory_space<vmem>>, vector<256x128xf32>
    %50 = arith.addf %49, %48 : vector<256x128xf32>
    %c0_61 = arith.constant 0 : index
    %c0_62 = arith.constant 0 : index
    %51 = vector.load %arg5[%c0_61, %c0_62] : memref<256x128xf32, #tpu.memory_space<vmem>>, vector<256x128xf32>
    tpu.vector_store %arg5[%c0_61, %c0_62], %50 {strides = array<i32>} : memref<256x128xf32, #tpu.memory_space<vmem>>, vector<256x128xf32>,
    %c0_63 = arith.constant 0 : index
    %c2_64 = arith.constant 2 : index
    %c0_65 = arith.constant 0 : index
    %c0_66 = arith.constant 0 : index
    %52 = vector.load %arg1[%c0_63, %c2_64, %c0_65, %c0_66] : memref<1x18x18x128xbf16, #tpu.memory_space<vmem>>, vector<1x16x16x128xbf16>
    %53 = vector.shape_cast %52 : vector<1x16x16x128xbf16> to vector<16x16x128xbf16>
    %54 = vector.shape_cast %53 : vector<16x16x128xbf16> to vector<256x128xbf16>
    %c6 = arith.constant 6 : index
    %c0_67 = arith.constant 0 : index
    %c0_68 = arith.constant 0 : index
    %55 = vector.load %arg2[%c6, %c0_67, %c0_68] : memref<9x128x128xbf16, #tpu.memory_space<vmem>>, vector<1x128x128xbf16>
    %56 = vector.shape_cast %55 : vector<1x128x128xbf16> to vector<128x128xbf16>
    %cst_69 = arith.constant dense<0.000000e+00> : vector<256x128xf32>
    %57 = tpu.matmul %54, %56, %cst_69 {dimension_numbers = #tpu.dot_dimension_numbers<[1], [0], [0], [1], [0, 0, 1, 1], [], []>} : vector<256x128xbf16>, vector<128x128xbf16>, vector<256x128xf32> -> vector<256x128xf32>
    %c0_70 = arith.constant 0 : index
    %c0_71 = arith.constant 0 : index
    %58 = vector.load %arg5[%c0_70, %c0_71] : memref<256x128xf32, #tpu.memory_space<vmem>>, vector<256x128xf32>
    %59 = arith.addf %58, %57 : vector<256x128xf32>
    %c0_72 = arith.constant 0 : index
    %c0_73 = arith.constant 0 : index
    %60 = vector.load %arg5[%c0_72, %c0_73] : memref<256x128xf32, #tpu.memory_space<vmem>>, vector<256x128xf32>
    tpu.vector_store %arg5[%c0_72, %c0_73], %59 {strides = array<i32>} : memref<256x128xf32, #tpu.memory_space<vmem>>, vector<256x128xf32>,
    %c0_74 = arith.constant 0 : index
    %c2_75 = arith.constant 2 : index
    %c1_76 = arith.constant 1 : index
    %c0_77 = arith.constant 0 : index
    %61 = vector.load %arg1[%c0_74, %c2_75, %c1_76, %c0_77] : memref<1x18x18x128xbf16, #tpu.memory_space<vmem>>, vector<1x16x16x128xbf16>
    %62 = vector.shape_cast %61 : vector<1x16x16x128xbf16> to vector<16x16x128xbf16>
    %63 = vector.shape_cast %62 : vector<16x16x128xbf16> to vector<256x128xbf16>
    %c7 = arith.constant 7 : index
    %c0_78 = arith.constant 0 : index
    %c0_79 = arith.constant 0 : index
    %64 = vector.load %arg2[%c7, %c0_78, %c0_79] : memref<9x128x128xbf16, #tpu.memory_space<vmem>>, vector<1x128x128xbf16>
    %65 = vector.shape_cast %64 : vector<1x128x128xbf16> to vector<128x128xbf16>
    %cst_80 = arith.constant dense<0.000000e+00> : vector<256x128xf32>
    %66 = tpu.matmul %63, %65, %cst_80 {dimension_numbers = #tpu.dot_dimension_numbers<[1], [0], [0], [1], [0, 0, 1, 1], [], []>} : vector<256x128xbf16>, vector<128x128xbf16>, vector<256x128xf32> -> vector<256x128xf32>
    %c0_81 = arith.constant 0 : index
    %c0_82 = arith.constant 0 : index
    %67 = vector.load %arg5[%c0_81, %c0_82] : memref<256x128xf32, #tpu.memory_space<vmem>>, vector<256x128xf32>
    %68 = arith.addf %67, %66 : vector<256x128xf32>
    %c0_83 = arith.constant 0 : index
    %c0_84 = arith.constant 0 : index
    %69 = vector.load %arg5[%c0_83, %c0_84] : memref<256x128xf32, #tpu.memory_space<vmem>>, vector<256x128xf32>
    tpu.vector_store %arg5[%c0_83, %c0_84], %68 {strides = array<i32>} : memref<256x128xf32, #tpu.memory_space<vmem>>, vector<256x128xf32>,
    %c0_85 = arith.constant 0 : index
    %c2_86 = arith.constant 2 : index
    %c2_87 = arith.constant 2 : index
    %c0_88 = arith.constant 0 : index
    %70 = vector.load %arg1[%c0_85, %c2_86, %c2_87, %c0_88] : memref<1x18x18x128xbf16, #tpu.memory_space<vmem>>, vector<1x16x16x128xbf16>
    %71 = vector.shape_cast %70 : vector<1x16x16x128xbf16> to vector<16x16x128xbf16>
    %72 = vector.shape_cast %71 : vector<16x16x128xbf16> to vector<256x128xbf16>
    %c8 = arith.constant 8 : index
    %c0_89 = arith.constant 0 : index
    %c0_90 = arith.constant 0 : index
    %73 = vector.load %arg2[%c8, %c0_89, %c0_90] : memref<9x128x128xbf16, #tpu.memory_space<vmem>>, vector<1x128x128xbf16>
    %74 = vector.shape_cast %73 : vector<1x128x128xbf16> to vector<128x128xbf16>
    %cst_91 = arith.constant dense<0.000000e+00> : vector<256x128xf32>
    %75 = tpu.matmul %72, %74, %cst_91 {dimension_numbers = #tpu.dot_dimension_numbers<[1], [0], [0], [1], [0, 0, 1, 1], [], []>} : vector<256x128xbf16>, vector<128x128xbf16>, vector<256x128xf32> -> vector<256x128xf32>
    %c0_92 = arith.constant 0 : index
    %c0_93 = arith.constant 0 : index
    %76 = vector.load %arg5[%c0_92, %c0_93] : memref<256x128xf32, #tpu.memory_space<vmem>>, vector<256x128xf32>
    %77 = arith.addf %76, %75 : vector<256x128xf32>
    %c0_94 = arith.constant 0 : index
    %c0_95 = arith.constant 0 : index
    %78 = vector.load %arg5[%c0_94, %c0_95] : memref<256x128xf32, #tpu.memory_space<vmem>>, vector<256x128xf32>
    tpu.vector_store %arg5[%c0_94, %c0_95], %77 {strides = array<i32>} : memref<256x128xf32, #tpu.memory_space<vmem>>, vector<256x128xf32>,
    %c0_96 = arith.constant 0 : index
    %c0_97 = arith.constant 0 : index
    %79 = vector.load %arg5[%c0_96, %c0_97] : memref<256x128xf32, #tpu.memory_space<vmem>>, vector<256x128xf32>
    %80 = arith.truncf %79 : vector<256x128xf32> to vector<256x128xbf16>
    %c0_98 = arith.constant 0 : index
    %c0_99 = arith.constant 0 : index
    %c0_100 = arith.constant 0 : index
    %81 = vector.load %arg3[%c0_98, %c0_99, %c0_100] : memref<1x256x128xbf16, #tpu.memory_space<vmem>>, vector<1x256x128xbf16>
    %82 = vector.shape_cast %81 : vector<1x256x128xbf16> to vector<256x128xbf16>
    %83 = vector.shape_cast %80 : vector<256x128xbf16> to vector<1x256x128xbf16>
    tpu.vector_store %arg3[%c0_98, %c0_99, %c0_100], %83 {strides = array<i32>} : memref<1x256x128xbf16, #tpu.memory_space<vmem>>, vector<1x256x128xbf16>,
    %cst_101 = arith.constant dense<0.000000e+00> : vector<128xf32>
    %84 = vector.multi_reduction <add>, %79, %cst_101 [0] : vector<256x128xf32> to vector<128xf32>
    %85 = vector.shape_cast %84 : vector<128xf32> to vector<1x128xf32>
    %c0_102 = arith.constant 0 : index
    %c0_103 = arith.constant 0 : index
    %c0_104 = arith.constant 0 : index
    %86 = vector.load %arg4[%c0_102, %c0_103, %c0_104] : memref<1x2x128xf32, #tpu.memory_space<vmem>>, vector<1x1x128xf32>
    %87 = vector.shape_cast %86 : vector<1x1x128xf32> to vector<1x128xf32>
    %88 = vector.shape_cast %85 : vector<1x128xf32> to vector<1x1x128xf32>
    tpu.vector_store %arg4[%c0_102, %c0_103, %c0_104], %88 {strides = array<i32>} : memref<1x2x128xf32, #tpu.memory_space<vmem>>, vector<1x1x128xf32>,
    %89 = arith.mulf %79, %79 : vector<256x128xf32>
    %cst_105 = arith.constant dense<0.000000e+00> : vector<128xf32>
    %90 = vector.multi_reduction <add>, %89, %cst_105 [0] : vector<256x128xf32> to vector<128xf32>
    %91 = vector.shape_cast %90 : vector<128xf32> to vector<1x128xf32>
    %c0_106 = arith.constant 0 : index
    %c1_107 = arith.constant 1 : index
    %c0_108 = arith.constant 0 : index
    %92 = vector.load %arg4[%c0_106, %c1_107, %c0_108] : memref<1x2x128xf32, #tpu.memory_space<vmem>>, vector<1x1x128xf32>
    %93 = vector.shape_cast %92 : vector<1x1x128xf32> to vector<1x128xf32>
    %94 = vector.shape_cast %91 : vector<1x128xf32> to vector<1x1x128xf32>
    tpu.vector_store %arg4[%c0_106, %c1_107, %c0_108], %94 {strides = array<i32>} : memref<1x2x128xf32, #tpu.memory_space<vmem>>, vector<1x1x128xf32>,
    return
  }
  func.func @transform_0(%arg0: i32) -> (i32, i32, i32, i32) {
    %c0_i32 = arith.constant 0 : i32
    %c0_i32_0 = arith.constant 0 : i32
    %c0_i32_1 = arith.constant 0 : i32
    %c0_i32_2 = arith.constant 0 : i32
    return %arg0, %c0_i32, %c0_i32_0, %c0_i32_1 : i32, i32, i32, i32
  }
  func.func @transform_1(%arg0: i32) -> (i32, i32, i32) {
    %c0_i32 = arith.constant 0 : i32
    %c0_i32_0 = arith.constant 0 : i32
    %c0_i32_1 = arith.constant 0 : i32
    %c0_i32_2 = arith.constant 0 : i32
    return %c0_i32, %c0_i32_0, %c0_i32_1 : i32, i32, i32
  }
  func.func @transform_2(%arg0: i32) -> (i32, i32, i32) {
    %c0_i32 = arith.constant 0 : i32
    %c0_i32_0 = arith.constant 0 : i32
    %c0_i32_1 = arith.constant 0 : i32
    return %arg0, %c0_i32, %c0_i32_0 : i32, i32, i32
  }
  func.func @transform_3(%arg0: i32) -> (i32, i32, i32) {
    %c0_i32 = arith.constant 0 : i32
    %c0_i32_0 = arith.constant 0 : i32
    %c0_i32_1 = arith.constant 0 : i32
    return %arg0, %c0_i32, %c0_i32_0 : i32, i32, i32
  }
}

module attributes {stable_mosaic.version = 11 : i64} {
  func.func @_bn_relu_kernel(%arg0: i32, %arg1: memref<1x256x128xbf16, #tpu.memory_space<vmem>>, %arg2: memref<1x128xf32, #tpu.memory_space<vmem>>, %arg3: memref<1x128xf32, #tpu.memory_space<vmem>>, %arg4: memref<1x256x128xbf16, #tpu.memory_space<vmem>>) attributes {dimension_semantics = [#tpu.dimension_semantics<parallel>], iteration_bounds = array<i64: 2>, scalar_prefetch = 0 : i64, scratch_operands = 0 : i64, tpu.core_type = #tpu.core_type<tc>, window_params = [{transform_indices = @transform_0, window_bounds = array<i64: 1, 256, 128>}, {pipeline_mode = #tpu.pipeline_mode<synchronous>, transform_indices = @transform_1, window_bounds = array<i64: 1, 128>}, {pipeline_mode = #tpu.pipeline_mode<synchronous>, transform_indices = @transform_2, window_bounds = array<i64: 1, 128>}, {transform_indices = @transform_3, window_bounds = array<i64: 1, 256, 128>}]} {
    %c0 = arith.constant 0 : index
    %c0_0 = arith.constant 0 : index
    %c0_1 = arith.constant 0 : index
    %0 = vector.load %arg1[%c0, %c0_0, %c0_1] : memref<1x256x128xbf16, #tpu.memory_space<vmem>>, vector<1x256x128xbf16>
    %1 = vector.shape_cast %0 : vector<1x256x128xbf16> to vector<256x128xbf16>
    %2 = arith.extf %1 : vector<256x128xbf16> to vector<256x128xf32>
    %c0_2 = arith.constant 0 : index
    %c0_3 = arith.constant 0 : index
    %3 = vector.load %arg2[%c0_2, %c0_3] : memref<1x128xf32, #tpu.memory_space<vmem>>, vector<1x128xf32>
    %4 = vector.broadcast %3 : vector<1x128xf32> to vector<256x128xf32>
    %5 = arith.mulf %2, %4 : vector<256x128xf32>
    %c0_4 = arith.constant 0 : index
    %c0_5 = arith.constant 0 : index
    %6 = vector.load %arg3[%c0_4, %c0_5] : memref<1x128xf32, #tpu.memory_space<vmem>>, vector<1x128xf32>
    %7 = vector.broadcast %6 : vector<1x128xf32> to vector<256x128xf32>
    %8 = arith.addf %5, %7 : vector<256x128xf32>
    %cst = arith.constant 0.000000e+00 : f32
    %9 = vector.broadcast %cst : f32 to vector<256x128xf32>
    %10 = arith.maximumf %8, %9 : vector<256x128xf32>
    %11 = arith.truncf %10 : vector<256x128xf32> to vector<256x128xbf16>
    %c0_6 = arith.constant 0 : index
    %c0_7 = arith.constant 0 : index
    %c0_8 = arith.constant 0 : index
    %12 = vector.load %arg4[%c0_6, %c0_7, %c0_8] : memref<1x256x128xbf16, #tpu.memory_space<vmem>>, vector<1x256x128xbf16>
    %13 = vector.shape_cast %12 : vector<1x256x128xbf16> to vector<256x128xbf16>
    %14 = vector.shape_cast %11 : vector<256x128xbf16> to vector<1x256x128xbf16>
    tpu.vector_store %arg4[%c0_6, %c0_7, %c0_8], %14 {strides = array<i32>} : memref<1x256x128xbf16, #tpu.memory_space<vmem>>, vector<1x256x128xbf16>,
    return
  }
  func.func @transform_0(%arg0: i32) -> (i32, i32, i32) {
    %c0_i32 = arith.constant 0 : i32
    %c0_i32_0 = arith.constant 0 : i32
    %c0_i32_1 = arith.constant 0 : i32
    return %arg0, %c0_i32, %c0_i32_0 : i32, i32, i32
  }
  func.func @transform_1(%arg0: i32) -> (i32, i32) {
    %c0_i32 = arith.constant 0 : i32
    %c0_i32_0 = arith.constant 0 : i32
    %c0_i32_1 = arith.constant 0 : i32
    return %c0_i32, %c0_i32_0 : i32, i32
  }
  func.func @transform_2(%arg0: i32) -> (i32, i32) {
    %c0_i32 = arith.constant 0 : i32
    %c0_i32_0 = arith.constant 0 : i32
    %c0_i32_1 = arith.constant 0 : i32
    return %c0_i32, %c0_i32_0 : i32, i32
  }
  func.func @transform_3(%arg0: i32) -> (i32, i32, i32) {
    %c0_i32 = arith.constant 0 : i32
    %c0_i32_0 = arith.constant 0 : i32
    %c0_i32_1 = arith.constant 0 : i32
    return %arg0, %c0_i32, %c0_i32_0 : i32, i32, i32
  }
}

module attributes {stable_mosaic.version = 11 : i64} {
  func.func @_bn_id_add_relu_kernel(%arg0: i32, %arg1: memref<1x256x128xbf16, #tpu.memory_space<vmem>>, %arg2: memref<1x128xf32, #tpu.memory_space<vmem>>, %arg3: memref<1x128xf32, #tpu.memory_space<vmem>>, %arg4: memref<1x256x128xbf16, #tpu.memory_space<vmem>>, %arg5: memref<128x128xbf16, #tpu.memory_space<vmem>>, %arg6: memref<1x256x128xbf16, #tpu.memory_space<vmem>>) attributes {dimension_semantics = [#tpu.dimension_semantics<parallel>], iteration_bounds = array<i64: 2>, scalar_prefetch = 0 : i64, scratch_operands = 0 : i64, tpu.core_type = #tpu.core_type<tc>, window_params = [{transform_indices = @transform_0, window_bounds = array<i64: 1, 256, 128>}, {pipeline_mode = #tpu.pipeline_mode<synchronous>, transform_indices = @transform_1, window_bounds = array<i64: 1, 128>}, {pipeline_mode = #tpu.pipeline_mode<synchronous>, transform_indices = @transform_2, window_bounds = array<i64: 1, 128>}, {transform_indices = @transform_3, window_bounds = array<i64: 1, 256, 128>}, {pipeline_mode = #tpu.pipeline_mode<synchronous>, transform_indices = @transform_4, window_bounds = array<i64: 128, 128>}, {transform_indices = @transform_5, window_bounds = array<i64: 1, 256, 128>}]} {
    %c0 = arith.constant 0 : index
    %c0_0 = arith.constant 0 : index
    %c0_1 = arith.constant 0 : index
    %0 = vector.load %arg4[%c0, %c0_0, %c0_1] : memref<1x256x128xbf16, #tpu.memory_space<vmem>>, vector<1x256x128xbf16>
    %1 = vector.shape_cast %0 : vector<1x256x128xbf16> to vector<256x128xbf16>
    %c0_2 = arith.constant 0 : index
    %c0_3 = arith.constant 0 : index
    %2 = vector.load %arg5[%c0_2, %c0_3] : memref<128x128xbf16, #tpu.memory_space<vmem>>, vector<128x128xbf16>
    %cst = arith.constant dense<0.000000e+00> : vector<256x128xf32>
    %3 = tpu.matmul %1, %2, %cst {dimension_numbers = #tpu.dot_dimension_numbers<[1], [0], [0], [1], [0, 0, 1, 1], [], []>} : vector<256x128xbf16>, vector<128x128xbf16>, vector<256x128xf32> -> vector<256x128xf32>
    %c0_4 = arith.constant 0 : index
    %c0_5 = arith.constant 0 : index
    %c0_6 = arith.constant 0 : index
    %4 = vector.load %arg1[%c0_4, %c0_5, %c0_6] : memref<1x256x128xbf16, #tpu.memory_space<vmem>>, vector<1x256x128xbf16>
    %5 = vector.shape_cast %4 : vector<1x256x128xbf16> to vector<256x128xbf16>
    %6 = arith.extf %5 : vector<256x128xbf16> to vector<256x128xf32>
    %c0_7 = arith.constant 0 : index
    %c0_8 = arith.constant 0 : index
    %7 = vector.load %arg2[%c0_7, %c0_8] : memref<1x128xf32, #tpu.memory_space<vmem>>, vector<1x128xf32>
    %8 = vector.broadcast %7 : vector<1x128xf32> to vector<256x128xf32>
    %9 = arith.mulf %6, %8 : vector<256x128xf32>
    %c0_9 = arith.constant 0 : index
    %c0_10 = arith.constant 0 : index
    %10 = vector.load %arg3[%c0_9, %c0_10] : memref<1x128xf32, #tpu.memory_space<vmem>>, vector<1x128xf32>
    %11 = vector.broadcast %10 : vector<1x128xf32> to vector<256x128xf32>
    %12 = arith.addf %9, %11 : vector<256x128xf32>
    %13 = arith.addf %12, %3 : vector<256x128xf32>
    %cst_11 = arith.constant 0.000000e+00 : f32
    %14 = vector.broadcast %cst_11 : f32 to vector<256x128xf32>
    %15 = arith.maximumf %13, %14 : vector<256x128xf32>
    %16 = arith.truncf %15 : vector<256x128xf32> to vector<256x128xbf16>
    %c0_12 = arith.constant 0 : index
    %c0_13 = arith.constant 0 : index
    %c0_14 = arith.constant 0 : index
    %17 = vector.load %arg6[%c0_12, %c0_13, %c0_14] : memref<1x256x128xbf16, #tpu.memory_space<vmem>>, vector<1x256x128xbf16>
    %18 = vector.shape_cast %17 : vector<1x256x128xbf16> to vector<256x128xbf16>
    %19 = vector.shape_cast %16 : vector<256x128xbf16> to vector<1x256x128xbf16>
    tpu.vector_store %arg6[%c0_12, %c0_13, %c0_14], %19 {strides = array<i32>} : memref<1x256x128xbf16, #tpu.memory_space<vmem>>, vector<1x256x128xbf16>,
    return
  }
  func.func @transform_0(%arg0: i32) -> (i32, i32, i32) {
    %c0_i32 = arith.constant 0 : i32
    %c0_i32_0 = arith.constant 0 : i32
    %c0_i32_1 = arith.constant 0 : i32
    return %arg0, %c0_i32, %c0_i32_0 : i32, i32, i32
  }
  func.func @transform_1(%arg0: i32) -> (i32, i32) {
    %c0_i32 = arith.constant 0 : i32
    %c0_i32_0 = arith.constant 0 : i32
    %c0_i32_1 = arith.constant 0 : i32
    return %c0_i32, %c0_i32_0 : i32, i32
  }
  func.func @transform_2(%arg0: i32) -> (i32, i32) {
    %c0_i32 = arith.constant 0 : i32
    %c0_i32_0 = arith.constant 0 : i32
    %c0_i32_1 = arith.constant 0 : i32
    return %c0_i32, %c0_i32_0 : i32, i32
  }
  func.func @transform_3(%arg0: i32) -> (i32, i32, i32) {
    %c0_i32 = arith.constant 0 : i32
    %c0_i32_0 = arith.constant 0 : i32
    %c0_i32_1 = arith.constant 0 : i32
    return %arg0, %c0_i32, %c0_i32_0 : i32, i32, i32
  }
  func.func @transform_4(%arg0: i32) -> (i32, i32) {
    %c0_i32 = arith.constant 0 : i32
    %c0_i32_0 = arith.constant 0 : i32
    %c0_i32_1 = arith.constant 0 : i32
    return %c0_i32, %c0_i32_0 : i32, i32
  }
  func.func @transform_5(%arg0: i32) -> (i32, i32, i32) {
    %c0_i32 = arith.constant 0 : i32
    %c0_i32_0 = arith.constant 0 : i32
    %c0_i32_1 = arith.constant 0 : i32
    return %arg0, %c0_i32, %c0_i32_0 : i32, i32, i32
  }
}

</mosaic_0001>

<llo_original>
// kernel: basic_block_forward.5
$region0: #{basic_block_forward.5}
  #allocation0 [shape = 'u32[]', space=smem, size = 0x4, offset = 0x4, fixed_abs, tag = 'smem constant byte address 0x4 - core index']
  #allocation1 [shape = 'u32[144,128]{1,0:T(1,128)}', space=vmem, size = 0x12000, scoped, tag = 'internal scratch']
  %s0 = inlined_call_operand.vmem [shape: bf16[2,256,128], index: 0, kind: input, shape index: {}]
  %s1 = inlined_call_operand.vmem [shape: f32[1,128], index: 1, kind: input, shape index: {}]
  %s2 = inlined_call_operand.vmem [shape: f32[1,128], index: 2, kind: input, shape index: {}]
  %s3 = inlined_call_operand.vmem [shape: bf16[2,256,128], index: 3, kind: output, shape index: {}]
  %s4 = sld [smem:[#allocation0]]
  $region45: #{basic_block_forward.5} parent=0
    _
  %s6 = ssub.s32 1, %s4
  %s7 = scalar_select 0, %s6, %s4
  loop: start=0, step=1, limit=4
  $region2: #{basic_block_forward.5} parent=0 // loop_pre_header
    _
  $region3: #{basic_block_forward.5} parent=0 // loop_header
    %s9 = sphi 0, %s13
    %p10 = scmp.ge.s32.totalorder %s9, 4
    %s19 = sphi 0, %s21
    %s22 = sphi 0, %s19
    %s23 = sphi 0, %s22
    %s39 = sphi 0, %s23
    %s43 = sphi 0, %s43
    %s45 = sphi 0, %s43
    %s46 = sphi 0, %s45
    %s60 = sphi 0, %s46
    %s64 = sphi 0, %s64
    %s66 = sphi 0, %s64
    %s67 = sphi 0, %s66
    %s81 = sphi 0, %s67
    %s87 = sphi 0, %s89
    %s90 = sphi 0, %s87
    %s91 = sphi 0, %s90
    %s107 = sphi 0, %s91
  $region4: #{basic_block_forward.5} parent=0 // loop_header_branch
    %12 = sbr.rel (%p10) target = $region8
  $region5: #{basic_block_forward.5} parent=0 // loop_body
    %s14 = ssub.s32 %s9, 1
    %s15 = ssub.s32 %s9, 2
    %s16 = sadd.s32 %s9, 1
    %s17 = ssub.s32 %s9, %s16
    %p18 = scmp.eq.s32.totalorder %s17, 0
    %s20 = sadd.s32 %s19, 1
    %s21 = scalar_select %p18, %s19, %s20
    %p24 = pneg %p18
    %p25 = scmp.eq.s32.totalorder %s9, 1
    %p26 = por %p24, %p25
    %p27 = scmp.ne.s32.totalorder %s19, %s22
    %p28 = scmp.eq.s32.totalorder %s9, 0
    %p29 = por %p27, %p28
    %p30 = scmp.ne.s32.totalorder %s19, %s22
    %p31 = scmp.eq.s32.totalorder %s14, 1
    %p32 = por %p30, %p31
    %p33 = scmp.ne.s32.totalorder %s22, %s23
    %p34 = scmp.eq.s32.totalorder %s14, 0
    %p35 = por %p33, %p34
    %p36 = scmp.ne.s32.totalorder %s22, %s23
    %p37 = scmp.eq.s32.totalorder %s15, 1
    %p38 = por %p36, %p37
    %p40 = scmp.ne.s32.totalorder %s23, %s39
    %p41 = scmp.eq.s32.totalorder %s15, 0
    %p42 = por %p40, %p41
    %s44 = sadd.s32 %s43, 1
    %p47 = scmp.eq.s32.totalorder %s9, 1
    %p48 = scmp.ne.s32.totalorder %s43, %s45
    %p49 = scmp.eq.s32.totalorder %s9, 0
    %p50 = por %p48, %p49
    %p51 = scmp.ne.s32.totalorder %s43, %s45
    %p52 = scmp.eq.s32.totalorder %s14, 1
    %p53 = por %p51, %p52
    %p54 = scmp.ne.s32.totalorder %s45, %s46
    %p55 = scmp.eq.s32.totalorder %s14, 0
    %p56 = por %p54, %p55
    %p57 = scmp.ne.s32.totalorder %s45, %s46
    %p58 = scmp.eq.s32.totalorder %s15, 1
    %p59 = por %p57, %p58
    %p61 = scmp.ne.s32.totalorder %s46, %s60
    %p62 = scmp.eq.s32.totalorder %s15, 0
    %p63 = por %p61, %p62
    %s65 = sadd.s32 %s64, 1
    %p68 = scmp.eq.s32.totalorder %s9, 1
    %p69 = scmp.ne.s32.totalorder %s64, %s66
    %p70 = scmp.eq.s32.totalorder %s9, 0
    %p71 = por %p69, %p70
    %p72 = scmp.ne.s32.totalorder %s64, %s66
    %p73 = scmp.eq.s32.totalorder %s14, 1
    %p74 = por %p72, %p73
    %p75 = scmp.ne.s32.totalorder %s66, %s67
    %p76 = scmp.eq.s32.totalorder %s14, 0
    %p77 = por %p75, %p76
    %p78 = scmp.ne.s32.totalorder %s66, %s67
    %p79 = scmp.eq.s32.totalorder %s15, 1
    %p80 = por %p78, %p79
    %p82 = scmp.ne.s32.totalorder %s67, %s81
    %p83 = scmp.eq.s32.totalorder %s15, 0
    %p84 = por %p82, %p83
    %s85 = ssub.s32 %s9, %s16
    %p86 = scmp.eq.s32.totalorder %s85, 0
    %s88 = sadd.s32 %s87, 1
    %s89 = scalar_select %p86, %s87, %s88
    %p92 = pneg %p86
    %p93 = scmp.eq.s32.totalorder %s9, 1
    %p94 = por %p92, %p93
    %p95 = scmp.ne.s32.totalorder %s87, %s90
    %p96 = scmp.eq.s32.totalorder %s9, 0
    %p97 = por %p95, %p96
    %p98 = scmp.ne.s32.totalorder %s87, %s90
    %p99 = scmp.eq.s32.totalorder %s14, 1
    %p100 = por %p98, %p99
    %p101 = scmp.ne.s32.totalorder %s90, %s91
    %p102 = scmp.eq.s32.totalorder %s14, 0
    %p103 = por %p101, %p102
    %p104 = scmp.ne.s32.totalorder %s90, %s91
    %p105 = scmp.eq.s32.totalorder %s15, 1
    %p106 = por %p104, %p105
    %p108 = scmp.ne.s32.totalorder %s91, %s107
    %p109 = scmp.eq.s32.totalorder %s15, 0
    %p110 = por %p108, %p109
    %p111 = scmp.le.s32.totalorder 1, %s9
    %p112 = scmp.lt.s32.totalorder %s9, 3
    %p113 = pnand %p111, %p112
    %p114 = pneg %p113
    // Predicated region
    $region9: #{basic_block_forward.5} parent=5 // pred_check
      _
    $region10: #{basic_block_forward.5} parent=5 // pred_check_branch
      %116 = sbr.rel (%p113) target = $region12
    $region11: #{basic_block_forward.5} parent=5 // pred_region
      %s117 = ssub.s32 %s9, 1
      // Predicated region
      $region13: #{basic_block_forward.5} parent=11 // pred_check
        %p118 = pneg %p56
      $region14: #{basic_block_forward.5} parent=11 // pred_check_branch
        %120 = sbr.rel (%p118) target = $region16
      $region15: #{basic_block_forward.5} parent=11 // pred_region
        _
      $region16: #{basic_block_forward.5} parent=11 // pred_fallthru
        _
      // Predicated region
      $region17: #{basic_block_forward.5} parent=11 // pred_check
        %p121 = pneg %p77
      $region18: #{basic_block_forward.5} parent=11 // pred_check_branch
        %123 = sbr.rel (%p121) target = $region20
      $region19: #{basic_block_forward.5} parent=11 // pred_region
        _
      $region20: #{basic_block_forward.5} parent=11 // pred_fallthru
        _
    $region12: #{basic_block_forward.5} parent=5 // pred_fallthru
      _
    %p124 = scmp.lt.s32.totalorder %s9, 2
    // Predicated region
    $region21: #{basic_block_forward.5} parent=5 // pred_check
      %p125 = pneg %p124
    $region22: #{basic_block_forward.5} parent=5 // pred_check_branch
      %127 = sbr.rel (%p125) target = $region24
    $region23: #{basic_block_forward.5} parent=5 // pred_region
      // Predicated region
      $region25: #{basic_block_forward.5} parent=23 // pred_check
        %p128 = pneg %p29
      $region26: #{basic_block_forward.5} parent=23 // pred_check_branch
        %130 = sbr.rel (%p128) target = $region28
      $region27: #{basic_block_forward.5} parent=23 // pred_region
        %p131 = scmp.lt.s32.totalorder %s9, 1
        %s132 = scalar_select %p131, %s9, 1
        %s133 = smul.addr %s132, 32
        %s134 = smul.addr %s133, 4
        %s135 = scalar_lea.vmem %s0, %s134
      $region28: #{basic_block_forward.5} parent=23 // pred_fallthru
        _
    $region24: #{basic_block_forward.5} parent=5 // pred_fallthru
      _
    %p136 = scmp.le.s32.totalorder 1, %s9
    %p137 = scmp.lt.s32.totalorder %s9, 3
    %p138 = pnand %p136, %p137
    %p139 = pneg %p138
    // Predicated region
    $region29: #{basic_block_forward.5} parent=5 // pred_check
      _
    $region30: #{basic_block_forward.5} parent=5 // pred_check_branch
      %141 = sbr.rel (%p138) target = $region32
    $region31: #{basic_block_forward.5} parent=5 // pred_region
      %s142 = ssub.s32 %s9, 1
      %p143 = scmp.lt.s32.totalorder %s14, 1
      %s144 = scalar_select %p143, %s14, 1
      %s145 = smul.addr %s144, 32
      %s146 = smul.addr %s145, 4
      %s147 = scalar_lea.vmem %s0, %s146
      %p148 = pneg %p35
      %p149 = pneg %p32
      %p150 = pneg %p56
      %p151 = pneg %p53
      %p152 = pneg %p77
      %p153 = pneg %p74
      %p154 = pneg %p103
      %p155 = pneg %p100
      %p156 = scmp.lt.s32.totalorder %s14, 1
      %s157 = scalar_select %p156, %s14, 1
      %s158 = smul.addr %s157, 32
      %s159 = smul.addr %s158, 4
      %s160 = scalar_lea.vmem %s3, %s159
      %p161 = scmp.lt.s32.totalorder %s14, 1
      %s162 = scalar_select %p161, %s14, 1
      %s163 = smul.addr %s162, 32
      %s164 = smul.addr %s163, 4
      %s165 = scalar_lea.vmem %s0, %s164
      %p166 = scmp.lt.s32.totalorder %s14, 1
      %s167 = scalar_select %p166, %s14, 1
      %s168 = smul.addr %s167, 32
      %s169 = smul.addr %s168, 4
      %s170 = scalar_lea.vmem %s3, %s169
      %v171 = vld [vmem:[%s165] sm:$0xf]
      %v172 = vld [vmem:[%s165 + $0x4] sm:$0xf]
      %v173 = vld [vmem:[%s165 + $0x8] sm:$0xf]
      %v174 = vld [vmem:[%s165 + $0xc] sm:$0xf]
      %v175 = vld [vmem:[%s165 + $0x10] sm:$0xf]
      %v176 = vld [vmem:[%s165 + $0x14] sm:$0xf]
      %v177 = vld [vmem:[%s165 + $0x18] sm:$0xf]
      %v178 = vld [vmem:[%s165 + $0x1c] sm:$0xf]
      %v179 = vld [vmem:[%s165 + $0x20] sm:$0xf]
      %v180 = vld [vmem:[%s165 + $0x24] sm:$0xf]
      %v181 = vld [vmem:[%s165 + $0x28] sm:$0xf]
      %v182 = vld [vmem:[%s165 + $0x2c] sm:$0xf]
      %v183 = vld [vmem:[%s165 + $0x30] sm:$0xf]
      %v184 = vld [vmem:[%s165 + $0x34] sm:$0xf]
      %v185 = vld [vmem:[%s165 + $0x38] sm:$0xf]
      %v186 = vld [vmem:[%s165 + $0x3c] sm:$0xf]
      %v187 = vld [vmem:[%s165 + $0x40] sm:$0xf]
      %v188 = vld [vmem:[%s165 + $0x44] sm:$0xf]
      %v189 = vld [vmem:[%s165 + $0x48] sm:$0xf]
      %v190 = vld [vmem:[%s165 + $0x4c] sm:$0xf]
      %v191 = vld [vmem:[%s165 + $0x50] sm:$0xf]
      %v192 = vld [vmem:[%s165 + $0x54] sm:$0xf]
      %v193 = vld [vmem:[%s165 + $0x58] sm:$0xf]
      %v194 = vld [vmem:[%s165 + $0x5c] sm:$0xf]
      %v195 = vld [vmem:[%s165 + $0x60] sm:$0xf]
      %v196 = vld [vmem:[%s165 + $0x64] sm:$0xf]
      %v197 = vld [vmem:[%s165 + $0x68] sm:$0xf]
      %v198 = vld [vmem:[%s165 + $0x6c] sm:$0xf]
      %v199 = vld [vmem:[%s165 + $0x70] sm:$0xf]
      %v200 = vld [vmem:[%s165 + $0x74] sm:$0xf]
      %v201 = vld [vmem:[%s165 + $0x78] sm:$0xf]
      %v202 = vld [vmem:[%s165 + $0x7c] sm:$0xf]
      %v203 = vunpack.c.l.bf16 %v171
      %v204 = vunpack.c.l.bf16 %v172
      %v205 = vunpack.c.l.bf16 %v173
      %v206 = vunpack.c.l.bf16 %v174
      %v207 = vunpack.c.l.bf16 %v175
      %v208 = vunpack.c.l.bf16 %v176
      %v209 = vunpack.c.l.bf16 %v177
      %v210 = vunpack.c.l.bf16 %v178
      %v211 = vunpack.c.l.bf16 %v179
      %v212 = vunpack.c.l.bf16 %v180
      %v213 = vunpack.c.l.bf16 %v181
      %v214 = vunpack.c.l.bf16 %v182
      %v215 = vunpack.c.l.bf16 %v183
      %v216 = vunpack.c.l.bf16 %v184
      %v217 = vunpack.c.l.bf16 %v185
      %v218 = vunpack.c.l.bf16 %v186
      %v219 = vunpack.c.l.bf16 %v187
      %v220 = vunpack.c.l.bf16 %v188
      %v221 = vunpack.c.l.bf16 %v189
      %v222 = vunpack.c.l.bf16 %v190
      %v223 = vunpack.c.l.bf16 %v191
      %v224 = vunpack.c.l.bf16 %v192
      %v225 = vunpack.c.l.bf16 %v193
      %v226 = vunpack.c.l.bf16 %v194
      %v227 = vunpack.c.l.bf16 %v195
      %v228 = vunpack.c.l.bf16 %v196
      %v229 = vunpack.c.l.bf16 %v197
      %v230 = vunpack.c.l.bf16 %v198
      %v231 = vunpack.c.l.bf16 %v199
      %v232 = vunpack.c.l.bf16 %v200
      %v233 = vunpack.c.l.bf16 %v201
      %v234 = vunpack.c.l.bf16 %v202
      %v235 = vld [vmem:[%s1] sm:$0x1]
      %v237 = vlaneseq
      %v238 = vshrl.u32 %v237, 7
      %v239 = vsub.s32 0, %v238
      %v240 = vrot.slane %v235, %v239
      %v242 = vmul.f32 %v203, %v240
      %v243 = vmul.f32 %v204, %v240
      %v244 = vmul.f32 %v205, %v240
      %v245 = vmul.f32 %v206, %v240
      %v246 = vmul.f32 %v207, %v240
      %v247 = vmul.f32 %v208, %v240
      %v248 = vmul.f32 %v209, %v240
      %v249 = vmul.f32 %v210, %v240
      %v250 = vmul.f32 %v211, %v240
      %v251 = vmul.f32 %v212, %v240
      %v252 = vmul.f32 %v213, %v240
      %v253 = vmul.f32 %v214, %v240
      %v254 = vmul.f32 %v215, %v240
      %v255 = vmul.f32 %v216, %v240
      %v256 = vmul.f32 %v217, %v240
      %v257 = vmul.f32 %v218, %v240
      %v258 = vmul.f32 %v219, %v240
      %v259 = vmul.f32 %v220, %v240
      %v260 = vmul.f32 %v221, %v240
      %v261 = vmul.f32 %v222, %v240
      %v262 = vmul.f32 %v223, %v240
      %v263 = vmul.f32 %v224, %v240
      %v264 = vmul.f32 %v225, %v240
      %v265 = vmul.f32 %v226, %v240
      %v266 = vmul.f32 %v227, %v240
      %v267 = vmul.f32 %v228, %v240
      %v268 = vmul.f32 %v229, %v240
      %v269 = vmul.f32 %v230, %v240
      %v270 = vmul.f32 %v231, %v240
      %v271 = vmul.f32 %v232, %v240
      %v272 = vmul.f32 %v233, %v240
      %v273 = vmul.f32 %v234, %v240
      %v274 = vld [vmem:[%s2] sm:$0x1]
      %v276 = vlaneseq
      %v277 = vshrl.u32 %v276, 7
      %v278 = vsub.s32 0, %v277
      %v279 = vrot.slane %v274, %v278
      %v281 = vadd.f32 %v242, %v279
      %v282 = vadd.f32 %v243, %v279
      %v283 = vadd.f32 %v244, %v279
      %v284 = vadd.f32 %v245, %v279
      %v285 = vadd.f32 %v246, %v279
      %v286 = vadd.f32 %v247, %v279
      %v287 = vadd.f32 %v248, %v279
      %v288 = vadd.f32 %v249, %v279
      %v289 = vadd.f32 %v250, %v279
      %v290 = vadd.f32 %v251, %v279
      %v291 = vadd.f32 %v252, %v279
      %v292 = vadd.f32 %v253, %v279
      %v293 = vadd.f32 %v254, %v279
      %v294 = vadd.f32 %v255, %v279
      %v295 = vadd.f32 %v256, %v279
      %v296 = vadd.f32 %v257, %v279
      %v297 = vadd.f32 %v258, %v279
      %v298 = vadd.f32 %v259, %v279
      %v299 = vadd.f32 %v260, %v279
      %v300 = vadd.f32 %v261, %v279
      %v301 = vadd.f32 %v262, %v279
      %v302 = vadd.f32 %v263, %v279
      %v303 = vadd.f32 %v264, %v279
      %v304 = vadd.f32 %v265, %v279
      %v305 = vadd.f32 %v266, %v279
      %v306 = vadd.f32 %v267, %v279
      %v307 = vadd.f32 %v268, %v279
      %v308 = vadd.f32 %v269, %v279
      %v309 = vadd.f32 %v270, %v279
      %v310 = vadd.f32 %v271, %v279
      %v311 = vadd.f32 %v272, %v279
      %v312 = vadd.f32 %v273, %v279
      %v313 = vmax.f32 %v281, 0.0
      %v314 = vmax.f32 %v282, 0.0
      %v315 = vmax.f32 %v283, 0.0
      %v316 = vmax.f32 %v284, 0.0
      %v317 = vmax.f32 %v285, 0.0
      %v318 = vmax.f32 %v286, 0.0
      %v319 = vmax.f32 %v287, 0.0
      %v320 = vmax.f32 %v288, 0.0
      %v321 = vmax.f32 %v289, 0.0
      %v322 = vmax.f32 %v290, 0.0
      %v323 = vmax.f32 %v291, 0.0
      %v324 = vmax.f32 %v292, 0.0
      %v325 = vmax.f32 %v293, 0.0
      %v326 = vmax.f32 %v294, 0.0
      %v327 = vmax.f32 %v295, 0.0
      %v328 = vmax.f32 %v296, 0.0
      %v329 = vmax.f32 %v297, 0.0
      %v330 = vmax.f32 %v298, 0.0
      %v331 = vmax.f32 %v299, 0.0
      %v332 = vmax.f32 %v300, 0.0
      %v333 = vmax.f32 %v301, 0.0
      %v334 = vmax.f32 %v302, 0.0
      %v335 = vmax.f32 %v303, 0.0
      %v336 = vmax.f32 %v304, 0.0
      %v337 = vmax.f32 %v305, 0.0
      %v338 = vmax.f32 %v306, 0.0
      %v339 = vmax.f32 %v307, 0.0
      %v340 = vmax.f32 %v308, 0.0
      %v341 = vmax.f32 %v309, 0.0
      %v342 = vmax.f32 %v310, 0.0
      %v343 = vmax.f32 %v311, 0.0
      %v344 = vmax.f32 %v312, 0.0
      %v345 = vpack.c.bf16 %v314, %v313
      %v346 = vpack.c.bf16 %v316, %v315
      %v347 = vpack.c.bf16 %v318, %v317
      %v348 = vpack.c.bf16 %v320, %v319
      %v349 = vpack.c.bf16 %v322, %v321
      %v350 = vpack.c.bf16 %v324, %v323
      %v351 = vpack.c.bf16 %v326, %v325
      %v352 = vpack.c.bf16 %v328, %v327
      %v353 = vpack.c.bf16 %v330, %v329
      %v354 = vpack.c.bf16 %v332, %v331
      %v355 = vpack.c.bf16 %v334, %v333
      %v356 = vpack.c.bf16 %v336, %v335
      %v357 = vpack.c.bf16 %v338, %v337
      %v358 = vpack.c.bf16 %v340, %v339
      %v359 = vpack.c.bf16 %v342, %v341
      %v360 = vpack.c.bf16 %v344, %v343
      %v377 = vunpack.c.l.b16 %v345
      %v378 = vunpack.c.h.b16 %v345
      %v379 = vunpack.c.l.b16 %v346
      %v380 = vunpack.c.h.b16 %v346
      %v381 = vunpack.c.l.b16 %v347
      %v382 = vunpack.c.h.b16 %v347
      %v383 = vunpack.c.l.b16 %v348
      %v384 = vunpack.c.h.b16 %v348
      %v385 = vunpack.c.l.b16 %v349
      %v386 = vunpack.c.h.b16 %v349
      %v387 = vunpack.c.l.b16 %v350
      %v388 = vunpack.c.h.b16 %v350
      %v389 = vunpack.c.l.b16 %v351
      %v390 = vunpack.c.h.b16 %v351
      %v391 = vunpack.c.l.b16 %v352
      %v392 = vunpack.c.h.b16 %v352
      %v393 = vunpack.c.l.b16 %v353
      %v394 = vunpack.c.h.b16 %v353
      %v395 = vunpack.c.l.b16 %v354
      %v396 = vunpack.c.h.b16 %v354
      %v397 = vunpack.c.l.b16 %v355
      %v398 = vunpack.c.h.b16 %v355
      %v399 = vunpack.c.l.b16 %v356
      %v400 = vunpack.c.h.b16 %v356
      %v401 = vunpack.c.l.b16 %v357
      %v402 = vunpack.c.h.b16 %v357
      %v403 = vunpack.c.l.b16 %v358
      %v404 = vunpack.c.h.b16 %v358
      %v405 = vunpack.c.l.b16 %v359
      %v406 = vunpack.c.h.b16 %v359
      %v407 = vunpack.c.l.b16 %v360
      %v408 = vunpack.c.h.b16 %v360
      %v409 = vpack.c.b16 %v377, %v377
      %v410 = vpack.c.b16 %v378, %v378
      %v411 = vpack.c.b16 %v379, %v379
      %v412 = vpack.c.b16 %v380, %v380
      %v413 = vpack.c.b16 %v381, %v381
      %v414 = vpack.c.b16 %v382, %v382
      %v415 = vpack.c.b16 %v383, %v383
      %v416 = vpack.c.b16 %v384, %v384
      %v417 = vpack.c.b16 %v385, %v385
      %v418 = vpack.c.b16 %v386, %v386
      %v419 = vpack.c.b16 %v387, %v387
      %v420 = vpack.c.b16 %v388, %v388
      %v421 = vpack.c.b16 %v389, %v389
      %v422 = vpack.c.b16 %v390, %v390
      %v423 = vpack.c.b16 %v391, %v391
      %v424 = vpack.c.b16 %v392, %v392
      %v425 = vpack.c.b16 %v393, %v393
      %v426 = vpack.c.b16 %v394, %v394
      %v427 = vpack.c.b16 %v395, %v395
      %v428 = vpack.c.b16 %v396, %v396
      %v429 = vpack.c.b16 %v397, %v397
      %v430 = vpack.c.b16 %v398, %v398
      %v431 = vpack.c.b16 %v399, %v399
      %v432 = vpack.c.b16 %v400, %v400
      %v433 = vpack.c.b16 %v401, %v401
      %v434 = vpack.c.b16 %v402, %v402
      %v435 = vpack.c.b16 %v403, %v403
      %v436 = vpack.c.b16 %v404, %v404
      %v437 = vpack.c.b16 %v405, %v405
      %v438 = vpack.c.b16 %v406, %v406
      %v439 = vpack.c.b16 %v407, %v407
      %v440 = vpack.c.b16 %v408, %v408
      %473 = vst [vmem:[%s170] sm:$0xf] %v409
      %474 = vst [vmem:[%s170 + $0x4] sm:$0xf] %v410
      %475 = vst [vmem:[%s170 + $0x8] sm:$0xf] %v411
      %476 = vst [vmem:[%s170 + $0xc] sm:$0xf] %v412
      %477 = vst [vmem:[%s170 + $0x10] sm:$0xf] %v413
      %478 = vst [vmem:[%s170 + $0x14] sm:$0xf] %v414
      %479 = vst [vmem:[%s170 + $0x18] sm:$0xf] %v415
      %480 = vst [vmem:[%s170 + $0x1c] sm:$0xf] %v416
      %481 = vst [vmem:[%s170 + $0x20] sm:$0xf] %v417
      %482 = vst [vmem:[%s170 + $0x24] sm:$0xf] %v418
      %483 = vst [vmem:[%s170 + $0x28] sm:$0xf] %v419
      %484 = vst [vmem:[%s170 + $0x2c] sm:$0xf] %v420
      %485 = vst [vmem:[%s170 + $0x30] sm:$0xf] %v421
      %486 = vst [vmem:[%s170 + $0x34] sm:$0xf] %v422
      %487 = vst [vmem:[%s170 + $0x38] sm:$0xf] %v423
      %488 = vst [vmem:[%s170 + $0x3c] sm:$0xf] %v424
      %489 = vst [vmem:[%s170 + $0x40] sm:$0xf] %v425
      %490 = vst [vmem:[%s170 + $0x44] sm:$0xf] %v426
      %491 = vst [vmem:[%s170 + $0x48] sm:$0xf] %v427
      %492 = vst [vmem:[%s170 + $0x4c] sm:$0xf] %v428
      %493 = vst [vmem:[%s170 + $0x50] sm:$0xf] %v429
      %494 = vst [vmem:[%s170 + $0x54] sm:$0xf] %v430
      %495 = vst [vmem:[%s170 + $0x58] sm:$0xf] %v431
      %496 = vst [vmem:[%s170 + $0x5c] sm:$0xf] %v432
      %497 = vst [vmem:[%s170 + $0x60] sm:$0xf] %v433
      %498 = vst [vmem:[%s170 + $0x64] sm:$0xf] %v434
      %499 = vst [vmem:[%s170 + $0x68] sm:$0xf] %v435
      %500 = vst [vmem:[%s170 + $0x6c] sm:$0xf] %v436
      %501 = vst [vmem:[%s170 + $0x70] sm:$0xf] %v437
      %502 = vst [vmem:[%s170 + $0x74] sm:$0xf] %v438
      %503 = vst [vmem:[%s170 + $0x78] sm:$0xf] %v439
      %504 = vst [vmem:[%s170 + $0x7c] sm:$0xf] %v440
      %p505 = scmp.lt.s32.totalorder %s14, 1
      %s506 = scalar_select %p505, %s14, 1
      %s507 = smul.addr %s506, 32
      %s508 = smul.addr %s507, 4
      %s509 = scalar_lea.vmem %s3, %s508
      // Predicated region
      $region33: #{basic_block_forward.5} parent=31 // pred_check
        %p510 = pneg %p100
      $region34: #{basic_block_forward.5} parent=31 // pred_check_branch
        %512 = sbr.rel (%p510) target = $region36
      $region35: #{basic_block_forward.5} parent=31 // pred_region
        _
      $region36: #{basic_block_forward.5} parent=31 // pred_fallthru
        _
    $region32: #{basic_block_forward.5} parent=5 // pred_fallthru
      _
    %p513 = scmp.le.s32.totalorder 2, %s9
    // Predicated region
    $region37: #{basic_block_forward.5} parent=5 // pred_check
      %p514 = pneg %p513
    $region38: #{basic_block_forward.5} parent=5 // pred_check_branch
      %516 = sbr.rel (%p514) target = $region40
    $region39: #{basic_block_forward.5} parent=5 // pred_region
      %s517 = ssub.s32 %s9, 2
      // Predicated region
      $region41: #{basic_block_forward.5} parent=39 // pred_check
        %p518 = pneg %p106
      $region42: #{basic_block_forward.5} parent=39 // pred_check_branch
        %520 = sbr.rel (%p518) target = $region44
      $region43: #{basic_block_forward.5} parent=39 // pred_region
        %p521 = scmp.lt.s32.totalorder %s15, 1
        %s522 = scalar_select %p521, %s15, 1
        %s523 = smul.addr %s522, 32
        %s524 = smul.addr %s523, 4
        %s525 = scalar_lea.vmem %s3, %s524
      $region44: #{basic_block_forward.5} parent=39 // pred_fallthru
        _
    $region40: #{basic_block_forward.5} parent=5 // pred_fallthru
      _
  $region6: #{basic_block_forward.5} parent=0 // loop_footer
    %s13 = sadd.s32 1, %s9
  $region7: #{basic_block_forward.5} parent=0 // loop_footer_branch
    %8 = sbr.rel target = $region3
  $region8: #{basic_block_forward.5} parent=0 // loop_exit
    _

// kernel: basic_block_forward.7
$region0: #{basic_block_forward.7}
  #allocation0 [shape = 'u32[]', space=smem, size = 0x4, offset = 0x4, fixed_abs, tag = 'smem constant byte address 0x4 - core index']
  #allocation1 [shape = 'u32[144,128]{1,0:T(1,128)}', space=vmem, size = 0x12000, scoped, tag = 'internal scratch']
  %s0 = inlined_call_operand.vmem [shape: bf16[2,256,128], index: 0, kind: input, shape index: {}]
  %s1 = inlined_call_operand.vmem [shape: f32[1,128], index: 1, kind: input, shape index: {}]
  %s2 = inlined_call_operand.vmem [shape: f32[1,128], index: 2, kind: input, shape index: {}]
  %s3 = inlined_call_operand.vmem [shape: bf16[2,256,128], index: 3, kind: input, shape index: {}]
  %s4 = inlined_call_operand.vmem [shape: bf16[128,128], index: 4, kind: input, shape index: {}]
  %s5 = inlined_call_operand.vmem [shape: bf16[2,256,128], index: 5, kind: output, shape index: {}]
  %s6 = sld [smem:[#allocation0]]
  $region53: #{basic_block_forward.7} parent=0
    _
  %s8 = ssub.s32 1, %s6
  %s9 = scalar_select 0, %s8, %s6
  loop: start=0, step=1, limit=4
  $region2: #{basic_block_forward.7} parent=0 // loop_pre_header
    _
  $region3: #{basic_block_forward.7} parent=0 // loop_header
    %s11 = sphi 0, %s15
    %p12 = scmp.ge.s32.totalorder %s11, 4
    %s21 = sphi 0, %s23
    %s24 = sphi 0, %s21
    %s25 = sphi 0, %s24
    %s41 = sphi 0, %s25
    %s45 = sphi 0, %s45
    %s47 = sphi 0, %s45
    %s48 = sphi 0, %s47
    %s62 = sphi 0, %s48
    %s66 = sphi 0, %s66
    %s68 = sphi 0, %s66
    %s69 = sphi 0, %s68
    %s83 = sphi 0, %s69
    %s89 = sphi 0, %s91
    %s92 = sphi 0, %s89
    %s93 = sphi 0, %s92
    %s109 = sphi 0, %s93
    %s113 = sphi 0, %s113
    %s115 = sphi 0, %s113
    %s116 = sphi 0, %s115
    %s130 = sphi 0, %s116
    %s136 = sphi 0, %s138
    %s139 = sphi 0, %s136
    %s140 = sphi 0, %s139
    %s156 = sphi 0, %s140
  $region4: #{basic_block_forward.7} parent=0 // loop_header_branch
    %14 = sbr.rel (%p12) target = $region8
  $region5: #{basic_block_forward.7} parent=0 // loop_body
    %s16 = ssub.s32 %s11, 1
    %s17 = ssub.s32 %s11, 2
    %s18 = sadd.s32 %s11, 1
    %s19 = ssub.s32 %s11, %s18
    %p20 = scmp.eq.s32.totalorder %s19, 0
    %s22 = sadd.s32 %s21, 1
    %s23 = scalar_select %p20, %s21, %s22
    %p26 = pneg %p20
    %p27 = scmp.eq.s32.totalorder %s11, 1
    %p28 = por %p26, %p27
    %p29 = scmp.ne.s32.totalorder %s21, %s24
    %p30 = scmp.eq.s32.totalorder %s11, 0
    %p31 = por %p29, %p30
    %p32 = scmp.ne.s32.totalorder %s21, %s24
    %p33 = scmp.eq.s32.totalorder %s16, 1
    %p34 = por %p32, %p33
    %p35 = scmp.ne.s32.totalorder %s24, %s25
    %p36 = scmp.eq.s32.totalorder %s16, 0
    %p37 = por %p35, %p36
    %p38 = scmp.ne.s32.totalorder %s24, %s25
    %p39 = scmp.eq.s32.totalorder %s17, 1
    %p40 = por %p38, %p39
    %p42 = scmp.ne.s32.totalorder %s25, %s41
    %p43 = scmp.eq.s32.totalorder %s17, 0
    %p44 = por %p42, %p43
    %s46 = sadd.s32 %s45, 1
    %p49 = scmp.eq.s32.totalorder %s11, 1
    %p50 = scmp.ne.s32.totalorder %s45, %s47
    %p51 = scmp.eq.s32.totalorder %s11, 0
    %p52 = por %p50, %p51
    %p53 = scmp.ne.s32.totalorder %s45, %s47
    %p54 = scmp.eq.s32.totalorder %s16, 1
    %p55 = por %p53, %p54
    %p56 = scmp.ne.s32.totalorder %s47, %s48
    %p57 = scmp.eq.s32.totalorder %s16, 0
    %p58 = por %p56, %p57
    %p59 = scmp.ne.s32.totalorder %s47, %s48
    %p60 = scmp.eq.s32.totalorder %s17, 1
    %p61 = por %p59, %p60
    %p63 = scmp.ne.s32.totalorder %s48, %s62
    %p64 = scmp.eq.s32.totalorder %s17, 0
    %p65 = por %p63, %p64
    %s67 = sadd.s32 %s66, 1
    %p70 = scmp.eq.s32.totalorder %s11, 1
    %p71 = scmp.ne.s32.totalorder %s66, %s68
    %p72 = scmp.eq.s32.totalorder %s11, 0
    %p73 = por %p71, %p72
    %p74 = scmp.ne.s32.totalorder %s66, %s68
    %p75 = scmp.eq.s32.totalorder %s16, 1
    %p76 = por %p74, %p75
    %p77 = scmp.ne.s32.totalorder %s68, %s69
    %p78 = scmp.eq.s32.totalorder %s16, 0
    %p79 = por %p77, %p78
    %p80 = scmp.ne.s32.totalorder %s68, %s69
    %p81 = scmp.eq.s32.totalorder %s17, 1
    %p82 = por %p80, %p81
    %p84 = scmp.ne.s32.totalorder %s69, %s83
    %p85 = scmp.eq.s32.totalorder %s17, 0
    %p86 = por %p84, %p85
    %s87 = ssub.s32 %s11, %s18
    %p88 = scmp.eq.s32.totalorder %s87, 0
    %s90 = sadd.s32 %s89, 1
    %s91 = scalar_select %p88, %s89, %s90
    %p94 = pneg %p88
    %p95 = scmp.eq.s32.totalorder %s11, 1
    %p96 = por %p94, %p95
    %p97 = scmp.ne.s32.totalorder %s89, %s92
    %p98 = scmp.eq.s32.totalorder %s11, 0
    %p99 = por %p97, %p98
    %p100 = scmp.ne.s32.totalorder %s89, %s92
    %p101 = scmp.eq.s32.totalorder %s16, 1
    %p102 = por %p100, %p101
    %p103 = scmp.ne.s32.totalorder %s92, %s93
    %p104 = scmp.eq.s32.totalorder %s16, 0
    %p105 = por %p103, %p104
    %p106 = scmp.ne.s32.totalorder %s92, %s93
    %p107 = scmp.eq.s32.totalorder %s17, 1
    %p108 = por %p106, %p107
    %p110 = scmp.ne.s32.totalorder %s93, %s109
    %p111 = scmp.eq.s32.totalorder %s17, 0
    %p112 = por %p110, %p111
    %s114 = sadd.s32 %s113, 1
    %p117 = scmp.eq.s32.totalorder %s11, 1
    %p118 = scmp.ne.s32.totalorder %s113, %s115
    %p119 = scmp.eq.s32.totalorder %s11, 0
    %p120 = por %p118, %p119
    %p121 = scmp.ne.s32.totalorder %s113, %s115
    %p122 = scmp.eq.s32.totalorder %s16, 1
    %p123 = por %p121, %p122
    %p124 = scmp.ne.s32.totalorder %s115, %s116
    %p125 = scmp.eq.s32.totalorder %s16, 0
    %p126 = por %p124, %p125
    %p127 = scmp.ne.s32.totalorder %s115, %s116
    %p128 = scmp.eq.s32.totalorder %s17, 1
    %p129 = por %p127, %p128
    %p131 = scmp.ne.s32.totalorder %s116, %s130
    %p132 = scmp.eq.s32.totalorder %s17, 0
    %p133 = por %p131, %p132
    %s134 = ssub.s32 %s11, %s18
    %p135 = scmp.eq.s32.totalorder %s134, 0
    %s137 = sadd.s32 %s136, 1
    %s138 = scalar_select %p135, %s136, %s137
    %p141 = pneg %p135
    %p142 = scmp.eq.s32.totalorder %s11, 1
    %p143 = por %p141, %p142
    %p144 = scmp.ne.s32.totalorder %s136, %s139
    %p145 = scmp.eq.s32.totalorder %s11, 0
    %p146 = por %p144, %p145
    %p147 = scmp.ne.s32.totalorder %s136, %s139
    %p148 = scmp.eq.s32.totalorder %s16, 1
    %p149 = por %p147, %p148
    %p150 = scmp.ne.s32.totalorder %s139, %s140
    %p151 = scmp.eq.s32.totalorder %s16, 0
    %p152 = por %p150, %p151
    %p153 = scmp.ne.s32.totalorder %s139, %s140
    %p154 = scmp.eq.s32.totalorder %s17, 1
    %p155 = por %p153, %p154
    %p157 = scmp.ne.s32.totalorder %s140, %s156
    %p158 = scmp.eq.s32.totalorder %s17, 0
    %p159 = por %p157, %p158
    %p160 = scmp.le.s32.totalorder 1, %s11
    %p161 = scmp.lt.s32.totalorder %s11, 3
    %p162 = pnand %p160, %p161
    %p163 = pneg %p162
    // Predicated region
    $region9: #{basic_block_forward.7} parent=5 // pred_check
      _
    $region10: #{basic_block_forward.7} parent=5 // pred_check_branch
      %165 = sbr.rel (%p162) target = $region12
    $region11: #{basic_block_forward.7} parent=5 // pred_region
      %s166 = ssub.s32 %s11, 1
      // Predicated region
      $region13: #{basic_block_forward.7} parent=11 // pred_check
        %p167 = pneg %p58
      $region14: #{basic_block_forward.7} parent=11 // pred_check_branch
        %169 = sbr.rel (%p167) target = $region16
      $region15: #{basic_block_forward.7} parent=11 // pred_region
        _
      $region16: #{basic_block_forward.7} parent=11 // pred_fallthru
        _
      // Predicated region
      $region17: #{basic_block_forward.7} parent=11 // pred_check
        %p170 = pneg %p79
      $region18: #{basic_block_forward.7} parent=11 // pred_check_branch
        %172 = sbr.rel (%p170) target = $region20
      $region19: #{basic_block_forward.7} parent=11 // pred_region
        _
      $region20: #{basic_block_forward.7} parent=11 // pred_fallthru
        _
      // Predicated region
      $region21: #{basic_block_forward.7} parent=11 // pred_check
        %p173 = pneg %p126
      $region22: #{basic_block_forward.7} parent=11 // pred_check_branch
        %175 = sbr.rel (%p173) target = $region24
      $region23: #{basic_block_forward.7} parent=11 // pred_region
        _
      $region24: #{basic_block_forward.7} parent=11 // pred_fallthru
        _
    $region12: #{basic_block_forward.7} parent=5 // pred_fallthru
      _
    %p176 = scmp.lt.s32.totalorder %s11, 2
    // Predicated region
    $region25: #{basic_block_forward.7} parent=5 // pred_check
      %p177 = pneg %p176
    $region26: #{basic_block_forward.7} parent=5 // pred_check_branch
      %179 = sbr.rel (%p177) target = $region28
    $region27: #{basic_block_forward.7} parent=5 // pred_region
      // Predicated region
      $region29: #{basic_block_forward.7} parent=27 // pred_check
        %p180 = pneg %p31
      $region30: #{basic_block_forward.7} parent=27 // pred_check_branch
        %182 = sbr.rel (%p180) target = $region32
      $region31: #{basic_block_forward.7} parent=27 // pred_region
        %p183 = scmp.lt.s32.totalorder %s11, 1
        %s184 = scalar_select %p183, %s11, 1
        %s185 = smul.addr %s184, 32
        %s186 = smul.addr %s185, 4
        %s187 = scalar_lea.vmem %s0, %s186
      $region32: #{basic_block_forward.7} parent=27 // pred_fallthru
        _
      // Predicated region
      $region33: #{basic_block_forward.7} parent=27 // pred_check
        %p188 = pneg %p99
      $region34: #{basic_block_forward.7} parent=27 // pred_check_branch
        %190 = sbr.rel (%p188) target = $region36
      $region35: #{basic_block_forward.7} parent=27 // pred_region
        %p191 = scmp.lt.s32.totalorder %s11, 1
        %s192 = scalar_select %p191, %s11, 1
        %s193 = smul.addr %s192, 32
        %s194 = smul.addr %s193, 4
        %s195 = scalar_lea.vmem %s3, %s194
      $region36: #{basic_block_forward.7} parent=27 // pred_fallthru
        _
    $region28: #{basic_block_forward.7} parent=5 // pred_fallthru
      _
    %p196 = scmp.le.s32.totalorder 1, %s11
    %p197 = scmp.lt.s32.totalorder %s11, 3
    %p198 = pnand %p196, %p197
    %p199 = pneg %p198
    // Predicated region
    $region37: #{basic_block_forward.7} parent=5 // pred_check
      _
    $region38: #{basic_block_forward.7} parent=5 // pred_check_branch
      %201 = sbr.rel (%p198) target = $region40
    $region39: #{basic_block_forward.7} parent=5 // pred_region
      %s202 = ssub.s32 %s11, 1
      %p203 = scmp.lt.s32.totalorder %s16, 1
      %s204 = scalar_select %p203, %s16, 1
      %s205 = smul.addr %s204, 32
      %s206 = smul.addr %s205, 4
      %s207 = scalar_lea.vmem %s0, %s206
      %p208 = pneg %p37
      %p209 = pneg %p34
      %p210 = pneg %p58
      %p211 = pneg %p55
      %p212 = pneg %p79
      %p213 = pneg %p76
      %p214 = scmp.lt.s32.totalorder %s16, 1
      %s215 = scalar_select %p214, %s16, 1
      %s216 = smul.addr %s215, 32
      %s217 = smul.addr %s216, 4
      %s218 = scalar_lea.vmem %s3, %s217
      %p219 = pneg %p105
      %p220 = pneg %p102
      %p221 = pneg %p126
      %p222 = pneg %p123
      %p223 = pneg %p152
      %p224 = pneg %p149
      %p225 = scmp.lt.s32.totalorder %s16, 1
      %s226 = scalar_select %p225, %s16, 1
      %s227 = smul.addr %s226, 32
      %s228 = smul.addr %s227, 4
      %s229 = scalar_lea.vmem %s5, %s228
      %p230 = scmp.lt.s32.totalorder %s16, 1
      %s231 = scalar_select %p230, %s16, 1
      %s232 = smul.addr %s231, 32
      %s233 = smul.addr %s232, 4
      %s234 = scalar_lea.vmem %s0, %s233
      %p235 = scmp.lt.s32.totalorder %s16, 1
      %s236 = scalar_select %p235, %s16, 1
      %s237 = smul.addr %s236, 32
      %s238 = smul.addr %s237, 4
      %s239 = scalar_lea.vmem %s3, %s238
      %p240 = scmp.lt.s32.totalorder %s16, 1
      %s241 = scalar_select %p240, %s16, 1
      %s242 = smul.addr %s241, 32
      %s243 = smul.addr %s242, 4
      %s244 = scalar_lea.vmem %s5, %s243
      %v246 = vld [vmem:[%s239] sm:$0xf]
      %v247 = vld [vmem:[%s239 + $0x4] sm:$0xf]
      %v248 = vld [vmem:[%s239 + $0x8] sm:$0xf]
      %v249 = vld [vmem:[%s239 + $0xc] sm:$0xf]
      %v250 = vld [vmem:[%s239 + $0x10] sm:$0xf]
      %v251 = vld [vmem:[%s239 + $0x14] sm:$0xf]
      %v252 = vld [vmem:[%s239 + $0x18] sm:$0xf]
      %v253 = vld [vmem:[%s239 + $0x1c] sm:$0xf]
      %v254 = vld [vmem:[%s239 + $0x20] sm:$0xf]
      %v255 = vld [vmem:[%s239 + $0x24] sm:$0xf]
      %v256 = vld [vmem:[%s239 + $0x28] sm:$0xf]
      %v257 = vld [vmem:[%s239 + $0x2c] sm:$0xf]
      %v258 = vld [vmem:[%s239 + $0x30] sm:$0xf]
      %v259 = vld [vmem:[%s239 + $0x34] sm:$0xf]
      %v260 = vld [vmem:[%s239 + $0x38] sm:$0xf]
      %v261 = vld [vmem:[%s239 + $0x3c] sm:$0xf]
      %v262 = vld [vmem:[%s239 + $0x40] sm:$0xf]
      %v263 = vld [vmem:[%s239 + $0x44] sm:$0xf]
      %v264 = vld [vmem:[%s239 + $0x48] sm:$0xf]
      %v265 = vld [vmem:[%s239 + $0x4c] sm:$0xf]
      %v266 = vld [vmem:[%s239 + $0x50] sm:$0xf]
      %v267 = vld [vmem:[%s239 + $0x54] sm:$0xf]
      %v268 = vld [vmem:[%s239 + $0x58] sm:$0xf]
      %v269 = vld [vmem:[%s239 + $0x5c] sm:$0xf]
      %v270 = vld [vmem:[%s239 + $0x60] sm:$0xf]
      %v271 = vld [vmem:[%s239 + $0x64] sm:$0xf]
      %v272 = vld [vmem:[%s239 + $0x68] sm:$0xf]
      %v273 = vld [vmem:[%s239 + $0x6c] sm:$0xf]
      %v274 = vld [vmem:[%s239 + $0x70] sm:$0xf]
      %v275 = vld [vmem:[%s239 + $0x74] sm:$0xf]
      %v276 = vld [vmem:[%s239 + $0x78] sm:$0xf]
      %v277 = vld [vmem:[%s239 + $0x7c] sm:$0xf]
      %v278 = vld [vmem:[%s4] sm:$0xf]
      %v279 = vld [vmem:[%s4 + $0x4] sm:$0xf]
      %v280 = vld [vmem:[%s4 + $0x8] sm:$0xf]
      %v281 = vld [vmem:[%s4 + $0xc] sm:$0xf]
      %v282 = vld [vmem:[%s4 + $0x10] sm:$0xf]
      %v283 = vld [vmem:[%s4 + $0x14] sm:$0xf]
      %v284 = vld [vmem:[%s4 + $0x18] sm:$0xf]
      %v285 = vld [vmem:[%s4 + $0x1c] sm:$0xf]
      %v286 = vld [vmem:[%s4 + $0x20] sm:$0xf]
      %v287 = vld [vmem:[%s4 + $0x24] sm:$0xf]
      %v288 = vld [vmem:[%s4 + $0x28] sm:$0xf]
      %v289 = vld [vmem:[%s4 + $0x2c] sm:$0xf]
      %v290 = vld [vmem:[%s4 + $0x30] sm:$0xf]
      %v291 = vld [vmem:[%s4 + $0x34] sm:$0xf]
      %v292 = vld [vmem:[%s4 + $0x38] sm:$0xf]
      %v293 = vld [vmem:[%s4 + $0x3c] sm:$0xf]
      %v326 = vunpack.c.l.b16 %v246
      %v327 = vunpack.c.l.b16 %v247
      %v328 = vunpack.c.l.b16 %v248
      %v329 = vunpack.c.l.b16 %v249
      %v330 = vunpack.c.l.b16 %v250
      %v331 = vunpack.c.l.b16 %v251
      %v332 = vunpack.c.l.b16 %v252
      %v333 = vunpack.c.l.b16 %v253
      %v334 = vunpack.c.l.b16 %v254
      %v335 = vunpack.c.l.b16 %v255
      %v336 = vunpack.c.l.b16 %v256
      %v337 = vunpack.c.l.b16 %v257
      %v338 = vunpack.c.l.b16 %v258
      %v339 = vunpack.c.l.b16 %v259
      %v340 = vunpack.c.l.b16 %v260
      %v341 = vunpack.c.l.b16 %v261
      %v342 = vunpack.c.l.b16 %v262
      %v343 = vunpack.c.l.b16 %v263
      %v344 = vunpack.c.l.b16 %v264
      %v345 = vunpack.c.l.b16 %v265
      %v346 = vunpack.c.l.b16 %v266
      %v347 = vunpack.c.l.b16 %v267
      %v348 = vunpack.c.l.b16 %v268
      %v349 = vunpack.c.l.b16 %v269
      %v350 = vunpack.c.l.b16 %v270
      %v351 = vunpack.c.l.b16 %v271
      %v352 = vunpack.c.l.b16 %v272
      %v353 = vunpack.c.l.b16 %v273
      %v354 = vunpack.c.l.b16 %v274
      %v355 = vunpack.c.l.b16 %v275
      %v356 = vunpack.c.l.b16 %v276
      %v357 = vunpack.c.l.b16 %v277
      %v358 = vpack.c.b16 %v327, %v326
      %v359 = vpack.c.b16 %v329, %v328
      %v360 = vpack.c.b16 %v331, %v330
      %v361 = vpack.c.b16 %v333, %v332
      %v362 = vpack.c.b16 %v335, %v334
      %v363 = vpack.c.b16 %v337, %v336
      %v364 = vpack.c.b16 %v339, %v338
      %v365 = vpack.c.b16 %v341, %v340
      %v366 = vpack.c.b16 %v343, %v342
      %v367 = vpack.c.b16 %v345, %v344
      %v368 = vpack.c.b16 %v347, %v346
      %v369 = vpack.c.b16 %v349, %v348
      %v370 = vpack.c.b16 %v351, %v350
      %v371 = vpack.c.b16 %v353, %v352
      %v372 = vpack.c.b16 %v355, %v354
      %v373 = vpack.c.b16 %v357, %v356
      %v406 = vunpack.c.l.b16 %v278
      %v407 = vunpack.c.l.b16 %v279
      %v408 = vunpack.c.l.b16 %v280
      %v409 = vunpack.c.l.b16 %v281
      %v410 = vunpack.c.l.b16 %v282
      %v411 = vunpack.c.l.b16 %v283
      %v412 = vunpack.c.l.b16 %v284
      %v413 = vunpack.c.l.b16 %v285
      %v414 = vunpack.c.l.b16 %v286
      %v415 = vunpack.c.l.b16 %v287
      %v416 = vunpack.c.l.b16 %v288
      %v417 = vunpack.c.l.b16 %v289
      %v418 = vunpack.c.l.b16 %v290
      %v419 = vunpack.c.l.b16 %v291
      %v420 = vunpack.c.l.b16 %v292
      %v421 = vunpack.c.l.b16 %v293
      %v422 = vpack.c.b16 %v407, %v406
      %v423 = vpack.c.b16 %v409, %v408
      %v424 = vpack.c.b16 %v411, %v410
      %v425 = vpack.c.b16 %v413, %v412
      %v426 = vpack.c.b16 %v415, %v414
      %v427 = vpack.c.b16 %v417, %v416
      %v428 = vpack.c.b16 %v419, %v418
      %v429 = vpack.c.b16 %v421, %v420
      %438 = vmatprep.subr.bf16.mxu0 0
      %439 = vmatpush1.bf16.msra.mxu0 %v429
      %440 = vmatprep.subr.bf16.mxu0 0
      %441 = vmatpush1.bf16.msra.mxu0 %v428
      %442 = vmatprep.subr.bf16.mxu0 0
      %443 = vmatpush1.bf16.msra.mxu0 %v427
      %444 = vmatprep.subr.bf16.mxu0 0
      %445 = vmatpush1.bf16.msra.mxu0 %v426
      %446 = vmatprep.subr.bf16.mxu0 0
      %447 = vmatpush1.bf16.msra.mxu0 %v425
      %448 = vmatprep.subr.bf16.mxu0 0
      %449 = vmatpush1.bf16.msra.mxu0 %v424
      %450 = vmatprep.subr.bf16.mxu0 0
      %451 = vmatpush1.bf16.msra.mxu0 %v423
      %452 = vmatprep.subr.bf16.mxu0 0
      %453 = vmatpush1.bf16.msra.mxu0 %v422
      %454 = vmatprep.subr.bf16.mxu0 0
      %455 = vmatpush2.bf16.msra.mxu0 0
      %456 = vmatprep.subr.bf16.mxu0 0
      %457 = vmatpush2.bf16.msra.mxu0 0
      %458 = vmatprep.subr.bf16.mxu0 0
      %459 = vmatpush2.bf16.msra.mxu0 0
      %460 = vmatprep.subr.bf16.mxu0 0
      %461 = vmatpush2.bf16.msra.mxu0 0
      %462 = vmatprep.subr.bf16.mxu0 0
      %463 = vmatpush2.bf16.msra.mxu0 0
      %464 = vmatprep.subr.bf16.mxu0 0
      %465 = vmatpush2.bf16.msra.mxu0 0
      %466 = vmatprep.subr.bf16.mxu0 0
      %467 = vmatpush2.bf16.msra.mxu0 0
      %468 = vmatprep.subr.bf16.mxu0 0
      %469 = vmatpush2.bf16.msra.mxu0 0
      %470 = vmatprep.mubr.bf16.mxu0 0
      %471 = vmatmul.mubr.bf16.gmra.mxu0 %v358
      %v472 = vpop.f32.mrf.mxu0
      %v473 = vadd.f32 0.0, %v472
      %v474 = vpop.f32.mrf.mxu0
      %v475 = vpop.f32.mrf.mxu0
      %v476 = vadd.f32 0.0, %v475
      %v477 = vpop.f32.mrf.mxu0
      %478 = vmatprep.mubr.bf16.mxu0 0
      %479 = vmatmul.mubr.bf16.gmra.mxu0 %v359
      %v480 = vpop.f32.mrf.mxu0
      %v481 = vadd.f32 0.0, %v480
      %v482 = vpop.f32.mrf.mxu0
      %v483 = vpop.f32.mrf.mxu0
      %v484 = vadd.f32 0.0, %v483
      %v485 = vpop.f32.mrf.mxu0
      %486 = vmatprep.mubr.bf16.mxu0 0
      %487 = vmatmul.mubr.bf16.gmra.mxu0 %v360
      %v488 = vpop.f32.mrf.mxu0
      %v489 = vadd.f32 0.0, %v488
      %v490 = vpop.f32.mrf.mxu0
      %v491 = vpop.f32.mrf.mxu0
      %v492 = vadd.f32 0.0, %v491
      %v493 = vpop.f32.mrf.mxu0
      %494 = vmatprep.mubr.bf16.mxu0 0
      %495 = vmatmul.mubr.bf16.gmra.mxu0 %v361
      %v496 = vpop.f32.mrf.mxu0
      %v497 = vadd.f32 0.0, %v496
      %v498 = vpop.f32.mrf.mxu0
      %v499 = vpop.f32.mrf.mxu0
      %v500 = vadd.f32 0.0, %v499
      %v501 = vpop.f32.mrf.mxu0
      %502 = vmatprep.mubr.bf16.mxu0 0
      %503 = vmatmul.mubr.bf16.gmra.mxu0 %v362
      %v504 = vpop.f32.mrf.mxu0
      %v505 = vadd.f32 0.0, %v504
      %v506 = vpop.f32.mrf.mxu0
      %v507 = vpop.f32.mrf.mxu0
      %v508 = vadd.f32 0.0, %v507
      %v509 = vpop.f32.mrf.mxu0
      %510 = vmatprep.mubr.bf16.mxu0 0
      %511 = vmatmul.mubr.bf16.gmra.mxu0 %v363
      %v512 = vpop.f32.mrf.mxu0
      %v513 = vadd.f32 0.0, %v512
      %v514 = vpop.f32.mrf.mxu0
      %v515 = vpop.f32.mrf.mxu0
      %v516 = vadd.f32 0.0, %v515
      %v517 = vpop.f32.mrf.mxu0
      %518 = vmatprep.mubr.bf16.mxu0 0
      %519 = vmatmul.mubr.bf16.gmra.mxu0 %v364
      %v520 = vpop.f32.mrf.mxu0
      %v521 = vadd.f32 0.0, %v520
      %v522 = vpop.f32.mrf.mxu0
      %v523 = vpop.f32.mrf.mxu0
      %v524 = vadd.f32 0.0, %v523
      %v525 = vpop.f32.mrf.mxu0
      %526 = vmatprep.mubr.bf16.mxu0 0
      %527 = vmatmul.mubr.bf16.gmra.mxu0 %v365
      %v528 = vpop.f32.mrf.mxu0
      %v529 = vadd.f32 0.0, %v528
      %v530 = vpop.f32.mrf.mxu0
      %v531 = vpop.f32.mrf.mxu0
      %v532 = vadd.f32 0.0, %v531
      %v533 = vpop.f32.mrf.mxu0
      %534 = vmatprep.mubr.bf16.mxu0 0
      %535 = vmatmul.mubr.bf16.gmra.mxu0 %v366
      %v536 = vpop.f32.mrf.mxu0
      %v537 = vadd.f32 0.0, %v536
      %v538 = vpop.f32.mrf.mxu0
      %v539 = vpop.f32.mrf.mxu0
      %v540 = vadd.f32 0.0, %v539
      %v541 = vpop.f32.mrf.mxu0
      %542 = vmatprep.mubr.bf16.mxu0 0
      %543 = vmatmul.mubr.bf16.gmra.mxu0 %v367
      %v544 = vpop.f32.mrf.mxu0
      %v545 = vadd.f32 0.0, %v544
      %v546 = vpop.f32.mrf.mxu0
      %v547 = vpop.f32.mrf.mxu0
      %v548 = vadd.f32 0.0, %v547
      %v549 = vpop.f32.mrf.mxu0
      %550 = vmatprep.mubr.bf16.mxu0 0
      %551 = vmatmul.mubr.bf16.gmra.mxu0 %v368
      %v552 = vpop.f32.mrf.mxu0
      %v553 = vadd.f32 0.0, %v552
      %v554 = vpop.f32.mrf.mxu0
      %v555 = vpop.f32.mrf.mxu0
      %v556 = vadd.f32 0.0, %v555
      %v557 = vpop.f32.mrf.mxu0
      %558 = vmatprep.mubr.bf16.mxu0 0
      %559 = vmatmul.mubr.bf16.gmra.mxu0 %v369
      %v560 = vpop.f32.mrf.mxu0
      %v561 = vadd.f32 0.0, %v560
      %v562 = vpop.f32.mrf.mxu0
      %v563 = vpop.f32.mrf.mxu0
      %v564 = vadd.f32 0.0, %v563
      %v565 = vpop.f32.mrf.mxu0
      %566 = vmatprep.mubr.bf16.mxu0 0
      %567 = vmatmul.mubr.bf16.gmra.mxu0 %v370
      %v568 = vpop.f32.mrf.mxu0
      %v569 = vadd.f32 0.0, %v568
      %v570 = vpop.f32.mrf.mxu0
      %v571 = vpop.f32.mrf.mxu0
      %v572 = vadd.f32 0.0, %v571
      %v573 = vpop.f32.mrf.mxu0
      %574 = vmatprep.mubr.bf16.mxu0 0
      %575 = vmatmul.mubr.bf16.gmra.mxu0 %v371
      %v576 = vpop.f32.mrf.mxu0
      %v577 = vadd.f32 0.0, %v576
      %v578 = vpop.f32.mrf.mxu0
      %v579 = vpop.f32.mrf.mxu0
      %v580 = vadd.f32 0.0, %v579
      %v581 = vpop.f32.mrf.mxu0
      %582 = vmatprep.mubr.bf16.mxu0 0
      %583 = vmatmul.mubr.bf16.gmra.mxu0 %v372
      %v584 = vpop.f32.mrf.mxu0
      %v585 = vadd.f32 0.0, %v584
      %v586 = vpop.f32.mrf.mxu0
      %v587 = vpop.f32.mrf.mxu0
      %v588 = vadd.f32 0.0, %v587
      %v589 = vpop.f32.mrf.mxu0
      %590 = vmatprep.mubr.bf16.mxu0 0
      %591 = vmatmul.mubr.bf16.gmra.mxu0 %v373
      %v592 = vpop.f32.mrf.mxu0
      %v593 = vadd.f32 0.0, %v592
      %v594 = vpop.f32.mrf.mxu0
      %v595 = vpop.f32.mrf.mxu0
      %v596 = vadd.f32 0.0, %v595
      %v597 = vpop.f32.mrf.mxu0
      %598 = vdwg.mxu0
      %v599 = vld [vmem:[%s234] sm:$0xf]
      %v600 = vld [vmem:[%s234 + $0x4] sm:$0xf]
      %v601 = vld [vmem:[%s234 + $0x8] sm:$0xf]
      %v602 = vld [vmem:[%s234 + $0xc] sm:$0xf]
      %v603 = vld [vmem:[%s234 + $0x10] sm:$0xf]
      %v604 = vld [vmem:[%s234 + $0x14] sm:$0xf]
      %v605 = vld [vmem:[%s234 + $0x18] sm:$0xf]
      %v606 = vld [vmem:[%s234 + $0x1c] sm:$0xf]
      %v607 = vld [vmem:[%s234 + $0x20] sm:$0xf]
      %v608 = vld [vmem:[%s234 + $0x24] sm:$0xf]
      %v609 = vld [vmem:[%s234 + $0x28] sm:$0xf]
      %v610 = vld [vmem:[%s234 + $0x2c] sm:$0xf]
      %v611 = vld [vmem:[%s234 + $0x30] sm:$0xf]
      %v612 = vld [vmem:[%s234 + $0x34] sm:$0xf]
      %v613 = vld [vmem:[%s234 + $0x38] sm:$0xf]
      %v614 = vld [vmem:[%s234 + $0x3c] sm:$0xf]
      %v615 = vld [vmem:[%s234 + $0x40] sm:$0xf]
      %v616 = vld [vmem:[%s234 + $0x44] sm:$0xf]
      %v617 = vld [vmem:[%s234 + $0x48] sm:$0xf]
      %v618 = vld [vmem:[%s234 + $0x4c] sm:$0xf]
      %v619 = vld [vmem:[%s234 + $0x50] sm:$0xf]
      %v620 = vld [vmem:[%s234 + $0x54] sm:$0xf]
      %v621 = vld [vmem:[%s234 + $0x58] sm:$0xf]
      %v622 = vld [vmem:[%s234 + $0x5c] sm:$0xf]
      %v623 = vld [vmem:[%s234 + $0x60] sm:$0xf]
      %v624 = vld [vmem:[%s234 + $0x64] sm:$0xf]
      %v625 = vld [vmem:[%s234 + $0x68] sm:$0xf]
      %v626 = vld [vmem:[%s234 + $0x6c] sm:$0xf]
      %v627 = vld [vmem:[%s234 + $0x70] sm:$0xf]
      %v628 = vld [vmem:[%s234 + $0x74] sm:$0xf]
      %v629 = vld [vmem:[%s234 + $0x78] sm:$0xf]
      %v630 = vld [vmem:[%s234 + $0x7c] sm:$0xf]
      %v631 = vunpack.c.l.bf16 %v599
      %v632 = vunpack.c.l.bf16 %v600
      %v633 = vunpack.c.l.bf16 %v601
      %v634 = vunpack.c.l.bf16 %v602
      %v635 = vunpack.c.l.bf16 %v603
      %v636 = vunpack.c.l.bf16 %v604
      %v637 = vunpack.c.l.bf16 %v605
      %v638 = vunpack.c.l.bf16 %v606
      %v639 = vunpack.c.l.bf16 %v607
      %v640 = vunpack.c.l.bf16 %v608
      %v641 = vunpack.c.l.bf16 %v609
      %v642 = vunpack.c.l.bf16 %v610
      %v643 = vunpack.c.l.bf16 %v611
      %v644 = vunpack.c.l.bf16 %v612
      %v645 = vunpack.c.l.bf16 %v613
      %v646 = vunpack.c.l.bf16 %v614
      %v647 = vunpack.c.l.bf16 %v615
      %v648 = vunpack.c.l.bf16 %v616
      %v649 = vunpack.c.l.bf16 %v617
      %v650 = vunpack.c.l.bf16 %v618
      %v651 = vunpack.c.l.bf16 %v619
      %v652 = vunpack.c.l.bf16 %v620
      %v653 = vunpack.c.l.bf16 %v621
      %v654 = vunpack.c.l.bf16 %v622
      %v655 = vunpack.c.l.bf16 %v623
      %v656 = vunpack.c.l.bf16 %v624
      %v657 = vunpack.c.l.bf16 %v625
      %v658 = vunpack.c.l.bf16 %v626
      %v659 = vunpack.c.l.bf16 %v627
      %v660 = vunpack.c.l.bf16 %v628
      %v661 = vunpack.c.l.bf16 %v629
      %v662 = vunpack.c.l.bf16 %v630
      %v663 = vld [vmem:[%s1] sm:$0x1]
      %v665 = vlaneseq
      %v666 = vshrl.u32 %v665, 7
      %v667 = vsub.s32 0, %v666
      %v668 = vrot.slane %v663, %v667
      %v670 = vmul.f32 %v631, %v668
      %v671 = vmul.f32 %v632, %v668
      %v672 = vmul.f32 %v633, %v668
      %v673 = vmul.f32 %v634, %v668
      %v674 = vmul.f32 %v635, %v668
      %v675 = vmul.f32 %v636, %v668
      %v676 = vmul.f32 %v637, %v668
      %v677 = vmul.f32 %v638, %v668
      %v678 = vmul.f32 %v639, %v668
      %v679 = vmul.f32 %v640, %v668
      %v680 = vmul.f32 %v641, %v668
      %v681 = vmul.f32 %v642, %v668
      %v682 = vmul.f32 %v643, %v668
      %v683 = vmul.f32 %v644, %v668
      %v684 = vmul.f32 %v645, %v668
      %v685 = vmul.f32 %v646, %v668
      %v686 = vmul.f32 %v647, %v668
      %v687 = vmul.f32 %v648, %v668
      %v688 = vmul.f32 %v649, %v668
      %v689 = vmul.f32 %v650, %v668
      %v690 = vmul.f32 %v651, %v668
      %v691 = vmul.f32 %v652, %v668
      %v692 = vmul.f32 %v653, %v668
      %v693 = vmul.f32 %v654, %v668
      %v694 = vmul.f32 %v655, %v668
      %v695 = vmul.f32 %v656, %v668
      %v696 = vmul.f32 %v657, %v668
      %v697 = vmul.f32 %v658, %v668
      %v698 = vmul.f32 %v659, %v668
      %v699 = vmul.f32 %v660, %v668
      %v700 = vmul.f32 %v661, %v668
      %v701 = vmul.f32 %v662, %v668
      %v702 = vld [vmem:[%s2] sm:$0x1]
      %v704 = vlaneseq
      %v705 = vshrl.u32 %v704, 7
      %v706 = vsub.s32 0, %v705
      %v707 = vrot.slane %v702, %v706
      %v709 = vadd.f32 %v670, %v707
      %v710 = vadd.f32 %v671, %v707
      %v711 = vadd.f32 %v672, %v707
      %v712 = vadd.f32 %v673, %v707
      %v713 = vadd.f32 %v674, %v707
      %v714 = vadd.f32 %v675, %v707
      %v715 = vadd.f32 %v676, %v707
      %v716 = vadd.f32 %v677, %v707
      %v717 = vadd.f32 %v678, %v707
      %v718 = vadd.f32 %v679, %v707
      %v719 = vadd.f32 %v680, %v707
      %v720 = vadd.f32 %v681, %v707
      %v721 = vadd.f32 %v682, %v707
      %v722 = vadd.f32 %v683, %v707
      %v723 = vadd.f32 %v684, %v707
      %v724 = vadd.f32 %v685, %v707
      %v725 = vadd.f32 %v686, %v707
      %v726 = vadd.f32 %v687, %v707
      %v727 = vadd.f32 %v688, %v707
      %v728 = vadd.f32 %v689, %v707
      %v729 = vadd.f32 %v690, %v707
      %v730 = vadd.f32 %v691, %v707
      %v731 = vadd.f32 %v692, %v707
      %v732 = vadd.f32 %v693, %v707
      %v733 = vadd.f32 %v694, %v707
      %v734 = vadd.f32 %v695, %v707
      %v735 = vadd.f32 %v696, %v707
      %v736 = vadd.f32 %v697, %v707
      %v737 = vadd.f32 %v698, %v707
      %v738 = vadd.f32 %v699, %v707
      %v739 = vadd.f32 %v700, %v707
      %v740 = vadd.f32 %v701, %v707
      %v741 = vadd.f32 %v709, %v473
      %v742 = vadd.f32 %v710, %v476
      %v743 = vadd.f32 %v711, %v481
      %v744 = vadd.f32 %v712, %v484
      %v745 = vadd.f32 %v713, %v489
      %v746 = vadd.f32 %v714, %v492
      %v747 = vadd.f32 %v715, %v497
      %v748 = vadd.f32 %v716, %v500
      %v749 = vadd.f32 %v717, %v505
      %v750 = vadd.f32 %v718, %v508
      %v751 = vadd.f32 %v719, %v513
      %v752 = vadd.f32 %v720, %v516
      %v753 = vadd.f32 %v721, %v521
      %v754 = vadd.f32 %v722, %v524
      %v755 = vadd.f32 %v723, %v529
      %v756 = vadd.f32 %v724, %v532
      %v757 = vadd.f32 %v725, %v537
      %v758 = vadd.f32 %v726, %v540
      %v759 = vadd.f32 %v727, %v545
      %v760 = vadd.f32 %v728, %v548
      %v761 = vadd.f32 %v729, %v553
      %v762 = vadd.f32 %v730, %v556
      %v763 = vadd.f32 %v731, %v561
      %v764 = vadd.f32 %v732, %v564
      %v765 = vadd.f32 %v733, %v569
      %v766 = vadd.f32 %v734, %v572
      %v767 = vadd.f32 %v735, %v577
      %v768 = vadd.f32 %v736, %v580
      %v769 = vadd.f32 %v737, %v585
      %v770 = vadd.f32 %v738, %v588
      %v771 = vadd.f32 %v739, %v593
      %v772 = vadd.f32 %v740, %v596
      %v773 = vmax.f32 %v741, 0.0
      %v774 = vmax.f32 %v742, 0.0
      %v775 = vmax.f32 %v743, 0.0
      %v776 = vmax.f32 %v744, 0.0
      %v777 = vmax.f32 %v745, 0.0
      %v778 = vmax.f32 %v746, 0.0
      %v779 = vmax.f32 %v747, 0.0
      %v780 = vmax.f32 %v748, 0.0
      %v781 = vmax.f32 %v749, 0.0
      %v782 = vmax.f32 %v750, 0.0
      %v783 = vmax.f32 %v751, 0.0
      %v784 = vmax.f32 %v752, 0.0
      %v785 = vmax.f32 %v753, 0.0
      %v786 = vmax.f32 %v754, 0.0
      %v787 = vmax.f32 %v755, 0.0
      %v788 = vmax.f32 %v756, 0.0
      %v789 = vmax.f32 %v757, 0.0
      %v790 = vmax.f32 %v758, 0.0
      %v791 = vmax.f32 %v759, 0.0
      %v792 = vmax.f32 %v760, 0.0
      %v793 = vmax.f32 %v761, 0.0
      %v794 = vmax.f32 %v762, 0.0
      %v795 = vmax.f32 %v763, 0.0
      %v796 = vmax.f32 %v764, 0.0
      %v797 = vmax.f32 %v765, 0.0
      %v798 = vmax.f32 %v766, 0.0
      %v799 = vmax.f32 %v767, 0.0
      %v800 = vmax.f32 %v768, 0.0
      %v801 = vmax.f32 %v769, 0.0
      %v802 = vmax.f32 %v770, 0.0
      %v803 = vmax.f32 %v771, 0.0
      %v804 = vmax.f32 %v772, 0.0
      %v805 = vpack.c.bf16 %v774, %v773
      %v806 = vpack.c.bf16 %v776, %v775
      %v807 = vpack.c.bf16 %v778, %v777
      %v808 = vpack.c.bf16 %v780, %v779
      %v809 = vpack.c.bf16 %v782, %v781
      %v810 = vpack.c.bf16 %v784, %v783
      %v811 = vpack.c.bf16 %v786, %v785
      %v812 = vpack.c.bf16 %v788, %v787
      %v813 = vpack.c.bf16 %v790, %v789
      %v814 = vpack.c.bf16 %v792, %v791
      %v815 = vpack.c.bf16 %v794, %v793
      %v816 = vpack.c.bf16 %v796, %v795
      %v817 = vpack.c.bf16 %v798, %v797
      %v818 = vpack.c.bf16 %v800, %v799
      %v819 = vpack.c.bf16 %v802, %v801
      %v820 = vpack.c.bf16 %v804, %v803
      %v837 = vunpack.c.l.b16 %v805
      %v838 = vunpack.c.h.b16 %v805
      %v839 = vunpack.c.l.b16 %v806
      %v840 = vunpack.c.h.b16 %v806
      %v841 = vunpack.c.l.b16 %v807
      %v842 = vunpack.c.h.b16 %v807
      %v843 = vunpack.c.l.b16 %v808
      %v844 = vunpack.c.h.b16 %v808
      %v845 = vunpack.c.l.b16 %v809
      %v846 = vunpack.c.h.b16 %v809
      %v847 = vunpack.c.l.b16 %v810
      %v848 = vunpack.c.h.b16 %v810
      %v849 = vunpack.c.l.b16 %v811
      %v850 = vunpack.c.h.b16 %v811
      %v851 = vunpack.c.l.b16 %v812
      %v852 = vunpack.c.h.b16 %v812
      %v853 = vunpack.c.l.b16 %v813
      %v854 = vunpack.c.h.b16 %v813
      %v855 = vunpack.c.l.b16 %v814
      %v856 = vunpack.c.h.b16 %v814
      %v857 = vunpack.c.l.b16 %v815
      %v858 = vunpack.c.h.b16 %v815
      %v859 = vunpack.c.l.b16 %v816
      %v860 = vunpack.c.h.b16 %v816
      %v861 = vunpack.c.l.b16 %v817
      %v862 = vunpack.c.h.b16 %v817
      %v863 = vunpack.c.l.b16 %v818
      %v864 = vunpack.c.h.b16 %v818
      %v865 = vunpack.c.l.b16 %v819
      %v866 = vunpack.c.h.b16 %v819
      %v867 = vunpack.c.l.b16 %v820
      %v868 = vunpack.c.h.b16 %v820
      %v869 = vpack.c.b16 %v837, %v837
      %v870 = vpack.c.b16 %v838, %v838
      %v871 = vpack.c.b16 %v839, %v839
      %v872 = vpack.c.b16 %v840, %v840
      %v873 = vpack.c.b16 %v841, %v841
      %v874 = vpack.c.b16 %v842, %v842
      %v875 = vpack.c.b16 %v843, %v843
      %v876 = vpack.c.b16 %v844, %v844
      %v877 = vpack.c.b16 %v845, %v845
      %v878 = vpack.c.b16 %v846, %v846
      %v879 = vpack.c.b16 %v847, %v847
      %v880 = vpack.c.b16 %v848, %v848
      %v881 = vpack.c.b16 %v849, %v849
      %v882 = vpack.c.b16 %v850, %v850
      %v883 = vpack.c.b16 %v851, %v851
      %v884 = vpack.c.b16 %v852, %v852
      %v885 = vpack.c.b16 %v853, %v853
      %v886 = vpack.c.b16 %v854, %v854
      %v887 = vpack.c.b16 %v855, %v855
      %v888 = vpack.c.b16 %v856, %v856
      %v889 = vpack.c.b16 %v857, %v857
      %v890 = vpack.c.b16 %v858, %v858
      %v891 = vpack.c.b16 %v859, %v859
      %v892 = vpack.c.b16 %v860, %v860
      %v893 = vpack.c.b16 %v861, %v861
      %v894 = vpack.c.b16 %v862, %v862
      %v895 = vpack.c.b16 %v863, %v863
      %v896 = vpack.c.b16 %v864, %v864
      %v897 = vpack.c.b16 %v865, %v865
      %v898 = vpack.c.b16 %v866, %v866
      %v899 = vpack.c.b16 %v867, %v867
      %v900 = vpack.c.b16 %v868, %v868
      %933 = vst [vmem:[%s244] sm:$0xf] %v869
      %934 = vst [vmem:[%s244 + $0x4] sm:$0xf] %v870
      %935 = vst [vmem:[%s244 + $0x8] sm:$0xf] %v871
      %936 = vst [vmem:[%s244 + $0xc] sm:$0xf] %v872
      %937 = vst [vmem:[%s244 + $0x10] sm:$0xf] %v873
      %938 = vst [vmem:[%s244 + $0x14] sm:$0xf] %v874
      %939 = vst [vmem:[%s244 + $0x18] sm:$0xf] %v875
      %940 = vst [vmem:[%s244 + $0x1c] sm:$0xf] %v876
      %941 = vst [vmem:[%s244 + $0x20] sm:$0xf] %v877
      %942 = vst [vmem:[%s244 + $0x24] sm:$0xf] %v878
      %943 = vst [vmem:[%s244 + $0x28] sm:$0xf] %v879
      %944 = vst [vmem:[%s244 + $0x2c] sm:$0xf] %v880
      %945 = vst [vmem:[%s244 + $0x30] sm:$0xf] %v881
      %946 = vst [vmem:[%s244 + $0x34] sm:$0xf] %v882
      %947 = vst [vmem:[%s244 + $0x38] sm:$0xf] %v883
      %948 = vst [vmem:[%s244 + $0x3c] sm:$0xf] %v884
      %949 = vst [vmem:[%s244 + $0x40] sm:$0xf] %v885
      %950 = vst [vmem:[%s244 + $0x44] sm:$0xf] %v886
      %951 = vst [vmem:[%s244 + $0x48] sm:$0xf] %v887
      %952 = vst [vmem:[%s244 + $0x4c] sm:$0xf] %v888
      %953 = vst [vmem:[%s244 + $0x50] sm:$0xf] %v889
      %954 = vst [vmem:[%s244 + $0x54] sm:$0xf] %v890
      %955 = vst [vmem:[%s244 + $0x58] sm:$0xf] %v891
      %956 = vst [vmem:[%s244 + $0x5c] sm:$0xf] %v892
      %957 = vst [vmem:[%s244 + $0x60] sm:$0xf] %v893
      %958 = vst [vmem:[%s244 + $0x64] sm:$0xf] %v894
      %959 = vst [vmem:[%s244 + $0x68] sm:$0xf] %v895
      %960 = vst [vmem:[%s244 + $0x6c] sm:$0xf] %v896
      %961 = vst [vmem:[%s244 + $0x70] sm:$0xf] %v897
      %962 = vst [vmem:[%s244 + $0x74] sm:$0xf] %v898
      %963 = vst [vmem:[%s244 + $0x78] sm:$0xf] %v899
      %964 = vst [vmem:[%s244 + $0x7c] sm:$0xf] %v900
      %p965 = scmp.lt.s32.totalorder %s16, 1
      %s966 = scalar_select %p965, %s16, 1
      %s967 = smul.addr %s966, 32
      %s968 = smul.addr %s967, 4
      %s969 = scalar_lea.vmem %s5, %s968
      // Predicated region
      $region41: #{basic_block_forward.7} parent=39 // pred_check
        %p970 = pneg %p149
      $region42: #{basic_block_forward.7} parent=39 // pred_check_branch
        %972 = sbr.rel (%p970) target = $region44
      $region43: #{basic_block_forward.7} parent=39 // pred_region
        _
      $region44: #{basic_block_forward.7} parent=39 // pred_fallthru
        _
    $region40: #{basic_block_forward.7} parent=5 // pred_fallthru
      _
    %p973 = scmp.le.s32.totalorder 2, %s11
    // Predicated region
    $region45: #{basic_block_forward.7} parent=5 // pred_check
      %p974 = pneg %p973
    $region46: #{basic_block_forward.7} parent=5 // pred_check_branch
      %976 = sbr.rel (%p974) target = $region48
    $region47: #{basic_block_forward.7} parent=5 // pred_region
      %s977 = ssub.s32 %s11, 2
      // Predicated region
      $region49: #{basic_block_forward.7} parent=47 // pred_check
        %p978 = pneg %p155
      $region50: #{basic_block_forward.7} parent=47 // pred_check_branch
        %980 = sbr.rel (%p978) target = $region52
      $region51: #{basic_block_forward.7} parent=47 // pred_region
        %p981 = scmp.lt.s32.totalorder %s17, 1
        %s982 = scalar_select %p981, %s17, 1
        %s983 = smul.addr %s982, 32
        %s984 = smul.addr %s983, 4
        %s985 = scalar_lea.vmem %s5, %s984
      $region52: #{basic_block_forward.7} parent=47 // pred_fallthru
        _
    $region48: #{basic_block_forward.7} parent=5 // pred_fallthru
      _
  $region6: #{basic_block_forward.7} parent=0 // loop_footer
    %s15 = sadd.s32 1, %s11
  $region7: #{basic_block_forward.7} parent=0 // loop_footer_branch
    %10 = sbr.rel target = $region3
  $region8: #{basic_block_forward.7} parent=0 // loop_exit
    _

// kernel: basic_block_forward.4
$region0: #{basic_block_forward.4}
  #allocation0 [shape = 'u32[]', space=smem, size = 0x4, offset = 0x4, fixed_abs, tag = 'smem constant byte address 0x4 - core index']
  #allocation1 [shape = 'u32[144,128]{1,0:T(1,128)}', space=vmem, size = 0x12000, scoped, tag = 'internal scratch']
  #allocation2 [shape = 'f32[256,128]{1,0:T(8,128)}', space=vmem, size = 0x20000, scoped, tag = 'scratch operand']
  %s0 = inlined_call_operand.vmem [shape: bf16[2,18,18,128], index: 0, kind: input, shape index: {}]
  %s1 = inlined_call_operand.vmem [shape: bf16[9,128,128], index: 1, kind: input, shape index: {}]
  %s2 = inlined_call_operand.vmem [shape: bf16[2,256,128], index: 2, kind: output, shape index: {0}]
  %s3 = inlined_call_operand.vmem [shape: f32[2,2,128], index: 3, kind: output, shape index: {1}]
  %4 = xla_tuple %s2, %s3
  %s5 = sld [smem:[#allocation0]]
  $region49: #{basic_block_forward.4} parent=0
    _
  %s7 = ssub.s32 1, %s5
  %s8 = scalar_select 0, %s7, %s5
  loop: start=0, step=1, limit=4
  $region2: #{basic_block_forward.4} parent=0 // loop_pre_header
    _
  $region3: #{basic_block_forward.4} parent=0 // loop_header
    %s10 = sphi 0, %s14
    %p11 = scmp.ge.s32.totalorder %s10, 4
    %s20 = sphi 0, %s22
    %s23 = sphi 0, %s20
    %s24 = sphi 0, %s23
    %s40 = sphi 0, %s24
    %s44 = sphi 0, %s44
    %s46 = sphi 0, %s44
    %s47 = sphi 0, %s46
    %s61 = sphi 0, %s47
    %s67 = sphi 0, %s69
    %s70 = sphi 0, %s67
    %s71 = sphi 0, %s70
    %s87 = sphi 0, %s71
    %s93 = sphi 0, %s95
    %s96 = sphi 0, %s93
    %s97 = sphi 0, %s96
    %s113 = sphi 0, %s97
  $region4: #{basic_block_forward.4} parent=0 // loop_header_branch
    %13 = sbr.rel (%p11) target = $region8
  $region5: #{basic_block_forward.4} parent=0 // loop_body
    %s15 = ssub.s32 %s10, 1
    %s16 = ssub.s32 %s10, 2
    %s17 = sadd.s32 %s10, 1
    %s18 = ssub.s32 %s10, %s17
    %p19 = scmp.eq.s32.totalorder %s18, 0
    %s21 = sadd.s32 %s20, 1
    %s22 = scalar_select %p19, %s20, %s21
    %p25 = pneg %p19
    %p26 = scmp.eq.s32.totalorder %s10, 1
    %p27 = por %p25, %p26
    %p28 = scmp.ne.s32.totalorder %s20, %s23
    %p29 = scmp.eq.s32.totalorder %s10, 0
    %p30 = por %p28, %p29
    %p31 = scmp.ne.s32.totalorder %s20, %s23
    %p32 = scmp.eq.s32.totalorder %s15, 1
    %p33 = por %p31, %p32
    %p34 = scmp.ne.s32.totalorder %s23, %s24
    %p35 = scmp.eq.s32.totalorder %s15, 0
    %p36 = por %p34, %p35
    %p37 = scmp.ne.s32.totalorder %s23, %s24
    %p38 = scmp.eq.s32.totalorder %s16, 1
    %p39 = por %p37, %p38
    %p41 = scmp.ne.s32.totalorder %s24, %s40
    %p42 = scmp.eq.s32.totalorder %s16, 0
    %p43 = por %p41, %p42
    %s45 = sadd.s32 %s44, 1
    %p48 = scmp.eq.s32.totalorder %s10, 1
    %p49 = scmp.ne.s32.totalorder %s44, %s46
    %p50 = scmp.eq.s32.totalorder %s10, 0
    %p51 = por %p49, %p50
    %p52 = scmp.ne.s32.totalorder %s44, %s46
    %p53 = scmp.eq.s32.totalorder %s15, 1
    %p54 = por %p52, %p53
    %p55 = scmp.ne.s32.totalorder %s46, %s47
    %p56 = scmp.eq.s32.totalorder %s15, 0
    %p57 = por %p55, %p56
    %p58 = scmp.ne.s32.totalorder %s46, %s47
    %p59 = scmp.eq.s32.totalorder %s16, 1
    %p60 = por %p58, %p59
    %p62 = scmp.ne.s32.totalorder %s47, %s61
    %p63 = scmp.eq.s32.totalorder %s16, 0
    %p64 = por %p62, %p63
    %s65 = ssub.s32 %s10, %s17
    %p66 = scmp.eq.s32.totalorder %s65, 0
    %s68 = sadd.s32 %s67, 1
    %s69 = scalar_select %p66, %s67, %s68
    %p72 = pneg %p66
    %p73 = scmp.eq.s32.totalorder %s10, 1
    %p74 = por %p72, %p73
    %p75 = scmp.ne.s32.totalorder %s67, %s70
    %p76 = scmp.eq.s32.totalorder %s10, 0
    %p77 = por %p75, %p76
    %p78 = scmp.ne.s32.totalorder %s67, %s70
    %p79 = scmp.eq.s32.totalorder %s15, 1
    %p80 = por %p78, %p79
    %p81 = scmp.ne.s32.totalorder %s70, %s71
    %p82 = scmp.eq.s32.totalorder %s15, 0
    %p83 = por %p81, %p82
    %p84 = scmp.ne.s32.totalorder %s70, %s71
    %p85 = scmp.eq.s32.totalorder %s16, 1
    %p86 = por %p84, %p85
    %p88 = scmp.ne.s32.totalorder %s71, %s87
    %p89 = scmp.eq.s32.totalorder %s16, 0
    %p90 = por %p88, %p89
    %s91 = ssub.s32 %s10, %s17
    %p92 = scmp.eq.s32.totalorder %s91, 0
    %s94 = sadd.s32 %s93, 1
    %s95 = scalar_select %p92, %s93, %s94
    %p98 = pneg %p92
    %p99 = scmp.eq.s32.totalorder %s10, 1
    %p100 = por %p98, %p99
    %p101 = scmp.ne.s32.totalorder %s93, %s96
    %p102 = scmp.eq.s32.totalorder %s10, 0
    %p103 = por %p101, %p102
    %p104 = scmp.ne.s32.totalorder %s93, %s96
    %p105 = scmp.eq.s32.totalorder %s15, 1
    %p106 = por %p104, %p105
    %p107 = scmp.ne.s32.totalorder %s96, %s97
    %p108 = scmp.eq.s32.totalorder %s15, 0
    %p109 = por %p107, %p108
    %p110 = scmp.ne.s32.totalorder %s96, %s97
    %p111 = scmp.eq.s32.totalorder %s16, 1
    %p112 = por %p110, %p111
    %p114 = scmp.ne.s32.totalorder %s97, %s113
    %p115 = scmp.eq.s32.totalorder %s16, 0
    %p116 = por %p114, %p115
    %p117 = scmp.le.s32.totalorder 1, %s10
    %p118 = scmp.lt.s32.totalorder %s10, 3
    %p119 = pnand %p117, %p118
    %p120 = pneg %p119
    // Predicated region
    $region9: #{basic_block_forward.4} parent=5 // pred_check
      _
    $region10: #{basic_block_forward.4} parent=5 // pred_check_branch
      %122 = sbr.rel (%p119) target = $region12
    $region11: #{basic_block_forward.4} parent=5 // pred_region
      %s123 = ssub.s32 %s10, 1
      // Predicated region
      $region13: #{basic_block_forward.4} parent=11 // pred_check
        %p124 = pneg %p57
      $region14: #{basic_block_forward.4} parent=11 // pred_check_branch
        %126 = sbr.rel (%p124) target = $region16
      $region15: #{basic_block_forward.4} parent=11 // pred_region
        _
      $region16: #{basic_block_forward.4} parent=11 // pred_fallthru
        _
    $region12: #{basic_block_forward.4} parent=5 // pred_fallthru
      _
    %p127 = scmp.lt.s32.totalorder %s10, 2
    // Predicated region
    $region17: #{basic_block_forward.4} parent=5 // pred_check
      %p128 = pneg %p127
    $region18: #{basic_block_forward.4} parent=5 // pred_check_branch
      %130 = sbr.rel (%p128) target = $region20
    $region19: #{basic_block_forward.4} parent=5 // pred_region
      // Predicated region
      $region21: #{basic_block_forward.4} parent=19 // pred_check
        %p131 = pneg %p30
      $region22: #{basic_block_forward.4} parent=19 // pred_check_branch
        %133 = sbr.rel (%p131) target = $region24
      $region23: #{basic_block_forward.4} parent=19 // pred_region
        %p134 = scmp.lt.s32.totalorder %s10, 1
        %s135 = scalar_select %p134, %s10, 1
        %s136 = smul.addr %s135, 54
        %s137 = smul.addr %s136, 4
        %s138 = scalar_lea.vmem %s0, %s137
      $region24: #{basic_block_forward.4} parent=19 // pred_fallthru
        _
    $region20: #{basic_block_forward.4} parent=5 // pred_fallthru
      _
    %p139 = scmp.le.s32.totalorder 1, %s10
    %p140 = scmp.lt.s32.totalorder %s10, 3
    %p141 = pnand %p139, %p140
    %p142 = pneg %p141
    // Predicated region
    $region25: #{basic_block_forward.4} parent=5 // pred_check
      _
    $region26: #{basic_block_forward.4} parent=5 // pred_check_branch
      %144 = sbr.rel (%p141) target = $region28
    $region27: #{basic_block_forward.4} parent=5 // pred_region
      %s145 = ssub.s32 %s10, 1
      %p146 = scmp.lt.s32.totalorder %s15, 1
      %s147 = scalar_select %p146, %s15, 1
      %s148 = smul.addr %s147, 54
      %s149 = smul.addr %s148, 4
      %s150 = scalar_lea.vmem %s0, %s149
      %p151 = pneg %p36
      %p152 = pneg %p33
      %p153 = pneg %p57
      %p154 = pneg %p54
      %p155 = pneg %p83
      %p156 = pneg %p80
      %p157 = scmp.lt.s32.totalorder %s15, 1
      %s158 = scalar_select %p157, %s15, 1
      %s159 = smul.addr %s158, 32
      %s160 = smul.addr %s159, 4
      %s161 = scalar_lea.vmem %s2, %s160
      %p162 = pneg %p109
      %p163 = pneg %p106
      %p164 = scmp.lt.s32.totalorder %s15, 1
      %s165 = scalar_select %p164, %s15, 1
      %s166 = smul.addr %s165, 2
      %s167 = scalar_lea.vmem %s3, %s166
      %p168 = scmp.lt.s32.totalorder %s15, 1
      %s169 = scalar_select %p168, %s15, 1
      %s170 = smul.addr %s169, 54
      %s171 = smul.addr %s170, 4
      %s172 = scalar_lea.vmem %s0, %s171
      %p173 = scmp.lt.s32.totalorder %s15, 1
      %s174 = scalar_select %p173, %s15, 1
      %s175 = smul.addr %s174, 32
      %s176 = smul.addr %s175, 4
      %s177 = scalar_lea.vmem %s2, %s176
      %p178 = scmp.lt.s32.totalorder %s15, 1
      %s179 = scalar_select %p178, %s15, 1
      %s180 = smul.addr %s179, 2
      %s181 = scalar_lea.vmem %s3, %s180
      %v183 = vld [vmem:[%s172] sm:$0xf]
      %v184 = vld [vmem:[%s172 + $0x4] sm:$0xf]
      %v185 = vld [vmem:[%s172 + $0xc] sm:$0xf]
      %v186 = vld [vmem:[%s172 + $0x10] sm:$0xf]
      %v187 = vld [vmem:[%s172 + $0x18] sm:$0xf]
      %v188 = vld [vmem:[%s172 + $0x1c] sm:$0xf]
      %v189 = vld [vmem:[%s172 + $0x24] sm:$0xf]
      %v190 = vld [vmem:[%s172 + $0x28] sm:$0xf]
      %v191 = vld [vmem:[%s172 + $0x30] sm:$0xf]
      %v192 = vld [vmem:[%s172 + $0x34] sm:$0xf]
      %v193 = vld [vmem:[%s172 + $0x3c] sm:$0xf]
      %v194 = vld [vmem:[%s172 + $0x40] sm:$0xf]
      %v195 = vld [vmem:[%s172 + $0x48] sm:$0xf]
      %v196 = vld [vmem:[%s172 + $0x4c] sm:$0xf]
      %v197 = vld [vmem:[%s172 + $0x54] sm:$0xf]
      %v198 = vld [vmem:[%s172 + $0x58] sm:$0xf]
      %v199 = vld [vmem:[%s172 + $0x60] sm:$0xf]
      %v200 = vld [vmem:[%s172 + $0x64] sm:$0xf]
      %v201 = vld [vmem:[%s172 + $0x6c] sm:$0xf]
      %v202 = vld [vmem:[%s172 + $0x70] sm:$0xf]
      %v203 = vld [vmem:[%s172 + $0x78] sm:$0xf]
      %v204 = vld [vmem:[%s172 + $0x7c] sm:$0xf]
      %v205 = vld [vmem:[%s172 + $0x84] sm:$0xf]
      %v206 = vld [vmem:[%s172 + $0x88] sm:$0xf]
      %v207 = vld [vmem:[%s172 + $0x90] sm:$0xf]
      %v208 = vld [vmem:[%s172 + $0x94] sm:$0xf]
      %v209 = vld [vmem:[%s172 + $0x9c] sm:$0xf]
      %v210 = vld [vmem:[%s172 + $0xa0] sm:$0xf]
      %v211 = vld [vmem:[%s172 + $0xa8] sm:$0xf]
      %v212 = vld [vmem:[%s172 + $0xac] sm:$0xf]
      %v213 = vld [vmem:[%s172 + $0xb4] sm:$0xf]
      %v214 = vld [vmem:[%s172 + $0xb8] sm:$0xf]
      %v215 = vld [vmem:[%s1] sm:$0xf]
      %v216 = vld [vmem:[%s1 + $0x4] sm:$0xf]
      %v217 = vld [vmem:[%s1 + $0x8] sm:$0xf]
      %v218 = vld [vmem:[%s1 + $0xc] sm:$0xf]
      %v219 = vld [vmem:[%s1 + $0x10] sm:$0xf]
      %v220 = vld [vmem:[%s1 + $0x14] sm:$0xf]
      %v221 = vld [vmem:[%s1 + $0x18] sm:$0xf]
      %v222 = vld [vmem:[%s1 + $0x1c] sm:$0xf]
      %v223 = vld [vmem:[%s1 + $0x20] sm:$0xf]
      %v224 = vld [vmem:[%s1 + $0x24] sm:$0xf]
      %v225 = vld [vmem:[%s1 + $0x28] sm:$0xf]
      %v226 = vld [vmem:[%s1 + $0x2c] sm:$0xf]
      %v227 = vld [vmem:[%s1 + $0x30] sm:$0xf]
      %v228 = vld [vmem:[%s1 + $0x34] sm:$0xf]
      %v229 = vld [vmem:[%s1 + $0x38] sm:$0xf]
      %v230 = vld [vmem:[%s1 + $0x3c] sm:$0xf]
      %v263 = vunpack.c.l.b16 %v183
      %v264 = vunpack.c.l.b16 %v184
      %v265 = vunpack.c.l.b16 %v185
      %v266 = vunpack.c.l.b16 %v186
      %v267 = vunpack.c.l.b16 %v187
      %v268 = vunpack.c.l.b16 %v188
      %v269 = vunpack.c.l.b16 %v189
      %v270 = vunpack.c.l.b16 %v190
      %v271 = vunpack.c.l.b16 %v191
      %v272 = vunpack.c.l.b16 %v192
      %v273 = vunpack.c.l.b16 %v193
      %v274 = vunpack.c.l.b16 %v194
      %v275 = vunpack.c.l.b16 %v195
      %v276 = vunpack.c.l.b16 %v196
      %v277 = vunpack.c.l.b16 %v197
      %v278 = vunpack.c.l.b16 %v198
      %v279 = vunpack.c.l.b16 %v199
      %v280 = vunpack.c.l.b16 %v200
      %v281 = vunpack.c.l.b16 %v201
      %v282 = vunpack.c.l.b16 %v202
      %v283 = vunpack.c.l.b16 %v203
      %v284 = vunpack.c.l.b16 %v204
      %v285 = vunpack.c.l.b16 %v205
      %v286 = vunpack.c.l.b16 %v206
      %v287 = vunpack.c.l.b16 %v207
      %v288 = vunpack.c.l.b16 %v208
      %v289 = vunpack.c.l.b16 %v209
      %v290 = vunpack.c.l.b16 %v210
      %v291 = vunpack.c.l.b16 %v211
      %v292 = vunpack.c.l.b16 %v212
      %v293 = vunpack.c.l.b16 %v213
      %v294 = vunpack.c.l.b16 %v214
      %v295 = vpack.c.b16 %v264, %v263
      %v296 = vpack.c.b16 %v266, %v265
      %v297 = vpack.c.b16 %v268, %v267
      %v298 = vpack.c.b16 %v270, %v269
      %v299 = vpack.c.b16 %v272, %v271
      %v300 = vpack.c.b16 %v274, %v273
      %v301 = vpack.c.b16 %v276, %v275
      %v302 = vpack.c.b16 %v278, %v277
      %v303 = vpack.c.b16 %v280, %v279
      %v304 = vpack.c.b16 %v282, %v281
      %v305 = vpack.c.b16 %v284, %v283
      %v306 = vpack.c.b16 %v286, %v285
      %v307 = vpack.c.b16 %v288, %v287
      %v308 = vpack.c.b16 %v290, %v289
      %v309 = vpack.c.b16 %v292, %v291
      %v310 = vpack.c.b16 %v294, %v293
      %v343 = vunpack.c.l.b16 %v215
      %v344 = vunpack.c.l.b16 %v216
      %v345 = vunpack.c.l.b16 %v217
      %v346 = vunpack.c.l.b16 %v218
      %v347 = vunpack.c.l.b16 %v219
      %v348 = vunpack.c.l.b16 %v220
      %v349 = vunpack.c.l.b16 %v221
      %v350 = vunpack.c.l.b16 %v222
      %v351 = vunpack.c.l.b16 %v223
      %v352 = vunpack.c.l.b16 %v224
      %v353 = vunpack.c.l.b16 %v225
      %v354 = vunpack.c.l.b16 %v226
      %v355 = vunpack.c.l.b16 %v227
      %v356 = vunpack.c.l.b16 %v228
      %v357 = vunpack.c.l.b16 %v229
      %v358 = vunpack.c.l.b16 %v230
      %v359 = vpack.c.b16 %v344, %v343
      %v360 = vpack.c.b16 %v346, %v345
      %v361 = vpack.c.b16 %v348, %v347
      %v362 = vpack.c.b16 %v350, %v349
      %v363 = vpack.c.b16 %v352, %v351
      %v364 = vpack.c.b16 %v354, %v353
      %v365 = vpack.c.b16 %v356, %v355
      %v366 = vpack.c.b16 %v358, %v357
      %375 = vmatprep.subr.bf16.mxu0 0
      %376 = vmatpush1.bf16.msra.mxu0 %v366
      %377 = vmatprep.subr.bf16.mxu0 0
      %378 = vmatpush1.bf16.msra.mxu0 %v365
      %379 = vmatprep.subr.bf16.mxu0 0
      %380 = vmatpush1.bf16.msra.mxu0 %v364
      %381 = vmatprep.subr.bf16.mxu0 0
      %382 = vmatpush1.bf16.msra.mxu0 %v363
      %383 = vmatprep.subr.bf16.mxu0 0
      %384 = vmatpush1.bf16.msra.mxu0 %v362
      %385 = vmatprep.subr.bf16.mxu0 0
      %386 = vmatpush1.bf16.msra.mxu0 %v361
      %387 = vmatprep.subr.bf16.mxu0 0
      %388 = vmatpush1.bf16.msra.mxu0 %v360
      %389 = vmatprep.subr.bf16.mxu0 0
      %390 = vmatpush1.bf16.msra.mxu0 %v359
      %391 = vmatprep.subr.bf16.mxu0 0
      %392 = vmatpush2.bf16.msra.mxu0 0
      %393 = vmatprep.subr.bf16.mxu0 0
      %394 = vmatpush2.bf16.msra.mxu0 0
      %395 = vmatprep.subr.bf16.mxu0 0
      %396 = vmatpush2.bf16.msra.mxu0 0
      %397 = vmatprep.subr.bf16.mxu0 0
      %398 = vmatpush2.bf16.msra.mxu0 0
      %399 = vmatprep.subr.bf16.mxu0 0
      %400 = vmatpush2.bf16.msra.mxu0 0
      %401 = vmatprep.subr.bf16.mxu0 0
      %402 = vmatpush2.bf16.msra.mxu0 0
      %403 = vmatprep.subr.bf16.mxu0 0
      %404 = vmatpush2.bf16.msra.mxu0 0
      %405 = vmatprep.subr.bf16.mxu0 0
      %406 = vmatpush2.bf16.msra.mxu0 0
      %407 = vmatprep.mubr.bf16.mxu0 0
      %408 = vmatmul.mubr.bf16.gmra.mxu0 %v295
      %v409 = vpop.f32.mrf.mxu0
      %v410 = vadd.f32 0.0, %v409
      %v411 = vpop.f32.mrf.mxu0
      %v412 = vpop.f32.mrf.mxu0
      %v413 = vadd.f32 0.0, %v412
      %v414 = vpop.f32.mrf.mxu0
      %415 = vmatprep.mubr.bf16.mxu0 0
      %416 = vmatmul.mubr.bf16.gmra.mxu0 %v296
      %v417 = vpop.f32.mrf.mxu0
      %v418 = vadd.f32 0.0, %v417
      %v419 = vpop.f32.mrf.mxu0
      %v420 = vpop.f32.mrf.mxu0
      %v421 = vadd.f32 0.0, %v420
      %v422 = vpop.f32.mrf.mxu0
      %423 = vmatprep.mubr.bf16.mxu0 0
      %424 = vmatmul.mubr.bf16.gmra.mxu0 %v297
      %v425 = vpop.f32.mrf.mxu0
      %v426 = vadd.f32 0.0, %v425
      %v427 = vpop.f32.mrf.mxu0
      %v428 = vpop.f32.mrf.mxu0
      %v429 = vadd.f32 0.0, %v428
      %v430 = vpop.f32.mrf.mxu0
      %431 = vmatprep.mubr.bf16.mxu0 0
      %432 = vmatmul.mubr.bf16.gmra.mxu0 %v298
      %v433 = vpop.f32.mrf.mxu0
      %v434 = vadd.f32 0.0, %v433
      %v435 = vpop.f32.mrf.mxu0
      %v436 = vpop.f32.mrf.mxu0
      %v437 = vadd.f32 0.0, %v436
      %v438 = vpop.f32.mrf.mxu0
      %439 = vmatprep.mubr.bf16.mxu0 0
      %440 = vmatmul.mubr.bf16.gmra.mxu0 %v299
      %v441 = vpop.f32.mrf.mxu0
      %v442 = vadd.f32 0.0, %v441
      %v443 = vpop.f32.mrf.mxu0
      %v444 = vpop.f32.mrf.mxu0
      %v445 = vadd.f32 0.0, %v444
      %v446 = vpop.f32.mrf.mxu0
      %447 = vmatprep.mubr.bf16.mxu0 0
      %448 = vmatmul.mubr.bf16.gmra.mxu0 %v300
      %v449 = vpop.f32.mrf.mxu0
      %v450 = vadd.f32 0.0, %v449
      %v451 = vpop.f32.mrf.mxu0
      %v452 = vpop.f32.mrf.mxu0
      %v453 = vadd.f32 0.0, %v452
      %v454 = vpop.f32.mrf.mxu0
      %455 = vmatprep.mubr.bf16.mxu0 0
      %456 = vmatmul.mubr.bf16.gmra.mxu0 %v301
      %v457 = vpop.f32.mrf.mxu0
      %v458 = vadd.f32 0.0, %v457
      %v459 = vpop.f32.mrf.mxu0
      %v460 = vpop.f32.mrf.mxu0
      %v461 = vadd.f32 0.0, %v460
      %v462 = vpop.f32.mrf.mxu0
      %463 = vmatprep.mubr.bf16.mxu0 0
      %464 = vmatmul.mubr.bf16.gmra.mxu0 %v302
      %v465 = vpop.f32.mrf.mxu0
      %v466 = vadd.f32 0.0, %v465
      %v467 = vpop.f32.mrf.mxu0
      %v468 = vpop.f32.mrf.mxu0
      %v469 = vadd.f32 0.0, %v468
      %v470 = vpop.f32.mrf.mxu0
      %471 = vmatprep.mubr.bf16.mxu0 0
      %472 = vmatmul.mubr.bf16.gmra.mxu0 %v303
      %v473 = vpop.f32.mrf.mxu0
      %v474 = vadd.f32 0.0, %v473
      %v475 = vpop.f32.mrf.mxu0
      %v476 = vpop.f32.mrf.mxu0
      %v477 = vadd.f32 0.0, %v476
      %v478 = vpop.f32.mrf.mxu0
      %479 = vmatprep.mubr.bf16.mxu0 0
      %480 = vmatmul.mubr.bf16.gmra.mxu0 %v304
      %v481 = vpop.f32.mrf.mxu0
      %v482 = vadd.f32 0.0, %v481
      %v483 = vpop.f32.mrf.mxu0
      %v484 = vpop.f32.mrf.mxu0
      %v485 = vadd.f32 0.0, %v484
      %v486 = vpop.f32.mrf.mxu0
      %487 = vmatprep.mubr.bf16.mxu0 0
      %488 = vmatmul.mubr.bf16.gmra.mxu0 %v305
      %v489 = vpop.f32.mrf.mxu0
      %v490 = vadd.f32 0.0, %v489
      %v491 = vpop.f32.mrf.mxu0
      %v492 = vpop.f32.mrf.mxu0
      %v493 = vadd.f32 0.0, %v492
      %v494 = vpop.f32.mrf.mxu0
      %495 = vmatprep.mubr.bf16.mxu0 0
      %496 = vmatmul.mubr.bf16.gmra.mxu0 %v306
      %v497 = vpop.f32.mrf.mxu0
      %v498 = vadd.f32 0.0, %v497
      %v499 = vpop.f32.mrf.mxu0
      %v500 = vpop.f32.mrf.mxu0
      %v501 = vadd.f32 0.0, %v500
      %v502 = vpop.f32.mrf.mxu0
      %503 = vmatprep.mubr.bf16.mxu0 0
      %504 = vmatmul.mubr.bf16.gmra.mxu0 %v307
      %v505 = vpop.f32.mrf.mxu0
      %v506 = vadd.f32 0.0, %v505
      %v507 = vpop.f32.mrf.mxu0
      %v508 = vpop.f32.mrf.mxu0
      %v509 = vadd.f32 0.0, %v508
      %v510 = vpop.f32.mrf.mxu0
      %511 = vmatprep.mubr.bf16.mxu0 0
      %512 = vmatmul.mubr.bf16.gmra.mxu0 %v308
      %v513 = vpop.f32.mrf.mxu0
      %v514 = vadd.f32 0.0, %v513
      %v515 = vpop.f32.mrf.mxu0
      %v516 = vpop.f32.mrf.mxu0
      %v517 = vadd.f32 0.0, %v516
      %v518 = vpop.f32.mrf.mxu0
      %519 = vmatprep.mubr.bf16.mxu0 0
      %520 = vmatmul.mubr.bf16.gmra.mxu0 %v309
      %v521 = vpop.f32.mrf.mxu0
      %v522 = vadd.f32 0.0, %v521
      %v523 = vpop.f32.mrf.mxu0
      %v524 = vpop.f32.mrf.mxu0
      %v525 = vadd.f32 0.0, %v524
      %v526 = vpop.f32.mrf.mxu0
      %527 = vmatprep.mubr.bf16.mxu0 0
      %528 = vmatmul.mubr.bf16.gmra.mxu0 %v310
      %v529 = vpop.f32.mrf.mxu0
      %v530 = vadd.f32 0.0, %v529
      %v531 = vpop.f32.mrf.mxu0
      %v532 = vpop.f32.mrf.mxu0
      %v533 = vadd.f32 0.0, %v532
      %v534 = vpop.f32.mrf.mxu0
      %535 = vdwg.mxu0
      %536 = vst [vmem:[#allocation2] sm:$0xff] %v410
      %537 = vst [vmem:[#allocation2 + $0x8] sm:$0xff] %v413
      %538 = vst [vmem:[#allocation2 + $0x10] sm:$0xff] %v418
      %539 = vst [vmem:[#allocation2 + $0x18] sm:$0xff] %v421
      %540 = vst [vmem:[#allocation2 + $0x20] sm:$0xff] %v426
      %541 = vst [vmem:[#allocation2 + $0x28] sm:$0xff] %v429
      %542 = vst [vmem:[#allocation2 + $0x30] sm:$0xff] %v434
      %543 = vst [vmem:[#allocation2 + $0x38] sm:$0xff] %v437
      %544 = vst [vmem:[#allocation2 + $0x40] sm:$0xff] %v442
      %545 = vst [vmem:[#allocation2 + $0x48] sm:$0xff] %v445
      %546 = vst [vmem:[#allocation2 + $0x50] sm:$0xff] %v450
      %547 = vst [vmem:[#allocation2 + $0x58] sm:$0xff] %v453
      %548 = vst [vmem:[#allocation2 + $0x60] sm:$0xff] %v458
      %549 = vst [vmem:[#allocation2 + $0x68] sm:$0xff] %v461
      %550 = vst [vmem:[#allocation2 + $0x70] sm:$0xff] %v466
      %551 = vst [vmem:[#allocation2 + $0x78] sm:$0xff] %v469
      %552 = vst [vmem:[#allocation2 + $0x80] sm:$0xff] %v474
      %553 = vst [vmem:[#allocation2 + $0x88] sm:$0xff] %v477
      %554 = vst [vmem:[#allocation2 + $0x90] sm:$0xff] %v482
      %555 = vst [vmem:[#allocation2 + $0x98] sm:$0xff] %v485
      %556 = vst [vmem:[#allocation2 + $0xa0] sm:$0xff] %v490
      %557 = vst [vmem:[#allocation2 + $0xa8] sm:$0xff] %v493
      %558 = vst [vmem:[#allocation2 + $0xb0] sm:$0xff] %v498
      %559 = vst [vmem:[#allocation2 + $0xb8] sm:$0xff] %v501
      %560 = vst [vmem:[#allocation2 + $0xc0] sm:$0xff] %v506
      %561 = vst [vmem:[#allocation2 + $0xc8] sm:$0xff] %v509
      %562 = vst [vmem:[#allocation2 + $0xd0] sm:$0xff] %v514
      %563 = vst [vmem:[#allocation2 + $0xd8] sm:$0xff] %v517
      %564 = vst [vmem:[#allocation2 + $0xe0] sm:$0xff] %v522
      %565 = vst [vmem:[#allocation2 + $0xe8] sm:$0xff] %v525
      %566 = vst [vmem:[#allocation2 + $0xf0] sm:$0xff] %v530
      %567 = vst [vmem:[#allocation2 + $0xf8] sm:$0xff] %v533
      %v568 = vld [vmem:[%s172] sm:$0xf]
      %v569 = vld [vmem:[%s172 + $0x4] sm:$0xf]
      %v570 = vld [vmem:[%s172 + $0x8] sm:$0x1]
      %v571 = vld [vmem:[%s172 + $0xc] sm:$0xf]
      %v572 = vld [vmem:[%s172 + $0x10] sm:$0xf]
      %v573 = vld [vmem:[%s172 + $0x14] sm:$0x1]
      %v574 = vld [vmem:[%s172 + $0x18] sm:$0xf]
      %v575 = vld [vmem:[%s172 + $0x1c] sm:$0xf]
      %v576 = vld [vmem:[%s172 + $0x20] sm:$0x1]
      %v577 = vld [vmem:[%s172 + $0x24] sm:$0xf]
      %v578 = vld [vmem:[%s172 + $0x28] sm:$0xf]
      %v579 = vld [vmem:[%s172 + $0x2c] sm:$0x1]
      %v580 = vld [vmem:[%s172 + $0x30] sm:$0xf]
      %v581 = vld [vmem:[%s172 + $0x34] sm:$0xf]
      %v582 = vld [vmem:[%s172 + $0x38] sm:$0x1]
      %v583 = vld [vmem:[%s172 + $0x3c] sm:$0xf]
      %v584 = vld [vmem:[%s172 + $0x40] sm:$0xf]
      %v585 = vld [vmem:[%s172 + $0x44] sm:$0x1]
      %v586 = vld [vmem:[%s172 + $0x48] sm:$0xf]
      %v587 = vld [vmem:[%s172 + $0x4c] sm:$0xf]
      %v588 = vld [vmem:[%s172 + $0x50] sm:$0x1]
      %v589 = vld [vmem:[%s172 + $0x54] sm:$0xf]
      %v590 = vld [vmem:[%s172 + $0x58] sm:$0xf]
      %v591 = vld [vmem:[%s172 + $0x5c] sm:$0x1]
      %v592 = vld [vmem:[%s172 + $0x60] sm:$0xf]
      %v593 = vld [vmem:[%s172 + $0x64] sm:$0xf]
      %v594 = vld [vmem:[%s172 + $0x68] sm:$0x1]
      %v595 = vld [vmem:[%s172 + $0x6c] sm:$0xf]
      %v596 = vld [vmem:[%s172 + $0x70] sm:$0xf]
      %v597 = vld [vmem:[%s172 + $0x74] sm:$0x1]
      %v598 = vld [vmem:[%s172 + $0x78] sm:$0xf]
      %v599 = vld [vmem:[%s172 + $0x7c] sm:$0xf]
      %v600 = vld [vmem:[%s172 + $0x80] sm:$0x1]
      %v601 = vld [vmem:[%s172 + $0x84] sm:$0xf]
      %v602 = vld [vmem:[%s172 + $0x88] sm:$0xf]
      %v603 = vld [vmem:[%s172 + $0x8c] sm:$0x1]
      %v604 = vld [vmem:[%s172 + $0x90] sm:$0xf]
      %v605 = vld [vmem:[%s172 + $0x94] sm:$0xf]
      %v606 = vld [vmem:[%s172 + $0x98] sm:$0x1]
      %v607 = vld [vmem:[%s172 + $0x9c] sm:$0xf]
      %v608 = vld [vmem:[%s172 + $0xa0] sm:$0xf]
      %v609 = vld [vmem:[%s172 + $0xa4] sm:$0x1]
      %v610 = vld [vmem:[%s172 + $0xa8] sm:$0xf]
      %v611 = vld [vmem:[%s172 + $0xac] sm:$0xf]
      %v612 = vld [vmem:[%s172 + $0xb0] sm:$0x1]
      %v613 = vld [vmem:[%s172 + $0xb4] sm:$0xf]
      %v614 = vld [vmem:[%s172 + $0xb8] sm:$0xf]
      %v615 = vld [vmem:[%s172 + $0xbc] sm:$0x1]
      %vm616 = vsmask.f32 3328
      %vm617 = vsmask.f32 7440
      %vm618 = vmor %vm616, %vm617
      %v620 = vshrl.u32 %v568, 16
      %v622 = vrot.slane %v620, 4
      %v623 = vshll.u32 %v568, 16
      %v625 = vrot.slane %v623, 5
      %v626 = vor.u32 %v622, %v625
      %v627 = vrot.slane %v626, 4
      %v629 = vshll.u32 %v569, 16
      %v631 = vrot.slane %v629, 5
      %v632 = vsel %vm618, %v627, %v631
      %v633 = vshrl.u32 %v569, 16
      %v635 = vrot.slane %v633, 4
      %v636 = vor.u32 %v635, %v631
      %v637 = vrot.slane %v636, 4
      %v639 = vshll.u32 %v570, 16
      %v641 = vrot.slane %v639, 5
      %v642 = vsel %vm618, %v637, %v641
      %v644 = vshrl.u32 %v571, 16
      %v646 = vrot.slane %v644, 4
      %v647 = vshll.u32 %v571, 16
      %v649 = vrot.slane %v647, 5
      %v650 = vor.u32 %v646, %v649
      %v651 = vrot.slane %v650, 4
      %v653 = vshll.u32 %v572, 16
      %v655 = vrot.slane %v653, 5
      %v656 = vsel %vm618, %v651, %v655
      %v657 = vshrl.u32 %v572, 16
      %v659 = vrot.slane %v657, 4
      %v660 = vor.u32 %v659, %v655
      %v661 = vrot.slane %v660, 4
      %v663 = vshll.u32 %v573, 16
      %v665 = vrot.slane %v663, 5
      %v666 = vsel %vm618, %v661, %v665
      %v668 = vshrl.u32 %v574, 16
      %v670 = vrot.slane %v668, 4
      %v671 = vshll.u32 %v574, 16
      %v673 = vrot.slane %v671, 5
      %v674 = vor.u32 %v670, %v673
      %v675 = vrot.slane %v674, 4
      %v677 = vshll.u32 %v575, 16
      %v679 = vrot.slane %v677, 5
      %v680 = vsel %vm618, %v675, %v679
      %v681 = vshrl.u32 %v575, 16
      %v683 = vrot.slane %v681, 4
      %v684 = vor.u32 %v683, %v679
      %v685 = vrot.slane %v684, 4
      %v687 = vshll.u32 %v576, 16
      %v689 = vrot.slane %v687, 5
      %v690 = vsel %vm618, %v685, %v689
      %v692 = vshrl.u32 %v577, 16
      %v694 = vrot.slane %v692, 4
      %v695 = vshll.u32 %v577, 16
      %v697 = vrot.slane %v695, 5
      %v698 = vor.u32 %v694, %v697
      %v699 = vrot.slane %v698, 4
      %v701 = vshll.u32 %v578, 16
      %v703 = vrot.slane %v701, 5
      %v704 = vsel %vm618, %v699, %v703
      %v705 = vshrl.u32 %v578, 16
      %v707 = vrot.slane %v705, 4
      %v708 = vor.u32 %v707, %v703
      %v709 = vrot.slane %v708, 4
      %v711 = vshll.u32 %v579, 16
      %v713 = vrot.slane %v711, 5
      %v714 = vsel %vm618, %v709, %v713
      %v716 = vshrl.u32 %v580, 16
      %v718 = vrot.slane %v716, 4
      %v719 = vshll.u32 %v580, 16
      %v721 = vrot.slane %v719, 5
      %v722 = vor.u32 %v718, %v721
      %v723 = vrot.slane %v722, 4
      %v725 = vshll.u32 %v581, 16
      %v727 = vrot.slane %v725, 5
      %v728 = vsel %vm618, %v723, %v727
      %v729 = vshrl.u32 %v581, 16
      %v731 = vrot.slane %v729, 4
      %v732 = vor.u32 %v731, %v727
      %v733 = vrot.slane %v732, 4
      %v735 = vshll.u32 %v582, 16
      %v737 = vrot.slane %v735, 5
      %v738 = vsel %vm618, %v733, %v737
      %v740 = vshrl.u32 %v583, 16
      %v742 = vrot.slane %v740, 4
      %v743 = vshll.u32 %v583, 16
      %v745 = vrot.slane %v743, 5
      %v746 = vor.u32 %v742, %v745
      %v747 = vrot.slane %v746, 4
      %v749 = vshll.u32 %v584, 16
      %v751 = vrot.slane %v749, 5
      %v752 = vsel %vm618, %v747, %v751
      %v753 = vshrl.u32 %v584, 16
      %v755 = vrot.slane %v753, 4
      %v756 = vor.u32 %v755, %v751
      %v757 = vrot.slane %v756, 4
      %v759 = vshll.u32 %v585, 16
      %v761 = vrot.slane %v759, 5
      %v762 = vsel %vm618, %v757, %v761
      %v764 = vshrl.u32 %v586, 16
      %v766 = vrot.slane %v764, 4
      %v767 = vshll.u32 %v586, 16
      %v769 = vrot.slane %v767, 5
      %v770 = vor.u32 %v766, %v769
      %v771 = vrot.slane %v770, 4
      %v773 = vshll.u32 %v587, 16
      %v775 = vrot.slane %v773, 5
      %v776 = vsel %vm618, %v771, %v775
      %v777 = vshrl.u32 %v587, 16
      %v779 = vrot.slane %v777, 4
      %v780 = vor.u32 %v779, %v775
      %v781 = vrot.slane %v780, 4
      %v783 = vshll.u32 %v588, 16
      %v785 = vrot.slane %v783, 5
      %v786 = vsel %vm618, %v781, %v785
      %v788 = vshrl.u32 %v589, 16
      %v790 = vrot.slane %v788, 4
      %v791 = vshll.u32 %v589, 16
      %v793 = vrot.slane %v791, 5
      %v794 = vor.u32 %v790, %v793
      %v795 = vrot.slane %v794, 4
      %v797 = vshll.u32 %v590, 16
      %v799 = vrot.slane %v797, 5
      %v800 = vsel %vm618, %v795, %v799
      %v801 = vshrl.u32 %v590, 16
      %v803 = vrot.slane %v801, 4
      %v804 = vor.u32 %v803, %v799
      %v805 = vrot.slane %v804, 4
      %v807 = vshll.u32 %v591, 16
      %v809 = vrot.slane %v807, 5
      %v810 = vsel %vm618, %v805, %v809
      %v812 = vshrl.u32 %v592, 16
      %v814 = vrot.slane %v812, 4
      %v815 = vshll.u32 %v592, 16
      %v817 = vrot.slane %v815, 5
      %v818 = vor.u32 %v814, %v817
      %v819 = vrot.slane %v818, 4
      %v821 = vshll.u32 %v593, 16
      %v823 = vrot.slane %v821, 5
      %v824 = vsel %vm618, %v819, %v823
      %v825 = vshrl.u32 %v593, 16
      %v827 = vrot.slane %v825, 4
      %v828 = vor.u32 %v827, %v823
      %v829 = vrot.slane %v828, 4
      %v831 = vshll.u32 %v594, 16
      %v833 = vrot.slane %v831, 5
      %v834 = vsel %vm618, %v829, %v833
      %v836 = vshrl.u32 %v595, 16
      %v838 = vrot.slane %v836, 4
      %v839 = vshll.u32 %v595, 16
      %v841 = vrot.slane %v839, 5
      %v842 = vor.u32 %v838, %v841
      %v843 = vrot.slane %v842, 4
      %v845 = vshll.u32 %v596, 16
      %v847 = vrot.slane %v845, 5
      %v848 = vsel %vm618, %v843, %v847
      %v849 = vshrl.u32 %v596, 16
      %v851 = vrot.slane %v849, 4
      %v852 = vor.u32 %v851, %v847
      %v853 = vrot.slane %v852, 4
      %v855 = vshll.u32 %v597, 16
      %v857 = vrot.slane %v855, 5
      %v858 = vsel %vm618, %v853, %v857
      %v860 = vshrl.u32 %v598, 16
      %v862 = vrot.slane %v860, 4
      %v863 = vshll.u32 %v598, 16
      %v865 = vrot.slane %v863, 5
      %v866 = vor.u32 %v862, %v865
      %v867 = vrot.slane %v866, 4
      %v869 = vshll.u32 %v599, 16
      %v871 = vrot.slane %v869, 5
      %v872 = vsel %vm618, %v867, %v871
      %v873 = vshrl.u32 %v599, 16
      %v875 = vrot.slane %v873, 4
      %v876 = vor.u32 %v875, %v871
      %v877 = vrot.slane %v876, 4
      %v879 = vshll.u32 %v600, 16
      %v881 = vrot.slane %v879, 5
      %v882 = vsel %vm618, %v877, %v881
      %v884 = vshrl.u32 %v601, 16
      %v886 = vrot.slane %v884, 4
      %v887 = vshll.u32 %v601, 16
      %v889 = vrot.slane %v887, 5
      %v890 = vor.u32 %v886, %v889
      %v891 = vrot.slane %v890, 4
      %v893 = vshll.u32 %v602, 16
      %v895 = vrot.slane %v893, 5
      %v896 = vsel %vm618, %v891, %v895
      %v897 = vshrl.u32 %v602, 16
      %v899 = vrot.slane %v897, 4
      %v900 = vor.u32 %v899, %v895
      %v901 = vrot.slane %v900, 4
      %v903 = vshll.u32 %v603, 16
      %v905 = vrot.slane %v903, 5
      %v906 = vsel %vm618, %v901, %v905
      %v908 = vshrl.u32 %v604, 16
      %v910 = vrot.slane %v908, 4
      %v911 = vshll.u32 %v604, 16
      %v913 = vrot.slane %v911, 5
      %v914 = vor.u32 %v910, %v913
      %v915 = vrot.slane %v914, 4
      %v917 = vshll.u32 %v605, 16
      %v919 = vrot.slane %v917, 5
      %v920 = vsel %vm618, %v915, %v919
      %v921 = vshrl.u32 %v605, 16
      %v923 = vrot.slane %v921, 4
      %v924 = vor.u32 %v923, %v919
      %v925 = vrot.slane %v924, 4
      %v927 = vshll.u32 %v606, 16
      %v929 = vrot.slane %v927, 5
      %v930 = vsel %vm618, %v925, %v929
      %v932 = vshrl.u32 %v607, 16
      %v934 = vrot.slane %v932, 4
      %v935 = vshll.u32 %v607, 16
      %v937 = vrot.slane %v935, 5
      %v938 = vor.u32 %v934, %v937
      %v939 = vrot.slane %v938, 4
      %v941 = vshll.u32 %v608, 16
      %v943 = vrot.slane %v941, 5
      %v944 = vsel %vm618, %v939, %v943
      %v945 = vshrl.u32 %v608, 16
      %v947 = vrot.slane %v945, 4
      %v948 = vor.u32 %v947, %v943
      %v949 = vrot.slane %v948, 4
      %v951 = vshll.u32 %v609, 16
      %v953 = vrot.slane %v951, 5
      %v954 = vsel %vm618, %v949, %v953
      %v956 = vshrl.u32 %v610, 16
      %v958 = vrot.slane %v956, 4
      %v959 = vshll.u32 %v610, 16
      %v961 = vrot.slane %v959, 5
      %v962 = vor.u32 %v958, %v961
      %v963 = vrot.slane %v962, 4
      %v965 = vshll.u32 %v611, 16
      %v967 = vrot.slane %v965, 5
      %v968 = vsel %vm618, %v963, %v967
      %v969 = vshrl.u32 %v611, 16
      %v971 = vrot.slane %v969, 4
      %v972 = vor.u32 %v971, %v967
      %v973 = vrot.slane %v972, 4
      %v975 = vshll.u32 %v612, 16
      %v977 = vrot.slane %v975, 5
      %v978 = vsel %vm618, %v973, %v977
      %v980 = vshrl.u32 %v613, 16
      %v982 = vrot.slane %v980, 4
      %v983 = vshll.u32 %v613, 16
      %v985 = vrot.slane %v983, 5
      %v986 = vor.u32 %v982, %v985
      %v987 = vrot.slane %v986, 4
      %v989 = vshll.u32 %v614, 16
      %v991 = vrot.slane %v989, 5
      %v992 = vsel %vm618, %v987, %v991
      %v993 = vshrl.u32 %v614, 16
      %v995 = vrot.slane %v993, 4
      %v996 = vor.u32 %v995, %v991
      %v997 = vrot.slane %v996, 4
      %v999 = vshll.u32 %v615, 16
      %v1001 = vrot.slane %v999, 5
      %v1002 = vsel %vm618, %v997, %v1001
      %s1003 = scalar_lea.vmem %s1, 64
      %v1004 = vld [vmem:[%s1003] sm:$0xf]
      %v1005 = vld [vmem:[%s1003 + $0x4] sm:$0xf]
      %v1006 = vld [vmem:[%s1003 + $0x8] sm:$0xf]
      %v1007 = vld [vmem:[%s1003 + $0xc] sm:$0xf]
      %v1008 = vld [vmem:[%s1003 + $0x10] sm:$0xf]
      %v1009 = vld [vmem:[%s1003 + $0x14] sm:$0xf]
      %v1010 = vld [vmem:[%s1003 + $0x18] sm:$0xf]
      %v1011 = vld [vmem:[%s1003 + $0x1c] sm:$0xf]
      %v1012 = vld [vmem:[%s1003 + $0x20] sm:$0xf]
      %v1013 = vld [vmem:[%s1003 + $0x24] sm:$0xf]
      %v1014 = vld [vmem:[%s1003 + $0x28] sm:$0xf]
      %v1015 = vld [vmem:[%s1003 + $0x2c] sm:$0xf]
      %v1016 = vld [vmem:[%s1003 + $0x30] sm:$0xf]
      %v1017 = vld [vmem:[%s1003 + $0x34] sm:$0xf]
      %v1018 = vld [vmem:[%s1003 + $0x38] sm:$0xf]
      %v1019 = vld [vmem:[%s1003 + $0x3c] sm:$0xf]
      %v1020 = vunpack.c.l.b16 %v632
      %v1021 = vunpack.c.l.b16 %v642
      %v1022 = vunpack.c.l.b16 %v656
      %v1023 = vunpack.c.l.b16 %v666
      %v1024 = vunpack.c.l.b16 %v680
      %v1025 = vunpack.c.l.b16 %v690
      %v1026 = vunpack.c.l.b16 %v704
      %v1027 = vunpack.c.l.b16 %v714
      %v1028 = vunpack.c.l.b16 %v728
      %v1029 = vunpack.c.l.b16 %v738
      %v1030 = vunpack.c.l.b16 %v752
      %v1031 = vunpack.c.l.b16 %v762
      %v1032 = vunpack.c.l.b16 %v776
      %v1033 = vunpack.c.l.b16 %v786
      %v1034 = vunpack.c.l.b16 %v800
      %v1035 = vunpack.c.l.b16 %v810
      %v1036 = vunpack.c.l.b16 %v824
      %v1037 = vunpack.c.l.b16 %v834
      %v1038 = vunpack.c.l.b16 %v848
      %v1039 = vunpack.c.l.b16 %v858
      %v1040 = vunpack.c.l.b16 %v872
      %v1041 = vunpack.c.l.b16 %v882
      %v1042 = vunpack.c.l.b16 %v896
      %v1043 = vunpack.c.l.b16 %v906
      %v1044 = vunpack.c.l.b16 %v920
      %v1045 = vunpack.c.l.b16 %v930
      %v1046 = vunpack.c.l.b16 %v944
      %v1047 = vunpack.c.l.b16 %v954
      %v1048 = vunpack.c.l.b16 %v968
      %v1049 = vunpack.c.l.b16 %v978
      %v1050 = vunpack.c.l.b16 %v992
      %v1051 = vunpack.c.l.b16 %v1002
      %v1052 = vpack.c.b16 %v1021, %v1020
      %v1053 = vpack.c.b16 %v1023, %v1022
      %v1054 = vpack.c.b16 %v1025, %v1024
      %v1055 = vpack.c.b16 %v1027, %v1026
      %v1056 = vpack.c.b16 %v1029, %v1028
      %v1057 = vpack.c.b16 %v1031, %v1030
      %v1058 = vpack.c.b16 %v1033, %v1032
      %v1059 = vpack.c.b16 %v1035, %v1034
      %v1060 = vpack.c.b16 %v1037, %v1036
      %v1061 = vpack.c.b16 %v1039, %v1038
      %v1062 = vpack.c.b16 %v1041, %v1040
      %v1063 = vpack.c.b16 %v1043, %v1042
      %v1064 = vpack.c.b16 %v1045, %v1044
      %v1065 = vpack.c.b16 %v1047, %v1046
      %v1066 = vpack.c.b16 %v1049, %v1048
      %v1067 = vpack.c.b16 %v1051, %v1050
      %v1100 = vunpack.c.l.b16 %v1004
      %v1101 = vunpack.c.l.b16 %v1005
      %v1102 = vunpack.c.l.b16 %v1006
      %v1103 = vunpack.c.l.b16 %v1007
      %v1104 = vunpack.c.l.b16 %v1008
      %v1105 = vunpack.c.l.b16 %v1009
      %v1106 = vunpack.c.l.b16 %v1010
      %v1107 = vunpack.c.l.b16 %v1011
      %v1108 = vunpack.c.l.b16 %v1012
      %v1109 = vunpack.c.l.b16 %v1013
      %v1110 = vunpack.c.l.b16 %v1014
      %v1111 = vunpack.c.l.b16 %v1015
      %v1112 = vunpack.c.l.b16 %v1016
      %v1113 = vunpack.c.l.b16 %v1017
      %v1114 = vunpack.c.l.b16 %v1018
      %v1115 = vunpack.c.l.b16 %v1019
      %v1116 = vpack.c.b16 %v1101, %v1100
      %v1117 = vpack.c.b16 %v1103, %v1102
      %v1118 = vpack.c.b16 %v1105, %v1104
      %v1119 = vpack.c.b16 %v1107, %v1106
      %v1120 = vpack.c.b16 %v1109, %v1108
      %v1121 = vpack.c.b16 %v1111, %v1110
      %v1122 = vpack.c.b16 %v1113, %v1112
      %v1123 = vpack.c.b16 %v1115, %v1114
      %1132 = vmatprep.subr.bf16.mxu0 0
      %1133 = vmatpush1.bf16.msra.mxu0 %v1123
      %1134 = vmatprep.subr.bf16.mxu0 0
      %1135 = vmatpush1.bf16.msra.mxu0 %v1122
      %1136 = vmatprep.subr.bf16.mxu0 0
      %1137 = vmatpush1.bf16.msra.mxu0 %v1121
      %1138 = vmatprep.subr.bf16.mxu0 0
      %1139 = vmatpush1.bf16.msra.mxu0 %v1120
      %1140 = vmatprep.subr.bf16.mxu0 0
      %1141 = vmatpush1.bf16.msra.mxu0 %v1119
      %1142 = vmatprep.subr.bf16.mxu0 0
      %1143 = vmatpush1.bf16.msra.mxu0 %v1118
      %1144 = vmatprep.subr.bf16.mxu0 0
      %1145 = vmatpush1.bf16.msra.mxu0 %v1117
      %1146 = vmatprep.subr.bf16.mxu0 0
      %1147 = vmatpush1.bf16.msra.mxu0 %v1116
      %1148 = vmatprep.subr.bf16.mxu0 0
      %1149 = vmatpush2.bf16.msra.mxu0 0
      %1150 = vmatprep.subr.bf16.mxu0 0
      %1151 = vmatpush2.bf16.msra.mxu0 0
      %1152 = vmatprep.subr.bf16.mxu0 0
      %1153 = vmatpush2.bf16.msra.mxu0 0
      %1154 = vmatprep.subr.bf16.mxu0 0
      %1155 = vmatpush2.bf16.msra.mxu0 0
      %1156 = vmatprep.subr.bf16.mxu0 0
      %1157 = vmatpush2.bf16.msra.mxu0 0
      %1158 = vmatprep.subr.bf16.mxu0 0
      %1159 = vmatpush2.bf16.msra.mxu0 0
      %1160 = vmatprep.subr.bf16.mxu0 0
      %1161 = vmatpush2.bf16.msra.mxu0 0
      %1162 = vmatprep.subr.bf16.mxu0 0
      %1163 = vmatpush2.bf16.msra.mxu0 0
      %1164 = vmatprep.mubr.bf16.mxu0 0
      %1165 = vmatmul.mubr.bf16.gmra.mxu0 %v1052
      %v1166 = vpop.f32.mrf.mxu0
      %v1167 = vadd.f32 0.0, %v1166
      %v1168 = vpop.f32.mrf.mxu0
      %v1169 = vpop.f32.mrf.mxu0
      %v1170 = vadd.f32 0.0, %v1169
      %v1171 = vpop.f32.mrf.mxu0
      %1172 = vmatprep.mubr.bf16.mxu0 0
      %1173 = vmatmul.mubr.bf16.gmra.mxu0 %v1053
      %v1174 = vpop.f32.mrf.mxu0
      %v1175 = vadd.f32 0.0, %v1174
      %v1176 = vpop.f32.mrf.mxu0
      %v1177 = vpop.f32.mrf.mxu0
      %v1178 = vadd.f32 0.0, %v1177
      %v1179 = vpop.f32.mrf.mxu0
      %1180 = vmatprep.mubr.bf16.mxu0 0
      %1181 = vmatmul.mubr.bf16.gmra.mxu0 %v1054
      %v1182 = vpop.f32.mrf.mxu0
      %v1183 = vadd.f32 0.0, %v1182
      %v1184 = vpop.f32.mrf.mxu0
      %v1185 = vpop.f32.mrf.mxu0
      %v1186 = vadd.f32 0.0, %v1185
      %v1187 = vpop.f32.mrf.mxu0
      %1188 = vmatprep.mubr.bf16.mxu0 0
      %1189 = vmatmul.mubr.bf16.gmra.mxu0 %v1055
      %v1190 = vpop.f32.mrf.mxu0
      %v1191 = vadd.f32 0.0, %v1190
      %v1192 = vpop.f32.mrf.mxu0
      %v1193 = vpop.f32.mrf.mxu0
      %v1194 = vadd.f32 0.0, %v1193
      %v1195 = vpop.f32.mrf.mxu0
      %1196 = vmatprep.mubr.bf16.mxu0 0
      %1197 = vmatmul.mubr.bf16.gmra.mxu0 %v1056
      %v1198 = vpop.f32.mrf.mxu0
      %v1199 = vadd.f32 0.0, %v1198
      %v1200 = vpop.f32.mrf.mxu0
      %v1201 = vpop.f32.mrf.mxu0
      %v1202 = vadd.f32 0.0, %v1201
      %v1203 = vpop.f32.mrf.mxu0
      %1204 = vmatprep.mubr.bf16.mxu0 0
      %1205 = vmatmul.mubr.bf16.gmra.mxu0 %v1057
      %v1206 = vpop.f32.mrf.mxu0
      %v1207 = vadd.f32 0.0, %v1206
      %v1208 = vpop.f32.mrf.mxu0
      %v1209 = vpop.f32.mrf.mxu0
      %v1210 = vadd.f32 0.0, %v1209
      %v1211 = vpop.f32.mrf.mxu0
      %1212 = vmatprep.mubr.bf16.mxu0 0
      %1213 = vmatmul.mubr.bf16.gmra.mxu0 %v1058
      %v1214 = vpop.f32.mrf.mxu0
      %v1215 = vadd.f32 0.0, %v1214
      %v1216 = vpop.f32.mrf.mxu0
      %v1217 = vpop.f32.mrf.mxu0
      %v1218 = vadd.f32 0.0, %v1217
      %v1219 = vpop.f32.mrf.mxu0
      %1220 = vmatprep.mubr.bf16.mxu0 0
      %1221 = vmatmul.mubr.bf16.gmra.mxu0 %v1059
      %v1222 = vpop.f32.mrf.mxu0
      %v1223 = vadd.f32 0.0, %v1222
      %v1224 = vpop.f32.mrf.mxu0
      %v1225 = vpop.f32.mrf.mxu0
      %v1226 = vadd.f32 0.0, %v1225
      %v1227 = vpop.f32.mrf.mxu0
      %1228 = vmatprep.mubr.bf16.mxu0 0
      %1229 = vmatmul.mubr.bf16.gmra.mxu0 %v1060
      %v1230 = vpop.f32.mrf.mxu0
      %v1231 = vadd.f32 0.0, %v1230
      %v1232 = vpop.f32.mrf.mxu0
      %v1233 = vpop.f32.mrf.mxu0
      %v1234 = vadd.f32 0.0, %v1233
      %v1235 = vpop.f32.mrf.mxu0
      %1236 = vmatprep.mubr.bf16.mxu0 0
      %1237 = vmatmul.mubr.bf16.gmra.mxu0 %v1061
      %v1238 = vpop.f32.mrf.mxu0
      %v1239 = vadd.f32 0.0, %v1238
      %v1240 = vpop.f32.mrf.mxu0
      %v1241 = vpop.f32.mrf.mxu0
      %v1242 = vadd.f32 0.0, %v1241
      %v1243 = vpop.f32.mrf.mxu0
      %1244 = vmatprep.mubr.bf16.mxu0 0
      %1245 = vmatmul.mubr.bf16.gmra.mxu0 %v1062
      %v1246 = vpop.f32.mrf.mxu0
      %v1247 = vadd.f32 0.0, %v1246
      %v1248 = vpop.f32.mrf.mxu0
      %v1249 = vpop.f32.mrf.mxu0
      %v1250 = vadd.f32 0.0, %v1249
      %v1251 = vpop.f32.mrf.mxu0
      %1252 = vmatprep.mubr.bf16.mxu0 0
      %1253 = vmatmul.mubr.bf16.gmra.mxu0 %v1063
      %v1254 = vpop.f32.mrf.mxu0
      %v1255 = vadd.f32 0.0, %v1254
      %v1256 = vpop.f32.mrf.mxu0
      %v1257 = vpop.f32.mrf.mxu0
      %v1258 = vadd.f32 0.0, %v1257
      %v1259 = vpop.f32.mrf.mxu0
      %1260 = vmatprep.mubr.bf16.mxu0 0
      %1261 = vmatmul.mubr.bf16.gmra.mxu0 %v1064
      %v1262 = vpop.f32.mrf.mxu0
      %v1263 = vadd.f32 0.0, %v1262
      %v1264 = vpop.f32.mrf.mxu0
      %v1265 = vpop.f32.mrf.mxu0
      %v1266 = vadd.f32 0.0, %v1265
      %v1267 = vpop.f32.mrf.mxu0
      %1268 = vmatprep.mubr.bf16.mxu0 0
      %1269 = vmatmul.mubr.bf16.gmra.mxu0 %v1065
      %v1270 = vpop.f32.mrf.mxu0
      %v1271 = vadd.f32 0.0, %v1270
      %v1272 = vpop.f32.mrf.mxu0
      %v1273 = vpop.f32.mrf.mxu0
      %v1274 = vadd.f32 0.0, %v1273
      %v1275 = vpop.f32.mrf.mxu0
      %1276 = vmatprep.mubr.bf16.mxu0 0
      %1277 = vmatmul.mubr.bf16.gmra.mxu0 %v1066
      %v1278 = vpop.f32.mrf.mxu0
      %v1279 = vadd.f32 0.0, %v1278
      %v1280 = vpop.f32.mrf.mxu0
      %v1281 = vpop.f32.mrf.mxu0
      %v1282 = vadd.f32 0.0, %v1281
      %v1283 = vpop.f32.mrf.mxu0
      %1284 = vmatprep.mubr.bf16.mxu0 0
      %1285 = vmatmul.mubr.bf16.gmra.mxu0 %v1067
      %v1286 = vpop.f32.mrf.mxu0
      %v1287 = vadd.f32 0.0, %v1286
      %v1288 = vpop.f32.mrf.mxu0
      %v1289 = vpop.f32.mrf.mxu0
      %v1290 = vadd.f32 0.0, %v1289
      %v1291 = vpop.f32.mrf.mxu0
      %1292 = vdwg.mxu0
      %v1293 = vld [vmem:[#allocation2] sm:$0xff]
      %v1294 = vld [vmem:[#allocation2 + $0x8] sm:$0xff]
      %v1295 = vld [vmem:[#allocation2 + $0x10] sm:$0xff]
      %v1296 = vld [vmem:[#allocation2 + $0x18] sm:$0xff]
      %v1297 = vld [vmem:[#allocation2 + $0x20] sm:$0xff]
      %v1298 = vld [vmem:[#allocation2 + $0x28] sm:$0xff]
      %v1299 = vld [vmem:[#allocation2 + $0x30] sm:$0xff]
      %v1300 = vld [vmem:[#allocation2 + $0x38] sm:$0xff]
      %v1301 = vld [vmem:[#allocation2 + $0x40] sm:$0xff]
      %v1302 = vld [vmem:[#allocation2 + $0x48] sm:$0xff]
      %v1303 = vld [vmem:[#allocation2 + $0x50] sm:$0xff]
      %v1304 = vld [vmem:[#allocation2 + $0x58] sm:$0xff]
      %v1305 = vld [vmem:[#allocation2 + $0x60] sm:$0xff]
      %v1306 = vld [vmem:[#allocation2 + $0x68] sm:$0xff]
      %v1307 = vld [vmem:[#allocation2 + $0x70] sm:$0xff]
      %v1308 = vld [vmem:[#allocation2 + $0x78] sm:$0xff]
      %v1309 = vld [vmem:[#allocation2 + $0x80] sm:$0xff]
      %v1310 = vld [vmem:[#allocation2 + $0x88] sm:$0xff]
      %v1311 = vld [vmem:[#allocation2 + $0x90] sm:$0xff]
      %v1312 = vld [vmem:[#allocation2 + $0x98] sm:$0xff]
      %v1313 = vld [vmem:[#allocation2 + $0xa0] sm:$0xff]
      %v1314 = vld [vmem:[#allocation2 + $0xa8] sm:$0xff]
      %v1315 = vld [vmem:[#allocation2 + $0xb0] sm:$0xff]
      %v1316 = vld [vmem:[#allocation2 + $0xb8] sm:$0xff]
      %v1317 = vld [vmem:[#allocation2 + $0xc0] sm:$0xff]
      %v1318 = vld [vmem:[#allocation2 + $0xc8] sm:$0xff]
      %v1319 = vld [vmem:[#allocation2 + $0xd0] sm:$0xff]
      %v1320 = vld [vmem:[#allocation2 + $0xd8] sm:$0xff]
      %v1321 = vld [vmem:[#allocation2 + $0xe0] sm:$0xff]
      %v1322 = vld [vmem:[#allocation2 + $0xe8] sm:$0xff]
      %v1323 = vld [vmem:[#allocation2 + $0xf0] sm:$0xff]
      %v1324 = vld [vmem:[#allocation2 + $0xf8] sm:$0xff]
      %v1325 = vadd.f32 %v1293, %v1167
      %v1326 = vadd.f32 %v1294, %v1170
      %v1327 = vadd.f32 %v1295, %v1175
      %v1328 = vadd.f32 %v1296, %v1178
      %v1329 = vadd.f32 %v1297, %v1183
      %v1330 = vadd.f32 %v1298, %v1186
      %v1331 = vadd.f32 %v1299, %v1191
      %v1332 = vadd.f32 %v1300, %v1194
      %v1333 = vadd.f32 %v1301, %v1199
      %v1334 = vadd.f32 %v1302, %v1202
      %v1335 = vadd.f32 %v1303, %v1207
      %v1336 = vadd.f32 %v1304, %v1210
      %v1337 = vadd.f32 %v1305, %v1215
      %v1338 = vadd.f32 %v1306, %v1218
      %v1339 = vadd.f32 %v1307, %v1223
      %v1340 = vadd.f32 %v1308, %v1226
      %v1341 = vadd.f32 %v1309, %v1231
      %v1342 = vadd.f32 %v1310, %v1234
      %v1343 = vadd.f32 %v1311, %v1239
      %v1344 = vadd.f32 %v1312, %v1242
      %v1345 = vadd.f32 %v1313, %v1247
      %v1346 = vadd.f32 %v1314, %v1250
      %v1347 = vadd.f32 %v1315, %v1255
      %v1348 = vadd.f32 %v1316, %v1258
      %v1349 = vadd.f32 %v1317, %v1263
      %v1350 = vadd.f32 %v1318, %v1266
      %v1351 = vadd.f32 %v1319, %v1271
      %v1352 = vadd.f32 %v1320, %v1274
      %v1353 = vadd.f32 %v1321, %v1279
      %v1354 = vadd.f32 %v1322, %v1282
      %v1355 = vadd.f32 %v1323, %v1287
      %v1356 = vadd.f32 %v1324, %v1290
      %1357 = vst [vmem:[#allocation2] sm:$0xff] %v1325
      %1358 = vst [vmem:[#allocation2 + $0x8] sm:$0xff] %v1326
      %1359 = vst [vmem:[#allocation2 + $0x10] sm:$0xff] %v1327
      %1360 = vst [vmem:[#allocation2 + $0x18] sm:$0xff] %v1328
      %1361 = vst [vmem:[#allocation2 + $0x20] sm:$0xff] %v1329
      %1362 = vst [vmem:[#allocation2 + $0x28] sm:$0xff] %v1330
      %1363 = vst [vmem:[#allocation2 + $0x30] sm:$0xff] %v1331
      %1364 = vst [vmem:[#allocation2 + $0x38] sm:$0xff] %v1332
      %1365 = vst [vmem:[#allocation2 + $0x40] sm:$0xff] %v1333
      %1366 = vst [vmem:[#allocation2 + $0x48] sm:$0xff] %v1334
      %1367 = vst [vmem:[#allocation2 + $0x50] sm:$0xff] %v1335
      %1368 = vst [vmem:[#allocation2 + $0x58] sm:$0xff] %v1336
      %1369 = vst [vmem:[#allocation2 + $0x60] sm:$0xff] %v1337
      %1370 = vst [vmem:[#allocation2 + $0x68] sm:$0xff] %v1338
      %1371 = vst [vmem:[#allocation2 + $0x70] sm:$0xff] %v1339
      %1372 = vst [vmem:[#allocation2 + $0x78] sm:$0xff] %v1340
      %1373 = vst [vmem:[#allocation2 + $0x80] sm:$0xff] %v1341
      %1374 = vst [vmem:[#allocation2 + $0x88] sm:$0xff] %v1342
      %1375 = vst [vmem:[#allocation2 + $0x90] sm:$0xff] %v1343
      %1376 = vst [vmem:[#allocation2 + $0x98] sm:$0xff] %v1344
      %1377 = vst [vmem:[#allocation2 + $0xa0] sm:$0xff] %v1345
      %1378 = vst [vmem:[#allocation2 + $0xa8] sm:$0xff] %v1346
      %1379 = vst [vmem:[#allocation2 + $0xb0] sm:$0xff] %v1347
      %1380 = vst [vmem:[#allocation2 + $0xb8] sm:$0xff] %v1348
      %1381 = vst [vmem:[#allocation2 + $0xc0] sm:$0xff] %v1349
      %1382 = vst [vmem:[#allocation2 + $0xc8] sm:$0xff] %v1350
      %1383 = vst [vmem:[#allocation2 + $0xd0] sm:$0xff] %v1351
      %1384 = vst [vmem:[#allocation2 + $0xd8] sm:$0xff] %v1352
      %1385 = vst [vmem:[#allocation2 + $0xe0] sm:$0xff] %v1353
      %1386 = vst [vmem:[#allocation2 + $0xe8] sm:$0xff] %v1354
      %1387 = vst [vmem:[#allocation2 + $0xf0] sm:$0xff] %v1355
      %1388 = vst [vmem:[#allocation2 + $0xf8] sm:$0xff] %v1356
      %v1389 = vld [vmem:[%s172] sm:$0xe]
      %v1390 = vld [vmem:[%s172 + $0x4] sm:$0xf]
      %v1391 = vld [vmem:[%s172 + $0x8] sm:$0x1]
      %v1392 = vld [vmem:[%s172 + $0xc] sm:$0xe]
      %v1393 = vld [vmem:[%s172 + $0x10] sm:$0xf]
      %v1394 = vld [vmem:[%s172 + $0x14] sm:$0x1]
      %v1395 = vld [vmem:[%s172 + $0x18] sm:$0xe]
      %v1396 = vld [vmem:[%s172 + $0x1c] sm:$0xf]
      %v1397 = vld [vmem:[%s172 + $0x20] sm:$0x1]
      %v1398 = vld [vmem:[%s172 + $0x24] sm:$0xe]
      %v1399 = vld [vmem:[%s172 + $0x28] sm:$0xf]
      %v1400 = vld [vmem:[%s172 + $0x2c] sm:$0x1]
      %v1401 = vld [vmem:[%s172 + $0x30] sm:$0xe]
      %v1402 = vld [vmem:[%s172 + $0x34] sm:$0xf]
      %v1403 = vld [vmem:[%s172 + $0x38] sm:$0x1]
      %v1404 = vld [vmem:[%s172 + $0x3c] sm:$0xe]
      %v1405 = vld [vmem:[%s172 + $0x40] sm:$0xf]
      %v1406 = vld [vmem:[%s172 + $0x44] sm:$0x1]
      %v1407 = vld [vmem:[%s172 + $0x48] sm:$0xe]
      %v1408 = vld [vmem:[%s172 + $0x4c] sm:$0xf]
      %v1409 = vld [vmem:[%s172 + $0x50] sm:$0x1]
      %v1410 = vld [vmem:[%s172 + $0x54] sm:$0xe]
      %v1411 = vld [vmem:[%s172 + $0x58] sm:$0xf]
      %v1412 = vld [vmem:[%s172 + $0x5c] sm:$0x1]
      %v1413 = vld [vmem:[%s172 + $0x60] sm:$0xe]
      %v1414 = vld [vmem:[%s172 + $0x64] sm:$0xf]
      %v1415 = vld [vmem:[%s172 + $0x68] sm:$0x1]
      %v1416 = vld [vmem:[%s172 + $0x6c] sm:$0xe]
      %v1417 = vld [vmem:[%s172 + $0x70] sm:$0xf]
      %v1418 = vld [vmem:[%s172 + $0x74] sm:$0x1]
      %v1419 = vld [vmem:[%s172 + $0x78] sm:$0xe]
      %v1420 = vld [vmem:[%s172 + $0x7c] sm:$0xf]
      %v1421 = vld [vmem:[%s172 + $0x80] sm:$0x1]
      %v1422 = vld [vmem:[%s172 + $0x84] sm:$0xe]
      %v1423 = vld [vmem:[%s172 + $0x88] sm:$0xf]
      %v1424 = vld [vmem:[%s172 + $0x8c] sm:$0x1]
      %v1425 = vld [vmem:[%s172 + $0x90] sm:$0xe]
      %v1426 = vld [vmem:[%s172 + $0x94] sm:$0xf]
      %v1427 = vld [vmem:[%s172 + $0x98] sm:$0x1]
      %v1428 = vld [vmem:[%s172 + $0x9c] sm:$0xe]
      %v1429 = vld [vmem:[%s172 + $0xa0] sm:$0xf]
      %v1430 = vld [vmem:[%s172 + $0xa4] sm:$0x1]
      %v1431 = vld [vmem:[%s172 + $0xa8] sm:$0xe]
      %v1432 = vld [vmem:[%s172 + $0xac] sm:$0xf]
      %v1433 = vld [vmem:[%s172 + $0xb0] sm:$0x1]
      %v1434 = vld [vmem:[%s172 + $0xb4] sm:$0xe]
      %v1435 = vld [vmem:[%s172 + $0xb8] sm:$0xf]
      %v1436 = vld [vmem:[%s172 + $0xbc] sm:$0x1]
      %vm1485 = vcmask 1042432
      %vm1486 = vcmask 1046532
      %vm1487 = vmor %vm1485, %vm1486
      %v1488 = vrot.slane %v1389, 5
      %v1489 = vrot.slane %v1488, 4
      %v1490 = vrot.slane %v1390, 5
      %v1491 = vsel %vm1487, %v1489, %v1490
      %v1492 = vrot.slane %v1490, 4
      %v1493 = vrot.slane %v1391, 5
      %v1494 = vsel %vm1487, %v1492, %v1493
      %v1495 = vrot.slane %v1392, 5
      %v1496 = vrot.slane %v1495, 4
      %v1497 = vrot.slane %v1393, 5
      %v1498 = vsel %vm1487, %v1496, %v1497
      %v1499 = vrot.slane %v1497, 4
      %v1500 = vrot.slane %v1394, 5
      %v1501 = vsel %vm1487, %v1499, %v1500
      %v1502 = vrot.slane %v1395, 5
      %v1503 = vrot.slane %v1502, 4
      %v1504 = vrot.slane %v1396, 5
      %v1505 = vsel %vm1487, %v1503, %v1504
      %v1506 = vrot.slane %v1504, 4
      %v1507 = vrot.slane %v1397, 5
      %v1508 = vsel %vm1487, %v1506, %v1507
      %v1509 = vrot.slane %v1398, 5
      %v1510 = vrot.slane %v1509, 4
      %v1511 = vrot.slane %v1399, 5
      %v1512 = vsel %vm1487, %v1510, %v1511
      %v1513 = vrot.slane %v1511, 4
      %v1514 = vrot.slane %v1400, 5
      %v1515 = vsel %vm1487, %v1513, %v1514
      %v1516 = vrot.slane %v1401, 5
      %v1517 = vrot.slane %v1516, 4
      %v1518 = vrot.slane %v1402, 5
      %v1519 = vsel %vm1487, %v1517, %v1518
      %v1520 = vrot.slane %v1518, 4
      %v1521 = vrot.slane %v1403, 5
      %v1522 = vsel %vm1487, %v1520, %v1521
      %v1523 = vrot.slane %v1404, 5
      %v1524 = vrot.slane %v1523, 4
      %v1525 = vrot.slane %v1405, 5
      %v1526 = vsel %vm1487, %v1524, %v1525
      %v1527 = vrot.slane %v1525, 4
      %v1528 = vrot.slane %v1406, 5
      %v1529 = vsel %vm1487, %v1527, %v1528
      %v1530 = vrot.slane %v1407, 5
      %v1531 = vrot.slane %v1530, 4
      %v1532 = vrot.slane %v1408, 5
      %v1533 = vsel %vm1487, %v1531, %v1532
      %v1534 = vrot.slane %v1532, 4
      %v1535 = vrot.slane %v1409, 5
      %v1536 = vsel %vm1487, %v1534, %v1535
      %v1537 = vrot.slane %v1410, 5
      %v1538 = vrot.slane %v1537, 4
      %v1539 = vrot.slane %v1411, 5
      %v1540 = vsel %vm1487, %v1538, %v1539
      %v1541 = vrot.slane %v1539, 4
      %v1542 = vrot.slane %v1412, 5
      %v1543 = vsel %vm1487, %v1541, %v1542
      %v1544 = vrot.slane %v1413, 5
      %v1545 = vrot.slane %v1544, 4
      %v1546 = vrot.slane %v1414, 5
      %v1547 = vsel %vm1487, %v1545, %v1546
      %v1548 = vrot.slane %v1546, 4
      %v1549 = vrot.slane %v1415, 5
      %v1550 = vsel %vm1487, %v1548, %v1549
      %v1551 = vrot.slane %v1416, 5
      %v1552 = vrot.slane %v1551, 4
      %v1553 = vrot.slane %v1417, 5
      %v1554 = vsel %vm1487, %v1552, %v1553
      %v1555 = vrot.slane %v1553, 4
      %v1556 = vrot.slane %v1418, 5
      %v1557 = vsel %vm1487, %v1555, %v1556
      %v1558 = vrot.slane %v1419, 5
      %v1559 = vrot.slane %v1558, 4
      %v1560 = vrot.slane %v1420, 5
      %v1561 = vsel %vm1487, %v1559, %v1560
      %v1562 = vrot.slane %v1560, 4
      %v1563 = vrot.slane %v1421, 5
      %v1564 = vsel %vm1487, %v1562, %v1563
      %v1565 = vrot.slane %v1422, 5
      %v1566 = vrot.slane %v1565, 4
      %v1567 = vrot.slane %v1423, 5
      %v1568 = vsel %vm1487, %v1566, %v1567
      %v1569 = vrot.slane %v1567, 4
      %v1570 = vrot.slane %v1424, 5
      %v1571 = vsel %vm1487, %v1569, %v1570
      %v1572 = vrot.slane %v1425, 5
      %v1573 = vrot.slane %v1572, 4
      %v1574 = vrot.slane %v1426, 5
      %v1575 = vsel %vm1487, %v1573, %v1574
      %v1576 = vrot.slane %v1574, 4
      %v1577 = vrot.slane %v1427, 5
      %v1578 = vsel %vm1487, %v1576, %v1577
      %v1579 = vrot.slane %v1428, 5
      %v1580 = vrot.slane %v1579, 4
      %v1581 = vrot.slane %v1429, 5
      %v1582 = vsel %vm1487, %v1580, %v1581
      %v1583 = vrot.slane %v1581, 4
      %v1584 = vrot.slane %v1430, 5
      %v1585 = vsel %vm1487, %v1583, %v1584
      %v1586 = vrot.slane %v1431, 5
      %v1587 = vrot.slane %v1586, 4
      %v1588 = vrot.slane %v1432, 5
      %v1589 = vsel %vm1487, %v1587, %v1588
      %v1590 = vrot.slane %v1588, 4
      %v1591 = vrot.slane %v1433, 5
      %v1592 = vsel %vm1487, %v1590, %v1591
      %v1593 = vrot.slane %v1434, 5
      %v1594 = vrot.slane %v1593, 4
      %v1595 = vrot.slane %v1435, 5
      %v1596 = vsel %vm1487, %v1594, %v1595
      %v1597 = vrot.slane %v1595, 4
      %v1598 = vrot.slane %v1436, 5
      %v1599 = vsel %vm1487, %v1597, %v1598
      %s1600 = scalar_lea.vmem %s1, 128
      %v1601 = vld [vmem:[%s1600] sm:$0xf]
      %v1602 = vld [vmem:[%s1600 + $0x4] sm:$0xf]
      %v1603 = vld [vmem:[%s1600 + $0x8] sm:$0xf]
      %v1604 = vld [vmem:[%s1600 + $0xc] sm:$0xf]
      %v1605 = vld [vmem:[%s1600 + $0x10] sm:$0xf]
      %v1606 = vld [vmem:[%s1600 + $0x14] sm:$0xf]
      %v1607 = vld [vmem:[%s1600 + $0x18] sm:$0xf]
      %v1608 = vld [vmem:[%s1600 + $0x1c] sm:$0xf]
      %v1609 = vld [vmem:[%s1600 + $0x20] sm:$0xf]
      %v1610 = vld [vmem:[%s1600 + $0x24] sm:$0xf]
      %v1611 = vld [vmem:[%s1600 + $0x28] sm:$0xf]
      %v1612 = vld [vmem:[%s1600 + $0x2c] sm:$0xf]
      %v1613 = vld [vmem:[%s1600 + $0x30] sm:$0xf]
      %v1614 = vld [vmem:[%s1600 + $0x34] sm:$0xf]
      %v1615 = vld [vmem:[%s1600 + $0x38] sm:$0xf]
      %v1616 = vld [vmem:[%s1600 + $0x3c] sm:$0xf]
      %v1617 = vunpack.c.l.b16 %v1491
      %v1618 = vunpack.c.l.b16 %v1494
      %v1619 = vunpack.c.l.b16 %v1498
      %v1620 = vunpack.c.l.b16 %v1501
      %v1621 = vunpack.c.l.b16 %v1505
      %v1622 = vunpack.c.l.b16 %v1508
      %v1623 = vunpack.c.l.b16 %v1512
      %v1624 = vunpack.c.l.b16 %v1515
      %v1625 = vunpack.c.l.b16 %v1519
      %v1626 = vunpack.c.l.b16 %v1522
      %v1627 = vunpack.c.l.b16 %v1526
      %v1628 = vunpack.c.l.b16 %v1529
      %v1629 = vunpack.c.l.b16 %v1533
      %v1630 = vunpack.c.l.b16 %v1536
      %v1631 = vunpack.c.l.b16 %v1540
      %v1632 = vunpack.c.l.b16 %v1543
      %v1633 = vunpack.c.l.b16 %v1547
      %v1634 = vunpack.c.l.b16 %v1550
      %v1635 = vunpack.c.l.b16 %v1554
      %v1636 = vunpack.c.l.b16 %v1557
      %v1637 = vunpack.c.l.b16 %v1561
      %v1638 = vunpack.c.l.b16 %v1564
      %v1639 = vunpack.c.l.b16 %v1568
      %v1640 = vunpack.c.l.b16 %v1571
      %v1641 = vunpack.c.l.b16 %v1575
      %v1642 = vunpack.c.l.b16 %v1578
      %v1643 = vunpack.c.l.b16 %v1582
      %v1644 = vunpack.c.l.b16 %v1585
      %v1645 = vunpack.c.l.b16 %v1589
      %v1646 = vunpack.c.l.b16 %v1592
      %v1647 = vunpack.c.l.b16 %v1596
      %v1648 = vunpack.c.l.b16 %v1599
      %v1649 = vpack.c.b16 %v1618, %v1617
      %v1650 = vpack.c.b16 %v1620, %v1619
      %v1651 = vpack.c.b16 %v1622, %v1621
      %v1652 = vpack.c.b16 %v1624, %v1623
      %v1653 = vpack.c.b16 %v1626, %v1625
      %v1654 = vpack.c.b16 %v1628, %v1627
      %v1655 = vpack.c.b16 %v1630, %v1629
      %v1656 = vpack.c.b16 %v1632, %v1631
      %v1657 = vpack.c.b16 %v1634, %v1633
      %v1658 = vpack.c.b16 %v1636, %v1635
      %v1659 = vpack.c.b16 %v1638, %v1637
      %v1660 = vpack.c.b16 %v1640, %v1639
      %v1661 = vpack.c.b16 %v1642, %v1641
      %v1662 = vpack.c.b16 %v1644, %v1643
      %v1663 = vpack.c.b16 %v1646, %v1645
      %v1664 = vpack.c.b16 %v1648, %v1647
      %v1697 = vunpack.c.l.b16 %v1601
      %v1698 = vunpack.c.l.b16 %v1602
      %v1699 = vunpack.c.l.b16 %v1603
      %v1700 = vunpack.c.l.b16 %v1604
      %v1701 = vunpack.c.l.b16 %v1605
      %v1702 = vunpack.c.l.b16 %v1606
      %v1703 = vunpack.c.l.b16 %v1607
      %v1704 = vunpack.c.l.b16 %v1608
      %v1705 = vunpack.c.l.b16 %v1609
      %v1706 = vunpack.c.l.b16 %v1610
      %v1707 = vunpack.c.l.b16 %v1611
      %v1708 = vunpack.c.l.b16 %v1612
      %v1709 = vunpack.c.l.b16 %v1613
      %v1710 = vunpack.c.l.b16 %v1614
      %v1711 = vunpack.c.l.b16 %v1615
      %v1712 = vunpack.c.l.b16 %v1616
      %v1713 = vpack.c.b16 %v1698, %v1697
      %v1714 = vpack.c.b16 %v1700, %v1699
      %v1715 = vpack.c.b16 %v1702, %v1701
      %v1716 = vpack.c.b16 %v1704, %v1703
      %v1717 = vpack.c.b16 %v1706, %v1705
      %v1718 = vpack.c.b16 %v1708, %v1707
      %v1719 = vpack.c.b16 %v1710, %v1709
      %v1720 = vpack.c.b16 %v1712, %v1711
      %1729 = vmatprep.subr.bf16.mxu0 0
      %1730 = vmatpush1.bf16.msra.mxu0 %v1720
      %1731 = vmatprep.subr.bf16.mxu0 0
      %1732 = vmatpush1.bf16.msra.mxu0 %v1719
      %1733 = vmatprep.subr.bf16.mxu0 0
      %1734 = vmatpush1.bf16.msra.mxu0 %v1718
      %1735 = vmatprep.subr.bf16.mxu0 0
      %1736 = vmatpush1.bf16.msra.mxu0 %v1717
      %1737 = vmatprep.subr.bf16.mxu0 0
      %1738 = vmatpush1.bf16.msra.mxu0 %v1716
      %1739 = vmatprep.subr.bf16.mxu0 0
      %1740 = vmatpush1.bf16.msra.mxu0 %v1715
      %1741 = vmatprep.subr.bf16.mxu0 0
      %1742 = vmatpush1.bf16.msra.mxu0 %v1714
      %1743 = vmatprep.subr.bf16.mxu0 0
      %1744 = vmatpush1.bf16.msra.mxu0 %v1713
      %1745 = vmatprep.subr.bf16.mxu0 0
      %1746 = vmatpush2.bf16.msra.mxu0 0
      %1747 = vmatprep.subr.bf16.mxu0 0
      %1748 = vmatpush2.bf16.msra.mxu0 0
      %1749 = vmatprep.subr.bf16.mxu0 0
      %1750 = vmatpush2.bf16.msra.mxu0 0
      %1751 = vmatprep.subr.bf16.mxu0 0
      %1752 = vmatpush2.bf16.msra.mxu0 0
      %1753 = vmatprep.subr.bf16.mxu0 0
      %1754 = vmatpush2.bf16.msra.mxu0 0
      %1755 = vmatprep.subr.bf16.mxu0 0
      %1756 = vmatpush2.bf16.msra.mxu0 0
      %1757 = vmatprep.subr.bf16.mxu0 0
      %1758 = vmatpush2.bf16.msra.mxu0 0
      %1759 = vmatprep.subr.bf16.mxu0 0
      %1760 = vmatpush2.bf16.msra.mxu0 0
      %1761 = vmatprep.mubr.bf16.mxu0 0
      %1762 = vmatmul.mubr.bf16.gmra.mxu0 %v1649
      %v1763 = vpop.f32.mrf.mxu0
      %v1764 = vadd.f32 0.0, %v1763
      %v1765 = vpop.f32.mrf.mxu0
      %v1766 = vpop.f32.mrf.mxu0
      %v1767 = vadd.f32 0.0, %v1766
      %v1768 = vpop.f32.mrf.mxu0
      %1769 = vmatprep.mubr.bf16.mxu0 0
      %1770 = vmatmul.mubr.bf16.gmra.mxu0 %v1650
      %v1771 = vpop.f32.mrf.mxu0
      %v1772 = vadd.f32 0.0, %v1771
      %v1773 = vpop.f32.mrf.mxu0
      %v1774 = vpop.f32.mrf.mxu0
      %v1775 = vadd.f32 0.0, %v1774
      %v1776 = vpop.f32.mrf.mxu0
      %1777 = vmatprep.mubr.bf16.mxu0 0
      %1778 = vmatmul.mubr.bf16.gmra.mxu0 %v1651
      %v1779 = vpop.f32.mrf.mxu0
      %v1780 = vadd.f32 0.0, %v1779
      %v1781 = vpop.f32.mrf.mxu0
      %v1782 = vpop.f32.mrf.mxu0
      %v1783 = vadd.f32 0.0, %v1782
      %v1784 = vpop.f32.mrf.mxu0
      %1785 = vmatprep.mubr.bf16.mxu0 0
      %1786 = vmatmul.mubr.bf16.gmra.mxu0 %v1652
      %v1787 = vpop.f32.mrf.mxu0
      %v1788 = vadd.f32 0.0, %v1787
      %v1789 = vpop.f32.mrf.mxu0
      %v1790 = vpop.f32.mrf.mxu0
      %v1791 = vadd.f32 0.0, %v1790
      %v1792 = vpop.f32.mrf.mxu0
      %1793 = vmatprep.mubr.bf16.mxu0 0
      %1794 = vmatmul.mubr.bf16.gmra.mxu0 %v1653
      %v1795 = vpop.f32.mrf.mxu0
      %v1796 = vadd.f32 0.0, %v1795
      %v1797 = vpop.f32.mrf.mxu0
      %v1798 = vpop.f32.mrf.mxu0
      %v1799 = vadd.f32 0.0, %v1798
      %v1800 = vpop.f32.mrf.mxu0
      %1801 = vmatprep.mubr.bf16.mxu0 0
      %1802 = vmatmul.mubr.bf16.gmra.mxu0 %v1654
      %v1803 = vpop.f32.mrf.mxu0
      %v1804 = vadd.f32 0.0, %v1803
      %v1805 = vpop.f32.mrf.mxu0
      %v1806 = vpop.f32.mrf.mxu0
      %v1807 = vadd.f32 0.0, %v1806
      %v1808 = vpop.f32.mrf.mxu0
      %1809 = vmatprep.mubr.bf16.mxu0 0
      %1810 = vmatmul.mubr.bf16.gmra.mxu0 %v1655
      %v1811 = vpop.f32.mrf.mxu0
      %v1812 = vadd.f32 0.0, %v1811
      %v1813 = vpop.f32.mrf.mxu0
      %v1814 = vpop.f32.mrf.mxu0
      %v1815 = vadd.f32 0.0, %v1814
      %v1816 = vpop.f32.mrf.mxu0
      %1817 = vmatprep.mubr.bf16.mxu0 0
      %1818 = vmatmul.mubr.bf16.gmra.mxu0 %v1656
      %v1819 = vpop.f32.mrf.mxu0
      %v1820 = vadd.f32 0.0, %v1819
      %v1821 = vpop.f32.mrf.mxu0
      %v1822 = vpop.f32.mrf.mxu0
      %v1823 = vadd.f32 0.0, %v1822
      %v1824 = vpop.f32.mrf.mxu0
      %1825 = vmatprep.mubr.bf16.mxu0 0
      %1826 = vmatmul.mubr.bf16.gmra.mxu0 %v1657
      %v1827 = vpop.f32.mrf.mxu0
      %v1828 = vadd.f32 0.0, %v1827
      %v1829 = vpop.f32.mrf.mxu0
      %v1830 = vpop.f32.mrf.mxu0
      %v1831 = vadd.f32 0.0, %v1830
      %v1832 = vpop.f32.mrf.mxu0
      %1833 = vmatprep.mubr.bf16.mxu0 0
      %1834 = vmatmul.mubr.bf16.gmra.mxu0 %v1658
      %v1835 = vpop.f32.mrf.mxu0
      %v1836 = vadd.f32 0.0, %v1835
      %v1837 = vpop.f32.mrf.mxu0
      %v1838 = vpop.f32.mrf.mxu0
      %v1839 = vadd.f32 0.0, %v1838
      %v1840 = vpop.f32.mrf.mxu0
      %1841 = vmatprep.mubr.bf16.mxu0 0
      %1842 = vmatmul.mubr.bf16.gmra.mxu0 %v1659
      %v1843 = vpop.f32.mrf.mxu0
      %v1844 = vadd.f32 0.0, %v1843
      %v1845 = vpop.f32.mrf.mxu0
      %v1846 = vpop.f32.mrf.mxu0
      %v1847 = vadd.f32 0.0, %v1846
      %v1848 = vpop.f32.mrf.mxu0
      %1849 = vmatprep.mubr.bf16.mxu0 0
      %1850 = vmatmul.mubr.bf16.gmra.mxu0 %v1660
      %v1851 = vpop.f32.mrf.mxu0
      %v1852 = vadd.f32 0.0, %v1851
      %v1853 = vpop.f32.mrf.mxu0
      %v1854 = vpop.f32.mrf.mxu0
      %v1855 = vadd.f32 0.0, %v1854
      %v1856 = vpop.f32.mrf.mxu0
      %1857 = vmatprep.mubr.bf16.mxu0 0
      %1858 = vmatmul.mubr.bf16.gmra.mxu0 %v1661
      %v1859 = vpop.f32.mrf.mxu0
      %v1860 = vadd.f32 0.0, %v1859
      %v1861 = vpop.f32.mrf.mxu0
      %v1862 = vpop.f32.mrf.mxu0
      %v1863 = vadd.f32 0.0, %v1862
      %v1864 = vpop.f32.mrf.mxu0
      %1865 = vmatprep.mubr.bf16.mxu0 0
      %1866 = vmatmul.mubr.bf16.gmra.mxu0 %v1662
      %v1867 = vpop.f32.mrf.mxu0
      %v1868 = vadd.f32 0.0, %v1867
      %v1869 = vpop.f32.mrf.mxu0
      %v1870 = vpop.f32.mrf.mxu0
      %v1871 = vadd.f32 0.0, %v1870
      %v1872 = vpop.f32.mrf.mxu0
      %1873 = vmatprep.mubr.bf16.mxu0 0
      %1874 = vmatmul.mubr.bf16.gmra.mxu0 %v1663
      %v1875 = vpop.f32.mrf.mxu0
      %v1876 = vadd.f32 0.0, %v1875
      %v1877 = vpop.f32.mrf.mxu0
      %v1878 = vpop.f32.mrf.mxu0
      %v1879 = vadd.f32 0.0, %v1878
      %v1880 = vpop.f32.mrf.mxu0
      %1881 = vmatprep.mubr.bf16.mxu0 0
      %1882 = vmatmul.mubr.bf16.gmra.mxu0 %v1664
      %v1883 = vpop.f32.mrf.mxu0
      %v1884 = vadd.f32 0.0, %v1883
      %v1885 = vpop.f32.mrf.mxu0
      %v1886 = vpop.f32.mrf.mxu0
      %v1887 = vadd.f32 0.0, %v1886
      %v1888 = vpop.f32.mrf.mxu0
      %1889 = vdwg.mxu0
      %v1890 = vld [vmem:[#allocation2] sm:$0xff]
      %v1891 = vld [vmem:[#allocation2 + $0x8] sm:$0xff]
      %v1892 = vld [vmem:[#allocation2 + $0x10] sm:$0xff]
      %v1893 = vld [vmem:[#allocation2 + $0x18] sm:$0xff]
      %v1894 = vld [vmem:[#allocation2 + $0x20] sm:$0xff]
      %v1895 = vld [vmem:[#allocation2 + $0x28] sm:$0xff]
      %v1896 = vld [vmem:[#allocation2 + $0x30] sm:$0xff]
      %v1897 = vld [vmem:[#allocation2 + $0x38] sm:$0xff]
      %v1898 = vld [vmem:[#allocation2 + $0x40] sm:$0xff]
      %v1899 = vld [vmem:[#allocation2 + $0x48] sm:$0xff]
      %v1900 = vld [vmem:[#allocation2 + $0x50] sm:$0xff]
      %v1901 = vld [vmem:[#allocation2 + $0x58] sm:$0xff]
      %v1902 = vld [vmem:[#allocation2 + $0x60] sm:$0xff]
      %v1903 = vld [vmem:[#allocation2 + $0x68] sm:$0xff]
      %v1904 = vld [vmem:[#allocation2 + $0x70] sm:$0xff]
      %v1905 = vld [vmem:[#allocation2 + $0x78] sm:$0xff]
      %v1906 = vld [vmem:[#allocation2 + $0x80] sm:$0xff]
      %v1907 = vld [vmem:[#allocation2 + $0x88] sm:$0xff]
      %v1908 = vld [vmem:[#allocation2 + $0x90] sm:$0xff]
      %v1909 = vld [vmem:[#allocation2 + $0x98] sm:$0xff]
      %v1910 = vld [vmem:[#allocation2 + $0xa0] sm:$0xff]
      %v1911 = vld [vmem:[#allocation2 + $0xa8] sm:$0xff]
      %v1912 = vld [vmem:[#allocation2 + $0xb0] sm:$0xff]
      %v1913 = vld [vmem:[#allocation2 + $0xb8] sm:$0xff]
      %v1914 = vld [vmem:[#allocation2 + $0xc0] sm:$0xff]
      %v1915 = vld [vmem:[#allocation2 + $0xc8] sm:$0xff]
      %v1916 = vld [vmem:[#allocation2 + $0xd0] sm:$0xff]
      %v1917 = vld [vmem:[#allocation2 + $0xd8] sm:$0xff]
      %v1918 = vld [vmem:[#allocation2 + $0xe0] sm:$0xff]
      %v1919 = vld [vmem:[#allocation2 + $0xe8] sm:$0xff]
      %v1920 = vld [vmem:[#allocation2 + $0xf0] sm:$0xff]
      %v1921 = vld [vmem:[#allocation2 + $0xf8] sm:$0xff]
      %v1922 = vadd.f32 %v1890, %v1764
      %v1923 = vadd.f32 %v1891, %v1767
      %v1924 = vadd.f32 %v1892, %v1772
      %v1925 = vadd.f32 %v1893, %v1775
      %v1926 = vadd.f32 %v1894, %v1780
      %v1927 = vadd.f32 %v1895, %v1783
      %v1928 = vadd.f32 %v1896, %v1788
      %v1929 = vadd.f32 %v1897, %v1791
      %v1930 = vadd.f32 %v1898, %v1796
      %v1931 = vadd.f32 %v1899, %v1799
      %v1932 = vadd.f32 %v1900, %v1804
      %v1933 = vadd.f32 %v1901, %v1807
      %v1934 = vadd.f32 %v1902, %v1812
      %v1935 = vadd.f32 %v1903, %v1815
      %v1936 = vadd.f32 %v1904, %v1820
      %v1937 = vadd.f32 %v1905, %v1823
      %v1938 = vadd.f32 %v1906, %v1828
      %v1939 = vadd.f32 %v1907, %v1831
      %v1940 = vadd.f32 %v1908, %v1836
      %v1941 = vadd.f32 %v1909, %v1839
      %v1942 = vadd.f32 %v1910, %v1844
      %v1943 = vadd.f32 %v1911, %v1847
      %v1944 = vadd.f32 %v1912, %v1852
      %v1945 = vadd.f32 %v1913, %v1855
      %v1946 = vadd.f32 %v1914, %v1860
      %v1947 = vadd.f32 %v1915, %v1863
      %v1948 = vadd.f32 %v1916, %v1868
      %v1949 = vadd.f32 %v1917, %v1871
      %v1950 = vadd.f32 %v1918, %v1876
      %v1951 = vadd.f32 %v1919, %v1879
      %v1952 = vadd.f32 %v1920, %v1884
      %v1953 = vadd.f32 %v1921, %v1887
      %1954 = vst [vmem:[#allocation2] sm:$0xff] %v1922
      %1955 = vst [vmem:[#allocation2 + $0x8] sm:$0xff] %v1923
      %1956 = vst [vmem:[#allocation2 + $0x10] sm:$0xff] %v1924
      %1957 = vst [vmem:[#allocation2 + $0x18] sm:$0xff] %v1925
      %1958 = vst [vmem:[#allocation2 + $0x20] sm:$0xff] %v1926
      %1959 = vst [vmem:[#allocation2 + $0x28] sm:$0xff] %v1927
      %1960 = vst [vmem:[#allocation2 + $0x30] sm:$0xff] %v1928
      %1961 = vst [vmem:[#allocation2 + $0x38] sm:$0xff] %v1929
      %1962 = vst [vmem:[#allocation2 + $0x40] sm:$0xff] %v1930
      %1963 = vst [vmem:[#allocation2 + $0x48] sm:$0xff] %v1931
      %1964 = vst [vmem:[#allocation2 + $0x50] sm:$0xff] %v1932
      %1965 = vst [vmem:[#allocation2 + $0x58] sm:$0xff] %v1933
      %1966 = vst [vmem:[#allocation2 + $0x60] sm:$0xff] %v1934
      %1967 = vst [vmem:[#allocation2 + $0x68] sm:$0xff] %v1935
      %1968 = vst [vmem:[#allocation2 + $0x70] sm:$0xff] %v1936
      %1969 = vst [vmem:[#allocation2 + $0x78] sm:$0xff] %v1937
      %1970 = vst [vmem:[#allocation2 + $0x80] sm:$0xff] %v1938
      %1971 = vst [vmem:[#allocation2 + $0x88] sm:$0xff] %v1939
      %1972 = vst [vmem:[#allocation2 + $0x90] sm:$0xff] %v1940
      %1973 = vst [vmem:[#allocation2 + $0x98] sm:$0xff] %v1941
      %1974 = vst [vmem:[#allocation2 + $0xa0] sm:$0xff] %v1942
      %1975 = vst [vmem:[#allocation2 + $0xa8] sm:$0xff] %v1943
      %1976 = vst [vmem:[#allocation2 + $0xb0] sm:$0xff] %v1944
      %1977 = vst [vmem:[#allocation2 + $0xb8] sm:$0xff] %v1945
      %1978 = vst [vmem:[#allocation2 + $0xc0] sm:$0xff] %v1946
      %1979 = vst [vmem:[#allocation2 + $0xc8] sm:$0xff] %v1947
      %1980 = vst [vmem:[#allocation2 + $0xd0] sm:$0xff] %v1948
      %1981 = vst [vmem:[#allocation2 + $0xd8] sm:$0xff] %v1949
      %1982 = vst [vmem:[#allocation2 + $0xe0] sm:$0xff] %v1950
      %1983 = vst [vmem:[#allocation2 + $0xe8] sm:$0xff] %v1951
      %1984 = vst [vmem:[#allocation2 + $0xf0] sm:$0xff] %v1952
      %1985 = vst [vmem:[#allocation2 + $0xf8] sm:$0xff] %v1953
      %s1986 = scalar_lea.vmem %s172, 12
      %v1987 = vld [vmem:[%s1986] sm:$0xf]
      %v1988 = vld [vmem:[%s1986 + $0x4] sm:$0xf]
      %v1989 = vld [vmem:[%s1986 + $0xc] sm:$0xf]
      %v1990 = vld [vmem:[%s1986 + $0x10] sm:$0xf]
      %v1991 = vld [vmem:[%s1986 + $0x18] sm:$0xf]
      %v1992 = vld [vmem:[%s1986 + $0x1c] sm:$0xf]
      %v1993 = vld [vmem:[%s1986 + $0x24] sm:$0xf]
      %v1994 = vld [vmem:[%s1986 + $0x28] sm:$0xf]
      %v1995 = vld [vmem:[%s1986 + $0x30] sm:$0xf]
      %v1996 = vld [vmem:[%s1986 + $0x34] sm:$0xf]
      %v1997 = vld [vmem:[%s1986 + $0x3c] sm:$0xf]
      %v1998 = vld [vmem:[%s1986 + $0x40] sm:$0xf]
      %v1999 = vld [vmem:[%s1986 + $0x48] sm:$0xf]
      %v2000 = vld [vmem:[%s1986 + $0x4c] sm:$0xf]
      %v2001 = vld [vmem:[%s1986 + $0x54] sm:$0xf]
      %v2002 = vld [vmem:[%s1986 + $0x58] sm:$0xf]
      %v2003 = vld [vmem:[%s1986 + $0x60] sm:$0xf]
      %v2004 = vld [vmem:[%s1986 + $0x64] sm:$0xf]
      %v2005 = vld [vmem:[%s1986 + $0x6c] sm:$0xf]
      %v2006 = vld [vmem:[%s1986 + $0x70] sm:$0xf]
      %v2007 = vld [vmem:[%s1986 + $0x78] sm:$0xf]
      %v2008 = vld [vmem:[%s1986 + $0x7c] sm:$0xf]
      %v2009 = vld [vmem:[%s1986 + $0x84] sm:$0xf]
      %v2010 = vld [vmem:[%s1986 + $0x88] sm:$0xf]
      %v2011 = vld [vmem:[%s1986 + $0x90] sm:$0xf]
      %v2012 = vld [vmem:[%s1986 + $0x94] sm:$0xf]
      %v2013 = vld [vmem:[%s1986 + $0x9c] sm:$0xf]
      %v2014 = vld [vmem:[%s1986 + $0xa0] sm:$0xf]
      %v2015 = vld [vmem:[%s1986 + $0xa8] sm:$0xf]
      %v2016 = vld [vmem:[%s1986 + $0xac] sm:$0xf]
      %v2017 = vld [vmem:[%s1986 + $0xb4] sm:$0xf]
      %v2018 = vld [vmem:[%s1986 + $0xb8] sm:$0xf]
      %s2019 = scalar_lea.vmem %s1, 192
      %v2020 = vld [vmem:[%s2019] sm:$0xf]
      %v2021 = vld [vmem:[%s2019 + $0x4] sm:$0xf]
      %v2022 = vld [vmem:[%s2019 + $0x8] sm:$0xf]
      %v2023 = vld [vmem:[%s2019 + $0xc] sm:$0xf]
      %v2024 = vld [vmem:[%s2019 + $0x10] sm:$0xf]
      %v2025 = vld [vmem:[%s2019 + $0x14] sm:$0xf]
      %v2026 = vld [vmem:[%s2019 + $0x18] sm:$0xf]
      %v2027 = vld [vmem:[%s2019 + $0x1c] sm:$0xf]
      %v2028 = vld [vmem:[%s2019 + $0x20] sm:$0xf]
      %v2029 = vld [vmem:[%s2019 + $0x24] sm:$0xf]
      %v2030 = vld [vmem:[%s2019 + $0x28] sm:$0xf]
      %v2031 = vld [vmem:[%s2019 + $0x2c] sm:$0xf]
      %v2032 = vld [vmem:[%s2019 + $0x30] sm:$0xf]
      %v2033 = vld [vmem:[%s2019 + $0x34] sm:$0xf]
      %v2034 = vld [vmem:[%s2019 + $0x38] sm:$0xf]
      %v2035 = vld [vmem:[%s2019 + $0x3c] sm:$0xf]
      %v2068 = vunpack.c.l.b16 %v1987
      %v2069 = vunpack.c.l.b16 %v1988
      %v2070 = vunpack.c.l.b16 %v1989
      %v2071 = vunpack.c.l.b16 %v1990
      %v2072 = vunpack.c.l.b16 %v1991
      %v2073 = vunpack.c.l.b16 %v1992
      %v2074 = vunpack.c.l.b16 %v1993
      %v2075 = vunpack.c.l.b16 %v1994
      %v2076 = vunpack.c.l.b16 %v1995
      %v2077 = vunpack.c.l.b16 %v1996
      %v2078 = vunpack.c.l.b16 %v1997
      %v2079 = vunpack.c.l.b16 %v1998
      %v2080 = vunpack.c.l.b16 %v1999
      %v2081 = vunpack.c.l.b16 %v2000
      %v2082 = vunpack.c.l.b16 %v2001
      %v2083 = vunpack.c.l.b16 %v2002
      %v2084 = vunpack.c.l.b16 %v2003
      %v2085 = vunpack.c.l.b16 %v2004
      %v2086 = vunpack.c.l.b16 %v2005
      %v2087 = vunpack.c.l.b16 %v2006
      %v2088 = vunpack.c.l.b16 %v2007
      %v2089 = vunpack.c.l.b16 %v2008
      %v2090 = vunpack.c.l.b16 %v2009
      %v2091 = vunpack.c.l.b16 %v2010
      %v2092 = vunpack.c.l.b16 %v2011
      %v2093 = vunpack.c.l.b16 %v2012
      %v2094 = vunpack.c.l.b16 %v2013
      %v2095 = vunpack.c.l.b16 %v2014
      %v2096 = vunpack.c.l.b16 %v2015
      %v2097 = vunpack.c.l.b16 %v2016
      %v2098 = vunpack.c.l.b16 %v2017
      %v2099 = vunpack.c.l.b16 %v2018
      %v2100 = vpack.c.b16 %v2069, %v2068
      %v2101 = vpack.c.b16 %v2071, %v2070
      %v2102 = vpack.c.b16 %v2073, %v2072
      %v2103 = vpack.c.b16 %v2075, %v2074
      %v2104 = vpack.c.b16 %v2077, %v2076
      %v2105 = vpack.c.b16 %v2079, %v2078
      %v2106 = vpack.c.b16 %v2081, %v2080
      %v2107 = vpack.c.b16 %v2083, %v2082
      %v2108 = vpack.c.b16 %v2085, %v2084
      %v2109 = vpack.c.b16 %v2087, %v2086
      %v2110 = vpack.c.b16 %v2089, %v2088
      %v2111 = vpack.c.b16 %v2091, %v2090
      %v2112 = vpack.c.b16 %v2093, %v2092
      %v2113 = vpack.c.b16 %v2095, %v2094
      %v2114 = vpack.c.b16 %v2097, %v2096
      %v2115 = vpack.c.b16 %v2099, %v2098
      %v2148 = vunpack.c.l.b16 %v2020
      %v2149 = vunpack.c.l.b16 %v2021
      %v2150 = vunpack.c.l.b16 %v2022
      %v2151 = vunpack.c.l.b16 %v2023
      %v2152 = vunpack.c.l.b16 %v2024
      %v2153 = vunpack.c.l.b16 %v2025
      %v2154 = vunpack.c.l.b16 %v2026
      %v2155 = vunpack.c.l.b16 %v2027
      %v2156 = vunpack.c.l.b16 %v2028
      %v2157 = vunpack.c.l.b16 %v2029
      %v2158 = vunpack.c.l.b16 %v2030
      %v2159 = vunpack.c.l.b16 %v2031
      %v2160 = vunpack.c.l.b16 %v2032
      %v2161 = vunpack.c.l.b16 %v2033
      %v2162 = vunpack.c.l.b16 %v2034
      %v2163 = vunpack.c.l.b16 %v2035
      %v2164 = vpack.c.b16 %v2149, %v2148
      %v2165 = vpack.c.b16 %v2151, %v2150
      %v2166 = vpack.c.b16 %v2153, %v2152
      %v2167 = vpack.c.b16 %v2155, %v2154
      %v2168 = vpack.c.b16 %v2157, %v2156
      %v2169 = vpack.c.b16 %v2159, %v2158
      %v2170 = vpack.c.b16 %v2161, %v2160
      %v2171 = vpack.c.b16 %v2163, %v2162
      %2180 = vmatprep.subr.bf16.mxu0 0
      %2181 = vmatpush1.bf16.msra.mxu0 %v2171
      %2182 = vmatprep.subr.bf16.mxu0 0
      %2183 = vmatpush1.bf16.msra.mxu0 %v2170
      %2184 = vmatprep.subr.bf16.mxu0 0
      %2185 = vmatpush1.bf16.msra.mxu0 %v2169
      %2186 = vmatprep.subr.bf16.mxu0 0
      %2187 = vmatpush1.bf16.msra.mxu0 %v2168
      %2188 = vmatprep.subr.bf16.mxu0 0
      %2189 = vmatpush1.bf16.msra.mxu0 %v2167
      %2190 = vmatprep.subr.bf16.mxu0 0
      %2191 = vmatpush1.bf16.msra.mxu0 %v2166
      %2192 = vmatprep.subr.bf16.mxu0 0
      %2193 = vmatpush1.bf16.msra.mxu0 %v2165
      %2194 = vmatprep.subr.bf16.mxu0 0
      %2195 = vmatpush1.bf16.msra.mxu0 %v2164
      %2196 = vmatprep.subr.bf16.mxu0 0
      %2197 = vmatpush2.bf16.msra.mxu0 0
      %2198 = vmatprep.subr.bf16.mxu0 0
      %2199 = vmatpush2.bf16.msra.mxu0 0
      %2200 = vmatprep.subr.bf16.mxu0 0
      %2201 = vmatpush2.bf16.msra.mxu0 0
      %2202 = vmatprep.subr.bf16.mxu0 0
      %2203 = vmatpush2.bf16.msra.mxu0 0
      %2204 = vmatprep.subr.bf16.mxu0 0
      %2205 = vmatpush2.bf16.msra.mxu0 0
      %2206 = vmatprep.subr.bf16.mxu0 0
      %2207 = vmatpush2.bf16.msra.mxu0 0
      %2208 = vmatprep.subr.bf16.mxu0 0
      %2209 = vmatpush2.bf16.msra.mxu0 0
      %2210 = vmatprep.subr.bf16.mxu0 0
      %2211 = vmatpush2.bf16.msra.mxu0 0
      %2212 = vmatprep.mubr.bf16.mxu0 0
      %2213 = vmatmul.mubr.bf16.gmra.mxu0 %v2100
      %v2214 = vpop.f32.mrf.mxu0
      %v2215 = vadd.f32 0.0, %v2214
      %v2216 = vpop.f32.mrf.mxu0
      %v2217 = vpop.f32.mrf.mxu0
      %v2218 = vadd.f32 0.0, %v2217
      %v2219 = vpop.f32.mrf.mxu0
      %2220 = vmatprep.mubr.bf16.mxu0 0
      %2221 = vmatmul.mubr.bf16.gmra.mxu0 %v2101
      %v2222 = vpop.f32.mrf.mxu0
      %v2223 = vadd.f32 0.0, %v2222
      %v2224 = vpop.f32.mrf.mxu0
      %v2225 = vpop.f32.mrf.mxu0
      %v2226 = vadd.f32 0.0, %v2225
      %v2227 = vpop.f32.mrf.mxu0
      %2228 = vmatprep.mubr.bf16.mxu0 0
      %2229 = vmatmul.mubr.bf16.gmra.mxu0 %v2102
      %v2230 = vpop.f32.mrf.mxu0
      %v2231 = vadd.f32 0.0, %v2230
      %v2232 = vpop.f32.mrf.mxu0
      %v2233 = vpop.f32.mrf.mxu0
      %v2234 = vadd.f32 0.0, %v2233
      %v2235 = vpop.f32.mrf.mxu0
      %2236 = vmatprep.mubr.bf16.mxu0 0
      %2237 = vmatmul.mubr.bf16.gmra.mxu0 %v2103
      %v2238 = vpop.f32.mrf.mxu0
      %v2239 = vadd.f32 0.0, %v2238
      %v2240 = vpop.f32.mrf.mxu0
      %v2241 = vpop.f32.mrf.mxu0
      %v2242 = vadd.f32 0.0, %v2241
      %v2243 = vpop.f32.mrf.mxu0
      %2244 = vmatprep.mubr.bf16.mxu0 0
      %2245 = vmatmul.mubr.bf16.gmra.mxu0 %v2104
      %v2246 = vpop.f32.mrf.mxu0
      %v2247 = vadd.f32 0.0, %v2246
      %v2248 = vpop.f32.mrf.mxu0
      %v2249 = vpop.f32.mrf.mxu0
      %v2250 = vadd.f32 0.0, %v2249
      %v2251 = vpop.f32.mrf.mxu0
      %2252 = vmatprep.mubr.bf16.mxu0 0
      %2253 = vmatmul.mubr.bf16.gmra.mxu0 %v2105
      %v2254 = vpop.f32.mrf.mxu0
      %v2255 = vadd.f32 0.0, %v2254
      %v2256 = vpop.f32.mrf.mxu0
      %v2257 = vpop.f32.mrf.mxu0
      %v2258 = vadd.f32 0.0, %v2257
      %v2259 = vpop.f32.mrf.mxu0
      %2260 = vmatprep.mubr.bf16.mxu0 0
      %2261 = vmatmul.mubr.bf16.gmra.mxu0 %v2106
      %v2262 = vpop.f32.mrf.mxu0
      %v2263 = vadd.f32 0.0, %v2262
      %v2264 = vpop.f32.mrf.mxu0
      %v2265 = vpop.f32.mrf.mxu0
      %v2266 = vadd.f32 0.0, %v2265
      %v2267 = vpop.f32.mrf.mxu0
      %2268 = vmatprep.mubr.bf16.mxu0 0
      %2269 = vmatmul.mubr.bf16.gmra.mxu0 %v2107
      %v2270 = vpop.f32.mrf.mxu0
      %v2271 = vadd.f32 0.0, %v2270
      %v2272 = vpop.f32.mrf.mxu0
      %v2273 = vpop.f32.mrf.mxu0
      %v2274 = vadd.f32 0.0, %v2273
      %v2275 = vpop.f32.mrf.mxu0
      %2276 = vmatprep.mubr.bf16.mxu0 0
      %2277 = vmatmul.mubr.bf16.gmra.mxu0 %v2108
      %v2278 = vpop.f32.mrf.mxu0
      %v2279 = vadd.f32 0.0, %v2278
      %v2280 = vpop.f32.mrf.mxu0
      %v2281 = vpop.f32.mrf.mxu0
      %v2282 = vadd.f32 0.0, %v2281
      %v2283 = vpop.f32.mrf.mxu0
      %2284 = vmatprep.mubr.bf16.mxu0 0
      %2285 = vmatmul.mubr.bf16.gmra.mxu0 %v2109
      %v2286 = vpop.f32.mrf.mxu0
      %v2287 = vadd.f32 0.0, %v2286
      %v2288 = vpop.f32.mrf.mxu0
      %v2289 = vpop.f32.mrf.mxu0
      %v2290 = vadd.f32 0.0, %v2289
      %v2291 = vpop.f32.mrf.mxu0
      %2292 = vmatprep.mubr.bf16.mxu0 0
      %2293 = vmatmul.mubr.bf16.gmra.mxu0 %v2110
      %v2294 = vpop.f32.mrf.mxu0
      %v2295 = vadd.f32 0.0, %v2294
      %v2296 = vpop.f32.mrf.mxu0
      %v2297 = vpop.f32.mrf.mxu0
      %v2298 = vadd.f32 0.0, %v2297
      %v2299 = vpop.f32.mrf.mxu0
      %2300 = vmatprep.mubr.bf16.mxu0 0
      %2301 = vmatmul.mubr.bf16.gmra.mxu0 %v2111
      %v2302 = vpop.f32.mrf.mxu0
      %v2303 = vadd.f32 0.0, %v2302
      %v2304 = vpop.f32.mrf.mxu0
      %v2305 = vpop.f32.mrf.mxu0
      %v2306 = vadd.f32 0.0, %v2305
      %v2307 = vpop.f32.mrf.mxu0
      %2308 = vmatprep.mubr.bf16.mxu0 0
      %2309 = vmatmul.mubr.bf16.gmra.mxu0 %v2112
      %v2310 = vpop.f32.mrf.mxu0
      %v2311 = vadd.f32 0.0, %v2310
      %v2312 = vpop.f32.mrf.mxu0
      %v2313 = vpop.f32.mrf.mxu0
      %v2314 = vadd.f32 0.0, %v2313
      %v2315 = vpop.f32.mrf.mxu0
      %2316 = vmatprep.mubr.bf16.mxu0 0
      %2317 = vmatmul.mubr.bf16.gmra.mxu0 %v2113
      %v2318 = vpop.f32.mrf.mxu0
      %v2319 = vadd.f32 0.0, %v2318
      %v2320 = vpop.f32.mrf.mxu0
      %v2321 = vpop.f32.mrf.mxu0
      %v2322 = vadd.f32 0.0, %v2321
      %v2323 = vpop.f32.mrf.mxu0
      %2324 = vmatprep.mubr.bf16.mxu0 0
      %2325 = vmatmul.mubr.bf16.gmra.mxu0 %v2114
      %v2326 = vpop.f32.mrf.mxu0
      %v2327 = vadd.f32 0.0, %v2326
      %v2328 = vpop.f32.mrf.mxu0
      %v2329 = vpop.f32.mrf.mxu0
      %v2330 = vadd.f32 0.0, %v2329
      %v2331 = vpop.f32.mrf.mxu0
      %2332 = vmatprep.mubr.bf16.mxu0 0
      %2333 = vmatmul.mubr.bf16.gmra.mxu0 %v2115
      %v2334 = vpop.f32.mrf.mxu0
      %v2335 = vadd.f32 0.0, %v2334
      %v2336 = vpop.f32.mrf.mxu0
      %v2337 = vpop.f32.mrf.mxu0
      %v2338 = vadd.f32 0.0, %v2337
      %v2339 = vpop.f32.mrf.mxu0
      %2340 = vdwg.mxu0
      %v2341 = vld [vmem:[#allocation2] sm:$0xff]
      %v2342 = vld [vmem:[#allocation2 + $0x8] sm:$0xff]
      %v2343 = vld [vmem:[#allocation2 + $0x10] sm:$0xff]
      %v2344 = vld [vmem:[#allocation2 + $0x18] sm:$0xff]
      %v2345 = vld [vmem:[#allocation2 + $0x20] sm:$0xff]
      %v2346 = vld [vmem:[#allocation2 + $0x28] sm:$0xff]
      %v2347 = vld [vmem:[#allocation2 + $0x30] sm:$0xff]
      %v2348 = vld [vmem:[#allocation2 + $0x38] sm:$0xff]
      %v2349 = vld [vmem:[#allocation2 + $0x40] sm:$0xff]
      %v2350 = vld [vmem:[#allocation2 + $0x48] sm:$0xff]
      %v2351 = vld [vmem:[#allocation2 + $0x50] sm:$0xff]
      %v2352 = vld [vmem:[#allocation2 + $0x58] sm:$0xff]
      %v2353 = vld [vmem:[#allocation2 + $0x60] sm:$0xff]
      %v2354 = vld [vmem:[#allocation2 + $0x68] sm:$0xff]
      %v2355 = vld [vmem:[#allocation2 + $0x70] sm:$0xff]
      %v2356 = vld [vmem:[#allocation2 + $0x78] sm:$0xff]
      %v2357 = vld [vmem:[#allocation2 + $0x80] sm:$0xff]
      %v2358 = vld [vmem:[#allocation2 + $0x88] sm:$0xff]
      %v2359 = vld [vmem:[#allocation2 + $0x90] sm:$0xff]
      %v2360 = vld [vmem:[#allocation2 + $0x98] sm:$0xff]
      %v2361 = vld [vmem:[#allocation2 + $0xa0] sm:$0xff]
      %v2362 = vld [vmem:[#allocation2 + $0xa8] sm:$0xff]
      %v2363 = vld [vmem:[#allocation2 + $0xb0] sm:$0xff]
      %v2364 = vld [vmem:[#allocation2 + $0xb8] sm:$0xff]
      %v2365 = vld [vmem:[#allocation2 + $0xc0] sm:$0xff]
      %v2366 = vld [vmem:[#allocation2 + $0xc8] sm:$0xff]
      %v2367 = vld [vmem:[#allocation2 + $0xd0] sm:$0xff]
      %v2368 = vld [vmem:[#allocation2 + $0xd8] sm:$0xff]
      %v2369 = vld [vmem:[#allocation2 + $0xe0] sm:$0xff]
      %v2370 = vld [vmem:[#allocation2 + $0xe8] sm:$0xff]
      %v2371 = vld [vmem:[#allocation2 + $0xf0] sm:$0xff]
      %v2372 = vld [vmem:[#allocation2 + $0xf8] sm:$0xff]
      %v2373 = vadd.f32 %v2341, %v2215
      %v2374 = vadd.f32 %v2342, %v2218
      %v2375 = vadd.f32 %v2343, %v2223
      %v2376 = vadd.f32 %v2344, %v2226
      %v2377 = vadd.f32 %v2345, %v2231
      %v2378 = vadd.f32 %v2346, %v2234
      %v2379 = vadd.f32 %v2347, %v2239
      %v2380 = vadd.f32 %v2348, %v2242
      %v2381 = vadd.f32 %v2349, %v2247
      %v2382 = vadd.f32 %v2350, %v2250
      %v2383 = vadd.f32 %v2351, %v2255
      %v2384 = vadd.f32 %v2352, %v2258
      %v2385 = vadd.f32 %v2353, %v2263
      %v2386 = vadd.f32 %v2354, %v2266
      %v2387 = vadd.f32 %v2355, %v2271
      %v2388 = vadd.f32 %v2356, %v2274
      %v2389 = vadd.f32 %v2357, %v2279
      %v2390 = vadd.f32 %v2358, %v2282
      %v2391 = vadd.f32 %v2359, %v2287
      %v2392 = vadd.f32 %v2360, %v2290
      %v2393 = vadd.f32 %v2361, %v2295
      %v2394 = vadd.f32 %v2362, %v2298
      %v2395 = vadd.f32 %v2363, %v2303
      %v2396 = vadd.f32 %v2364, %v2306
      %v2397 = vadd.f32 %v2365, %v2311
      %v2398 = vadd.f32 %v2366, %v2314
      %v2399 = vadd.f32 %v2367, %v2319
      %v2400 = vadd.f32 %v2368, %v2322
      %v2401 = vadd.f32 %v2369, %v2327
      %v2402 = vadd.f32 %v2370, %v2330
      %v2403 = vadd.f32 %v2371, %v2335
      %v2404 = vadd.f32 %v2372, %v2338
      %2405 = vst [vmem:[#allocation2] sm:$0xff] %v2373
      %2406 = vst [vmem:[#allocation2 + $0x8] sm:$0xff] %v2374
      %2407 = vst [vmem:[#allocation2 + $0x10] sm:$0xff] %v2375
      %2408 = vst [vmem:[#allocation2 + $0x18] sm:$0xff] %v2376
      %2409 = vst [vmem:[#allocation2 + $0x20] sm:$0xff] %v2377
      %2410 = vst [vmem:[#allocation2 + $0x28] sm:$0xff] %v2378
      %2411 = vst [vmem:[#allocation2 + $0x30] sm:$0xff] %v2379
      %2412 = vst [vmem:[#allocation2 + $0x38] sm:$0xff] %v2380
      %2413 = vst [vmem:[#allocation2 + $0x40] sm:$0xff] %v2381
      %2414 = vst [vmem:[#allocation2 + $0x48] sm:$0xff] %v2382
      %2415 = vst [vmem:[#allocation2 + $0x50] sm:$0xff] %v2383
      %2416 = vst [vmem:[#allocation2 + $0x58] sm:$0xff] %v2384
      %2417 = vst [vmem:[#allocation2 + $0x60] sm:$0xff] %v2385
      %2418 = vst [vmem:[#allocation2 + $0x68] sm:$0xff] %v2386
      %2419 = vst [vmem:[#allocation2 + $0x70] sm:$0xff] %v2387
      %2420 = vst [vmem:[#allocation2 + $0x78] sm:$0xff] %v2388
      %2421 = vst [vmem:[#allocation2 + $0x80] sm:$0xff] %v2389
      %2422 = vst [vmem:[#allocation2 + $0x88] sm:$0xff] %v2390
      %2423 = vst [vmem:[#allocation2 + $0x90] sm:$0xff] %v2391
      %2424 = vst [vmem:[#allocation2 + $0x98] sm:$0xff] %v2392
      %2425 = vst [vmem:[#allocation2 + $0xa0] sm:$0xff] %v2393
      %2426 = vst [vmem:[#allocation2 + $0xa8] sm:$0xff] %v2394
      %2427 = vst [vmem:[#allocation2 + $0xb0] sm:$0xff] %v2395
      %2428 = vst [vmem:[#allocation2 + $0xb8] sm:$0xff] %v2396
      %2429 = vst [vmem:[#allocation2 + $0xc0] sm:$0xff] %v2397
      %2430 = vst [vmem:[#allocation2 + $0xc8] sm:$0xff] %v2398
      %2431 = vst [vmem:[#allocation2 + $0xd0] sm:$0xff] %v2399
      %2432 = vst [vmem:[#allocation2 + $0xd8] sm:$0xff] %v2400
      %2433 = vst [vmem:[#allocation2 + $0xe0] sm:$0xff] %v2401
      %2434 = vst [vmem:[#allocation2 + $0xe8] sm:$0xff] %v2402
      %2435 = vst [vmem:[#allocation2 + $0xf0] sm:$0xff] %v2403
      %2436 = vst [vmem:[#allocation2 + $0xf8] sm:$0xff] %v2404
      %v2437 = vld [vmem:[%s1986] sm:$0xf]
      %v2438 = vld [vmem:[%s1986 + $0x4] sm:$0xf]
      %v2439 = vld [vmem:[%s1986 + $0x8] sm:$0x1]
      %v2440 = vld [vmem:[%s1986 + $0xc] sm:$0xf]
      %v2441 = vld [vmem:[%s1986 + $0x10] sm:$0xf]
      %v2442 = vld [vmem:[%s1986 + $0x14] sm:$0x1]
      %v2443 = vld [vmem:[%s1986 + $0x18] sm:$0xf]
      %v2444 = vld [vmem:[%s1986 + $0x1c] sm:$0xf]
      %v2445 = vld [vmem:[%s1986 + $0x20] sm:$0x1]
      %v2446 = vld [vmem:[%s1986 + $0x24] sm:$0xf]
      %v2447 = vld [vmem:[%s1986 + $0x28] sm:$0xf]
      %v2448 = vld [vmem:[%s1986 + $0x2c] sm:$0x1]
      %v2449 = vld [vmem:[%s1986 + $0x30] sm:$0xf]
      %v2450 = vld [vmem:[%s1986 + $0x34] sm:$0xf]
      %v2451 = vld [vmem:[%s1986 + $0x38] sm:$0x1]
      %v2452 = vld [vmem:[%s1986 + $0x3c] sm:$0xf]
      %v2453 = vld [vmem:[%s1986 + $0x40] sm:$0xf]
      %v2454 = vld [vmem:[%s1986 + $0x44] sm:$0x1]
      %v2455 = vld [vmem:[%s1986 + $0x48] sm:$0xf]
      %v2456 = vld [vmem:[%s1986 + $0x4c] sm:$0xf]
      %v2457 = vld [vmem:[%s1986 + $0x50] sm:$0x1]
      %v2458 = vld [vmem:[%s1986 + $0x54] sm:$0xf]
      %v2459 = vld [vmem:[%s1986 + $0x58] sm:$0xf]
      %v2460 = vld [vmem:[%s1986 + $0x5c] sm:$0x1]
      %v2461 = vld [vmem:[%s1986 + $0x60] sm:$0xf]
      %v2462 = vld [vmem:[%s1986 + $0x64] sm:$0xf]
      %v2463 = vld [vmem:[%s1986 + $0x68] sm:$0x1]
      %v2464 = vld [vmem:[%s1986 + $0x6c] sm:$0xf]
      %v2465 = vld [vmem:[%s1986 + $0x70] sm:$0xf]
      %v2466 = vld [vmem:[%s1986 + $0x74] sm:$0x1]
      %v2467 = vld [vmem:[%s1986 + $0x78] sm:$0xf]
      %v2468 = vld [vmem:[%s1986 + $0x7c] sm:$0xf]
      %v2469 = vld [vmem:[%s1986 + $0x80] sm:$0x1]
      %v2470 = vld [vmem:[%s1986 + $0x84] sm:$0xf]
      %v2471 = vld [vmem:[%s1986 + $0x88] sm:$0xf]
      %v2472 = vld [vmem:[%s1986 + $0x8c] sm:$0x1]
      %v2473 = vld [vmem:[%s1986 + $0x90] sm:$0xf]
      %v2474 = vld [vmem:[%s1986 + $0x94] sm:$0xf]
      %v2475 = vld [vmem:[%s1986 + $0x98] sm:$0x1]
      %v2476 = vld [vmem:[%s1986 + $0x9c] sm:$0xf]
      %v2477 = vld [vmem:[%s1986 + $0xa0] sm:$0xf]
      %v2478 = vld [vmem:[%s1986 + $0xa4] sm:$0x1]
      %v2479 = vld [vmem:[%s1986 + $0xa8] sm:$0xf]
      %v2480 = vld [vmem:[%s1986 + $0xac] sm:$0xf]
      %v2481 = vld [vmem:[%s1986 + $0xb0] sm:$0x1]
      %v2482 = vld [vmem:[%s1986 + $0xb4] sm:$0xf]
      %v2483 = vld [vmem:[%s1986 + $0xb8] sm:$0xf]
      %v2484 = vld [vmem:[%s1986 + $0xbc] sm:$0x1]
      %v2486 = vshrl.u32 %v2437, 16
      %v2488 = vrot.slane %v2486, 4
      %v2489 = vshll.u32 %v2437, 16
      %v2491 = vrot.slane %v2489, 5
      %v2492 = vor.u32 %v2488, %v2491
      %v2493 = vrot.slane %v2492, 4
      %v2495 = vshll.u32 %v2438, 16
      %v2497 = vrot.slane %v2495, 5
      %v2498 = vsel %vm618, %v2493, %v2497
      %v2499 = vshrl.u32 %v2438, 16
      %v2501 = vrot.slane %v2499, 4
      %v2502 = vor.u32 %v2501, %v2497
      %v2503 = vrot.slane %v2502, 4
      %v2505 = vshll.u32 %v2439, 16
      %v2507 = vrot.slane %v2505, 5
      %v2508 = vsel %vm618, %v2503, %v2507
      %v2510 = vshrl.u32 %v2440, 16
      %v2512 = vrot.slane %v2510, 4
      %v2513 = vshll.u32 %v2440, 16
      %v2515 = vrot.slane %v2513, 5
      %v2516 = vor.u32 %v2512, %v2515
      %v2517 = vrot.slane %v2516, 4
      %v2519 = vshll.u32 %v2441, 16
      %v2521 = vrot.slane %v2519, 5
      %v2522 = vsel %vm618, %v2517, %v2521
      %v2523 = vshrl.u32 %v2441, 16
      %v2525 = vrot.slane %v2523, 4
      %v2526 = vor.u32 %v2525, %v2521
      %v2527 = vrot.slane %v2526, 4
      %v2529 = vshll.u32 %v2442, 16
      %v2531 = vrot.slane %v2529, 5
      %v2532 = vsel %vm618, %v2527, %v2531
      %v2534 = vshrl.u32 %v2443, 16
      %v2536 = vrot.slane %v2534, 4
      %v2537 = vshll.u32 %v2443, 16
      %v2539 = vrot.slane %v2537, 5
      %v2540 = vor.u32 %v2536, %v2539
      %v2541 = vrot.slane %v2540, 4
      %v2543 = vshll.u32 %v2444, 16
      %v2545 = vrot.slane %v2543, 5
      %v2546 = vsel %vm618, %v2541, %v2545
      %v2547 = vshrl.u32 %v2444, 16
      %v2549 = vrot.slane %v2547, 4
      %v2550 = vor.u32 %v2549, %v2545
      %v2551 = vrot.slane %v2550, 4
      %v2553 = vshll.u32 %v2445, 16
      %v2555 = vrot.slane %v2553, 5
      %v2556 = vsel %vm618, %v2551, %v2555
      %v2558 = vshrl.u32 %v2446, 16
      %v2560 = vrot.slane %v2558, 4
      %v2561 = vshll.u32 %v2446, 16
      %v2563 = vrot.slane %v2561, 5
      %v2564 = vor.u32 %v2560, %v2563
      %v2565 = vrot.slane %v2564, 4
      %v2567 = vshll.u32 %v2447, 16
      %v2569 = vrot.slane %v2567, 5
      %v2570 = vsel %vm618, %v2565, %v2569
      %v2571 = vshrl.u32 %v2447, 16
      %v2573 = vrot.slane %v2571, 4
      %v2574 = vor.u32 %v2573, %v2569
      %v2575 = vrot.slane %v2574, 4
      %v2577 = vshll.u32 %v2448, 16
      %v2579 = vrot.slane %v2577, 5
      %v2580 = vsel %vm618, %v2575, %v2579
      %v2582 = vshrl.u32 %v2449, 16
      %v2584 = vrot.slane %v2582, 4
      %v2585 = vshll.u32 %v2449, 16
      %v2587 = vrot.slane %v2585, 5
      %v2588 = vor.u32 %v2584, %v2587
      %v2589 = vrot.slane %v2588, 4
      %v2591 = vshll.u32 %v2450, 16
      %v2593 = vrot.slane %v2591, 5
      %v2594 = vsel %vm618, %v2589, %v2593
      %v2595 = vshrl.u32 %v2450, 16
      %v2597 = vrot.slane %v2595, 4
      %v2598 = vor.u32 %v2597, %v2593
      %v2599 = vrot.slane %v2598, 4
      %v2601 = vshll.u32 %v2451, 16
      %v2603 = vrot.slane %v2601, 5
      %v2604 = vsel %vm618, %v2599, %v2603
      %v2606 = vshrl.u32 %v2452, 16
      %v2608 = vrot.slane %v2606, 4
      %v2609 = vshll.u32 %v2452, 16
      %v2611 = vrot.slane %v2609, 5
      %v2612 = vor.u32 %v2608, %v2611
      %v2613 = vrot.slane %v2612, 4
      %v2615 = vshll.u32 %v2453, 16
      %v2617 = vrot.slane %v2615, 5
      %v2618 = vsel %vm618, %v2613, %v2617
      %v2619 = vshrl.u32 %v2453, 16
      %v2621 = vrot.slane %v2619, 4
      %v2622 = vor.u32 %v2621, %v2617
      %v2623 = vrot.slane %v2622, 4
      %v2625 = vshll.u32 %v2454, 16
      %v2627 = vrot.slane %v2625, 5
      %v2628 = vsel %vm618, %v2623, %v2627
      %v2630 = vshrl.u32 %v2455, 16
      %v2632 = vrot.slane %v2630, 4
      %v2633 = vshll.u32 %v2455, 16
      %v2635 = vrot.slane %v2633, 5
      %v2636 = vor.u32 %v2632, %v2635
      %v2637 = vrot.slane %v2636, 4
      %v2639 = vshll.u32 %v2456, 16
      %v2641 = vrot.slane %v2639, 5
      %v2642 = vsel %vm618, %v2637, %v2641
      %v2643 = vshrl.u32 %v2456, 16
      %v2645 = vrot.slane %v2643, 4
      %v2646 = vor.u32 %v2645, %v2641
      %v2647 = vrot.slane %v2646, 4
      %v2649 = vshll.u32 %v2457, 16
      %v2651 = vrot.slane %v2649, 5
      %v2652 = vsel %vm618, %v2647, %v2651
      %v2654 = vshrl.u32 %v2458, 16
      %v2656 = vrot.slane %v2654, 4
      %v2657 = vshll.u32 %v2458, 16
      %v2659 = vrot.slane %v2657, 5
      %v2660 = vor.u32 %v2656, %v2659
      %v2661 = vrot.slane %v2660, 4
      %v2663 = vshll.u32 %v2459, 16
      %v2665 = vrot.slane %v2663, 5
      %v2666 = vsel %vm618, %v2661, %v2665
      %v2667 = vshrl.u32 %v2459, 16
      %v2669 = vrot.slane %v2667, 4
      %v2670 = vor.u32 %v2669, %v2665
      %v2671 = vrot.slane %v2670, 4
      %v2673 = vshll.u32 %v2460, 16
      %v2675 = vrot.slane %v2673, 5
      %v2676 = vsel %vm618, %v2671, %v2675
      %v2678 = vshrl.u32 %v2461, 16
      %v2680 = vrot.slane %v2678, 4
      %v2681 = vshll.u32 %v2461, 16
      %v2683 = vrot.slane %v2681, 5
      %v2684 = vor.u32 %v2680, %v2683
      %v2685 = vrot.slane %v2684, 4
      %v2687 = vshll.u32 %v2462, 16
      %v2689 = vrot.slane %v2687, 5
      %v2690 = vsel %vm618, %v2685, %v2689
      %v2691 = vshrl.u32 %v2462, 16
      %v2693 = vrot.slane %v2691, 4
      %v2694 = vor.u32 %v2693, %v2689
      %v2695 = vrot.slane %v2694, 4
      %v2697 = vshll.u32 %v2463, 16
      %v2699 = vrot.slane %v2697, 5
      %v2700 = vsel %vm618, %v2695, %v2699
      %v2702 = vshrl.u32 %v2464, 16
      %v2704 = vrot.slane %v2702, 4
      %v2705 = vshll.u32 %v2464, 16
      %v2707 = vrot.slane %v2705, 5
      %v2708 = vor.u32 %v2704, %v2707
      %v2709 = vrot.slane %v2708, 4
      %v2711 = vshll.u32 %v2465, 16
      %v2713 = vrot.slane %v2711, 5
      %v2714 = vsel %vm618, %v2709, %v2713
      %v2715 = vshrl.u32 %v2465, 16
      %v2717 = vrot.slane %v2715, 4
      %v2718 = vor.u32 %v2717, %v2713
      %v2719 = vrot.slane %v2718, 4
      %v2721 = vshll.u32 %v2466, 16
      %v2723 = vrot.slane %v2721, 5
      %v2724 = vsel %vm618, %v2719, %v2723
      %v2726 = vshrl.u32 %v2467, 16
      %v2728 = vrot.slane %v2726, 4
      %v2729 = vshll.u32 %v2467, 16
      %v2731 = vrot.slane %v2729, 5
      %v2732 = vor.u32 %v2728, %v2731
      %v2733 = vrot.slane %v2732, 4
      %v2735 = vshll.u32 %v2468, 16
      %v2737 = vrot.slane %v2735, 5
      %v2738 = vsel %vm618, %v2733, %v2737
      %v2739 = vshrl.u32 %v2468, 16
      %v2741 = vrot.slane %v2739, 4
      %v2742 = vor.u32 %v2741, %v2737
      %v2743 = vrot.slane %v2742, 4
      %v2745 = vshll.u32 %v2469, 16
      %v2747 = vrot.slane %v2745, 5
      %v2748 = vsel %vm618, %v2743, %v2747
      %v2750 = vshrl.u32 %v2470, 16
      %v2752 = vrot.slane %v2750, 4
      %v2753 = vshll.u32 %v2470, 16
      %v2755 = vrot.slane %v2753, 5
      %v2756 = vor.u32 %v2752, %v2755
      %v2757 = vrot.slane %v2756, 4
      %v2759 = vshll.u32 %v2471, 16
      %v2761 = vrot.slane %v2759, 5
      %v2762 = vsel %vm618, %v2757, %v2761
      %v2763 = vshrl.u32 %v2471, 16
      %v2765 = vrot.slane %v2763, 4
      %v2766 = vor.u32 %v2765, %v2761
      %v2767 = vrot.slane %v2766, 4
      %v2769 = vshll.u32 %v2472, 16
      %v2771 = vrot.slane %v2769, 5
      %v2772 = vsel %vm618, %v2767, %v2771
      %v2774 = vshrl.u32 %v2473, 16
      %v2776 = vrot.slane %v2774, 4
      %v2777 = vshll.u32 %v2473, 16
      %v2779 = vrot.slane %v2777, 5
      %v2780 = vor.u32 %v2776, %v2779
      %v2781 = vrot.slane %v2780, 4
      %v2783 = vshll.u32 %v2474, 16
      %v2785 = vrot.slane %v2783, 5
      %v2786 = vsel %vm618, %v2781, %v2785
      %v2787 = vshrl.u32 %v2474, 16
      %v2789 = vrot.slane %v2787, 4
      %v2790 = vor.u32 %v2789, %v2785
      %v2791 = vrot.slane %v2790, 4
      %v2793 = vshll.u32 %v2475, 16
      %v2795 = vrot.slane %v2793, 5
      %v2796 = vsel %vm618, %v2791, %v2795
      %v2798 = vshrl.u32 %v2476, 16
      %v2800 = vrot.slane %v2798, 4
      %v2801 = vshll.u32 %v2476, 16
      %v2803 = vrot.slane %v2801, 5
      %v2804 = vor.u32 %v2800, %v2803
      %v2805 = vrot.slane %v2804, 4
      %v2807 = vshll.u32 %v2477, 16
      %v2809 = vrot.slane %v2807, 5
      %v2810 = vsel %vm618, %v2805, %v2809
      %v2811 = vshrl.u32 %v2477, 16
      %v2813 = vrot.slane %v2811, 4
      %v2814 = vor.u32 %v2813, %v2809
      %v2815 = vrot.slane %v2814, 4
      %v2817 = vshll.u32 %v2478, 16
      %v2819 = vrot.slane %v2817, 5
      %v2820 = vsel %vm618, %v2815, %v2819
      %v2822 = vshrl.u32 %v2479, 16
      %v2824 = vrot.slane %v2822, 4
      %v2825 = vshll.u32 %v2479, 16
      %v2827 = vrot.slane %v2825, 5
      %v2828 = vor.u32 %v2824, %v2827
      %v2829 = vrot.slane %v2828, 4
      %v2831 = vshll.u32 %v2480, 16
      %v2833 = vrot.slane %v2831, 5
      %v2834 = vsel %vm618, %v2829, %v2833
      %v2835 = vshrl.u32 %v2480, 16
      %v2837 = vrot.slane %v2835, 4
      %v2838 = vor.u32 %v2837, %v2833
      %v2839 = vrot.slane %v2838, 4
      %v2841 = vshll.u32 %v2481, 16
      %v2843 = vrot.slane %v2841, 5
      %v2844 = vsel %vm618, %v2839, %v2843
      %v2846 = vshrl.u32 %v2482, 16
      %v2848 = vrot.slane %v2846, 4
      %v2849 = vshll.u32 %v2482, 16
      %v2851 = vrot.slane %v2849, 5
      %v2852 = vor.u32 %v2848, %v2851
      %v2853 = vrot.slane %v2852, 4
      %v2855 = vshll.u32 %v2483, 16
      %v2857 = vrot.slane %v2855, 5
      %v2858 = vsel %vm618, %v2853, %v2857
      %v2859 = vshrl.u32 %v2483, 16
      %v2861 = vrot.slane %v2859, 4
      %v2862 = vor.u32 %v2861, %v2857
      %v2863 = vrot.slane %v2862, 4
      %v2865 = vshll.u32 %v2484, 16
      %v2867 = vrot.slane %v2865, 5
      %v2868 = vsel %vm618, %v2863, %v2867
      %s2869 = scalar_lea.vmem %s1, 256
      %v2870 = vld [vmem:[%s2869] sm:$0xf]
      %v2871 = vld [vmem:[%s2869 + $0x4] sm:$0xf]
      %v2872 = vld [vmem:[%s2869 + $0x8] sm:$0xf]
      %v2873 = vld [vmem:[%s2869 + $0xc] sm:$0xf]
      %v2874 = vld [vmem:[%s2869 + $0x10] sm:$0xf]
      %v2875 = vld [vmem:[%s2869 + $0x14] sm:$0xf]
      %v2876 = vld [vmem:[%s2869 + $0x18] sm:$0xf]
      %v2877 = vld [vmem:[%s2869 + $0x1c] sm:$0xf]
      %v2878 = vld [vmem:[%s2869 + $0x20] sm:$0xf]
      %v2879 = vld [vmem:[%s2869 + $0x24] sm:$0xf]
      %v2880 = vld [vmem:[%s2869 + $0x28] sm:$0xf]
      %v2881 = vld [vmem:[%s2869 + $0x2c] sm:$0xf]
      %v2882 = vld [vmem:[%s2869 + $0x30] sm:$0xf]
      %v2883 = vld [vmem:[%s2869 + $0x34] sm:$0xf]
      %v2884 = vld [vmem:[%s2869 + $0x38] sm:$0xf]
      %v2885 = vld [vmem:[%s2869 + $0x3c] sm:$0xf]
      %v2886 = vunpack.c.l.b16 %v2498
      %v2887 = vunpack.c.l.b16 %v2508
      %v2888 = vunpack.c.l.b16 %v2522
      %v2889 = vunpack.c.l.b16 %v2532
      %v2890 = vunpack.c.l.b16 %v2546
      %v2891 = vunpack.c.l.b16 %v2556
      %v2892 = vunpack.c.l.b16 %v2570
      %v2893 = vunpack.c.l.b16 %v2580
      %v2894 = vunpack.c.l.b16 %v2594
      %v2895 = vunpack.c.l.b16 %v2604
      %v2896 = vunpack.c.l.b16 %v2618
      %v2897 = vunpack.c.l.b16 %v2628
      %v2898 = vunpack.c.l.b16 %v2642
      %v2899 = vunpack.c.l.b16 %v2652
      %v2900 = vunpack.c.l.b16 %v2666
      %v2901 = vunpack.c.l.b16 %v2676
      %v2902 = vunpack.c.l.b16 %v2690
      %v2903 = vunpack.c.l.b16 %v2700
      %v2904 = vunpack.c.l.b16 %v2714
      %v2905 = vunpack.c.l.b16 %v2724
      %v2906 = vunpack.c.l.b16 %v2738
      %v2907 = vunpack.c.l.b16 %v2748
      %v2908 = vunpack.c.l.b16 %v2762
      %v2909 = vunpack.c.l.b16 %v2772
      %v2910 = vunpack.c.l.b16 %v2786
      %v2911 = vunpack.c.l.b16 %v2796
      %v2912 = vunpack.c.l.b16 %v2810
      %v2913 = vunpack.c.l.b16 %v2820
      %v2914 = vunpack.c.l.b16 %v2834
      %v2915 = vunpack.c.l.b16 %v2844
      %v2916 = vunpack.c.l.b16 %v2858
      %v2917 = vunpack.c.l.b16 %v2868
      %v2918 = vpack.c.b16 %v2887, %v2886
      %v2919 = vpack.c.b16 %v2889, %v2888
      %v2920 = vpack.c.b16 %v2891, %v2890
      %v2921 = vpack.c.b16 %v2893, %v2892
      %v2922 = vpack.c.b16 %v2895, %v2894
      %v2923 = vpack.c.b16 %v2897, %v2896
      %v2924 = vpack.c.b16 %v2899, %v2898
      %v2925 = vpack.c.b16 %v2901, %v2900
      %v2926 = vpack.c.b16 %v2903, %v2902
      %v2927 = vpack.c.b16 %v2905, %v2904
      %v2928 = vpack.c.b16 %v2907, %v2906
      %v2929 = vpack.c.b16 %v2909, %v2908
      %v2930 = vpack.c.b16 %v2911, %v2910
      %v2931 = vpack.c.b16 %v2913, %v2912
      %v2932 = vpack.c.b16 %v2915, %v2914
      %v2933 = vpack.c.b16 %v2917, %v2916
      %v2966 = vunpack.c.l.b16 %v2870
      %v2967 = vunpack.c.l.b16 %v2871
      %v2968 = vunpack.c.l.b16 %v2872
      %v2969 = vunpack.c.l.b16 %v2873
      %v2970 = vunpack.c.l.b16 %v2874
      %v2971 = vunpack.c.l.b16 %v2875
      %v2972 = vunpack.c.l.b16 %v2876
      %v2973 = vunpack.c.l.b16 %v2877
      %v2974 = vunpack.c.l.b16 %v2878
      %v2975 = vunpack.c.l.b16 %v2879
      %v2976 = vunpack.c.l.b16 %v2880
      %v2977 = vunpack.c.l.b16 %v2881
      %v2978 = vunpack.c.l.b16 %v2882
      %v2979 = vunpack.c.l.b16 %v2883
      %v2980 = vunpack.c.l.b16 %v2884
      %v2981 = vunpack.c.l.b16 %v2885
      %v2982 = vpack.c.b16 %v2967, %v2966
      %v2983 = vpack.c.b16 %v2969, %v2968
      %v2984 = vpack.c.b16 %v2971, %v2970
      %v2985 = vpack.c.b16 %v2973, %v2972
      %v2986 = vpack.c.b16 %v2975, %v2974
      %v2987 = vpack.c.b16 %v2977, %v2976
      %v2988 = vpack.c.b16 %v2979, %v2978
      %v2989 = vpack.c.b16 %v2981, %v2980
      %2998 = vmatprep.subr.bf16.mxu0 0
      %2999 = vmatpush1.bf16.msra.mxu0 %v2989
      %3000 = vmatprep.subr.bf16.mxu0 0
      %3001 = vmatpush1.bf16.msra.mxu0 %v2988
      %3002 = vmatprep.subr.bf16.mxu0 0
      %3003 = vmatpush1.bf16.msra.mxu0 %v2987
      %3004 = vmatprep.subr.bf16.mxu0 0
      %3005 = vmatpush1.bf16.msra.mxu0 %v2986
      %3006 = vmatprep.subr.bf16.mxu0 0
      %3007 = vmatpush1.bf16.msra.mxu0 %v2985
      %3008 = vmatprep.subr.bf16.mxu0 0
      %3009 = vmatpush1.bf16.msra.mxu0 %v2984
      %3010 = vmatprep.subr.bf16.mxu0 0
      %3011 = vmatpush1.bf16.msra.mxu0 %v2983
      %3012 = vmatprep.subr.bf16.mxu0 0
      %3013 = vmatpush1.bf16.msra.mxu0 %v2982
      %3014 = vmatprep.subr.bf16.mxu0 0
      %3015 = vmatpush2.bf16.msra.mxu0 0
      %3016 = vmatprep.subr.bf16.mxu0 0
      %3017 = vmatpush2.bf16.msra.mxu0 0
      %3018 = vmatprep.subr.bf16.mxu0 0
      %3019 = vmatpush2.bf16.msra.mxu0 0
      %3020 = vmatprep.subr.bf16.mxu0 0
      %3021 = vmatpush2.bf16.msra.mxu0 0
      %3022 = vmatprep.subr.bf16.mxu0 0
      %3023 = vmatpush2.bf16.msra.mxu0 0
      %3024 = vmatprep.subr.bf16.mxu0 0
      %3025 = vmatpush2.bf16.msra.mxu0 0
      %3026 = vmatprep.subr.bf16.mxu0 0
      %3027 = vmatpush2.bf16.msra.mxu0 0
      %3028 = vmatprep.subr.bf16.mxu0 0
      %3029 = vmatpush2.bf16.msra.mxu0 0
      %3030 = vmatprep.mubr.bf16.mxu0 0
      %3031 = vmatmul.mubr.bf16.gmra.mxu0 %v2918
      %v3032 = vpop.f32.mrf.mxu0
      %v3033 = vadd.f32 0.0, %v3032
      %v3034 = vpop.f32.mrf.mxu0
      %v3035 = vpop.f32.mrf.mxu0
      %v3036 = vadd.f32 0.0, %v3035
      %v3037 = vpop.f32.mrf.mxu0
      %3038 = vmatprep.mubr.bf16.mxu0 0
      %3039 = vmatmul.mubr.bf16.gmra.mxu0 %v2919
      %v3040 = vpop.f32.mrf.mxu0
      %v3041 = vadd.f32 0.0, %v3040
      %v3042 = vpop.f32.mrf.mxu0
      %v3043 = vpop.f32.mrf.mxu0
      %v3044 = vadd.f32 0.0, %v3043
      %v3045 = vpop.f32.mrf.mxu0
      %3046 = vmatprep.mubr.bf16.mxu0 0
      %3047 = vmatmul.mubr.bf16.gmra.mxu0 %v2920
      %v3048 = vpop.f32.mrf.mxu0
      %v3049 = vadd.f32 0.0, %v3048
      %v3050 = vpop.f32.mrf.mxu0
      %v3051 = vpop.f32.mrf.mxu0
      %v3052 = vadd.f32 0.0, %v3051
      %v3053 = vpop.f32.mrf.mxu0
      %3054 = vmatprep.mubr.bf16.mxu0 0
      %3055 = vmatmul.mubr.bf16.gmra.mxu0 %v2921
      %v3056 = vpop.f32.mrf.mxu0
      %v3057 = vadd.f32 0.0, %v3056
      %v3058 = vpop.f32.mrf.mxu0
      %v3059 = vpop.f32.mrf.mxu0
      %v3060 = vadd.f32 0.0, %v3059
      %v3061 = vpop.f32.mrf.mxu0
      %3062 = vmatprep.mubr.bf16.mxu0 0
      %3063 = vmatmul.mubr.bf16.gmra.mxu0 %v2922
      %v3064 = vpop.f32.mrf.mxu0
      %v3065 = vadd.f32 0.0, %v3064
      %v3066 = vpop.f32.mrf.mxu0
      %v3067 = vpop.f32.mrf.mxu0
      %v3068 = vadd.f32 0.0, %v3067
      %v3069 = vpop.f32.mrf.mxu0
      %3070 = vmatprep.mubr.bf16.mxu0 0
      %3071 = vmatmul.mubr.bf16.gmra.mxu0 %v2923
      %v3072 = vpop.f32.mrf.mxu0
      %v3073 = vadd.f32 0.0, %v3072
      %v3074 = vpop.f32.mrf.mxu0
      %v3075 = vpop.f32.mrf.mxu0
      %v3076 = vadd.f32 0.0, %v3075
      %v3077 = vpop.f32.mrf.mxu0
      %3078 = vmatprep.mubr.bf16.mxu0 0
      %3079 = vmatmul.mubr.bf16.gmra.mxu0 %v2924
      %v3080 = vpop.f32.mrf.mxu0
      %v3081 = vadd.f32 0.0, %v3080
      %v3082 = vpop.f32.mrf.mxu0
      %v3083 = vpop.f32.mrf.mxu0
      %v3084 = vadd.f32 0.0, %v3083
      %v3085 = vpop.f32.mrf.mxu0
      %3086 = vmatprep.mubr.bf16.mxu0 0
      %3087 = vmatmul.mubr.bf16.gmra.mxu0 %v2925
      %v3088 = vpop.f32.mrf.mxu0
      %v3089 = vadd.f32 0.0, %v3088
      %v3090 = vpop.f32.mrf.mxu0
      %v3091 = vpop.f32.mrf.mxu0
      %v3092 = vadd.f32 0.0, %v3091
      %v3093 = vpop.f32.mrf.mxu0
      %3094 = vmatprep.mubr.bf16.mxu0 0
      %3095 = vmatmul.mubr.bf16.gmra.mxu0 %v2926
      %v3096 = vpop.f32.mrf.mxu0
      %v3097 = vadd.f32 0.0, %v3096
      %v3098 = vpop.f32.mrf.mxu0
      %v3099 = vpop.f32.mrf.mxu0
      %v3100 = vadd.f32 0.0, %v3099
      %v3101 = vpop.f32.mrf.mxu0
      %3102 = vmatprep.mubr.bf16.mxu0 0
      %3103 = vmatmul.mubr.bf16.gmra.mxu0 %v2927
      %v3104 = vpop.f32.mrf.mxu0
      %v3105 = vadd.f32 0.0, %v3104
      %v3106 = vpop.f32.mrf.mxu0
      %v3107 = vpop.f32.mrf.mxu0
      %v3108 = vadd.f32 0.0, %v3107
      %v3109 = vpop.f32.mrf.mxu0
      %3110 = vmatprep.mubr.bf16.mxu0 0
      %3111 = vmatmul.mubr.bf16.gmra.mxu0 %v2928
      %v3112 = vpop.f32.mrf.mxu0
      %v3113 = vadd.f32 0.0, %v3112
      %v3114 = vpop.f32.mrf.mxu0
      %v3115 = vpop.f32.mrf.mxu0
      %v3116 = vadd.f32 0.0, %v3115
      %v3117 = vpop.f32.mrf.mxu0
      %3118 = vmatprep.mubr.bf16.mxu0 0
      %3119 = vmatmul.mubr.bf16.gmra.mxu0 %v2929
      %v3120 = vpop.f32.mrf.mxu0
      %v3121 = vadd.f32 0.0, %v3120
      %v3122 = vpop.f32.mrf.mxu0
      %v3123 = vpop.f32.mrf.mxu0
      %v3124 = vadd.f32 0.0, %v3123
      %v3125 = vpop.f32.mrf.mxu0
      %3126 = vmatprep.mubr.bf16.mxu0 0
      %3127 = vmatmul.mubr.bf16.gmra.mxu0 %v2930
      %v3128 = vpop.f32.mrf.mxu0
      %v3129 = vadd.f32 0.0, %v3128
      %v3130 = vpop.f32.mrf.mxu0
      %v3131 = vpop.f32.mrf.mxu0
      %v3132 = vadd.f32 0.0, %v3131
      %v3133 = vpop.f32.mrf.mxu0
      %3134 = vmatprep.mubr.bf16.mxu0 0
      %3135 = vmatmul.mubr.bf16.gmra.mxu0 %v2931
      %v3136 = vpop.f32.mrf.mxu0
      %v3137 = vadd.f32 0.0, %v3136
      %v3138 = vpop.f32.mrf.mxu0
      %v3139 = vpop.f32.mrf.mxu0
      %v3140 = vadd.f32 0.0, %v3139
      %v3141 = vpop.f32.mrf.mxu0
      %3142 = vmatprep.mubr.bf16.mxu0 0
      %3143 = vmatmul.mubr.bf16.gmra.mxu0 %v2932
      %v3144 = vpop.f32.mrf.mxu0
      %v3145 = vadd.f32 0.0, %v3144
      %v3146 = vpop.f32.mrf.mxu0
      %v3147 = vpop.f32.mrf.mxu0
      %v3148 = vadd.f32 0.0, %v3147
      %v3149 = vpop.f32.mrf.mxu0
      %3150 = vmatprep.mubr.bf16.mxu0 0
      %3151 = vmatmul.mubr.bf16.gmra.mxu0 %v2933
      %v3152 = vpop.f32.mrf.mxu0
      %v3153 = vadd.f32 0.0, %v3152
      %v3154 = vpop.f32.mrf.mxu0
      %v3155 = vpop.f32.mrf.mxu0
      %v3156 = vadd.f32 0.0, %v3155
      %v3157 = vpop.f32.mrf.mxu0
      %3158 = vdwg.mxu0
      %v3159 = vld [vmem:[#allocation2] sm:$0xff]
      %v3160 = vld [vmem:[#allocation2 + $0x8] sm:$0xff]
      %v3161 = vld [vmem:[#allocation2 + $0x10] sm:$0xff]
      %v3162 = vld [vmem:[#allocation2 + $0x18] sm:$0xff]
      %v3163 = vld [vmem:[#allocation2 + $0x20] sm:$0xff]
      %v3164 = vld [vmem:[#allocation2 + $0x28] sm:$0xff]
      %v3165 = vld [vmem:[#allocation2 + $0x30] sm:$0xff]
      %v3166 = vld [vmem:[#allocation2 + $0x38] sm:$0xff]
      %v3167 = vld [vmem:[#allocation2 + $0x40] sm:$0xff]
      %v3168 = vld [vmem:[#allocation2 + $0x48] sm:$0xff]
      %v3169 = vld [vmem:[#allocation2 + $0x50] sm:$0xff]
      %v3170 = vld [vmem:[#allocation2 + $0x58] sm:$0xff]
      %v3171 = vld [vmem:[#allocation2 + $0x60] sm:$0xff]
      %v3172 = vld [vmem:[#allocation2 + $0x68] sm:$0xff]
      %v3173 = vld [vmem:[#allocation2 + $0x70] sm:$0xff]
      %v3174 = vld [vmem:[#allocation2 + $0x78] sm:$0xff]
      %v3175 = vld [vmem:[#allocation2 + $0x80] sm:$0xff]
      %v3176 = vld [vmem:[#allocation2 + $0x88] sm:$0xff]
      %v3177 = vld [vmem:[#allocation2 + $0x90] sm:$0xff]
      %v3178 = vld [vmem:[#allocation2 + $0x98] sm:$0xff]
      %v3179 = vld [vmem:[#allocation2 + $0xa0] sm:$0xff]
      %v3180 = vld [vmem:[#allocation2 + $0xa8] sm:$0xff]
      %v3181 = vld [vmem:[#allocation2 + $0xb0] sm:$0xff]
      %v3182 = vld [vmem:[#allocation2 + $0xb8] sm:$0xff]
      %v3183 = vld [vmem:[#allocation2 + $0xc0] sm:$0xff]
      %v3184 = vld [vmem:[#allocation2 + $0xc8] sm:$0xff]
      %v3185 = vld [vmem:[#allocation2 + $0xd0] sm:$0xff]
      %v3186 = vld [vmem:[#allocation2 + $0xd8] sm:$0xff]
      %v3187 = vld [vmem:[#allocation2 + $0xe0] sm:$0xff]
      %v3188 = vld [vmem:[#allocation2 + $0xe8] sm:$0xff]
      %v3189 = vld [vmem:[#allocation2 + $0xf0] sm:$0xff]
      %v3190 = vld [vmem:[#allocation2 + $0xf8] sm:$0xff]
      %v3191 = vadd.f32 %v3159, %v3033
      %v3192 = vadd.f32 %v3160, %v3036
      %v3193 = vadd.f32 %v3161, %v3041
      %v3194 = vadd.f32 %v3162, %v3044
      %v3195 = vadd.f32 %v3163, %v3049
      %v3196 = vadd.f32 %v3164, %v3052
      %v3197 = vadd.f32 %v3165, %v3057
      %v3198 = vadd.f32 %v3166, %v3060
      %v3199 = vadd.f32 %v3167, %v3065
      %v3200 = vadd.f32 %v3168, %v3068
      %v3201 = vadd.f32 %v3169, %v3073
      %v3202 = vadd.f32 %v3170, %v3076
      %v3203 = vadd.f32 %v3171, %v3081
      %v3204 = vadd.f32 %v3172, %v3084
      %v3205 = vadd.f32 %v3173, %v3089
      %v3206 = vadd.f32 %v3174, %v3092
      %v3207 = vadd.f32 %v3175, %v3097
      %v3208 = vadd.f32 %v3176, %v3100
      %v3209 = vadd.f32 %v3177, %v3105
      %v3210 = vadd.f32 %v3178, %v3108
      %v3211 = vadd.f32 %v3179, %v3113
      %v3212 = vadd.f32 %v3180, %v3116
      %v3213 = vadd.f32 %v3181, %v3121
      %v3214 = vadd.f32 %v3182, %v3124
      %v3215 = vadd.f32 %v3183, %v3129
      %v3216 = vadd.f32 %v3184, %v3132
      %v3217 = vadd.f32 %v3185, %v3137
      %v3218 = vadd.f32 %v3186, %v3140
      %v3219 = vadd.f32 %v3187, %v3145
      %v3220 = vadd.f32 %v3188, %v3148
      %v3221 = vadd.f32 %v3189, %v3153
      %v3222 = vadd.f32 %v3190, %v3156
      %3223 = vst [vmem:[#allocation2] sm:$0xff] %v3191
      %3224 = vst [vmem:[#allocation2 + $0x8] sm:$0xff] %v3192
      %3225 = vst [vmem:[#allocation2 + $0x10] sm:$0xff] %v3193
      %3226 = vst [vmem:[#allocation2 + $0x18] sm:$0xff] %v3194
      %3227 = vst [vmem:[#allocation2 + $0x20] sm:$0xff] %v3195
      %3228 = vst [vmem:[#allocation2 + $0x28] sm:$0xff] %v3196
      %3229 = vst [vmem:[#allocation2 + $0x30] sm:$0xff] %v3197
      %3230 = vst [vmem:[#allocation2 + $0x38] sm:$0xff] %v3198
      %3231 = vst [vmem:[#allocation2 + $0x40] sm:$0xff] %v3199
      %3232 = vst [vmem:[#allocation2 + $0x48] sm:$0xff] %v3200
      %3233 = vst [vmem:[#allocation2 + $0x50] sm:$0xff] %v3201
      %3234 = vst [vmem:[#allocation2 + $0x58] sm:$0xff] %v3202
      %3235 = vst [vmem:[#allocation2 + $0x60] sm:$0xff] %v3203
      %3236 = vst [vmem:[#allocation2 + $0x68] sm:$0xff] %v3204
      %3237 = vst [vmem:[#allocation2 + $0x70] sm:$0xff] %v3205
      %3238 = vst [vmem:[#allocation2 + $0x78] sm:$0xff] %v3206
      %3239 = vst [vmem:[#allocation2 + $0x80] sm:$0xff] %v3207
      %3240 = vst [vmem:[#allocation2 + $0x88] sm:$0xff] %v3208
      %3241 = vst [vmem:[#allocation2 + $0x90] sm:$0xff] %v3209
      %3242 = vst [vmem:[#allocation2 + $0x98] sm:$0xff] %v3210
      %3243 = vst [vmem:[#allocation2 + $0xa0] sm:$0xff] %v3211
      %3244 = vst [vmem:[#allocation2 + $0xa8] sm:$0xff] %v3212
      %3245 = vst [vmem:[#allocation2 + $0xb0] sm:$0xff] %v3213
      %3246 = vst [vmem:[#allocation2 + $0xb8] sm:$0xff] %v3214
      %3247 = vst [vmem:[#allocation2 + $0xc0] sm:$0xff] %v3215
      %3248 = vst [vmem:[#allocation2 + $0xc8] sm:$0xff] %v3216
      %3249 = vst [vmem:[#allocation2 + $0xd0] sm:$0xff] %v3217
      %3250 = vst [vmem:[#allocation2 + $0xd8] sm:$0xff] %v3218
      %3251 = vst [vmem:[#allocation2 + $0xe0] sm:$0xff] %v3219
      %3252 = vst [vmem:[#allocation2 + $0xe8] sm:$0xff] %v3220
      %3253 = vst [vmem:[#allocation2 + $0xf0] sm:$0xff] %v3221
      %3254 = vst [vmem:[#allocation2 + $0xf8] sm:$0xff] %v3222
      %v3255 = vld [vmem:[%s1986] sm:$0xe]
      %v3256 = vld [vmem:[%s1986 + $0x4] sm:$0xf]
      %v3257 = vld [vmem:[%s1986 + $0x8] sm:$0x1]
      %v3258 = vld [vmem:[%s1986 + $0xc] sm:$0xe]
      %v3259 = vld [vmem:[%s1986 + $0x10] sm:$0xf]
      %v3260 = vld [vmem:[%s1986 + $0x14] sm:$0x1]
      %v3261 = vld [vmem:[%s1986 + $0x18] sm:$0xe]
      %v3262 = vld [vmem:[%s1986 + $0x1c] sm:$0xf]
      %v3263 = vld [vmem:[%s1986 + $0x20] sm:$0x1]
      %v3264 = vld [vmem:[%s1986 + $0x24] sm:$0xe]
      %v3265 = vld [vmem:[%s1986 + $0x28] sm:$0xf]
      %v3266 = vld [vmem:[%s1986 + $0x2c] sm:$0x1]
      %v3267 = vld [vmem:[%s1986 + $0x30] sm:$0xe]
      %v3268 = vld [vmem:[%s1986 + $0x34] sm:$0xf]
      %v3269 = vld [vmem:[%s1986 + $0x38] sm:$0x1]
      %v3270 = vld [vmem:[%s1986 + $0x3c] sm:$0xe]
      %v3271 = vld [vmem:[%s1986 + $0x40] sm:$0xf]
      %v3272 = vld [vmem:[%s1986 + $0x44] sm:$0x1]
      %v3273 = vld [vmem:[%s1986 + $0x48] sm:$0xe]
      %v3274 = vld [vmem:[%s1986 + $0x4c] sm:$0xf]
      %v3275 = vld [vmem:[%s1986 + $0x50] sm:$0x1]
      %v3276 = vld [vmem:[%s1986 + $0x54] sm:$0xe]
      %v3277 = vld [vmem:[%s1986 + $0x58] sm:$0xf]
      %v3278 = vld [vmem:[%s1986 + $0x5c] sm:$0x1]
      %v3279 = vld [vmem:[%s1986 + $0x60] sm:$0xe]
      %v3280 = vld [vmem:[%s1986 + $0x64] sm:$0xf]
      %v3281 = vld [vmem:[%s1986 + $0x68] sm:$0x1]
      %v3282 = vld [vmem:[%s1986 + $0x6c] sm:$0xe]
      %v3283 = vld [vmem:[%s1986 + $0x70] sm:$0xf]
      %v3284 = vld [vmem:[%s1986 + $0x74] sm:$0x1]
      %v3285 = vld [vmem:[%s1986 + $0x78] sm:$0xe]
      %v3286 = vld [vmem:[%s1986 + $0x7c] sm:$0xf]
      %v3287 = vld [vmem:[%s1986 + $0x80] sm:$0x1]
      %v3288 = vld [vmem:[%s1986 + $0x84] sm:$0xe]
      %v3289 = vld [vmem:[%s1986 + $0x88] sm:$0xf]
      %v3290 = vld [vmem:[%s1986 + $0x8c] sm:$0x1]
      %v3291 = vld [vmem:[%s1986 + $0x90] sm:$0xe]
      %v3292 = vld [vmem:[%s1986 + $0x94] sm:$0xf]
      %v3293 = vld [vmem:[%s1986 + $0x98] sm:$0x1]
      %v3294 = vld [vmem:[%s1986 + $0x9c] sm:$0xe]
      %v3295 = vld [vmem:[%s1986 + $0xa0] sm:$0xf]
      %v3296 = vld [vmem:[%s1986 + $0xa4] sm:$0x1]
      %v3297 = vld [vmem:[%s1986 + $0xa8] sm:$0xe]
      %v3298 = vld [vmem:[%s1986 + $0xac] sm:$0xf]
      %v3299 = vld [vmem:[%s1986 + $0xb0] sm:$0x1]
      %v3300 = vld [vmem:[%s1986 + $0xb4] sm:$0xe]
      %v3301 = vld [vmem:[%s1986 + $0xb8] sm:$0xf]
      %v3302 = vld [vmem:[%s1986 + $0xbc] sm:$0x1]
      %v3351 = vrot.slane %v3255, 5
      %v3352 = vrot.slane %v3351, 4
      %v3353 = vrot.slane %v3256, 5
      %v3354 = vsel %vm1487, %v3352, %v3353
      %v3355 = vrot.slane %v3353, 4
      %v3356 = vrot.slane %v3257, 5
      %v3357 = vsel %vm1487, %v3355, %v3356
      %v3358 = vrot.slane %v3258, 5
      %v3359 = vrot.slane %v3358, 4
      %v3360 = vrot.slane %v3259, 5
      %v3361 = vsel %vm1487, %v3359, %v3360
      %v3362 = vrot.slane %v3360, 4
      %v3363 = vrot.slane %v3260, 5
      %v3364 = vsel %vm1487, %v3362, %v3363
      %v3365 = vrot.slane %v3261, 5
      %v3366 = vrot.slane %v3365, 4
      %v3367 = vrot.slane %v3262, 5
      %v3368 = vsel %vm1487, %v3366, %v3367
      %v3369 = vrot.slane %v3367, 4
      %v3370 = vrot.slane %v3263, 5
      %v3371 = vsel %vm1487, %v3369, %v3370
      %v3372 = vrot.slane %v3264, 5
      %v3373 = vrot.slane %v3372, 4
      %v3374 = vrot.slane %v3265, 5
      %v3375 = vsel %vm1487, %v3373, %v3374
      %v3376 = vrot.slane %v3374, 4
      %v3377 = vrot.slane %v3266, 5
      %v3378 = vsel %vm1487, %v3376, %v3377
      %v3379 = vrot.slane %v3267, 5
      %v3380 = vrot.slane %v3379, 4
      %v3381 = vrot.slane %v3268, 5
      %v3382 = vsel %vm1487, %v3380, %v3381
      %v3383 = vrot.slane %v3381, 4
      %v3384 = vrot.slane %v3269, 5
      %v3385 = vsel %vm1487, %v3383, %v3384
      %v3386 = vrot.slane %v3270, 5
      %v3387 = vrot.slane %v3386, 4
      %v3388 = vrot.slane %v3271, 5
      %v3389 = vsel %vm1487, %v3387, %v3388
      %v3390 = vrot.slane %v3388, 4
      %v3391 = vrot.slane %v3272, 5
      %v3392 = vsel %vm1487, %v3390, %v3391
      %v3393 = vrot.slane %v3273, 5
      %v3394 = vrot.slane %v3393, 4
      %v3395 = vrot.slane %v3274, 5
      %v3396 = vsel %vm1487, %v3394, %v3395
      %v3397 = vrot.slane %v3395, 4
      %v3398 = vrot.slane %v3275, 5
      %v3399 = vsel %vm1487, %v3397, %v3398
      %v3400 = vrot.slane %v3276, 5
      %v3401 = vrot.slane %v3400, 4
      %v3402 = vrot.slane %v3277, 5
      %v3403 = vsel %vm1487, %v3401, %v3402
      %v3404 = vrot.slane %v3402, 4
      %v3405 = vrot.slane %v3278, 5
      %v3406 = vsel %vm1487, %v3404, %v3405
      %v3407 = vrot.slane %v3279, 5
      %v3408 = vrot.slane %v3407, 4
      %v3409 = vrot.slane %v3280, 5
      %v3410 = vsel %vm1487, %v3408, %v3409
      %v3411 = vrot.slane %v3409, 4
      %v3412 = vrot.slane %v3281, 5
      %v3413 = vsel %vm1487, %v3411, %v3412
      %v3414 = vrot.slane %v3282, 5
      %v3415 = vrot.slane %v3414, 4
      %v3416 = vrot.slane %v3283, 5
      %v3417 = vsel %vm1487, %v3415, %v3416
      %v3418 = vrot.slane %v3416, 4
      %v3419 = vrot.slane %v3284, 5
      %v3420 = vsel %vm1487, %v3418, %v3419
      %v3421 = vrot.slane %v3285, 5
      %v3422 = vrot.slane %v3421, 4
      %v3423 = vrot.slane %v3286, 5
      %v3424 = vsel %vm1487, %v3422, %v3423
      %v3425 = vrot.slane %v3423, 4
      %v3426 = vrot.slane %v3287, 5
      %v3427 = vsel %vm1487, %v3425, %v3426
      %v3428 = vrot.slane %v3288, 5
      %v3429 = vrot.slane %v3428, 4
      %v3430 = vrot.slane %v3289, 5
      %v3431 = vsel %vm1487, %v3429, %v3430
      %v3432 = vrot.slane %v3430, 4
      %v3433 = vrot.slane %v3290, 5
      %v3434 = vsel %vm1487, %v3432, %v3433
      %v3435 = vrot.slane %v3291, 5
      %v3436 = vrot.slane %v3435, 4
      %v3437 = vrot.slane %v3292, 5
      %v3438 = vsel %vm1487, %v3436, %v3437
      %v3439 = vrot.slane %v3437, 4
      %v3440 = vrot.slane %v3293, 5
      %v3441 = vsel %vm1487, %v3439, %v3440
      %v3442 = vrot.slane %v3294, 5
      %v3443 = vrot.slane %v3442, 4
      %v3444 = vrot.slane %v3295, 5
      %v3445 = vsel %vm1487, %v3443, %v3444
      %v3446 = vrot.slane %v3444, 4
      %v3447 = vrot.slane %v3296, 5
      %v3448 = vsel %vm1487, %v3446, %v3447
      %v3449 = vrot.slane %v3297, 5
      %v3450 = vrot.slane %v3449, 4
      %v3451 = vrot.slane %v3298, 5
      %v3452 = vsel %vm1487, %v3450, %v3451
      %v3453 = vrot.slane %v3451, 4
      %v3454 = vrot.slane %v3299, 5
      %v3455 = vsel %vm1487, %v3453, %v3454
      %v3456 = vrot.slane %v3300, 5
      %v3457 = vrot.slane %v3456, 4
      %v3458 = vrot.slane %v3301, 5
      %v3459 = vsel %vm1487, %v3457, %v3458
      %v3460 = vrot.slane %v3458, 4
      %v3461 = vrot.slane %v3302, 5
      %v3462 = vsel %vm1487, %v3460, %v3461
      %s3463 = scalar_lea.vmem %s1, 320
      %v3464 = vld [vmem:[%s3463] sm:$0xf]
      %v3465 = vld [vmem:[%s3463 + $0x4] sm:$0xf]
      %v3466 = vld [vmem:[%s3463 + $0x8] sm:$0xf]
      %v3467 = vld [vmem:[%s3463 + $0xc] sm:$0xf]
      %v3468 = vld [vmem:[%s3463 + $0x10] sm:$0xf]
      %v3469 = vld [vmem:[%s3463 + $0x14] sm:$0xf]
      %v3470 = vld [vmem:[%s3463 + $0x18] sm:$0xf]
      %v3471 = vld [vmem:[%s3463 + $0x1c] sm:$0xf]
      %v3472 = vld [vmem:[%s3463 + $0x20] sm:$0xf]
      %v3473 = vld [vmem:[%s3463 + $0x24] sm:$0xf]
      %v3474 = vld [vmem:[%s3463 + $0x28] sm:$0xf]
      %v3475 = vld [vmem:[%s3463 + $0x2c] sm:$0xf]
      %v3476 = vld [vmem:[%s3463 + $0x30] sm:$0xf]
      %v3477 = vld [vmem:[%s3463 + $0x34] sm:$0xf]
      %v3478 = vld [vmem:[%s3463 + $0x38] sm:$0xf]
      %v3479 = vld [vmem:[%s3463 + $0x3c] sm:$0xf]
      %v3480 = vunpack.c.l.b16 %v3354
      %v3481 = vunpack.c.l.b16 %v3357
      %v3482 = vunpack.c.l.b16 %v3361
      %v3483 = vunpack.c.l.b16 %v3364
      %v3484 = vunpack.c.l.b16 %v3368
      %v3485 = vunpack.c.l.b16 %v3371
      %v3486 = vunpack.c.l.b16 %v3375
      %v3487 = vunpack.c.l.b16 %v3378
      %v3488 = vunpack.c.l.b16 %v3382
      %v3489 = vunpack.c.l.b16 %v3385
      %v3490 = vunpack.c.l.b16 %v3389
      %v3491 = vunpack.c.l.b16 %v3392
      %v3492 = vunpack.c.l.b16 %v3396
      %v3493 = vunpack.c.l.b16 %v3399
      %v3494 = vunpack.c.l.b16 %v3403
      %v3495 = vunpack.c.l.b16 %v3406
      %v3496 = vunpack.c.l.b16 %v3410
      %v3497 = vunpack.c.l.b16 %v3413
      %v3498 = vunpack.c.l.b16 %v3417
      %v3499 = vunpack.c.l.b16 %v3420
      %v3500 = vunpack.c.l.b16 %v3424
      %v3501 = vunpack.c.l.b16 %v3427
      %v3502 = vunpack.c.l.b16 %v3431
      %v3503 = vunpack.c.l.b16 %v3434
      %v3504 = vunpack.c.l.b16 %v3438
      %v3505 = vunpack.c.l.b16 %v3441
      %v3506 = vunpack.c.l.b16 %v3445
      %v3507 = vunpack.c.l.b16 %v3448
      %v3508 = vunpack.c.l.b16 %v3452
      %v3509 = vunpack.c.l.b16 %v3455
      %v3510 = vunpack.c.l.b16 %v3459
      %v3511 = vunpack.c.l.b16 %v3462
      %v3512 = vpack.c.b16 %v3481, %v3480
      %v3513 = vpack.c.b16 %v3483, %v3482
      %v3514 = vpack.c.b16 %v3485, %v3484
      %v3515 = vpack.c.b16 %v3487, %v3486
      %v3516 = vpack.c.b16 %v3489, %v3488
      %v3517 = vpack.c.b16 %v3491, %v3490
      %v3518 = vpack.c.b16 %v3493, %v3492
      %v3519 = vpack.c.b16 %v3495, %v3494
      %v3520 = vpack.c.b16 %v3497, %v3496
      %v3521 = vpack.c.b16 %v3499, %v3498
      %v3522 = vpack.c.b16 %v3501, %v3500
      %v3523 = vpack.c.b16 %v3503, %v3502
      %v3524 = vpack.c.b16 %v3505, %v3504
      %v3525 = vpack.c.b16 %v3507, %v3506
      %v3526 = vpack.c.b16 %v3509, %v3508
      %v3527 = vpack.c.b16 %v3511, %v3510
      %v3560 = vunpack.c.l.b16 %v3464
      %v3561 = vunpack.c.l.b16 %v3465
      %v3562 = vunpack.c.l.b16 %v3466
      %v3563 = vunpack.c.l.b16 %v3467
      %v3564 = vunpack.c.l.b16 %v3468
      %v3565 = vunpack.c.l.b16 %v3469
      %v3566 = vunpack.c.l.b16 %v3470
      %v3567 = vunpack.c.l.b16 %v3471
      %v3568 = vunpack.c.l.b16 %v3472
      %v3569 = vunpack.c.l.b16 %v3473
      %v3570 = vunpack.c.l.b16 %v3474
      %v3571 = vunpack.c.l.b16 %v3475
      %v3572 = vunpack.c.l.b16 %v3476
      %v3573 = vunpack.c.l.b16 %v3477
      %v3574 = vunpack.c.l.b16 %v3478
      %v3575 = vunpack.c.l.b16 %v3479
      %v3576 = vpack.c.b16 %v3561, %v3560
      %v3577 = vpack.c.b16 %v3563, %v3562
      %v3578 = vpack.c.b16 %v3565, %v3564
      %v3579 = vpack.c.b16 %v3567, %v3566
      %v3580 = vpack.c.b16 %v3569, %v3568
      %v3581 = vpack.c.b16 %v3571, %v3570
      %v3582 = vpack.c.b16 %v3573, %v3572
      %v3583 = vpack.c.b16 %v3575, %v3574
      %3592 = vmatprep.subr.bf16.mxu0 0
      %3593 = vmatpush1.bf16.msra.mxu0 %v3583
      %3594 = vmatprep.subr.bf16.mxu0 0
      %3595 = vmatpush1.bf16.msra.mxu0 %v3582
      %3596 = vmatprep.subr.bf16.mxu0 0
      %3597 = vmatpush1.bf16.msra.mxu0 %v3581
      %3598 = vmatprep.subr.bf16.mxu0 0
      %3599 = vmatpush1.bf16.msra.mxu0 %v3580
      %3600 = vmatprep.subr.bf16.mxu0 0
      %3601 = vmatpush1.bf16.msra.mxu0 %v3579
      %3602 = vmatprep.subr.bf16.mxu0 0
      %3603 = vmatpush1.bf16.msra.mxu0 %v3578
      %3604 = vmatprep.subr.bf16.mxu0 0
      %3605 = vmatpush1.bf16.msra.mxu0 %v3577
      %3606 = vmatprep.subr.bf16.mxu0 0
      %3607 = vmatpush1.bf16.msra.mxu0 %v3576
      %3608 = vmatprep.subr.bf16.mxu0 0
      %3609 = vmatpush2.bf16.msra.mxu0 0
      %3610 = vmatprep.subr.bf16.mxu0 0
      %3611 = vmatpush2.bf16.msra.mxu0 0
      %3612 = vmatprep.subr.bf16.mxu0 0
      %3613 = vmatpush2.bf16.msra.mxu0 0
      %3614 = vmatprep.subr.bf16.mxu0 0
      %3615 = vmatpush2.bf16.msra.mxu0 0
      %3616 = vmatprep.subr.bf16.mxu0 0
      %3617 = vmatpush2.bf16.msra.mxu0 0
      %3618 = vmatprep.subr.bf16.mxu0 0
      %3619 = vmatpush2.bf16.msra.mxu0 0
      %3620 = vmatprep.subr.bf16.mxu0 0
      %3621 = vmatpush2.bf16.msra.mxu0 0
      %3622 = vmatprep.subr.bf16.mxu0 0
      %3623 = vmatpush2.bf16.msra.mxu0 0
      %3624 = vmatprep.mubr.bf16.mxu0 0
      %3625 = vmatmul.mubr.bf16.gmra.mxu0 %v3512
      %v3626 = vpop.f32.mrf.mxu0
      %v3627 = vadd.f32 0.0, %v3626
      %v3628 = vpop.f32.mrf.mxu0
      %v3629 = vpop.f32.mrf.mxu0
      %v3630 = vadd.f32 0.0, %v3629
      %v3631 = vpop.f32.mrf.mxu0
      %3632 = vmatprep.mubr.bf16.mxu0 0
      %3633 = vmatmul.mubr.bf16.gmra.mxu0 %v3513
      %v3634 = vpop.f32.mrf.mxu0
      %v3635 = vadd.f32 0.0, %v3634
      %v3636 = vpop.f32.mrf.mxu0
      %v3637 = vpop.f32.mrf.mxu0
      %v3638 = vadd.f32 0.0, %v3637
      %v3639 = vpop.f32.mrf.mxu0
      %3640 = vmatprep.mubr.bf16.mxu0 0
      %3641 = vmatmul.mubr.bf16.gmra.mxu0 %v3514
      %v3642 = vpop.f32.mrf.mxu0
      %v3643 = vadd.f32 0.0, %v3642
      %v3644 = vpop.f32.mrf.mxu0
      %v3645 = vpop.f32.mrf.mxu0
      %v3646 = vadd.f32 0.0, %v3645
      %v3647 = vpop.f32.mrf.mxu0
      %3648 = vmatprep.mubr.bf16.mxu0 0
      %3649 = vmatmul.mubr.bf16.gmra.mxu0 %v3515
      %v3650 = vpop.f32.mrf.mxu0
      %v3651 = vadd.f32 0.0, %v3650
      %v3652 = vpop.f32.mrf.mxu0
      %v3653 = vpop.f32.mrf.mxu0
      %v3654 = vadd.f32 0.0, %v3653
      %v3655 = vpop.f32.mrf.mxu0
      %3656 = vmatprep.mubr.bf16.mxu0 0
      %3657 = vmatmul.mubr.bf16.gmra.mxu0 %v3516
      %v3658 = vpop.f32.mrf.mxu0
      %v3659 = vadd.f32 0.0, %v3658
      %v3660 = vpop.f32.mrf.mxu0
      %v3661 = vpop.f32.mrf.mxu0
      %v3662 = vadd.f32 0.0, %v3661
      %v3663 = vpop.f32.mrf.mxu0
      %3664 = vmatprep.mubr.bf16.mxu0 0
      %3665 = vmatmul.mubr.bf16.gmra.mxu0 %v3517
      %v3666 = vpop.f32.mrf.mxu0
      %v3667 = vadd.f32 0.0, %v3666
      %v3668 = vpop.f32.mrf.mxu0
      %v3669 = vpop.f32.mrf.mxu0
      %v3670 = vadd.f32 0.0, %v3669
      %v3671 = vpop.f32.mrf.mxu0
      %3672 = vmatprep.mubr.bf16.mxu0 0
      %3673 = vmatmul.mubr.bf16.gmra.mxu0 %v3518
      %v3674 = vpop.f32.mrf.mxu0
      %v3675 = vadd.f32 0.0, %v3674
      %v3676 = vpop.f32.mrf.mxu0
      %v3677 = vpop.f32.mrf.mxu0
      %v3678 = vadd.f32 0.0, %v3677
      %v3679 = vpop.f32.mrf.mxu0
      %3680 = vmatprep.mubr.bf16.mxu0 0
      %3681 = vmatmul.mubr.bf16.gmra.mxu0 %v3519
      %v3682 = vpop.f32.mrf.mxu0
      %v3683 = vadd.f32 0.0, %v3682
      %v3684 = vpop.f32.mrf.mxu0
      %v3685 = vpop.f32.mrf.mxu0
      %v3686 = vadd.f32 0.0, %v3685
      %v3687 = vpop.f32.mrf.mxu0
      %3688 = vmatprep.mubr.bf16.mxu0 0
      %3689 = vmatmul.mubr.bf16.gmra.mxu0 %v3520
      %v3690 = vpop.f32.mrf.mxu0
      %v3691 = vadd.f32 0.0, %v3690
      %v3692 = vpop.f32.mrf.mxu0
      %v3693 = vpop.f32.mrf.mxu0
      %v3694 = vadd.f32 0.0, %v3693
      %v3695 = vpop.f32.mrf.mxu0
      %3696 = vmatprep.mubr.bf16.mxu0 0
      %3697 = vmatmul.mubr.bf16.gmra.mxu0 %v3521
      %v3698 = vpop.f32.mrf.mxu0
      %v3699 = vadd.f32 0.0, %v3698
      %v3700 = vpop.f32.mrf.mxu0
      %v3701 = vpop.f32.mrf.mxu0
      %v3702 = vadd.f32 0.0, %v3701
      %v3703 = vpop.f32.mrf.mxu0
      %3704 = vmatprep.mubr.bf16.mxu0 0
      %3705 = vmatmul.mubr.bf16.gmra.mxu0 %v3522
      %v3706 = vpop.f32.mrf.mxu0
      %v3707 = vadd.f32 0.0, %v3706
      %v3708 = vpop.f32.mrf.mxu0
      %v3709 = vpop.f32.mrf.mxu0
      %v3710 = vadd.f32 0.0, %v3709
      %v3711 = vpop.f32.mrf.mxu0
      %3712 = vmatprep.mubr.bf16.mxu0 0
      %3713 = vmatmul.mubr.bf16.gmra.mxu0 %v3523
      %v3714 = vpop.f32.mrf.mxu0
      %v3715 = vadd.f32 0.0, %v3714
      %v3716 = vpop.f32.mrf.mxu0
      %v3717 = vpop.f32.mrf.mxu0
      %v3718 = vadd.f32 0.0, %v3717
      %v3719 = vpop.f32.mrf.mxu0
      %3720 = vmatprep.mubr.bf16.mxu0 0
      %3721 = vmatmul.mubr.bf16.gmra.mxu0 %v3524
      %v3722 = vpop.f32.mrf.mxu0
      %v3723 = vadd.f32 0.0, %v3722
      %v3724 = vpop.f32.mrf.mxu0
      %v3725 = vpop.f32.mrf.mxu0
      %v3726 = vadd.f32 0.0, %v3725
      %v3727 = vpop.f32.mrf.mxu0
      %3728 = vmatprep.mubr.bf16.mxu0 0
      %3729 = vmatmul.mubr.bf16.gmra.mxu0 %v3525
      %v3730 = vpop.f32.mrf.mxu0
      %v3731 = vadd.f32 0.0, %v3730
      %v3732 = vpop.f32.mrf.mxu0
      %v3733 = vpop.f32.mrf.mxu0
      %v3734 = vadd.f32 0.0, %v3733
      %v3735 = vpop.f32.mrf.mxu0
      %3736 = vmatprep.mubr.bf16.mxu0 0
      %3737 = vmatmul.mubr.bf16.gmra.mxu0 %v3526
      %v3738 = vpop.f32.mrf.mxu0
      %v3739 = vadd.f32 0.0, %v3738
      %v3740 = vpop.f32.mrf.mxu0
      %v3741 = vpop.f32.mrf.mxu0
      %v3742 = vadd.f32 0.0, %v3741
      %v3743 = vpop.f32.mrf.mxu0
      %3744 = vmatprep.mubr.bf16.mxu0 0
      %3745 = vmatmul.mubr.bf16.gmra.mxu0 %v3527
      %v3746 = vpop.f32.mrf.mxu0
      %v3747 = vadd.f32 0.0, %v3746
      %v3748 = vpop.f32.mrf.mxu0
      %v3749 = vpop.f32.mrf.mxu0
      %v3750 = vadd.f32 0.0, %v3749
      %v3751 = vpop.f32.mrf.mxu0
      %3752 = vdwg.mxu0
      %v3753 = vld [vmem:[#allocation2] sm:$0xff]
      %v3754 = vld [vmem:[#allocation2 + $0x8] sm:$0xff]
      %v3755 = vld [vmem:[#allocation2 + $0x10] sm:$0xff]
      %v3756 = vld [vmem:[#allocation2 + $0x18] sm:$0xff]
      %v3757 = vld [vmem:[#allocation2 + $0x20] sm:$0xff]
      %v3758 = vld [vmem:[#allocation2 + $0x28] sm:$0xff]
      %v3759 = vld [vmem:[#allocation2 + $0x30] sm:$0xff]
      %v3760 = vld [vmem:[#allocation2 + $0x38] sm:$0xff]
      %v3761 = vld [vmem:[#allocation2 + $0x40] sm:$0xff]
      %v3762 = vld [vmem:[#allocation2 + $0x48] sm:$0xff]
      %v3763 = vld [vmem:[#allocation2 + $0x50] sm:$0xff]
      %v3764 = vld [vmem:[#allocation2 + $0x58] sm:$0xff]
      %v3765 = vld [vmem:[#allocation2 + $0x60] sm:$0xff]
      %v3766 = vld [vmem:[#allocation2 + $0x68] sm:$0xff]
      %v3767 = vld [vmem:[#allocation2 + $0x70] sm:$0xff]
      %v3768 = vld [vmem:[#allocation2 + $0x78] sm:$0xff]
      %v3769 = vld [vmem:[#allocation2 + $0x80] sm:$0xff]
      %v3770 = vld [vmem:[#allocation2 + $0x88] sm:$0xff]
      %v3771 = vld [vmem:[#allocation2 + $0x90] sm:$0xff]
      %v3772 = vld [vmem:[#allocation2 + $0x98] sm:$0xff]
      %v3773 = vld [vmem:[#allocation2 + $0xa0] sm:$0xff]
      %v3774 = vld [vmem:[#allocation2 + $0xa8] sm:$0xff]
      %v3775 = vld [vmem:[#allocation2 + $0xb0] sm:$0xff]
      %v3776 = vld [vmem:[#allocation2 + $0xb8] sm:$0xff]
      %v3777 = vld [vmem:[#allocation2 + $0xc0] sm:$0xff]
      %v3778 = vld [vmem:[#allocation2 + $0xc8] sm:$0xff]
      %v3779 = vld [vmem:[#allocation2 + $0xd0] sm:$0xff]
      %v3780 = vld [vmem:[#allocation2 + $0xd8] sm:$0xff]
      %v3781 = vld [vmem:[#allocation2 + $0xe0] sm:$0xff]
      %v3782 = vld [vmem:[#allocation2 + $0xe8] sm:$0xff]
      %v3783 = vld [vmem:[#allocation2 + $0xf0] sm:$0xff]
      %v3784 = vld [vmem:[#allocation2 + $0xf8] sm:$0xff]
      %v3785 = vadd.f32 %v3753, %v3627
      %v3786 = vadd.f32 %v3754, %v3630
      %v3787 = vadd.f32 %v3755, %v3635
      %v3788 = vadd.f32 %v3756, %v3638
      %v3789 = vadd.f32 %v3757, %v3643
      %v3790 = vadd.f32 %v3758, %v3646
      %v3791 = vadd.f32 %v3759, %v3651
      %v3792 = vadd.f32 %v3760, %v3654
      %v3793 = vadd.f32 %v3761, %v3659
      %v3794 = vadd.f32 %v3762, %v3662
      %v3795 = vadd.f32 %v3763, %v3667
      %v3796 = vadd.f32 %v3764, %v3670
      %v3797 = vadd.f32 %v3765, %v3675
      %v3798 = vadd.f32 %v3766, %v3678
      %v3799 = vadd.f32 %v3767, %v3683
      %v3800 = vadd.f32 %v3768, %v3686
      %v3801 = vadd.f32 %v3769, %v3691
      %v3802 = vadd.f32 %v3770, %v3694
      %v3803 = vadd.f32 %v3771, %v3699
      %v3804 = vadd.f32 %v3772, %v3702
      %v3805 = vadd.f32 %v3773, %v3707
      %v3806 = vadd.f32 %v3774, %v3710
      %v3807 = vadd.f32 %v3775, %v3715
      %v3808 = vadd.f32 %v3776, %v3718
      %v3809 = vadd.f32 %v3777, %v3723
      %v3810 = vadd.f32 %v3778, %v3726
      %v3811 = vadd.f32 %v3779, %v3731
      %v3812 = vadd.f32 %v3780, %v3734
      %v3813 = vadd.f32 %v3781, %v3739
      %v3814 = vadd.f32 %v3782, %v3742
      %v3815 = vadd.f32 %v3783, %v3747
      %v3816 = vadd.f32 %v3784, %v3750
      %3817 = vst [vmem:[#allocation2] sm:$0xff] %v3785
      %3818 = vst [vmem:[#allocation2 + $0x8] sm:$0xff] %v3786
      %3819 = vst [vmem:[#allocation2 + $0x10] sm:$0xff] %v3787
      %3820 = vst [vmem:[#allocation2 + $0x18] sm:$0xff] %v3788
      %3821 = vst [vmem:[#allocation2 + $0x20] sm:$0xff] %v3789
      %3822 = vst [vmem:[#allocation2 + $0x28] sm:$0xff] %v3790
      %3823 = vst [vmem:[#allocation2 + $0x30] sm:$0xff] %v3791
      %3824 = vst [vmem:[#allocation2 + $0x38] sm:$0xff] %v3792
      %3825 = vst [vmem:[#allocation2 + $0x40] sm:$0xff] %v3793
      %3826 = vst [vmem:[#allocation2 + $0x48] sm:$0xff] %v3794
      %3827 = vst [vmem:[#allocation2 + $0x50] sm:$0xff] %v3795
      %3828 = vst [vmem:[#allocation2 + $0x58] sm:$0xff] %v3796
      %3829 = vst [vmem:[#allocation2 + $0x60] sm:$0xff] %v3797
      %3830 = vst [vmem:[#allocation2 + $0x68] sm:$0xff] %v3798
      %3831 = vst [vmem:[#allocation2 + $0x70] sm:$0xff] %v3799
      %3832 = vst [vmem:[#allocation2 + $0x78] sm:$0xff] %v3800
      %3833 = vst [vmem:[#allocation2 + $0x80] sm:$0xff] %v3801
      %3834 = vst [vmem:[#allocation2 + $0x88] sm:$0xff] %v3802
      %3835 = vst [vmem:[#allocation2 + $0x90] sm:$0xff] %v3803
      %3836 = vst [vmem:[#allocation2 + $0x98] sm:$0xff] %v3804
      %3837 = vst [vmem:[#allocation2 + $0xa0] sm:$0xff] %v3805
      %3838 = vst [vmem:[#allocation2 + $0xa8] sm:$0xff] %v3806
      %3839 = vst [vmem:[#allocation2 + $0xb0] sm:$0xff] %v3807
      %3840 = vst [vmem:[#allocation2 + $0xb8] sm:$0xff] %v3808
      %3841 = vst [vmem:[#allocation2 + $0xc0] sm:$0xff] %v3809
      %3842 = vst [vmem:[#allocation2 + $0xc8] sm:$0xff] %v3810
      %3843 = vst [vmem:[#allocation2 + $0xd0] sm:$0xff] %v3811
      %3844 = vst [vmem:[#allocation2 + $0xd8] sm:$0xff] %v3812
      %3845 = vst [vmem:[#allocation2 + $0xe0] sm:$0xff] %v3813
      %3846 = vst [vmem:[#allocation2 + $0xe8] sm:$0xff] %v3814
      %3847 = vst [vmem:[#allocation2 + $0xf0] sm:$0xff] %v3815
      %3848 = vst [vmem:[#allocation2 + $0xf8] sm:$0xff] %v3816
      %s3849 = scalar_lea.vmem %s172, 24
      %v3850 = vld [vmem:[%s3849] sm:$0xf]
      %v3851 = vld [vmem:[%s3849 + $0x4] sm:$0xf]
      %v3852 = vld [vmem:[%s3849 + $0xc] sm:$0xf]
      %v3853 = vld [vmem:[%s3849 + $0x10] sm:$0xf]
      %v3854 = vld [vmem:[%s3849 + $0x18] sm:$0xf]
      %v3855 = vld [vmem:[%s3849 + $0x1c] sm:$0xf]
      %v3856 = vld [vmem:[%s3849 + $0x24] sm:$0xf]
      %v3857 = vld [vmem:[%s3849 + $0x28] sm:$0xf]
      %v3858 = vld [vmem:[%s3849 + $0x30] sm:$0xf]
      %v3859 = vld [vmem:[%s3849 + $0x34] sm:$0xf]
      %v3860 = vld [vmem:[%s3849 + $0x3c] sm:$0xf]
      %v3861 = vld [vmem:[%s3849 + $0x40] sm:$0xf]
      %v3862 = vld [vmem:[%s3849 + $0x48] sm:$0xf]
      %v3863 = vld [vmem:[%s3849 + $0x4c] sm:$0xf]
      %v3864 = vld [vmem:[%s3849 + $0x54] sm:$0xf]
      %v3865 = vld [vmem:[%s3849 + $0x58] sm:$0xf]
      %v3866 = vld [vmem:[%s3849 + $0x60] sm:$0xf]
      %v3867 = vld [vmem:[%s3849 + $0x64] sm:$0xf]
      %v3868 = vld [vmem:[%s3849 + $0x6c] sm:$0xf]
      %v3869 = vld [vmem:[%s3849 + $0x70] sm:$0xf]
      %v3870 = vld [vmem:[%s3849 + $0x78] sm:$0xf]
      %v3871 = vld [vmem:[%s3849 + $0x7c] sm:$0xf]
      %v3872 = vld [vmem:[%s3849 + $0x84] sm:$0xf]
      %v3873 = vld [vmem:[%s3849 + $0x88] sm:$0xf]
      %v3874 = vld [vmem:[%s3849 + $0x90] sm:$0xf]
      %v3875 = vld [vmem:[%s3849 + $0x94] sm:$0xf]
      %v3876 = vld [vmem:[%s3849 + $0x9c] sm:$0xf]
      %v3877 = vld [vmem:[%s3849 + $0xa0] sm:$0xf]
      %v3878 = vld [vmem:[%s3849 + $0xa8] sm:$0xf]
      %v3879 = vld [vmem:[%s3849 + $0xac] sm:$0xf]
      %v3880 = vld [vmem:[%s3849 + $0xb4] sm:$0xf]
      %v3881 = vld [vmem:[%s3849 + $0xb8] sm:$0xf]
      %s3882 = scalar_lea.vmem %s1, 384
      %v3883 = vld [vmem:[%s3882] sm:$0xf]
      %v3884 = vld [vmem:[%s3882 + $0x4] sm:$0xf]
      %v3885 = vld [vmem:[%s3882 + $0x8] sm:$0xf]
      %v3886 = vld [vmem:[%s3882 + $0xc] sm:$0xf]
      %v3887 = vld [vmem:[%s3882 + $0x10] sm:$0xf]
      %v3888 = vld [vmem:[%s3882 + $0x14] sm:$0xf]
      %v3889 = vld [vmem:[%s3882 + $0x18] sm:$0xf]
      %v3890 = vld [vmem:[%s3882 + $0x1c] sm:$0xf]
      %v3891 = vld [vmem:[%s3882 + $0x20] sm:$0xf]
      %v3892 = vld [vmem:[%s3882 + $0x24] sm:$0xf]
      %v3893 = vld [vmem:[%s3882 + $0x28] sm:$0xf]
      %v3894 = vld [vmem:[%s3882 + $0x2c] sm:$0xf]
      %v3895 = vld [vmem:[%s3882 + $0x30] sm:$0xf]
      %v3896 = vld [vmem:[%s3882 + $0x34] sm:$0xf]
      %v3897 = vld [vmem:[%s3882 + $0x38] sm:$0xf]
      %v3898 = vld [vmem:[%s3882 + $0x3c] sm:$0xf]
      %v3931 = vunpack.c.l.b16 %v3850
      %v3932 = vunpack.c.l.b16 %v3851
      %v3933 = vunpack.c.l.b16 %v3852
      %v3934 = vunpack.c.l.b16 %v3853
      %v3935 = vunpack.c.l.b16 %v3854
      %v3936 = vunpack.c.l.b16 %v3855
      %v3937 = vunpack.c.l.b16 %v3856
      %v3938 = vunpack.c.l.b16 %v3857
      %v3939 = vunpack.c.l.b16 %v3858
      %v3940 = vunpack.c.l.b16 %v3859
      %v3941 = vunpack.c.l.b16 %v3860
      %v3942 = vunpack.c.l.b16 %v3861
      %v3943 = vunpack.c.l.b16 %v3862
      %v3944 = vunpack.c.l.b16 %v3863
      %v3945 = vunpack.c.l.b16 %v3864
      %v3946 = vunpack.c.l.b16 %v3865
      %v3947 = vunpack.c.l.b16 %v3866
      %v3948 = vunpack.c.l.b16 %v3867
      %v3949 = vunpack.c.l.b16 %v3868
      %v3950 = vunpack.c.l.b16 %v3869
      %v3951 = vunpack.c.l.b16 %v3870
      %v3952 = vunpack.c.l.b16 %v3871
      %v3953 = vunpack.c.l.b16 %v3872
      %v3954 = vunpack.c.l.b16 %v3873
      %v3955 = vunpack.c.l.b16 %v3874
      %v3956 = vunpack.c.l.b16 %v3875
      %v3957 = vunpack.c.l.b16 %v3876
      %v3958 = vunpack.c.l.b16 %v3877
      %v3959 = vunpack.c.l.b16 %v3878
      %v3960 = vunpack.c.l.b16 %v3879
      %v3961 = vunpack.c.l.b16 %v3880
      %v3962 = vunpack.c.l.b16 %v3881
      %v3963 = vpack.c.b16 %v3932, %v3931
      %v3964 = vpack.c.b16 %v3934, %v3933
      %v3965 = vpack.c.b16 %v3936, %v3935
      %v3966 = vpack.c.b16 %v3938, %v3937
      %v3967 = vpack.c.b16 %v3940, %v3939
      %v3968 = vpack.c.b16 %v3942, %v3941
      %v3969 = vpack.c.b16 %v3944, %v3943
      %v3970 = vpack.c.b16 %v3946, %v3945
      %v3971 = vpack.c.b16 %v3948, %v3947
      %v3972 = vpack.c.b16 %v3950, %v3949
      %v3973 = vpack.c.b16 %v3952, %v3951
      %v3974 = vpack.c.b16 %v3954, %v3953
      %v3975 = vpack.c.b16 %v3956, %v3955
      %v3976 = vpack.c.b16 %v3958, %v3957
      %v3977 = vpack.c.b16 %v3960, %v3959
      %v3978 = vpack.c.b16 %v3962, %v3961
      %v4011 = vunpack.c.l.b16 %v3883
      %v4012 = vunpack.c.l.b16 %v3884
      %v4013 = vunpack.c.l.b16 %v3885
      %v4014 = vunpack.c.l.b16 %v3886
      %v4015 = vunpack.c.l.b16 %v3887
      %v4016 = vunpack.c.l.b16 %v3888
      %v4017 = vunpack.c.l.b16 %v3889
      %v4018 = vunpack.c.l.b16 %v3890
      %v4019 = vunpack.c.l.b16 %v3891
      %v4020 = vunpack.c.l.b16 %v3892
      %v4021 = vunpack.c.l.b16 %v3893
      %v4022 = vunpack.c.l.b16 %v3894
      %v4023 = vunpack.c.l.b16 %v3895
      %v4024 = vunpack.c.l.b16 %v3896
      %v4025 = vunpack.c.l.b16 %v3897
      %v4026 = vunpack.c.l.b16 %v3898
      %v4027 = vpack.c.b16 %v4012, %v4011
      %v4028 = vpack.c.b16 %v4014, %v4013
      %v4029 = vpack.c.b16 %v4016, %v4015
      %v4030 = vpack.c.b16 %v4018, %v4017
      %v4031 = vpack.c.b16 %v4020, %v4019
      %v4032 = vpack.c.b16 %v4022, %v4021
      %v4033 = vpack.c.b16 %v4024, %v4023
      %v4034 = vpack.c.b16 %v4026, %v4025
      %4043 = vmatprep.subr.bf16.mxu0 0
      %4044 = vmatpush1.bf16.msra.mxu0 %v4034
      %4045 = vmatprep.subr.bf16.mxu0 0
      %4046 = vmatpush1.bf16.msra.mxu0 %v4033
      %4047 = vmatprep.subr.bf16.mxu0 0
      %4048 = vmatpush1.bf16.msra.mxu0 %v4032
      %4049 = vmatprep.subr.bf16.mxu0 0
      %4050 = vmatpush1.bf16.msra.mxu0 %v4031
      %4051 = vmatprep.subr.bf16.mxu0 0
      %4052 = vmatpush1.bf16.msra.mxu0 %v4030
      %4053 = vmatprep.subr.bf16.mxu0 0
      %4054 = vmatpush1.bf16.msra.mxu0 %v4029
      %4055 = vmatprep.subr.bf16.mxu0 0
      %4056 = vmatpush1.bf16.msra.mxu0 %v4028
      %4057 = vmatprep.subr.bf16.mxu0 0
      %4058 = vmatpush1.bf16.msra.mxu0 %v4027
      %4059 = vmatprep.subr.bf16.mxu0 0
      %4060 = vmatpush2.bf16.msra.mxu0 0
      %4061 = vmatprep.subr.bf16.mxu0 0
      %4062 = vmatpush2.bf16.msra.mxu0 0
      %4063 = vmatprep.subr.bf16.mxu0 0
      %4064 = vmatpush2.bf16.msra.mxu0 0
      %4065 = vmatprep.subr.bf16.mxu0 0
      %4066 = vmatpush2.bf16.msra.mxu0 0
      %4067 = vmatprep.subr.bf16.mxu0 0
      %4068 = vmatpush2.bf16.msra.mxu0 0
      %4069 = vmatprep.subr.bf16.mxu0 0
      %4070 = vmatpush2.bf16.msra.mxu0 0
      %4071 = vmatprep.subr.bf16.mxu0 0
      %4072 = vmatpush2.bf16.msra.mxu0 0
      %4073 = vmatprep.subr.bf16.mxu0 0
      %4074 = vmatpush2.bf16.msra.mxu0 0
      %4075 = vmatprep.mubr.bf16.mxu0 0
      %4076 = vmatmul.mubr.bf16.gmra.mxu0 %v3963
      %v4077 = vpop.f32.mrf.mxu0
      %v4078 = vadd.f32 0.0, %v4077
      %v4079 = vpop.f32.mrf.mxu0
      %v4080 = vpop.f32.mrf.mxu0
      %v4081 = vadd.f32 0.0, %v4080
      %v4082 = vpop.f32.mrf.mxu0
      %4083 = vmatprep.mubr.bf16.mxu0 0
      %4084 = vmatmul.mubr.bf16.gmra.mxu0 %v3964
      %v4085 = vpop.f32.mrf.mxu0
      %v4086 = vadd.f32 0.0, %v4085
      %v4087 = vpop.f32.mrf.mxu0
      %v4088 = vpop.f32.mrf.mxu0
      %v4089 = vadd.f32 0.0, %v4088
      %v4090 = vpop.f32.mrf.mxu0
      %4091 = vmatprep.mubr.bf16.mxu0 0
      %4092 = vmatmul.mubr.bf16.gmra.mxu0 %v3965
      %v4093 = vpop.f32.mrf.mxu0
      %v4094 = vadd.f32 0.0, %v4093
      %v4095 = vpop.f32.mrf.mxu0
      %v4096 = vpop.f32.mrf.mxu0
      %v4097 = vadd.f32 0.0, %v4096
      %v4098 = vpop.f32.mrf.mxu0
      %4099 = vmatprep.mubr.bf16.mxu0 0
      %4100 = vmatmul.mubr.bf16.gmra.mxu0 %v3966
      %v4101 = vpop.f32.mrf.mxu0
      %v4102 = vadd.f32 0.0, %v4101
      %v4103 = vpop.f32.mrf.mxu0
      %v4104 = vpop.f32.mrf.mxu0
      %v4105 = vadd.f32 0.0, %v4104
      %v4106 = vpop.f32.mrf.mxu0
      %4107 = vmatprep.mubr.bf16.mxu0 0
      %4108 = vmatmul.mubr.bf16.gmra.mxu0 %v3967
      %v4109 = vpop.f32.mrf.mxu0
      %v4110 = vadd.f32 0.0, %v4109
      %v4111 = vpop.f32.mrf.mxu0
      %v4112 = vpop.f32.mrf.mxu0
      %v4113 = vadd.f32 0.0, %v4112
      %v4114 = vpop.f32.mrf.mxu0
      %4115 = vmatprep.mubr.bf16.mxu0 0
      %4116 = vmatmul.mubr.bf16.gmra.mxu0 %v3968
      %v4117 = vpop.f32.mrf.mxu0
      %v4118 = vadd.f32 0.0, %v4117
      %v4119 = vpop.f32.mrf.mxu0
      %v4120 = vpop.f32.mrf.mxu0
      %v4121 = vadd.f32 0.0, %v4120
      %v4122 = vpop.f32.mrf.mxu0
      %4123 = vmatprep.mubr.bf16.mxu0 0
      %4124 = vmatmul.mubr.bf16.gmra.mxu0 %v3969
      %v4125 = vpop.f32.mrf.mxu0
      %v4126 = vadd.f32 0.0, %v4125
      %v4127 = vpop.f32.mrf.mxu0
      %v4128 = vpop.f32.mrf.mxu0
      %v4129 = vadd.f32 0.0, %v4128
      %v4130 = vpop.f32.mrf.mxu0
      %4131 = vmatprep.mubr.bf16.mxu0 0
      %4132 = vmatmul.mubr.bf16.gmra.mxu0 %v3970
      %v4133 = vpop.f32.mrf.mxu0
      %v4134 = vadd.f32 0.0, %v4133
      %v4135 = vpop.f32.mrf.mxu0
      %v4136 = vpop.f32.mrf.mxu0
      %v4137 = vadd.f32 0.0, %v4136
      %v4138 = vpop.f32.mrf.mxu0
      %4139 = vmatprep.mubr.bf16.mxu0 0
      %4140 = vmatmul.mubr.bf16.gmra.mxu0 %v3971
      %v4141 = vpop.f32.mrf.mxu0
      %v4142 = vadd.f32 0.0, %v4141
      %v4143 = vpop.f32.mrf.mxu0
      %v4144 = vpop.f32.mrf.mxu0
      %v4145 = vadd.f32 0.0, %v4144
      %v4146 = vpop.f32.mrf.mxu0
      %4147 = vmatprep.mubr.bf16.mxu0 0
      %4148 = vmatmul.mubr.bf16.gmra.mxu0 %v3972
      %v4149 = vpop.f32.mrf.mxu0
      %v4150 = vadd.f32 0.0, %v4149
      %v4151 = vpop.f32.mrf.mxu0
      %v4152 = vpop.f32.mrf.mxu0
      %v4153 = vadd.f32 0.0, %v4152
      %v4154 = vpop.f32.mrf.mxu0
      %4155 = vmatprep.mubr.bf16.mxu0 0
      %4156 = vmatmul.mubr.bf16.gmra.mxu0 %v3973
      %v4157 = vpop.f32.mrf.mxu0
      %v4158 = vadd.f32 0.0, %v4157
      %v4159 = vpop.f32.mrf.mxu0
      %v4160 = vpop.f32.mrf.mxu0
      %v4161 = vadd.f32 0.0, %v4160
      %v4162 = vpop.f32.mrf.mxu0
      %4163 = vmatprep.mubr.bf16.mxu0 0
      %4164 = vmatmul.mubr.bf16.gmra.mxu0 %v3974
      %v4165 = vpop.f32.mrf.mxu0
      %v4166 = vadd.f32 0.0, %v4165
      %v4167 = vpop.f32.mrf.mxu0
      %v4168 = vpop.f32.mrf.mxu0
      %v4169 = vadd.f32 0.0, %v4168
      %v4170 = vpop.f32.mrf.mxu0
      %4171 = vmatprep.mubr.bf16.mxu0 0
      %4172 = vmatmul.mubr.bf16.gmra.mxu0 %v3975
      %v4173 = vpop.f32.mrf.mxu0
      %v4174 = vadd.f32 0.0, %v4173
      %v4175 = vpop.f32.mrf.mxu0
      %v4176 = vpop.f32.mrf.mxu0
      %v4177 = vadd.f32 0.0, %v4176
      %v4178 = vpop.f32.mrf.mxu0
      %4179 = vmatprep.mubr.bf16.mxu0 0
      %4180 = vmatmul.mubr.bf16.gmra.mxu0 %v3976
      %v4181 = vpop.f32.mrf.mxu0
      %v4182 = vadd.f32 0.0, %v4181
      %v4183 = vpop.f32.mrf.mxu0
      %v4184 = vpop.f32.mrf.mxu0
      %v4185 = vadd.f32 0.0, %v4184
      %v4186 = vpop.f32.mrf.mxu0
      %4187 = vmatprep.mubr.bf16.mxu0 0
      %4188 = vmatmul.mubr.bf16.gmra.mxu0 %v3977
      %v4189 = vpop.f32.mrf.mxu0
      %v4190 = vadd.f32 0.0, %v4189
      %v4191 = vpop.f32.mrf.mxu0
      %v4192 = vpop.f32.mrf.mxu0
      %v4193 = vadd.f32 0.0, %v4192
      %v4194 = vpop.f32.mrf.mxu0
      %4195 = vmatprep.mubr.bf16.mxu0 0
      %4196 = vmatmul.mubr.bf16.gmra.mxu0 %v3978
      %v4197 = vpop.f32.mrf.mxu0
      %v4198 = vadd.f32 0.0, %v4197
      %v4199 = vpop.f32.mrf.mxu0
      %v4200 = vpop.f32.mrf.mxu0
      %v4201 = vadd.f32 0.0, %v4200
      %v4202 = vpop.f32.mrf.mxu0
      %4203 = vdwg.mxu0
      %v4204 = vld [vmem:[#allocation2] sm:$0xff]
      %v4205 = vld [vmem:[#allocation2 + $0x8] sm:$0xff]
      %v4206 = vld [vmem:[#allocation2 + $0x10] sm:$0xff]
      %v4207 = vld [vmem:[#allocation2 + $0x18] sm:$0xff]
      %v4208 = vld [vmem:[#allocation2 + $0x20] sm:$0xff]
      %v4209 = vld [vmem:[#allocation2 + $0x28] sm:$0xff]
      %v4210 = vld [vmem:[#allocation2 + $0x30] sm:$0xff]
      %v4211 = vld [vmem:[#allocation2 + $0x38] sm:$0xff]
      %v4212 = vld [vmem:[#allocation2 + $0x40] sm:$0xff]
      %v4213 = vld [vmem:[#allocation2 + $0x48] sm:$0xff]
      %v4214 = vld [vmem:[#allocation2 + $0x50] sm:$0xff]
      %v4215 = vld [vmem:[#allocation2 + $0x58] sm:$0xff]
      %v4216 = vld [vmem:[#allocation2 + $0x60] sm:$0xff]
      %v4217 = vld [vmem:[#allocation2 + $0x68] sm:$0xff]
      %v4218 = vld [vmem:[#allocation2 + $0x70] sm:$0xff]
      %v4219 = vld [vmem:[#allocation2 + $0x78] sm:$0xff]
      %v4220 = vld [vmem:[#allocation2 + $0x80] sm:$0xff]
      %v4221 = vld [vmem:[#allocation2 + $0x88] sm:$0xff]
      %v4222 = vld [vmem:[#allocation2 + $0x90] sm:$0xff]
      %v4223 = vld [vmem:[#allocation2 + $0x98] sm:$0xff]
      %v4224 = vld [vmem:[#allocation2 + $0xa0] sm:$0xff]
      %v4225 = vld [vmem:[#allocation2 + $0xa8] sm:$0xff]
      %v4226 = vld [vmem:[#allocation2 + $0xb0] sm:$0xff]
      %v4227 = vld [vmem:[#allocation2 + $0xb8] sm:$0xff]
      %v4228 = vld [vmem:[#allocation2 + $0xc0] sm:$0xff]
      %v4229 = vld [vmem:[#allocation2 + $0xc8] sm:$0xff]
      %v4230 = vld [vmem:[#allocation2 + $0xd0] sm:$0xff]
      %v4231 = vld [vmem:[#allocation2 + $0xd8] sm:$0xff]
      %v4232 = vld [vmem:[#allocation2 + $0xe0] sm:$0xff]
      %v4233 = vld [vmem:[#allocation2 + $0xe8] sm:$0xff]
      %v4234 = vld [vmem:[#allocation2 + $0xf0] sm:$0xff]
      %v4235 = vld [vmem:[#allocation2 + $0xf8] sm:$0xff]
      %v4236 = vadd.f32 %v4204, %v4078
      %v4237 = vadd.f32 %v4205, %v4081
      %v4238 = vadd.f32 %v4206, %v4086
      %v4239 = vadd.f32 %v4207, %v4089
      %v4240 = vadd.f32 %v4208, %v4094
      %v4241 = vadd.f32 %v4209, %v4097
      %v4242 = vadd.f32 %v4210, %v4102
      %v4243 = vadd.f32 %v4211, %v4105
      %v4244 = vadd.f32 %v4212, %v4110
      %v4245 = vadd.f32 %v4213, %v4113
      %v4246 = vadd.f32 %v4214, %v4118
      %v4247 = vadd.f32 %v4215, %v4121
      %v4248 = vadd.f32 %v4216, %v4126
      %v4249 = vadd.f32 %v4217, %v4129
      %v4250 = vadd.f32 %v4218, %v4134
      %v4251 = vadd.f32 %v4219, %v4137
      %v4252 = vadd.f32 %v4220, %v4142
      %v4253 = vadd.f32 %v4221, %v4145
      %v4254 = vadd.f32 %v4222, %v4150
      %v4255 = vadd.f32 %v4223, %v4153
      %v4256 = vadd.f32 %v4224, %v4158
      %v4257 = vadd.f32 %v4225, %v4161
      %v4258 = vadd.f32 %v4226, %v4166
      %v4259 = vadd.f32 %v4227, %v4169
      %v4260 = vadd.f32 %v4228, %v4174
      %v4261 = vadd.f32 %v4229, %v4177
      %v4262 = vadd.f32 %v4230, %v4182
      %v4263 = vadd.f32 %v4231, %v4185
      %v4264 = vadd.f32 %v4232, %v4190
      %v4265 = vadd.f32 %v4233, %v4193
      %v4266 = vadd.f32 %v4234, %v4198
      %v4267 = vadd.f32 %v4235, %v4201
      %4268 = vst [vmem:[#allocation2] sm:$0xff] %v4236
      %4269 = vst [vmem:[#allocation2 + $0x8] sm:$0xff] %v4237
      %4270 = vst [vmem:[#allocation2 + $0x10] sm:$0xff] %v4238
      %4271 = vst [vmem:[#allocation2 + $0x18] sm:$0xff] %v4239
      %4272 = vst [vmem:[#allocation2 + $0x20] sm:$0xff] %v4240
      %4273 = vst [vmem:[#allocation2 + $0x28] sm:$0xff] %v4241
      %4274 = vst [vmem:[#allocation2 + $0x30] sm:$0xff] %v4242
      %4275 = vst [vmem:[#allocation2 + $0x38] sm:$0xff] %v4243
      %4276 = vst [vmem:[#allocation2 + $0x40] sm:$0xff] %v4244
      %4277 = vst [vmem:[#allocation2 + $0x48] sm:$0xff] %v4245
      %4278 = vst [vmem:[#allocation2 + $0x50] sm:$0xff] %v4246
      %4279 = vst [vmem:[#allocation2 + $0x58] sm:$0xff] %v4247
      %4280 = vst [vmem:[#allocation2 + $0x60] sm:$0xff] %v4248
      %4281 = vst [vmem:[#allocation2 + $0x68] sm:$0xff] %v4249
      %4282 = vst [vmem:[#allocation2 + $0x70] sm:$0xff] %v4250
      %4283 = vst [vmem:[#allocation2 + $0x78] sm:$0xff] %v4251
      %4284 = vst [vmem:[#allocation2 + $0x80] sm:$0xff] %v4252
      %4285 = vst [vmem:[#allocation2 + $0x88] sm:$0xff] %v4253
      %4286 = vst [vmem:[#allocation2 + $0x90] sm:$0xff] %v4254
      %4287 = vst [vmem:[#allocation2 + $0x98] sm:$0xff] %v4255
      %4288 = vst [vmem:[#allocation2 + $0xa0] sm:$0xff] %v4256
      %4289 = vst [vmem:[#allocation2 + $0xa8] sm:$0xff] %v4257
      %4290 = vst [vmem:[#allocation2 + $0xb0] sm:$0xff] %v4258
      %4291 = vst [vmem:[#allocation2 + $0xb8] sm:$0xff] %v4259
      %4292 = vst [vmem:[#allocation2 + $0xc0] sm:$0xff] %v4260
      %4293 = vst [vmem:[#allocation2 + $0xc8] sm:$0xff] %v4261
      %4294 = vst [vmem:[#allocation2 + $0xd0] sm:$0xff] %v4262
      %4295 = vst [vmem:[#allocation2 + $0xd8] sm:$0xff] %v4263
      %4296 = vst [vmem:[#allocation2 + $0xe0] sm:$0xff] %v4264
      %4297 = vst [vmem:[#allocation2 + $0xe8] sm:$0xff] %v4265
      %4298 = vst [vmem:[#allocation2 + $0xf0] sm:$0xff] %v4266
      %4299 = vst [vmem:[#allocation2 + $0xf8] sm:$0xff] %v4267
      %v4300 = vld [vmem:[%s3849] sm:$0xf]
      %v4301 = vld [vmem:[%s3849 + $0x4] sm:$0xf]
      %v4302 = vld [vmem:[%s3849 + $0x8] sm:$0x1]
      %v4303 = vld [vmem:[%s3849 + $0xc] sm:$0xf]
      %v4304 = vld [vmem:[%s3849 + $0x10] sm:$0xf]
      %v4305 = vld [vmem:[%s3849 + $0x14] sm:$0x1]
      %v4306 = vld [vmem:[%s3849 + $0x18] sm:$0xf]
      %v4307 = vld [vmem:[%s3849 + $0x1c] sm:$0xf]
      %v4308 = vld [vmem:[%s3849 + $0x20] sm:$0x1]
      %v4309 = vld [vmem:[%s3849 + $0x24] sm:$0xf]
      %v4310 = vld [vmem:[%s3849 + $0x28] sm:$0xf]
      %v4311 = vld [vmem:[%s3849 + $0x2c] sm:$0x1]
      %v4312 = vld [vmem:[%s3849 + $0x30] sm:$0xf]
      %v4313 = vld [vmem:[%s3849 + $0x34] sm:$0xf]
      %v4314 = vld [vmem:[%s3849 + $0x38] sm:$0x1]
      %v4315 = vld [vmem:[%s3849 + $0x3c] sm:$0xf]
      %v4316 = vld [vmem:[%s3849 + $0x40] sm:$0xf]
      %v4317 = vld [vmem:[%s3849 + $0x44] sm:$0x1]
      %v4318 = vld [vmem:[%s3849 + $0x48] sm:$0xf]
      %v4319 = vld [vmem:[%s3849 + $0x4c] sm:$0xf]
      %v4320 = vld [vmem:[%s3849 + $0x50] sm:$0x1]
      %v4321 = vld [vmem:[%s3849 + $0x54] sm:$0xf]
      %v4322 = vld [vmem:[%s3849 + $0x58] sm:$0xf]
      %v4323 = vld [vmem:[%s3849 + $0x5c] sm:$0x1]
      %v4324 = vld [vmem:[%s3849 + $0x60] sm:$0xf]
      %v4325 = vld [vmem:[%s3849 + $0x64] sm:$0xf]
      %v4326 = vld [vmem:[%s3849 + $0x68] sm:$0x1]
      %v4327 = vld [vmem:[%s3849 + $0x6c] sm:$0xf]
      %v4328 = vld [vmem:[%s3849 + $0x70] sm:$0xf]
      %v4329 = vld [vmem:[%s3849 + $0x74] sm:$0x1]
      %v4330 = vld [vmem:[%s3849 + $0x78] sm:$0xf]
      %v4331 = vld [vmem:[%s3849 + $0x7c] sm:$0xf]
      %v4332 = vld [vmem:[%s3849 + $0x80] sm:$0x1]
      %v4333 = vld [vmem:[%s3849 + $0x84] sm:$0xf]
      %v4334 = vld [vmem:[%s3849 + $0x88] sm:$0xf]
      %v4335 = vld [vmem:[%s3849 + $0x8c] sm:$0x1]
      %v4336 = vld [vmem:[%s3849 + $0x90] sm:$0xf]
      %v4337 = vld [vmem:[%s3849 + $0x94] sm:$0xf]
      %v4338 = vld [vmem:[%s3849 + $0x98] sm:$0x1]
      %v4339 = vld [vmem:[%s3849 + $0x9c] sm:$0xf]
      %v4340 = vld [vmem:[%s3849 + $0xa0] sm:$0xf]
      %v4341 = vld [vmem:[%s3849 + $0xa4] sm:$0x1]
      %v4342 = vld [vmem:[%s3849 + $0xa8] sm:$0xf]
      %v4343 = vld [vmem:[%s3849 + $0xac] sm:$0xf]
      %v4344 = vld [vmem:[%s3849 + $0xb0] sm:$0x1]
      %v4345 = vld [vmem:[%s3849 + $0xb4] sm:$0xf]
      %v4346 = vld [vmem:[%s3849 + $0xb8] sm:$0xf]
      %v4347 = vld [vmem:[%s3849 + $0xbc] sm:$0x1]
      %v4349 = vshrl.u32 %v4300, 16
      %v4351 = vrot.slane %v4349, 4
      %v4352 = vshll.u32 %v4300, 16
      %v4354 = vrot.slane %v4352, 5
      %v4355 = vor.u32 %v4351, %v4354
      %v4356 = vrot.slane %v4355, 4
      %v4358 = vshll.u32 %v4301, 16
      %v4360 = vrot.slane %v4358, 5
      %v4361 = vsel %vm618, %v4356, %v4360
      %v4362 = vshrl.u32 %v4301, 16
      %v4364 = vrot.slane %v4362, 4
      %v4365 = vor.u32 %v4364, %v4360
      %v4366 = vrot.slane %v4365, 4
      %v4368 = vshll.u32 %v4302, 16
      %v4370 = vrot.slane %v4368, 5
      %v4371 = vsel %vm618, %v4366, %v4370
      %v4373 = vshrl.u32 %v4303, 16
      %v4375 = vrot.slane %v4373, 4
      %v4376 = vshll.u32 %v4303, 16
      %v4378 = vrot.slane %v4376, 5
      %v4379 = vor.u32 %v4375, %v4378
      %v4380 = vrot.slane %v4379, 4
      %v4382 = vshll.u32 %v4304, 16
      %v4384 = vrot.slane %v4382, 5
      %v4385 = vsel %vm618, %v4380, %v4384
      %v4386 = vshrl.u32 %v4304, 16
      %v4388 = vrot.slane %v4386, 4
      %v4389 = vor.u32 %v4388, %v4384
      %v4390 = vrot.slane %v4389, 4
      %v4392 = vshll.u32 %v4305, 16
      %v4394 = vrot.slane %v4392, 5
      %v4395 = vsel %vm618, %v4390, %v4394
      %v4397 = vshrl.u32 %v4306, 16
      %v4399 = vrot.slane %v4397, 4
      %v4400 = vshll.u32 %v4306, 16
      %v4402 = vrot.slane %v4400, 5
      %v4403 = vor.u32 %v4399, %v4402
      %v4404 = vrot.slane %v4403, 4
      %v4406 = vshll.u32 %v4307, 16
      %v4408 = vrot.slane %v4406, 5
      %v4409 = vsel %vm618, %v4404, %v4408
      %v4410 = vshrl.u32 %v4307, 16
      %v4412 = vrot.slane %v4410, 4
      %v4413 = vor.u32 %v4412, %v4408
      %v4414 = vrot.slane %v4413, 4
      %v4416 = vshll.u32 %v4308, 16
      %v4418 = vrot.slane %v4416, 5
      %v4419 = vsel %vm618, %v4414, %v4418
      %v4421 = vshrl.u32 %v4309, 16
      %v4423 = vrot.slane %v4421, 4
      %v4424 = vshll.u32 %v4309, 16
      %v4426 = vrot.slane %v4424, 5
      %v4427 = vor.u32 %v4423, %v4426
      %v4428 = vrot.slane %v4427, 4
      %v4430 = vshll.u32 %v4310, 16
      %v4432 = vrot.slane %v4430, 5
      %v4433 = vsel %vm618, %v4428, %v4432
      %v4434 = vshrl.u32 %v4310, 16
      %v4436 = vrot.slane %v4434, 4
      %v4437 = vor.u32 %v4436, %v4432
      %v4438 = vrot.slane %v4437, 4
      %v4440 = vshll.u32 %v4311, 16
      %v4442 = vrot.slane %v4440, 5
      %v4443 = vsel %vm618, %v4438, %v4442
      %v4445 = vshrl.u32 %v4312, 16
      %v4447 = vrot.slane %v4445, 4
      %v4448 = vshll.u32 %v4312, 16
      %v4450 = vrot.slane %v4448, 5
      %v4451 = vor.u32 %v4447, %v4450
      %v4452 = vrot.slane %v4451, 4
      %v4454 = vshll.u32 %v4313, 16
      %v4456 = vrot.slane %v4454, 5
      %v4457 = vsel %vm618, %v4452, %v4456
      %v4458 = vshrl.u32 %v4313, 16
      %v4460 = vrot.slane %v4458, 4
      %v4461 = vor.u32 %v4460, %v4456
      %v4462 = vrot.slane %v4461, 4
      %v4464 = vshll.u32 %v4314, 16
      %v4466 = vrot.slane %v4464, 5
      %v4467 = vsel %vm618, %v4462, %v4466
      %v4469 = vshrl.u32 %v4315, 16
      %v4471 = vrot.slane %v4469, 4
      %v4472 = vshll.u32 %v4315, 16
      %v4474 = vrot.slane %v4472, 5
      %v4475 = vor.u32 %v4471, %v4474
      %v4476 = vrot.slane %v4475, 4
      %v4478 = vshll.u32 %v4316, 16
      %v4480 = vrot.slane %v4478, 5
      %v4481 = vsel %vm618, %v4476, %v4480
      %v4482 = vshrl.u32 %v4316, 16
      %v4484 = vrot.slane %v4482, 4
      %v4485 = vor.u32 %v4484, %v4480
      %v4486 = vrot.slane %v4485, 4
      %v4488 = vshll.u32 %v4317, 16
      %v4490 = vrot.slane %v4488, 5
      %v4491 = vsel %vm618, %v4486, %v4490
      %v4493 = vshrl.u32 %v4318, 16
      %v4495 = vrot.slane %v4493, 4
      %v4496 = vshll.u32 %v4318, 16
      %v4498 = vrot.slane %v4496, 5
      %v4499 = vor.u32 %v4495, %v4498
      %v4500 = vrot.slane %v4499, 4
      %v4502 = vshll.u32 %v4319, 16
      %v4504 = vrot.slane %v4502, 5
      %v4505 = vsel %vm618, %v4500, %v4504
      %v4506 = vshrl.u32 %v4319, 16
      %v4508 = vrot.slane %v4506, 4
      %v4509 = vor.u32 %v4508, %v4504
      %v4510 = vrot.slane %v4509, 4
      %v4512 = vshll.u32 %v4320, 16
      %v4514 = vrot.slane %v4512, 5
      %v4515 = vsel %vm618, %v4510, %v4514
      %v4517 = vshrl.u32 %v4321, 16
      %v4519 = vrot.slane %v4517, 4
      %v4520 = vshll.u32 %v4321, 16
      %v4522 = vrot.slane %v4520, 5
      %v4523 = vor.u32 %v4519, %v4522
      %v4524 = vrot.slane %v4523, 4
      %v4526 = vshll.u32 %v4322, 16
      %v4528 = vrot.slane %v4526, 5
      %v4529 = vsel %vm618, %v4524, %v4528
      %v4530 = vshrl.u32 %v4322, 16
      %v4532 = vrot.slane %v4530, 4
      %v4533 = vor.u32 %v4532, %v4528
      %v4534 = vrot.slane %v4533, 4
      %v4536 = vshll.u32 %v4323, 16
      %v4538 = vrot.slane %v4536, 5
      %v4539 = vsel %vm618, %v4534, %v4538
      %v4541 = vshrl.u32 %v4324, 16
      %v4543 = vrot.slane %v4541, 4
      %v4544 = vshll.u32 %v4324, 16
      %v4546 = vrot.slane %v4544, 5
      %v4547 = vor.u32 %v4543, %v4546
      %v4548 = vrot.slane %v4547, 4
      %v4550 = vshll.u32 %v4325, 16
      %v4552 = vrot.slane %v4550, 5
      %v4553 = vsel %vm618, %v4548, %v4552
      %v4554 = vshrl.u32 %v4325, 16
      %v4556 = vrot.slane %v4554, 4
      %v4557 = vor.u32 %v4556, %v4552
      %v4558 = vrot.slane %v4557, 4
      %v4560 = vshll.u32 %v4326, 16
      %v4562 = vrot.slane %v4560, 5
      %v4563 = vsel %vm618, %v4558, %v4562
      %v4565 = vshrl.u32 %v4327, 16
      %v4567 = vrot.slane %v4565, 4
      %v4568 = vshll.u32 %v4327, 16
      %v4570 = vrot.slane %v4568, 5
      %v4571 = vor.u32 %v4567, %v4570
      %v4572 = vrot.slane %v4571, 4
      %v4574 = vshll.u32 %v4328, 16
      %v4576 = vrot.slane %v4574, 5
      %v4577 = vsel %vm618, %v4572, %v4576
      %v4578 = vshrl.u32 %v4328, 16
      %v4580 = vrot.slane %v4578, 4
      %v4581 = vor.u32 %v4580, %v4576
      %v4582 = vrot.slane %v4581, 4
      %v4584 = vshll.u32 %v4329, 16
      %v4586 = vrot.slane %v4584, 5
      %v4587 = vsel %vm618, %v4582, %v4586
      %v4589 = vshrl.u32 %v4330, 16
      %v4591 = vrot.slane %v4589, 4
      %v4592 = vshll.u32 %v4330, 16
      %v4594 = vrot.slane %v4592, 5
      %v4595 = vor.u32 %v4591, %v4594
      %v4596 = vrot.slane %v4595, 4
      %v4598 = vshll.u32 %v4331, 16
      %v4600 = vrot.slane %v4598, 5
      %v4601 = vsel %vm618, %v4596, %v4600
      %v4602 = vshrl.u32 %v4331, 16
      %v4604 = vrot.slane %v4602, 4
      %v4605 = vor.u32 %v4604, %v4600
      %v4606 = vrot.slane %v4605, 4
      %v4608 = vshll.u32 %v4332, 16
      %v4610 = vrot.slane %v4608, 5
      %v4611 = vsel %vm618, %v4606, %v4610
      %v4613 = vshrl.u32 %v4333, 16
      %v4615 = vrot.slane %v4613, 4
      %v4616 = vshll.u32 %v4333, 16
      %v4618 = vrot.slane %v4616, 5
      %v4619 = vor.u32 %v4615, %v4618
      %v4620 = vrot.slane %v4619, 4
      %v4622 = vshll.u32 %v4334, 16
      %v4624 = vrot.slane %v4622, 5
      %v4625 = vsel %vm618, %v4620, %v4624
      %v4626 = vshrl.u32 %v4334, 16
      %v4628 = vrot.slane %v4626, 4
      %v4629 = vor.u32 %v4628, %v4624
      %v4630 = vrot.slane %v4629, 4
      %v4632 = vshll.u32 %v4335, 16
      %v4634 = vrot.slane %v4632, 5
      %v4635 = vsel %vm618, %v4630, %v4634
      %v4637 = vshrl.u32 %v4336, 16
      %v4639 = vrot.slane %v4637, 4
      %v4640 = vshll.u32 %v4336, 16
      %v4642 = vrot.slane %v4640, 5
      %v4643 = vor.u32 %v4639, %v4642
      %v4644 = vrot.slane %v4643, 4
      %v4646 = vshll.u32 %v4337, 16
      %v4648 = vrot.slane %v4646, 5
      %v4649 = vsel %vm618, %v4644, %v4648
      %v4650 = vshrl.u32 %v4337, 16
      %v4652 = vrot.slane %v4650, 4
      %v4653 = vor.u32 %v4652, %v4648
      %v4654 = vrot.slane %v4653, 4
      %v4656 = vshll.u32 %v4338, 16
      %v4658 = vrot.slane %v4656, 5
      %v4659 = vsel %vm618, %v4654, %v4658
      %v4661 = vshrl.u32 %v4339, 16
      %v4663 = vrot.slane %v4661, 4
      %v4664 = vshll.u32 %v4339, 16
      %v4666 = vrot.slane %v4664, 5
      %v4667 = vor.u32 %v4663, %v4666
      %v4668 = vrot.slane %v4667, 4
      %v4670 = vshll.u32 %v4340, 16
      %v4672 = vrot.slane %v4670, 5
      %v4673 = vsel %vm618, %v4668, %v4672
      %v4674 = vshrl.u32 %v4340, 16
      %v4676 = vrot.slane %v4674, 4
      %v4677 = vor.u32 %v4676, %v4672
      %v4678 = vrot.slane %v4677, 4
      %v4680 = vshll.u32 %v4341, 16
      %v4682 = vrot.slane %v4680, 5
      %v4683 = vsel %vm618, %v4678, %v4682
      %v4685 = vshrl.u32 %v4342, 16
      %v4687 = vrot.slane %v4685, 4
      %v4688 = vshll.u32 %v4342, 16
      %v4690 = vrot.slane %v4688, 5
      %v4691 = vor.u32 %v4687, %v4690
      %v4692 = vrot.slane %v4691, 4
      %v4694 = vshll.u32 %v4343, 16
      %v4696 = vrot.slane %v4694, 5
      %v4697 = vsel %vm618, %v4692, %v4696
      %v4698 = vshrl.u32 %v4343, 16
      %v4700 = vrot.slane %v4698, 4
      %v4701 = vor.u32 %v4700, %v4696
      %v4702 = vrot.slane %v4701, 4
      %v4704 = vshll.u32 %v4344, 16
      %v4706 = vrot.slane %v4704, 5
      %v4707 = vsel %vm618, %v4702, %v4706
      %v4709 = vshrl.u32 %v4345, 16
      %v4711 = vrot.slane %v4709, 4
      %v4712 = vshll.u32 %v4345, 16
      %v4714 = vrot.slane %v4712, 5
      %v4715 = vor.u32 %v4711, %v4714
      %v4716 = vrot.slane %v4715, 4
      %v4718 = vshll.u32 %v4346, 16
      %v4720 = vrot.slane %v4718, 5
      %v4721 = vsel %vm618, %v4716, %v4720
      %v4722 = vshrl.u32 %v4346, 16
      %v4724 = vrot.slane %v4722, 4
      %v4725 = vor.u32 %v4724, %v4720
      %v4726 = vrot.slane %v4725, 4
      %v4728 = vshll.u32 %v4347, 16
      %v4730 = vrot.slane %v4728, 5
      %v4731 = vsel %vm618, %v4726, %v4730
      %s4732 = scalar_lea.vmem %s1, 448
      %v4733 = vld [vmem:[%s4732] sm:$0xf]
      %v4734 = vld [vmem:[%s4732 + $0x4] sm:$0xf]
      %v4735 = vld [vmem:[%s4732 + $0x8] sm:$0xf]
      %v4736 = vld [vmem:[%s4732 + $0xc] sm:$0xf]
      %v4737 = vld [vmem:[%s4732 + $0x10] sm:$0xf]
      %v4738 = vld [vmem:[%s4732 + $0x14] sm:$0xf]
      %v4739 = vld [vmem:[%s4732 + $0x18] sm:$0xf]
      %v4740 = vld [vmem:[%s4732 + $0x1c] sm:$0xf]
      %v4741 = vld [vmem:[%s4732 + $0x20] sm:$0xf]
      %v4742 = vld [vmem:[%s4732 + $0x24] sm:$0xf]
      %v4743 = vld [vmem:[%s4732 + $0x28] sm:$0xf]
      %v4744 = vld [vmem:[%s4732 + $0x2c] sm:$0xf]
      %v4745 = vld [vmem:[%s4732 + $0x30] sm:$0xf]
      %v4746 = vld [vmem:[%s4732 + $0x34] sm:$0xf]
      %v4747 = vld [vmem:[%s4732 + $0x38] sm:$0xf]
      %v4748 = vld [vmem:[%s4732 + $0x3c] sm:$0xf]
      %v4749 = vunpack.c.l.b16 %v4361
      %v4750 = vunpack.c.l.b16 %v4371
      %v4751 = vunpack.c.l.b16 %v4385
      %v4752 = vunpack.c.l.b16 %v4395
      %v4753 = vunpack.c.l.b16 %v4409
      %v4754 = vunpack.c.l.b16 %v4419
      %v4755 = vunpack.c.l.b16 %v4433
      %v4756 = vunpack.c.l.b16 %v4443
      %v4757 = vunpack.c.l.b16 %v4457
      %v4758 = vunpack.c.l.b16 %v4467
      %v4759 = vunpack.c.l.b16 %v4481
      %v4760 = vunpack.c.l.b16 %v4491
      %v4761 = vunpack.c.l.b16 %v4505
      %v4762 = vunpack.c.l.b16 %v4515
      %v4763 = vunpack.c.l.b16 %v4529
      %v4764 = vunpack.c.l.b16 %v4539
      %v4765 = vunpack.c.l.b16 %v4553
      %v4766 = vunpack.c.l.b16 %v4563
      %v4767 = vunpack.c.l.b16 %v4577
      %v4768 = vunpack.c.l.b16 %v4587
      %v4769 = vunpack.c.l.b16 %v4601
      %v4770 = vunpack.c.l.b16 %v4611
      %v4771 = vunpack.c.l.b16 %v4625
      %v4772 = vunpack.c.l.b16 %v4635
      %v4773 = vunpack.c.l.b16 %v4649
      %v4774 = vunpack.c.l.b16 %v4659
      %v4775 = vunpack.c.l.b16 %v4673
      %v4776 = vunpack.c.l.b16 %v4683
      %v4777 = vunpack.c.l.b16 %v4697
      %v4778 = vunpack.c.l.b16 %v4707
      %v4779 = vunpack.c.l.b16 %v4721
      %v4780 = vunpack.c.l.b16 %v4731
      %v4781 = vpack.c.b16 %v4750, %v4749
      %v4782 = vpack.c.b16 %v4752, %v4751
      %v4783 = vpack.c.b16 %v4754, %v4753
      %v4784 = vpack.c.b16 %v4756, %v4755
      %v4785 = vpack.c.b16 %v4758, %v4757
      %v4786 = vpack.c.b16 %v4760, %v4759
      %v4787 = vpack.c.b16 %v4762, %v4761
      %v4788 = vpack.c.b16 %v4764, %v4763
      %v4789 = vpack.c.b16 %v4766, %v4765
      %v4790 = vpack.c.b16 %v4768, %v4767
      %v4791 = vpack.c.b16 %v4770, %v4769
      %v4792 = vpack.c.b16 %v4772, %v4771
      %v4793 = vpack.c.b16 %v4774, %v4773
      %v4794 = vpack.c.b16 %v4776, %v4775
      %v4795 = vpack.c.b16 %v4778, %v4777
      %v4796 = vpack.c.b16 %v4780, %v4779
      %v4829 = vunpack.c.l.b16 %v4733
      %v4830 = vunpack.c.l.b16 %v4734
      %v4831 = vunpack.c.l.b16 %v4735
      %v4832 = vunpack.c.l.b16 %v4736
      %v4833 = vunpack.c.l.b16 %v4737
      %v4834 = vunpack.c.l.b16 %v4738
      %v4835 = vunpack.c.l.b16 %v4739
      %v4836 = vunpack.c.l.b16 %v4740
      %v4837 = vunpack.c.l.b16 %v4741
      %v4838 = vunpack.c.l.b16 %v4742
      %v4839 = vunpack.c.l.b16 %v4743
      %v4840 = vunpack.c.l.b16 %v4744
      %v4841 = vunpack.c.l.b16 %v4745
      %v4842 = vunpack.c.l.b16 %v4746
      %v4843 = vunpack.c.l.b16 %v4747
      %v4844 = vunpack.c.l.b16 %v4748
      %v4845 = vpack.c.b16 %v4830, %v4829
      %v4846 = vpack.c.b16 %v4832, %v4831
      %v4847 = vpack.c.b16 %v4834, %v4833
      %v4848 = vpack.c.b16 %v4836, %v4835
      %v4849 = vpack.c.b16 %v4838, %v4837
      %v4850 = vpack.c.b16 %v4840, %v4839
      %v4851 = vpack.c.b16 %v4842, %v4841
      %v4852 = vpack.c.b16 %v4844, %v4843
      %4861 = vmatprep.subr.bf16.mxu0 0
      %4862 = vmatpush1.bf16.msra.mxu0 %v4852
      %4863 = vmatprep.subr.bf16.mxu0 0
      %4864 = vmatpush1.bf16.msra.mxu0 %v4851
      %4865 = vmatprep.subr.bf16.mxu0 0
      %4866 = vmatpush1.bf16.msra.mxu0 %v4850
      %4867 = vmatprep.subr.bf16.mxu0 0
      %4868 = vmatpush1.bf16.msra.mxu0 %v4849
      %4869 = vmatprep.subr.bf16.mxu0 0
      %4870 = vmatpush1.bf16.msra.mxu0 %v4848
      %4871 = vmatprep.subr.bf16.mxu0 0
      %4872 = vmatpush1.bf16.msra.mxu0 %v4847
      %4873 = vmatprep.subr.bf16.mxu0 0
      %4874 = vmatpush1.bf16.msra.mxu0 %v4846
      %4875 = vmatprep.subr.bf16.mxu0 0
      %4876 = vmatpush1.bf16.msra.mxu0 %v4845
      %4877 = vmatprep.subr.bf16.mxu0 0
      %4878 = vmatpush2.bf16.msra.mxu0 0
      %4879 = vmatprep.subr.bf16.mxu0 0
      %4880 = vmatpush2.bf16.msra.mxu0 0
      %4881 = vmatprep.subr.bf16.mxu0 0
      %4882 = vmatpush2.bf16.msra.mxu0 0
      %4883 = vmatprep.subr.bf16.mxu0 0
      %4884 = vmatpush2.bf16.msra.mxu0 0
      %4885 = vmatprep.subr.bf16.mxu0 0
      %4886 = vmatpush2.bf16.msra.mxu0 0
      %4887 = vmatprep.subr.bf16.mxu0 0
      %4888 = vmatpush2.bf16.msra.mxu0 0
      %4889 = vmatprep.subr.bf16.mxu0 0
      %4890 = vmatpush2.bf16.msra.mxu0 0
      %4891 = vmatprep.subr.bf16.mxu0 0
      %4892 = vmatpush2.bf16.msra.mxu0 0
      %4893 = vmatprep.mubr.bf16.mxu0 0
      %4894 = vmatmul.mubr.bf16.gmra.mxu0 %v4781
      %v4895 = vpop.f32.mrf.mxu0
      %v4896 = vadd.f32 0.0, %v4895
      %v4897 = vpop.f32.mrf.mxu0
      %v4898 = vpop.f32.mrf.mxu0
      %v4899 = vadd.f32 0.0, %v4898
      %v4900 = vpop.f32.mrf.mxu0
      %4901 = vmatprep.mubr.bf16.mxu0 0
      %4902 = vmatmul.mubr.bf16.gmra.mxu0 %v4782
      %v4903 = vpop.f32.mrf.mxu0
      %v4904 = vadd.f32 0.0, %v4903
      %v4905 = vpop.f32.mrf.mxu0
      %v4906 = vpop.f32.mrf.mxu0
      %v4907 = vadd.f32 0.0, %v4906
      %v4908 = vpop.f32.mrf.mxu0
      %4909 = vmatprep.mubr.bf16.mxu0 0
      %4910 = vmatmul.mubr.bf16.gmra.mxu0 %v4783
      %v4911 = vpop.f32.mrf.mxu0
      %v4912 = vadd.f32 0.0, %v4911
      %v4913 = vpop.f32.mrf.mxu0
      %v4914 = vpop.f32.mrf.mxu0
      %v4915 = vadd.f32 0.0, %v4914
      %v4916 = vpop.f32.mrf.mxu0
      %4917 = vmatprep.mubr.bf16.mxu0 0
      %4918 = vmatmul.mubr.bf16.gmra.mxu0 %v4784
      %v4919 = vpop.f32.mrf.mxu0
      %v4920 = vadd.f32 0.0, %v4919
      %v4921 = vpop.f32.mrf.mxu0
      %v4922 = vpop.f32.mrf.mxu0
      %v4923 = vadd.f32 0.0, %v4922
      %v4924 = vpop.f32.mrf.mxu0
      %4925 = vmatprep.mubr.bf16.mxu0 0
      %4926 = vmatmul.mubr.bf16.gmra.mxu0 %v4785
      %v4927 = vpop.f32.mrf.mxu0
      %v4928 = vadd.f32 0.0, %v4927
      %v4929 = vpop.f32.mrf.mxu0
      %v4930 = vpop.f32.mrf.mxu0
      %v4931 = vadd.f32 0.0, %v4930
      %v4932 = vpop.f32.mrf.mxu0
      %4933 = vmatprep.mubr.bf16.mxu0 0
      %4934 = vmatmul.mubr.bf16.gmra.mxu0 %v4786
      %v4935 = vpop.f32.mrf.mxu0
      %v4936 = vadd.f32 0.0, %v4935
      %v4937 = vpop.f32.mrf.mxu0
      %v4938 = vpop.f32.mrf.mxu0
      %v4939 = vadd.f32 0.0, %v4938
      %v4940 = vpop.f32.mrf.mxu0
      %4941 = vmatprep.mubr.bf16.mxu0 0
      %4942 = vmatmul.mubr.bf16.gmra.mxu0 %v4787
      %v4943 = vpop.f32.mrf.mxu0
      %v4944 = vadd.f32 0.0, %v4943
      %v4945 = vpop.f32.mrf.mxu0
      %v4946 = vpop.f32.mrf.mxu0
      %v4947 = vadd.f32 0.0, %v4946
      %v4948 = vpop.f32.mrf.mxu0
      %4949 = vmatprep.mubr.bf16.mxu0 0
      %4950 = vmatmul.mubr.bf16.gmra.mxu0 %v4788
      %v4951 = vpop.f32.mrf.mxu0
      %v4952 = vadd.f32 0.0, %v4951
      %v4953 = vpop.f32.mrf.mxu0
      %v4954 = vpop.f32.mrf.mxu0
      %v4955 = vadd.f32 0.0, %v4954
      %v4956 = vpop.f32.mrf.mxu0
      %4957 = vmatprep.mubr.bf16.mxu0 0
      %4958 = vmatmul.mubr.bf16.gmra.mxu0 %v4789
      %v4959 = vpop.f32.mrf.mxu0
      %v4960 = vadd.f32 0.0, %v4959
      %v4961 = vpop.f32.mrf.mxu0
      %v4962 = vpop.f32.mrf.mxu0
      %v4963 = vadd.f32 0.0, %v4962
      %v4964 = vpop.f32.mrf.mxu0
      %4965 = vmatprep.mubr.bf16.mxu0 0
      %4966 = vmatmul.mubr.bf16.gmra.mxu0 %v4790
      %v4967 = vpop.f32.mrf.mxu0
      %v4968 = vadd.f32 0.0, %v4967
      %v4969 = vpop.f32.mrf.mxu0
      %v4970 = vpop.f32.mrf.mxu0
      %v4971 = vadd.f32 0.0, %v4970
      %v4972 = vpop.f32.mrf.mxu0
      %4973 = vmatprep.mubr.bf16.mxu0 0
      %4974 = vmatmul.mubr.bf16.gmra.mxu0 %v4791
      %v4975 = vpop.f32.mrf.mxu0
      %v4976 = vadd.f32 0.0, %v4975
      %v4977 = vpop.f32.mrf.mxu0
      %v4978 = vpop.f32.mrf.mxu0
      %v4979 = vadd.f32 0.0, %v4978
      %v4980 = vpop.f32.mrf.mxu0
      %4981 = vmatprep.mubr.bf16.mxu0 0
      %4982 = vmatmul.mubr.bf16.gmra.mxu0 %v4792
      %v4983 = vpop.f32.mrf.mxu0
      %v4984 = vadd.f32 0.0, %v4983
      %v4985 = vpop.f32.mrf.mxu0
      %v4986 = vpop.f32.mrf.mxu0
      %v4987 = vadd.f32 0.0, %v4986
      %v4988 = vpop.f32.mrf.mxu0
      %4989 = vmatprep.mubr.bf16.mxu0 0
      %4990 = vmatmul.mubr.bf16.gmra.mxu0 %v4793
      %v4991 = vpop.f32.mrf.mxu0
      %v4992 = vadd.f32 0.0, %v4991
      %v4993 = vpop.f32.mrf.mxu0
      %v4994 = vpop.f32.mrf.mxu0
      %v4995 = vadd.f32 0.0, %v4994
      %v4996 = vpop.f32.mrf.mxu0
      %4997 = vmatprep.mubr.bf16.mxu0 0
      %4998 = vmatmul.mubr.bf16.gmra.mxu0 %v4794
      %v4999 = vpop.f32.mrf.mxu0
      %v5000 = vadd.f32 0.0, %v4999
      %v5001 = vpop.f32.mrf.mxu0
      %v5002 = vpop.f32.mrf.mxu0
      %v5003 = vadd.f32 0.0, %v5002
      %v5004 = vpop.f32.mrf.mxu0
      %5005 = vmatprep.mubr.bf16.mxu0 0
      %5006 = vmatmul.mubr.bf16.gmra.mxu0 %v4795
      %v5007 = vpop.f32.mrf.mxu0
      %v5008 = vadd.f32 0.0, %v5007
      %v5009 = vpop.f32.mrf.mxu0
      %v5010 = vpop.f32.mrf.mxu0
      %v5011 = vadd.f32 0.0, %v5010
      %v5012 = vpop.f32.mrf.mxu0
      %5013 = vmatprep.mubr.bf16.mxu0 0
      %5014 = vmatmul.mubr.bf16.gmra.mxu0 %v4796
      %v5015 = vpop.f32.mrf.mxu0
      %v5016 = vadd.f32 0.0, %v5015
      %v5017 = vpop.f32.mrf.mxu0
      %v5018 = vpop.f32.mrf.mxu0
      %v5019 = vadd.f32 0.0, %v5018
      %v5020 = vpop.f32.mrf.mxu0
      %5021 = vdwg.mxu0
      %v5022 = vld [vmem:[#allocation2] sm:$0xff]
      %v5023 = vld [vmem:[#allocation2 + $0x8] sm:$0xff]
      %v5024 = vld [vmem:[#allocation2 + $0x10] sm:$0xff]
      %v5025 = vld [vmem:[#allocation2 + $0x18] sm:$0xff]
      %v5026 = vld [vmem:[#allocation2 + $0x20] sm:$0xff]
      %v5027 = vld [vmem:[#allocation2 + $0x28] sm:$0xff]
      %v5028 = vld [vmem:[#allocation2 + $0x30] sm:$0xff]
      %v5029 = vld [vmem:[#allocation2 + $0x38] sm:$0xff]
      %v5030 = vld [vmem:[#allocation2 + $0x40] sm:$0xff]
      %v5031 = vld [vmem:[#allocation2 + $0x48] sm:$0xff]
      %v5032 = vld [vmem:[#allocation2 + $0x50] sm:$0xff]
      %v5033 = vld [vmem:[#allocation2 + $0x58] sm:$0xff]
      %v5034 = vld [vmem:[#allocation2 + $0x60] sm:$0xff]
      %v5035 = vld [vmem:[#allocation2 + $0x68] sm:$0xff]
      %v5036 = vld [vmem:[#allocation2 + $0x70] sm:$0xff]
      %v5037 = vld [vmem:[#allocation2 + $0x78] sm:$0xff]
      %v5038 = vld [vmem:[#allocation2 + $0x80] sm:$0xff]
      %v5039 = vld [vmem:[#allocation2 + $0x88] sm:$0xff]
      %v5040 = vld [vmem:[#allocation2 + $0x90] sm:$0xff]
      %v5041 = vld [vmem:[#allocation2 + $0x98] sm:$0xff]
      %v5042 = vld [vmem:[#allocation2 + $0xa0] sm:$0xff]
      %v5043 = vld [vmem:[#allocation2 + $0xa8] sm:$0xff]
      %v5044 = vld [vmem:[#allocation2 + $0xb0] sm:$0xff]
      %v5045 = vld [vmem:[#allocation2 + $0xb8] sm:$0xff]
      %v5046 = vld [vmem:[#allocation2 + $0xc0] sm:$0xff]
      %v5047 = vld [vmem:[#allocation2 + $0xc8] sm:$0xff]
      %v5048 = vld [vmem:[#allocation2 + $0xd0] sm:$0xff]
      %v5049 = vld [vmem:[#allocation2 + $0xd8] sm:$0xff]
      %v5050 = vld [vmem:[#allocation2 + $0xe0] sm:$0xff]
      %v5051 = vld [vmem:[#allocation2 + $0xe8] sm:$0xff]
      %v5052 = vld [vmem:[#allocation2 + $0xf0] sm:$0xff]
      %v5053 = vld [vmem:[#allocation2 + $0xf8] sm:$0xff]
      %v5054 = vadd.f32 %v5022, %v4896
      %v5055 = vadd.f32 %v5023, %v4899
      %v5056 = vadd.f32 %v5024, %v4904
      %v5057 = vadd.f32 %v5025, %v4907
      %v5058 = vadd.f32 %v5026, %v4912
      %v5059 = vadd.f32 %v5027, %v4915
      %v5060 = vadd.f32 %v5028, %v4920
      %v5061 = vadd.f32 %v5029, %v4923
      %v5062 = vadd.f32 %v5030, %v4928
      %v5063 = vadd.f32 %v5031, %v4931
      %v5064 = vadd.f32 %v5032, %v4936
      %v5065 = vadd.f32 %v5033, %v4939
      %v5066 = vadd.f32 %v5034, %v4944
      %v5067 = vadd.f32 %v5035, %v4947
      %v5068 = vadd.f32 %v5036, %v4952
      %v5069 = vadd.f32 %v5037, %v4955
      %v5070 = vadd.f32 %v5038, %v4960
      %v5071 = vadd.f32 %v5039, %v4963
      %v5072 = vadd.f32 %v5040, %v4968
      %v5073 = vadd.f32 %v5041, %v4971
      %v5074 = vadd.f32 %v5042, %v4976
      %v5075 = vadd.f32 %v5043, %v4979
      %v5076 = vadd.f32 %v5044, %v4984
      %v5077 = vadd.f32 %v5045, %v4987
      %v5078 = vadd.f32 %v5046, %v4992
      %v5079 = vadd.f32 %v5047, %v4995
      %v5080 = vadd.f32 %v5048, %v5000
      %v5081 = vadd.f32 %v5049, %v5003
      %v5082 = vadd.f32 %v5050, %v5008
      %v5083 = vadd.f32 %v5051, %v5011
      %v5084 = vadd.f32 %v5052, %v5016
      %v5085 = vadd.f32 %v5053, %v5019
      %5086 = vst [vmem:[#allocation2] sm:$0xff] %v5054
      %5087 = vst [vmem:[#allocation2 + $0x8] sm:$0xff] %v5055
      %5088 = vst [vmem:[#allocation2 + $0x10] sm:$0xff] %v5056
      %5089 = vst [vmem:[#allocation2 + $0x18] sm:$0xff] %v5057
      %5090 = vst [vmem:[#allocation2 + $0x20] sm:$0xff] %v5058
      %5091 = vst [vmem:[#allocation2 + $0x28] sm:$0xff] %v5059
      %5092 = vst [vmem:[#allocation2 + $0x30] sm:$0xff] %v5060
      %5093 = vst [vmem:[#allocation2 + $0x38] sm:$0xff] %v5061
      %5094 = vst [vmem:[#allocation2 + $0x40] sm:$0xff] %v5062
      %5095 = vst [vmem:[#allocation2 + $0x48] sm:$0xff] %v5063
      %5096 = vst [vmem:[#allocation2 + $0x50] sm:$0xff] %v5064
      %5097 = vst [vmem:[#allocation2 + $0x58] sm:$0xff] %v5065
      %5098 = vst [vmem:[#allocation2 + $0x60] sm:$0xff] %v5066
      %5099 = vst [vmem:[#allocation2 + $0x68] sm:$0xff] %v5067
      %5100 = vst [vmem:[#allocation2 + $0x70] sm:$0xff] %v5068
      %5101 = vst [vmem:[#allocation2 + $0x78] sm:$0xff] %v5069
      %5102 = vst [vmem:[#allocation2 + $0x80] sm:$0xff] %v5070
      %5103 = vst [vmem:[#allocation2 + $0x88] sm:$0xff] %v5071
      %5104 = vst [vmem:[#allocation2 + $0x90] sm:$0xff] %v5072
      %5105 = vst [vmem:[#allocation2 + $0x98] sm:$0xff] %v5073
      %5106 = vst [vmem:[#allocation2 + $0xa0] sm:$0xff] %v5074
      %5107 = vst [vmem:[#allocation2 + $0xa8] sm:$0xff] %v5075
      %5108 = vst [vmem:[#allocation2 + $0xb0] sm:$0xff] %v5076
      %5109 = vst [vmem:[#allocation2 + $0xb8] sm:$0xff] %v5077
      %5110 = vst [vmem:[#allocation2 + $0xc0] sm:$0xff] %v5078
      %5111 = vst [vmem:[#allocation2 + $0xc8] sm:$0xff] %v5079
      %5112 = vst [vmem:[#allocation2 + $0xd0] sm:$0xff] %v5080
      %5113 = vst [vmem:[#allocation2 + $0xd8] sm:$0xff] %v5081
      %5114 = vst [vmem:[#allocation2 + $0xe0] sm:$0xff] %v5082
      %5115 = vst [vmem:[#allocation2 + $0xe8] sm:$0xff] %v5083
      %5116 = vst [vmem:[#allocation2 + $0xf0] sm:$0xff] %v5084
      %5117 = vst [vmem:[#allocation2 + $0xf8] sm:$0xff] %v5085
      %v5118 = vld [vmem:[%s3849] sm:$0xe]
      %v5119 = vld [vmem:[%s3849 + $0x4] sm:$0xf]
      %v5120 = vld [vmem:[%s3849 + $0x8] sm:$0x1]
      %v5121 = vld [vmem:[%s3849 + $0xc] sm:$0xe]
      %v5122 = vld [vmem:[%s3849 + $0x10] sm:$0xf]
      %v5123 = vld [vmem:[%s3849 + $0x14] sm:$0x1]
      %v5124 = vld [vmem:[%s3849 + $0x18] sm:$0xe]
      %v5125 = vld [vmem:[%s3849 + $0x1c] sm:$0xf]
      %v5126 = vld [vmem:[%s3849 + $0x20] sm:$0x1]
      %v5127 = vld [vmem:[%s3849 + $0x24] sm:$0xe]
      %v5128 = vld [vmem:[%s3849 + $0x28] sm:$0xf]
      %v5129 = vld [vmem:[%s3849 + $0x2c] sm:$0x1]
      %v5130 = vld [vmem:[%s3849 + $0x30] sm:$0xe]
      %v5131 = vld [vmem:[%s3849 + $0x34] sm:$0xf]
      %v5132 = vld [vmem:[%s3849 + $0x38] sm:$0x1]
      %v5133 = vld [vmem:[%s3849 + $0x3c] sm:$0xe]
      %v5134 = vld [vmem:[%s3849 + $0x40] sm:$0xf]
      %v5135 = vld [vmem:[%s3849 + $0x44] sm:$0x1]
      %v5136 = vld [vmem:[%s3849 + $0x48] sm:$0xe]
      %v5137 = vld [vmem:[%s3849 + $0x4c] sm:$0xf]
      %v5138 = vld [vmem:[%s3849 + $0x50] sm:$0x1]
      %v5139 = vld [vmem:[%s3849 + $0x54] sm:$0xe]
      %v5140 = vld [vmem:[%s3849 + $0x58] sm:$0xf]
      %v5141 = vld [vmem:[%s3849 + $0x5c] sm:$0x1]
      %v5142 = vld [vmem:[%s3849 + $0x60] sm:$0xe]
      %v5143 = vld [vmem:[%s3849 + $0x64] sm:$0xf]
      %v5144 = vld [vmem:[%s3849 + $0x68] sm:$0x1]
      %v5145 = vld [vmem:[%s3849 + $0x6c] sm:$0xe]
      %v5146 = vld [vmem:[%s3849 + $0x70] sm:$0xf]
      %v5147 = vld [vmem:[%s3849 + $0x74] sm:$0x1]
      %v5148 = vld [vmem:[%s3849 + $0x78] sm:$0xe]
      %v5149 = vld [vmem:[%s3849 + $0x7c] sm:$0xf]
      %v5150 = vld [vmem:[%s3849 + $0x80] sm:$0x1]
      %v5151 = vld [vmem:[%s3849 + $0x84] sm:$0xe]
      %v5152 = vld [vmem:[%s3849 + $0x88] sm:$0xf]
      %v5153 = vld [vmem:[%s3849 + $0x8c] sm:$0x1]
      %v5154 = vld [vmem:[%s3849 + $0x90] sm:$0xe]
      %v5155 = vld [vmem:[%s3849 + $0x94] sm:$0xf]
      %v5156 = vld [vmem:[%s3849 + $0x98] sm:$0x1]
      %v5157 = vld [vmem:[%s3849 + $0x9c] sm:$0xe]
      %v5158 = vld [vmem:[%s3849 + $0xa0] sm:$0xf]
      %v5159 = vld [vmem:[%s3849 + $0xa4] sm:$0x1]
      %v5160 = vld [vmem:[%s3849 + $0xa8] sm:$0xe]
      %v5161 = vld [vmem:[%s3849 + $0xac] sm:$0xf]
      %v5162 = vld [vmem:[%s3849 + $0xb0] sm:$0x1]
      %v5163 = vld [vmem:[%s3849 + $0xb4] sm:$0xe]
      %v5164 = vld [vmem:[%s3849 + $0xb8] sm:$0xf]
      %v5165 = vld [vmem:[%s3849 + $0xbc] sm:$0x1]
      %v5214 = vrot.slane %v5118, 5
      %v5215 = vrot.slane %v5214, 4
      %v5216 = vrot.slane %v5119, 5
      %v5217 = vsel %vm1487, %v5215, %v5216
      %v5218 = vrot.slane %v5216, 4
      %v5219 = vrot.slane %v5120, 5
      %v5220 = vsel %vm1487, %v5218, %v5219
      %v5221 = vrot.slane %v5121, 5
      %v5222 = vrot.slane %v5221, 4
      %v5223 = vrot.slane %v5122, 5
      %v5224 = vsel %vm1487, %v5222, %v5223
      %v5225 = vrot.slane %v5223, 4
      %v5226 = vrot.slane %v5123, 5
      %v5227 = vsel %vm1487, %v5225, %v5226
      %v5228 = vrot.slane %v5124, 5
      %v5229 = vrot.slane %v5228, 4
      %v5230 = vrot.slane %v5125, 5
      %v5231 = vsel %vm1487, %v5229, %v5230
      %v5232 = vrot.slane %v5230, 4
      %v5233 = vrot.slane %v5126, 5
      %v5234 = vsel %vm1487, %v5232, %v5233
      %v5235 = vrot.slane %v5127, 5
      %v5236 = vrot.slane %v5235, 4
      %v5237 = vrot.slane %v5128, 5
      %v5238 = vsel %vm1487, %v5236, %v5237
      %v5239 = vrot.slane %v5237, 4
      %v5240 = vrot.slane %v5129, 5
      %v5241 = vsel %vm1487, %v5239, %v5240
      %v5242 = vrot.slane %v5130, 5
      %v5243 = vrot.slane %v5242, 4
      %v5244 = vrot.slane %v5131, 5
      %v5245 = vsel %vm1487, %v5243, %v5244
      %v5246 = vrot.slane %v5244, 4
      %v5247 = vrot.slane %v5132, 5
      %v5248 = vsel %vm1487, %v5246, %v5247
      %v5249 = vrot.slane %v5133, 5
      %v5250 = vrot.slane %v5249, 4
      %v5251 = vrot.slane %v5134, 5
      %v5252 = vsel %vm1487, %v5250, %v5251
      %v5253 = vrot.slane %v5251, 4
      %v5254 = vrot.slane %v5135, 5
      %v5255 = vsel %vm1487, %v5253, %v5254
      %v5256 = vrot.slane %v5136, 5
      %v5257 = vrot.slane %v5256, 4
      %v5258 = vrot.slane %v5137, 5
      %v5259 = vsel %vm1487, %v5257, %v5258
      %v5260 = vrot.slane %v5258, 4
      %v5261 = vrot.slane %v5138, 5
      %v5262 = vsel %vm1487, %v5260, %v5261
      %v5263 = vrot.slane %v5139, 5
      %v5264 = vrot.slane %v5263, 4
      %v5265 = vrot.slane %v5140, 5
      %v5266 = vsel %vm1487, %v5264, %v5265
      %v5267 = vrot.slane %v5265, 4
      %v5268 = vrot.slane %v5141, 5
      %v5269 = vsel %vm1487, %v5267, %v5268
      %v5270 = vrot.slane %v5142, 5
      %v5271 = vrot.slane %v5270, 4
      %v5272 = vrot.slane %v5143, 5
      %v5273 = vsel %vm1487, %v5271, %v5272
      %v5274 = vrot.slane %v5272, 4
      %v5275 = vrot.slane %v5144, 5
      %v5276 = vsel %vm1487, %v5274, %v5275
      %v5277 = vrot.slane %v5145, 5
      %v5278 = vrot.slane %v5277, 4
      %v5279 = vrot.slane %v5146, 5
      %v5280 = vsel %vm1487, %v5278, %v5279
      %v5281 = vrot.slane %v5279, 4
      %v5282 = vrot.slane %v5147, 5
      %v5283 = vsel %vm1487, %v5281, %v5282
      %v5284 = vrot.slane %v5148, 5
      %v5285 = vrot.slane %v5284, 4
      %v5286 = vrot.slane %v5149, 5
      %v5287 = vsel %vm1487, %v5285, %v5286
      %v5288 = vrot.slane %v5286, 4
      %v5289 = vrot.slane %v5150, 5
      %v5290 = vsel %vm1487, %v5288, %v5289
      %v5291 = vrot.slane %v5151, 5
      %v5292 = vrot.slane %v5291, 4
      %v5293 = vrot.slane %v5152, 5
      %v5294 = vsel %vm1487, %v5292, %v5293
      %v5295 = vrot.slane %v5293, 4
      %v5296 = vrot.slane %v5153, 5
      %v5297 = vsel %vm1487, %v5295, %v5296
      %v5298 = vrot.slane %v5154, 5
      %v5299 = vrot.slane %v5298, 4
      %v5300 = vrot.slane %v5155, 5
      %v5301 = vsel %vm1487, %v5299, %v5300
      %v5302 = vrot.slane %v5300, 4
      %v5303 = vrot.slane %v5156, 5
      %v5304 = vsel %vm1487, %v5302, %v5303
      %v5305 = vrot.slane %v5157, 5
      %v5306 = vrot.slane %v5305, 4
      %v5307 = vrot.slane %v5158, 5
      %v5308 = vsel %vm1487, %v5306, %v5307
      %v5309 = vrot.slane %v5307, 4
      %v5310 = vrot.slane %v5159, 5
      %v5311 = vsel %vm1487, %v5309, %v5310
      %v5312 = vrot.slane %v5160, 5
      %v5313 = vrot.slane %v5312, 4
      %v5314 = vrot.slane %v5161, 5
      %v5315 = vsel %vm1487, %v5313, %v5314
      %v5316 = vrot.slane %v5314, 4
      %v5317 = vrot.slane %v5162, 5
      %v5318 = vsel %vm1487, %v5316, %v5317
      %v5319 = vrot.slane %v5163, 5
      %v5320 = vrot.slane %v5319, 4
      %v5321 = vrot.slane %v5164, 5
      %v5322 = vsel %vm1487, %v5320, %v5321
      %v5323 = vrot.slane %v5321, 4
      %v5324 = vrot.slane %v5165, 5
      %v5325 = vsel %vm1487, %v5323, %v5324
      %s5326 = scalar_lea.vmem %s1, 512
      %v5327 = vld [vmem:[%s5326] sm:$0xf]
      %v5328 = vld [vmem:[%s5326 + $0x4] sm:$0xf]
      %v5329 = vld [vmem:[%s5326 + $0x8] sm:$0xf]
      %v5330 = vld [vmem:[%s5326 + $0xc] sm:$0xf]
      %v5331 = vld [vmem:[%s5326 + $0x10] sm:$0xf]
      %v5332 = vld [vmem:[%s5326 + $0x14] sm:$0xf]
      %v5333 = vld [vmem:[%s5326 + $0x18] sm:$0xf]
      %v5334 = vld [vmem:[%s5326 + $0x1c] sm:$0xf]
      %v5335 = vld [vmem:[%s5326 + $0x20] sm:$0xf]
      %v5336 = vld [vmem:[%s5326 + $0x24] sm:$0xf]
      %v5337 = vld [vmem:[%s5326 + $0x28] sm:$0xf]
      %v5338 = vld [vmem:[%s5326 + $0x2c] sm:$0xf]
      %v5339 = vld [vmem:[%s5326 + $0x30] sm:$0xf]
      %v5340 = vld [vmem:[%s5326 + $0x34] sm:$0xf]
      %v5341 = vld [vmem:[%s5326 + $0x38] sm:$0xf]
      %v5342 = vld [vmem:[%s5326 + $0x3c] sm:$0xf]
      %v5343 = vunpack.c.l.b16 %v5217
      %v5344 = vunpack.c.l.b16 %v5220
      %v5345 = vunpack.c.l.b16 %v5224
      %v5346 = vunpack.c.l.b16 %v5227
      %v5347 = vunpack.c.l.b16 %v5231
      %v5348 = vunpack.c.l.b16 %v5234
      %v5349 = vunpack.c.l.b16 %v5238
      %v5350 = vunpack.c.l.b16 %v5241
      %v5351 = vunpack.c.l.b16 %v5245
      %v5352 = vunpack.c.l.b16 %v5248
      %v5353 = vunpack.c.l.b16 %v5252
      %v5354 = vunpack.c.l.b16 %v5255
      %v5355 = vunpack.c.l.b16 %v5259
      %v5356 = vunpack.c.l.b16 %v5262
      %v5357 = vunpack.c.l.b16 %v5266
      %v5358 = vunpack.c.l.b16 %v5269
      %v5359 = vunpack.c.l.b16 %v5273
      %v5360 = vunpack.c.l.b16 %v5276
      %v5361 = vunpack.c.l.b16 %v5280
      %v5362 = vunpack.c.l.b16 %v5283
      %v5363 = vunpack.c.l.b16 %v5287
      %v5364 = vunpack.c.l.b16 %v5290
      %v5365 = vunpack.c.l.b16 %v5294
      %v5366 = vunpack.c.l.b16 %v5297
      %v5367 = vunpack.c.l.b16 %v5301
      %v5368 = vunpack.c.l.b16 %v5304
      %v5369 = vunpack.c.l.b16 %v5308
      %v5370 = vunpack.c.l.b16 %v5311
      %v5371 = vunpack.c.l.b16 %v5315
      %v5372 = vunpack.c.l.b16 %v5318
      %v5373 = vunpack.c.l.b16 %v5322
      %v5374 = vunpack.c.l.b16 %v5325
      %v5375 = vpack.c.b16 %v5344, %v5343
      %v5376 = vpack.c.b16 %v5346, %v5345
      %v5377 = vpack.c.b16 %v5348, %v5347
      %v5378 = vpack.c.b16 %v5350, %v5349
      %v5379 = vpack.c.b16 %v5352, %v5351
      %v5380 = vpack.c.b16 %v5354, %v5353
      %v5381 = vpack.c.b16 %v5356, %v5355
      %v5382 = vpack.c.b16 %v5358, %v5357
      %v5383 = vpack.c.b16 %v5360, %v5359
      %v5384 = vpack.c.b16 %v5362, %v5361
      %v5385 = vpack.c.b16 %v5364, %v5363
      %v5386 = vpack.c.b16 %v5366, %v5365
      %v5387 = vpack.c.b16 %v5368, %v5367
      %v5388 = vpack.c.b16 %v5370, %v5369
      %v5389 = vpack.c.b16 %v5372, %v5371
      %v5390 = vpack.c.b16 %v5374, %v5373
      %v5423 = vunpack.c.l.b16 %v5327
      %v5424 = vunpack.c.l.b16 %v5328
      %v5425 = vunpack.c.l.b16 %v5329
      %v5426 = vunpack.c.l.b16 %v5330
      %v5427 = vunpack.c.l.b16 %v5331
      %v5428 = vunpack.c.l.b16 %v5332
      %v5429 = vunpack.c.l.b16 %v5333
      %v5430 = vunpack.c.l.b16 %v5334
      %v5431 = vunpack.c.l.b16 %v5335
      %v5432 = vunpack.c.l.b16 %v5336
      %v5433 = vunpack.c.l.b16 %v5337
      %v5434 = vunpack.c.l.b16 %v5338
      %v5435 = vunpack.c.l.b16 %v5339
      %v5436 = vunpack.c.l.b16 %v5340
      %v5437 = vunpack.c.l.b16 %v5341
      %v5438 = vunpack.c.l.b16 %v5342
      %v5439 = vpack.c.b16 %v5424, %v5423
      %v5440 = vpack.c.b16 %v5426, %v5425
      %v5441 = vpack.c.b16 %v5428, %v5427
      %v5442 = vpack.c.b16 %v5430, %v5429
      %v5443 = vpack.c.b16 %v5432, %v5431
      %v5444 = vpack.c.b16 %v5434, %v5433
      %v5445 = vpack.c.b16 %v5436, %v5435
      %v5446 = vpack.c.b16 %v5438, %v5437
      %5455 = vmatprep.subr.bf16.mxu0 0
      %5456 = vmatpush1.bf16.msra.mxu0 %v5446
      %5457 = vmatprep.subr.bf16.mxu0 0
      %5458 = vmatpush1.bf16.msra.mxu0 %v5445
      %5459 = vmatprep.subr.bf16.mxu0 0
      %5460 = vmatpush1.bf16.msra.mxu0 %v5444
      %5461 = vmatprep.subr.bf16.mxu0 0
      %5462 = vmatpush1.bf16.msra.mxu0 %v5443
      %5463 = vmatprep.subr.bf16.mxu0 0
      %5464 = vmatpush1.bf16.msra.mxu0 %v5442
      %5465 = vmatprep.subr.bf16.mxu0 0
      %5466 = vmatpush1.bf16.msra.mxu0 %v5441
      %5467 = vmatprep.subr.bf16.mxu0 0
      %5468 = vmatpush1.bf16.msra.mxu0 %v5440
      %5469 = vmatprep.subr.bf16.mxu0 0
      %5470 = vmatpush1.bf16.msra.mxu0 %v5439
      %5471 = vmatprep.subr.bf16.mxu0 0
      %5472 = vmatpush2.bf16.msra.mxu0 0
      %5473 = vmatprep.subr.bf16.mxu0 0
      %5474 = vmatpush2.bf16.msra.mxu0 0
      %5475 = vmatprep.subr.bf16.mxu0 0
      %5476 = vmatpush2.bf16.msra.mxu0 0
      %5477 = vmatprep.subr.bf16.mxu0 0
      %5478 = vmatpush2.bf16.msra.mxu0 0
      %5479 = vmatprep.subr.bf16.mxu0 0
      %5480 = vmatpush2.bf16.msra.mxu0 0
      %5481 = vmatprep.subr.bf16.mxu0 0
      %5482 = vmatpush2.bf16.msra.mxu0 0
      %5483 = vmatprep.subr.bf16.mxu0 0
      %5484 = vmatpush2.bf16.msra.mxu0 0
      %5485 = vmatprep.subr.bf16.mxu0 0
      %5486 = vmatpush2.bf16.msra.mxu0 0
      %5487 = vmatprep.mubr.bf16.mxu0 0
      %5488 = vmatmul.mubr.bf16.gmra.mxu0 %v5375
      %v5489 = vpop.f32.mrf.mxu0
      %v5490 = vadd.f32 0.0, %v5489
      %v5491 = vpop.f32.mrf.mxu0
      %v5492 = vpop.f32.mrf.mxu0
      %v5493 = vadd.f32 0.0, %v5492
      %v5494 = vpop.f32.mrf.mxu0
      %5495 = vmatprep.mubr.bf16.mxu0 0
      %5496 = vmatmul.mubr.bf16.gmra.mxu0 %v5376
      %v5497 = vpop.f32.mrf.mxu0
      %v5498 = vadd.f32 0.0, %v5497
      %v5499 = vpop.f32.mrf.mxu0
      %v5500 = vpop.f32.mrf.mxu0
      %v5501 = vadd.f32 0.0, %v5500
      %v5502 = vpop.f32.mrf.mxu0
      %5503 = vmatprep.mubr.bf16.mxu0 0
      %5504 = vmatmul.mubr.bf16.gmra.mxu0 %v5377
      %v5505 = vpop.f32.mrf.mxu0
      %v5506 = vadd.f32 0.0, %v5505
      %v5507 = vpop.f32.mrf.mxu0
      %v5508 = vpop.f32.mrf.mxu0
      %v5509 = vadd.f32 0.0, %v5508
      %v5510 = vpop.f32.mrf.mxu0
      %5511 = vmatprep.mubr.bf16.mxu0 0
      %5512 = vmatmul.mubr.bf16.gmra.mxu0 %v5378
      %v5513 = vpop.f32.mrf.mxu0
      %v5514 = vadd.f32 0.0, %v5513
      %v5515 = vpop.f32.mrf.mxu0
      %v5516 = vpop.f32.mrf.mxu0
      %v5517 = vadd.f32 0.0, %v5516
      %v5518 = vpop.f32.mrf.mxu0
      %5519 = vmatprep.mubr.bf16.mxu0 0
      %5520 = vmatmul.mubr.bf16.gmra.mxu0 %v5379
      %v5521 = vpop.f32.mrf.mxu0
      %v5522 = vadd.f32 0.0, %v5521
      %v5523 = vpop.f32.mrf.mxu0
      %v5524 = vpop.f32.mrf.mxu0
      %v5525 = vadd.f32 0.0, %v5524
      %v5526 = vpop.f32.mrf.mxu0
      %5527 = vmatprep.mubr.bf16.mxu0 0
      %5528 = vmatmul.mubr.bf16.gmra.mxu0 %v5380
      %v5529 = vpop.f32.mrf.mxu0
      %v5530 = vadd.f32 0.0, %v5529
      %v5531 = vpop.f32.mrf.mxu0
      %v5532 = vpop.f32.mrf.mxu0
      %v5533 = vadd.f32 0.0, %v5532
      %v5534 = vpop.f32.mrf.mxu0
      %5535 = vmatprep.mubr.bf16.mxu0 0
      %5536 = vmatmul.mubr.bf16.gmra.mxu0 %v5381
      %v5537 = vpop.f32.mrf.mxu0
      %v5538 = vadd.f32 0.0, %v5537
      %v5539 = vpop.f32.mrf.mxu0
      %v5540 = vpop.f32.mrf.mxu0
      %v5541 = vadd.f32 0.0, %v5540
      %v5542 = vpop.f32.mrf.mxu0
      %5543 = vmatprep.mubr.bf16.mxu0 0
      %5544 = vmatmul.mubr.bf16.gmra.mxu0 %v5382
      %v5545 = vpop.f32.mrf.mxu0
      %v5546 = vadd.f32 0.0, %v5545
      %v5547 = vpop.f32.mrf.mxu0
      %v5548 = vpop.f32.mrf.mxu0
      %v5549 = vadd.f32 0.0, %v5548
      %v5550 = vpop.f32.mrf.mxu0
      %5551 = vmatprep.mubr.bf16.mxu0 0
      %5552 = vmatmul.mubr.bf16.gmra.mxu0 %v5383
      %v5553 = vpop.f32.mrf.mxu0
      %v5554 = vadd.f32 0.0, %v5553
      %v5555 = vpop.f32.mrf.mxu0
      %v5556 = vpop.f32.mrf.mxu0
      %v5557 = vadd.f32 0.0, %v5556
      %v5558 = vpop.f32.mrf.mxu0
      %5559 = vmatprep.mubr.bf16.mxu0 0
      %5560 = vmatmul.mubr.bf16.gmra.mxu0 %v5384
      %v5561 = vpop.f32.mrf.mxu0
      %v5562 = vadd.f32 0.0, %v5561
      %v5563 = vpop.f32.mrf.mxu0
      %v5564 = vpop.f32.mrf.mxu0
      %v5565 = vadd.f32 0.0, %v5564
      %v5566 = vpop.f32.mrf.mxu0
      %5567 = vmatprep.mubr.bf16.mxu0 0
      %5568 = vmatmul.mubr.bf16.gmra.mxu0 %v5385
      %v5569 = vpop.f32.mrf.mxu0
      %v5570 = vadd.f32 0.0, %v5569
      %v5571 = vpop.f32.mrf.mxu0
      %v5572 = vpop.f32.mrf.mxu0
      %v5573 = vadd.f32 0.0, %v5572
      %v5574 = vpop.f32.mrf.mxu0
      %5575 = vmatprep.mubr.bf16.mxu0 0
      %5576 = vmatmul.mubr.bf16.gmra.mxu0 %v5386
      %v5577 = vpop.f32.mrf.mxu0
      %v5578 = vadd.f32 0.0, %v5577
      %v5579 = vpop.f32.mrf.mxu0
      %v5580 = vpop.f32.mrf.mxu0
      %v5581 = vadd.f32 0.0, %v5580
      %v5582 = vpop.f32.mrf.mxu0
      %5583 = vmatprep.mubr.bf16.mxu0 0
      %5584 = vmatmul.mubr.bf16.gmra.mxu0 %v5387
      %v5585 = vpop.f32.mrf.mxu0
      %v5586 = vadd.f32 0.0, %v5585
      %v5587 = vpop.f32.mrf.mxu0
      %v5588 = vpop.f32.mrf.mxu0
      %v5589 = vadd.f32 0.0, %v5588
      %v5590 = vpop.f32.mrf.mxu0
      %5591 = vmatprep.mubr.bf16.mxu0 0
      %5592 = vmatmul.mubr.bf16.gmra.mxu0 %v5388
      %v5593 = vpop.f32.mrf.mxu0
      %v5594 = vadd.f32 0.0, %v5593
      %v5595 = vpop.f32.mrf.mxu0
      %v5596 = vpop.f32.mrf.mxu0
      %v5597 = vadd.f32 0.0, %v5596
      %v5598 = vpop.f32.mrf.mxu0
      %5599 = vmatprep.mubr.bf16.mxu0 0
      %5600 = vmatmul.mubr.bf16.gmra.mxu0 %v5389
      %v5601 = vpop.f32.mrf.mxu0
      %v5602 = vadd.f32 0.0, %v5601
      %v5603 = vpop.f32.mrf.mxu0
      %v5604 = vpop.f32.mrf.mxu0
      %v5605 = vadd.f32 0.0, %v5604
      %v5606 = vpop.f32.mrf.mxu0
      %5607 = vmatprep.mubr.bf16.mxu0 0
      %5608 = vmatmul.mubr.bf16.gmra.mxu0 %v5390
      %v5609 = vpop.f32.mrf.mxu0
      %v5610 = vadd.f32 0.0, %v5609
      %v5611 = vpop.f32.mrf.mxu0
      %v5612 = vpop.f32.mrf.mxu0
      %v5613 = vadd.f32 0.0, %v5612
      %v5614 = vpop.f32.mrf.mxu0
      %5615 = vdwg.mxu0
      %v5616 = vld [vmem:[#allocation2] sm:$0xff]
      %v5617 = vld [vmem:[#allocation2 + $0x8] sm:$0xff]
      %v5618 = vld [vmem:[#allocation2 + $0x10] sm:$0xff]
      %v5619 = vld [vmem:[#allocation2 + $0x18] sm:$0xff]
      %v5620 = vld [vmem:[#allocation2 + $0x20] sm:$0xff]
      %v5621 = vld [vmem:[#allocation2 + $0x28] sm:$0xff]
      %v5622 = vld [vmem:[#allocation2 + $0x30] sm:$0xff]
      %v5623 = vld [vmem:[#allocation2 + $0x38] sm:$0xff]
      %v5624 = vld [vmem:[#allocation2 + $0x40] sm:$0xff]
      %v5625 = vld [vmem:[#allocation2 + $0x48] sm:$0xff]
      %v5626 = vld [vmem:[#allocation2 + $0x50] sm:$0xff]
      %v5627 = vld [vmem:[#allocation2 + $0x58] sm:$0xff]
      %v5628 = vld [vmem:[#allocation2 + $0x60] sm:$0xff]
      %v5629 = vld [vmem:[#allocation2 + $0x68] sm:$0xff]
      %v5630 = vld [vmem:[#allocation2 + $0x70] sm:$0xff]
      %v5631 = vld [vmem:[#allocation2 + $0x78] sm:$0xff]
      %v5632 = vld [vmem:[#allocation2 + $0x80] sm:$0xff]
      %v5633 = vld [vmem:[#allocation2 + $0x88] sm:$0xff]
      %v5634 = vld [vmem:[#allocation2 + $0x90] sm:$0xff]
      %v5635 = vld [vmem:[#allocation2 + $0x98] sm:$0xff]
      %v5636 = vld [vmem:[#allocation2 + $0xa0] sm:$0xff]
      %v5637 = vld [vmem:[#allocation2 + $0xa8] sm:$0xff]
      %v5638 = vld [vmem:[#allocation2 + $0xb0] sm:$0xff]
      %v5639 = vld [vmem:[#allocation2 + $0xb8] sm:$0xff]
      %v5640 = vld [vmem:[#allocation2 + $0xc0] sm:$0xff]
      %v5641 = vld [vmem:[#allocation2 + $0xc8] sm:$0xff]
      %v5642 = vld [vmem:[#allocation2 + $0xd0] sm:$0xff]
      %v5643 = vld [vmem:[#allocation2 + $0xd8] sm:$0xff]
      %v5644 = vld [vmem:[#allocation2 + $0xe0] sm:$0xff]
      %v5645 = vld [vmem:[#allocation2 + $0xe8] sm:$0xff]
      %v5646 = vld [vmem:[#allocation2 + $0xf0] sm:$0xff]
      %v5647 = vld [vmem:[#allocation2 + $0xf8] sm:$0xff]
      %v5648 = vadd.f32 %v5616, %v5490
      %v5649 = vadd.f32 %v5617, %v5493
      %v5650 = vadd.f32 %v5618, %v5498
      %v5651 = vadd.f32 %v5619, %v5501
      %v5652 = vadd.f32 %v5620, %v5506
      %v5653 = vadd.f32 %v5621, %v5509
      %v5654 = vadd.f32 %v5622, %v5514
      %v5655 = vadd.f32 %v5623, %v5517
      %v5656 = vadd.f32 %v5624, %v5522
      %v5657 = vadd.f32 %v5625, %v5525
      %v5658 = vadd.f32 %v5626, %v5530
      %v5659 = vadd.f32 %v5627, %v5533
      %v5660 = vadd.f32 %v5628, %v5538
      %v5661 = vadd.f32 %v5629, %v5541
      %v5662 = vadd.f32 %v5630, %v5546
      %v5663 = vadd.f32 %v5631, %v5549
      %v5664 = vadd.f32 %v5632, %v5554
      %v5665 = vadd.f32 %v5633, %v5557
      %v5666 = vadd.f32 %v5634, %v5562
      %v5667 = vadd.f32 %v5635, %v5565
      %v5668 = vadd.f32 %v5636, %v5570
      %v5669 = vadd.f32 %v5637, %v5573
      %v5670 = vadd.f32 %v5638, %v5578
      %v5671 = vadd.f32 %v5639, %v5581
      %v5672 = vadd.f32 %v5640, %v5586
      %v5673 = vadd.f32 %v5641, %v5589
      %v5674 = vadd.f32 %v5642, %v5594
      %v5675 = vadd.f32 %v5643, %v5597
      %v5676 = vadd.f32 %v5644, %v5602
      %v5677 = vadd.f32 %v5645, %v5605
      %v5678 = vadd.f32 %v5646, %v5610
      %v5679 = vadd.f32 %v5647, %v5613
      %5680 = vst [vmem:[#allocation2] sm:$0xff] %v5648
      %5681 = vst [vmem:[#allocation2 + $0x8] sm:$0xff] %v5649
      %5682 = vst [vmem:[#allocation2 + $0x10] sm:$0xff] %v5650
      %5683 = vst [vmem:[#allocation2 + $0x18] sm:$0xff] %v5651
      %5684 = vst [vmem:[#allocation2 + $0x20] sm:$0xff] %v5652
      %5685 = vst [vmem:[#allocation2 + $0x28] sm:$0xff] %v5653
      %5686 = vst [vmem:[#allocation2 + $0x30] sm:$0xff] %v5654
      %5687 = vst [vmem:[#allocation2 + $0x38] sm:$0xff] %v5655
      %5688 = vst [vmem:[#allocation2 + $0x40] sm:$0xff] %v5656
      %5689 = vst [vmem:[#allocation2 + $0x48] sm:$0xff] %v5657
      %5690 = vst [vmem:[#allocation2 + $0x50] sm:$0xff] %v5658
      %5691 = vst [vmem:[#allocation2 + $0x58] sm:$0xff] %v5659
      %5692 = vst [vmem:[#allocation2 + $0x60] sm:$0xff] %v5660
      %5693 = vst [vmem:[#allocation2 + $0x68] sm:$0xff] %v5661
      %5694 = vst [vmem:[#allocation2 + $0x70] sm:$0xff] %v5662
      %5695 = vst [vmem:[#allocation2 + $0x78] sm:$0xff] %v5663
      %5696 = vst [vmem:[#allocation2 + $0x80] sm:$0xff] %v5664
      %5697 = vst [vmem:[#allocation2 + $0x88] sm:$0xff] %v5665
      %5698 = vst [vmem:[#allocation2 + $0x90] sm:$0xff] %v5666
      %5699 = vst [vmem:[#allocation2 + $0x98] sm:$0xff] %v5667
      %5700 = vst [vmem:[#allocation2 + $0xa0] sm:$0xff] %v5668
      %5701 = vst [vmem:[#allocation2 + $0xa8] sm:$0xff] %v5669
      %5702 = vst [vmem:[#allocation2 + $0xb0] sm:$0xff] %v5670
      %5703 = vst [vmem:[#allocation2 + $0xb8] sm:$0xff] %v5671
      %5704 = vst [vmem:[#allocation2 + $0xc0] sm:$0xff] %v5672
      %5705 = vst [vmem:[#allocation2 + $0xc8] sm:$0xff] %v5673
      %5706 = vst [vmem:[#allocation2 + $0xd0] sm:$0xff] %v5674
      %5707 = vst [vmem:[#allocation2 + $0xd8] sm:$0xff] %v5675
      %5708 = vst [vmem:[#allocation2 + $0xe0] sm:$0xff] %v5676
      %5709 = vst [vmem:[#allocation2 + $0xe8] sm:$0xff] %v5677
      %5710 = vst [vmem:[#allocation2 + $0xf0] sm:$0xff] %v5678
      %5711 = vst [vmem:[#allocation2 + $0xf8] sm:$0xff] %v5679
      %v5712 = vld [vmem:[#allocation2] sm:$0xff]
      %v5713 = vld [vmem:[#allocation2 + $0x8] sm:$0xff]
      %v5714 = vld [vmem:[#allocation2 + $0x10] sm:$0xff]
      %v5715 = vld [vmem:[#allocation2 + $0x18] sm:$0xff]
      %v5716 = vld [vmem:[#allocation2 + $0x20] sm:$0xff]
      %v5717 = vld [vmem:[#allocation2 + $0x28] sm:$0xff]
      %v5718 = vld [vmem:[#allocation2 + $0x30] sm:$0xff]
      %v5719 = vld [vmem:[#allocation2 + $0x38] sm:$0xff]
      %v5720 = vld [vmem:[#allocation2 + $0x40] sm:$0xff]
      %v5721 = vld [vmem:[#allocation2 + $0x48] sm:$0xff]
      %v5722 = vld [vmem:[#allocation2 + $0x50] sm:$0xff]
      %v5723 = vld [vmem:[#allocation2 + $0x58] sm:$0xff]
      %v5724 = vld [vmem:[#allocation2 + $0x60] sm:$0xff]
      %v5725 = vld [vmem:[#allocation2 + $0x68] sm:$0xff]
      %v5726 = vld [vmem:[#allocation2 + $0x70] sm:$0xff]
      %v5727 = vld [vmem:[#allocation2 + $0x78] sm:$0xff]
      %v5728 = vld [vmem:[#allocation2 + $0x80] sm:$0xff]
      %v5729 = vld [vmem:[#allocation2 + $0x88] sm:$0xff]
      %v5730 = vld [vmem:[#allocation2 + $0x90] sm:$0xff]
      %v5731 = vld [vmem:[#allocation2 + $0x98] sm:$0xff]
      %v5732 = vld [vmem:[#allocation2 + $0xa0] sm:$0xff]
      %v5733 = vld [vmem:[#allocation2 + $0xa8] sm:$0xff]
      %v5734 = vld [vmem:[#allocation2 + $0xb0] sm:$0xff]
      %v5735 = vld [vmem:[#allocation2 + $0xb8] sm:$0xff]
      %v5736 = vld [vmem:[#allocation2 + $0xc0] sm:$0xff]
      %v5737 = vld [vmem:[#allocation2 + $0xc8] sm:$0xff]
      %v5738 = vld [vmem:[#allocation2 + $0xd0] sm:$0xff]
      %v5739 = vld [vmem:[#allocation2 + $0xd8] sm:$0xff]
      %v5740 = vld [vmem:[#allocation2 + $0xe0] sm:$0xff]
      %v5741 = vld [vmem:[#allocation2 + $0xe8] sm:$0xff]
      %v5742 = vld [vmem:[#allocation2 + $0xf0] sm:$0xff]
      %v5743 = vld [vmem:[#allocation2 + $0xf8] sm:$0xff]
      %v5744 = vpack.c.bf16 %v5713, %v5712
      %v5745 = vpack.c.bf16 %v5715, %v5714
      %v5746 = vpack.c.bf16 %v5717, %v5716
      %v5747 = vpack.c.bf16 %v5719, %v5718
      %v5748 = vpack.c.bf16 %v5721, %v5720
      %v5749 = vpack.c.bf16 %v5723, %v5722
      %v5750 = vpack.c.bf16 %v5725, %v5724
      %v5751 = vpack.c.bf16 %v5727, %v5726
      %v5752 = vpack.c.bf16 %v5729, %v5728
      %v5753 = vpack.c.bf16 %v5731, %v5730
      %v5754 = vpack.c.bf16 %v5733, %v5732
      %v5755 = vpack.c.bf16 %v5735, %v5734
      %v5756 = vpack.c.bf16 %v5737, %v5736
      %v5757 = vpack.c.bf16 %v5739, %v5738
      %v5758 = vpack.c.bf16 %v5741, %v5740
      %v5759 = vpack.c.bf16 %v5743, %v5742
      %v5776 = vunpack.c.l.b16 %v5744
      %v5777 = vunpack.c.h.b16 %v5744
      %v5778 = vunpack.c.l.b16 %v5745
      %v5779 = vunpack.c.h.b16 %v5745
      %v5780 = vunpack.c.l.b16 %v5746
      %v5781 = vunpack.c.h.b16 %v5746
      %v5782 = vunpack.c.l.b16 %v5747
      %v5783 = vunpack.c.h.b16 %v5747
      %v5784 = vunpack.c.l.b16 %v5748
      %v5785 = vunpack.c.h.b16 %v5748
      %v5786 = vunpack.c.l.b16 %v5749
      %v5787 = vunpack.c.h.b16 %v5749
      %v5788 = vunpack.c.l.b16 %v5750
      %v5789 = vunpack.c.h.b16 %v5750
      %v5790 = vunpack.c.l.b16 %v5751
      %v5791 = vunpack.c.h.b16 %v5751
      %v5792 = vunpack.c.l.b16 %v5752
      %v5793 = vunpack.c.h.b16 %v5752
      %v5794 = vunpack.c.l.b16 %v5753
      %v5795 = vunpack.c.h.b16 %v5753
      %v5796 = vunpack.c.l.b16 %v5754
      %v5797 = vunpack.c.h.b16 %v5754
      %v5798 = vunpack.c.l.b16 %v5755
      %v5799 = vunpack.c.h.b16 %v5755
      %v5800 = vunpack.c.l.b16 %v5756
      %v5801 = vunpack.c.h.b16 %v5756
      %v5802 = vunpack.c.l.b16 %v5757
      %v5803 = vunpack.c.h.b16 %v5757
      %v5804 = vunpack.c.l.b16 %v5758
      %v5805 = vunpack.c.h.b16 %v5758
      %v5806 = vunpack.c.l.b16 %v5759
      %v5807 = vunpack.c.h.b16 %v5759
      %v5808 = vpack.c.b16 %v5776, %v5776
      %v5809 = vpack.c.b16 %v5777, %v5777
      %v5810 = vpack.c.b16 %v5778, %v5778
      %v5811 = vpack.c.b16 %v5779, %v5779
      %v5812 = vpack.c.b16 %v5780, %v5780
      %v5813 = vpack.c.b16 %v5781, %v5781
      %v5814 = vpack.c.b16 %v5782, %v5782
      %v5815 = vpack.c.b16 %v5783, %v5783
      %v5816 = vpack.c.b16 %v5784, %v5784
      %v5817 = vpack.c.b16 %v5785, %v5785
      %v5818 = vpack.c.b16 %v5786, %v5786
      %v5819 = vpack.c.b16 %v5787, %v5787
      %v5820 = vpack.c.b16 %v5788, %v5788
      %v5821 = vpack.c.b16 %v5789, %v5789
      %v5822 = vpack.c.b16 %v5790, %v5790
      %v5823 = vpack.c.b16 %v5791, %v5791
      %v5824 = vpack.c.b16 %v5792, %v5792
      %v5825 = vpack.c.b16 %v5793, %v5793
      %v5826 = vpack.c.b16 %v5794, %v5794
      %v5827 = vpack.c.b16 %v5795, %v5795
      %v5828 = vpack.c.b16 %v5796, %v5796
      %v5829 = vpack.c.b16 %v5797, %v5797
      %v5830 = vpack.c.b16 %v5798, %v5798
      %v5831 = vpack.c.b16 %v5799, %v5799
      %v5832 = vpack.c.b16 %v5800, %v5800
      %v5833 = vpack.c.b16 %v5801, %v5801
      %v5834 = vpack.c.b16 %v5802, %v5802
      %v5835 = vpack.c.b16 %v5803, %v5803
      %v5836 = vpack.c.b16 %v5804, %v5804
      %v5837 = vpack.c.b16 %v5805, %v5805
      %v5838 = vpack.c.b16 %v5806, %v5806
      %v5839 = vpack.c.b16 %v5807, %v5807
      %5872 = vst [vmem:[%s177] sm:$0xf] %v5808
      %5873 = vst [vmem:[%s177 + $0x4] sm:$0xf] %v5809
      %5874 = vst [vmem:[%s177 + $0x8] sm:$0xf] %v5810
      %5875 = vst [vmem:[%s177 + $0xc] sm:$0xf] %v5811
      %5876 = vst [vmem:[%s177 + $0x10] sm:$0xf] %v5812
      %5877 = vst [vmem:[%s177 + $0x14] sm:$0xf] %v5813
      %5878 = vst [vmem:[%s177 + $0x18] sm:$0xf] %v5814
      %5879 = vst [vmem:[%s177 + $0x1c] sm:$0xf] %v5815
      %5880 = vst [vmem:[%s177 + $0x20] sm:$0xf] %v5816
      %5881 = vst [vmem:[%s177 + $0x24] sm:$0xf] %v5817
      %5882 = vst [vmem:[%s177 + $0x28] sm:$0xf] %v5818
      %5883 = vst [vmem:[%s177 + $0x2c] sm:$0xf] %v5819
      %5884 = vst [vmem:[%s177 + $0x30] sm:$0xf] %v5820
      %5885 = vst [vmem:[%s177 + $0x34] sm:$0xf] %v5821
      %5886 = vst [vmem:[%s177 + $0x38] sm:$0xf] %v5822
      %5887 = vst [vmem:[%s177 + $0x3c] sm:$0xf] %v5823
      %5888 = vst [vmem:[%s177 + $0x40] sm:$0xf] %v5824
      %5889 = vst [vmem:[%s177 + $0x44] sm:$0xf] %v5825
      %5890 = vst [vmem:[%s177 + $0x48] sm:$0xf] %v5826
      %5891 = vst [vmem:[%s177 + $0x4c] sm:$0xf] %v5827
      %5892 = vst [vmem:[%s177 + $0x50] sm:$0xf] %v5828
      %5893 = vst [vmem:[%s177 + $0x54] sm:$0xf] %v5829
      %5894 = vst [vmem:[%s177 + $0x58] sm:$0xf] %v5830
      %5895 = vst [vmem:[%s177 + $0x5c] sm:$0xf] %v5831
      %5896 = vst [vmem:[%s177 + $0x60] sm:$0xf] %v5832
      %5897 = vst [vmem:[%s177 + $0x64] sm:$0xf] %v5833
      %5898 = vst [vmem:[%s177 + $0x68] sm:$0xf] %v5834
      %5899 = vst [vmem:[%s177 + $0x6c] sm:$0xf] %v5835
      %5900 = vst [vmem:[%s177 + $0x70] sm:$0xf] %v5836
      %5901 = vst [vmem:[%s177 + $0x74] sm:$0xf] %v5837
      %5902 = vst [vmem:[%s177 + $0x78] sm:$0xf] %v5838
      %5903 = vst [vmem:[%s177 + $0x7c] sm:$0xf] %v5839
      %v5904 = vadd.f32 %v5712, %v5713
      %v5905 = vadd.f32 %v5904, %v5714
      %v5906 = vadd.f32 %v5905, %v5715
      %v5907 = vadd.f32 %v5906, %v5716
      %v5908 = vadd.f32 %v5907, %v5717
      %v5909 = vadd.f32 %v5908, %v5718
      %v5910 = vadd.f32 %v5909, %v5719
      %v5911 = vadd.f32 %v5910, %v5720
      %v5912 = vadd.f32 %v5911, %v5721
      %v5913 = vadd.f32 %v5912, %v5722
      %v5914 = vadd.f32 %v5913, %v5723
      %v5915 = vadd.f32 %v5914, %v5724
      %v5916 = vadd.f32 %v5915, %v5725
      %v5917 = vadd.f32 %v5916, %v5726
      %v5918 = vadd.f32 %v5917, %v5727
      %v5919 = vadd.f32 %v5918, %v5728
      %v5920 = vadd.f32 %v5919, %v5729
      %v5921 = vadd.f32 %v5920, %v5730
      %v5922 = vadd.f32 %v5921, %v5731
      %v5923 = vadd.f32 %v5922, %v5732
      %v5924 = vadd.f32 %v5923, %v5733
      %v5925 = vadd.f32 %v5924, %v5734
      %v5926 = vadd.f32 %v5925, %v5735
      %v5927 = vadd.f32 %v5926, %v5736
      %v5928 = vadd.f32 %v5927, %v5737
      %v5929 = vadd.f32 %v5928, %v5738
      %v5930 = vadd.f32 %v5929, %v5739
      %v5931 = vadd.f32 %v5930, %v5740
      %v5932 = vadd.f32 %v5931, %v5741
      %v5933 = vadd.f32 %v5932, %v5742
      %v5934 = vadd.f32 %v5933, %v5743
      %v5935 = vrot.slane %v5934, 4
      %v5936 = vadd.f32 %v5934, %v5935
      %v5937 = vrot.slane %v5936, 2
      %v5938 = vadd.f32 %v5936, %v5937
      %v5939 = vrot.slane %v5938, 1
      %v5940 = vadd.f32 %v5938, %v5939
      %5941 = vst [vmem:[%s181] sm:$0x1] %v5940
      %v5942 = vmul.f32 %v5712, %v5712
      %v5943 = vmul.f32 %v5713, %v5713
      %v5944 = vmul.f32 %v5714, %v5714
      %v5945 = vmul.f32 %v5715, %v5715
      %v5946 = vmul.f32 %v5716, %v5716
      %v5947 = vmul.f32 %v5717, %v5717
      %v5948 = vmul.f32 %v5718, %v5718
      %v5949 = vmul.f32 %v5719, %v5719
      %v5950 = vmul.f32 %v5720, %v5720
      %v5951 = vmul.f32 %v5721, %v5721
      %v5952 = vmul.f32 %v5722, %v5722
      %v5953 = vmul.f32 %v5723, %v5723
      %v5954 = vmul.f32 %v5724, %v5724
      %v5955 = vmul.f32 %v5725, %v5725
      %v5956 = vmul.f32 %v5726, %v5726
      %v5957 = vmul.f32 %v5727, %v5727
      %v5958 = vmul.f32 %v5728, %v5728
      %v5959 = vmul.f32 %v5729, %v5729
      %v5960 = vmul.f32 %v5730, %v5730
      %v5961 = vmul.f32 %v5731, %v5731
      %v5962 = vmul.f32 %v5732, %v5732
      %v5963 = vmul.f32 %v5733, %v5733
      %v5964 = vmul.f32 %v5734, %v5734
      %v5965 = vmul.f32 %v5735, %v5735
      %v5966 = vmul.f32 %v5736, %v5736
      %v5967 = vmul.f32 %v5737, %v5737
      %v5968 = vmul.f32 %v5738, %v5738
      %v5969 = vmul.f32 %v5739, %v5739
      %v5970 = vmul.f32 %v5740, %v5740
      %v5971 = vmul.f32 %v5741, %v5741
      %v5972 = vmul.f32 %v5742, %v5742
      %v5973 = vmul.f32 %v5743, %v5743
      %v5974 = vadd.f32 %v5942, %v5943
      %v5975 = vadd.f32 %v5974, %v5944
      %v5976 = vadd.f32 %v5975, %v5945
      %v5977 = vadd.f32 %v5976, %v5946
      %v5978 = vadd.f32 %v5977, %v5947
      %v5979 = vadd.f32 %v5978, %v5948
      %v5980 = vadd.f32 %v5979, %v5949
      %v5981 = vadd.f32 %v5980, %v5950
      %v5982 = vadd.f32 %v5981, %v5951
      %v5983 = vadd.f32 %v5982, %v5952
      %v5984 = vadd.f32 %v5983, %v5953
      %v5985 = vadd.f32 %v5984, %v5954
      %v5986 = vadd.f32 %v5985, %v5955
      %v5987 = vadd.f32 %v5986, %v5956
      %v5988 = vadd.f32 %v5987, %v5957
      %v5989 = vadd.f32 %v5988, %v5958
      %v5990 = vadd.f32 %v5989, %v5959
      %v5991 = vadd.f32 %v5990, %v5960
      %v5992 = vadd.f32 %v5991, %v5961
      %v5993 = vadd.f32 %v5992, %v5962
      %v5994 = vadd.f32 %v5993, %v5963
      %v5995 = vadd.f32 %v5994, %v5964
      %v5996 = vadd.f32 %v5995, %v5965
      %v5997 = vadd.f32 %v5996, %v5966
      %v5998 = vadd.f32 %v5997, %v5967
      %v5999 = vadd.f32 %v5998, %v5968
      %v6000 = vadd.f32 %v5999, %v5969
      %v6001 = vadd.f32 %v6000, %v5970
      %v6002 = vadd.f32 %v6001, %v5971
      %v6003 = vadd.f32 %v6002, %v5972
      %v6004 = vadd.f32 %v6003, %v5973
      %v6005 = vrot.slane %v6004, 4
      %v6006 = vadd.f32 %v6004, %v6005
      %v6007 = vrot.slane %v6006, 2
      %v6008 = vadd.f32 %v6006, %v6007
      %v6009 = vrot.slane %v6008, 1
      %v6010 = vadd.f32 %v6008, %v6009
      %6011 = vst [vmem:[%s181 + $0x1] sm:$0x1] %v6010
      %p6012 = scmp.lt.s32.totalorder %s15, 1
      %s6013 = scalar_select %p6012, %s15, 1
      %s6014 = smul.addr %s6013, 32
      %s6015 = smul.addr %s6014, 4
      %s6016 = scalar_lea.vmem %s2, %s6015
      %p6017 = scmp.lt.s32.totalorder %s15, 1
      %s6018 = scalar_select %p6017, %s15, 1
      %s6019 = smul.addr %s6018, 2
      %s6020 = scalar_lea.vmem %s3, %s6019
      // Predicated region
      $region29: #{basic_block_forward.4} parent=27 // pred_check
        %p6021 = pneg %p80
      $region30: #{basic_block_forward.4} parent=27 // pred_check_branch
        %6023 = sbr.rel (%p6021) target = $region32
      $region31: #{basic_block_forward.4} parent=27 // pred_region
        _
      $region32: #{basic_block_forward.4} parent=27 // pred_fallthru
        _
      // Predicated region
      $region33: #{basic_block_forward.4} parent=27 // pred_check
        %p6024 = pneg %p106
      $region34: #{basic_block_forward.4} parent=27 // pred_check_branch
        %6026 = sbr.rel (%p6024) target = $region36
      $region35: #{basic_block_forward.4} parent=27 // pred_region
        _
      $region36: #{basic_block_forward.4} parent=27 // pred_fallthru
        _
    $region28: #{basic_block_forward.4} parent=5 // pred_fallthru
      _
    %p6027 = scmp.le.s32.totalorder 2, %s10
    // Predicated region
    $region37: #{basic_block_forward.4} parent=5 // pred_check
      %p6028 = pneg %p6027
    $region38: #{basic_block_forward.4} parent=5 // pred_check_branch
      %6030 = sbr.rel (%p6028) target = $region40
    $region39: #{basic_block_forward.4} parent=5 // pred_region
      %s6031 = ssub.s32 %s10, 2
      // Predicated region
      $region41: #{basic_block_forward.4} parent=39 // pred_check
        %p6032 = pneg %p86
      $region42: #{basic_block_forward.4} parent=39 // pred_check_branch
        %6034 = sbr.rel (%p6032) target = $region44
      $region43: #{basic_block_forward.4} parent=39 // pred_region
        %p6035 = scmp.lt.s32.totalorder %s16, 1
        %s6036 = scalar_select %p6035, %s16, 1
        %s6037 = smul.addr %s6036, 32
        %s6038 = smul.addr %s6037, 4
        %s6039 = scalar_lea.vmem %s2, %s6038
      $region44: #{basic_block_forward.4} parent=39 // pred_fallthru
        _
      // Predicated region
      $region45: #{basic_block_forward.4} parent=39 // pred_check
        %p6040 = pneg %p112
      $region46: #{basic_block_forward.4} parent=39 // pred_check_branch
        %6042 = sbr.rel (%p6040) target = $region48
      $region47: #{basic_block_forward.4} parent=39 // pred_region
        %p6043 = scmp.lt.s32.totalorder %s16, 1
        %s6044 = scalar_select %p6043, %s16, 1
        %s6045 = smul.addr %s6044, 2
        %s6046 = scalar_lea.vmem %s3, %s6045
      $region48: #{basic_block_forward.4} parent=39 // pred_fallthru
        _
    $region40: #{basic_block_forward.4} parent=5 // pred_fallthru
      _
  $region6: #{basic_block_forward.4} parent=0 // loop_footer
    %s14 = sadd.s32 1, %s10
  $region7: #{basic_block_forward.4} parent=0 // loop_footer_branch
    %9 = sbr.rel target = $region3
  $region8: #{basic_block_forward.4} parent=0 // loop_exit
    _

</llo_original>
